<compile_context>
chip_gen: v5e
topology: v5e:2x2
jax: 0.10.0
libtpu: 0.0.40
codegen_flags: <defaults>
</compile_context>

<pallas_src>
import functools

import numpy as np
import jax
import jax.numpy as jnp
from jax.experimental import pallas as pl
from jax.experimental.pallas import tpu as pltpu

CPAD = 128                      # every stage's channel dim padded to one 128-lane slab
_WIDTHS = (8, 16, 32, 64, 128)  # encoder stage widths (all <= CPAD)
_STRIDES = (1, 2, 2, 2, 2)
_VMEM = pl.BlockSpec(memory_space=pltpu.MemorySpace.VMEM)   # whole array, VMEM-resident


# ----------------------------- fused Pallas kernel ---------------------------

def _fused_encoder_cls_kernel(x_ref, p0, p1, p2, p3, p4,
                              w_ref, b_ref, wh_ref, bh_ref, o_ref):
    """One batch element: 5x (3x3 conv + bias + ReLU) -> global avg pool -> linear head.

    x_ref : (1, H*W, CPAD)       bf16  flattened NHWC input, channels padded to 128
    p_s   : (9, HoWo_s, HiWi_s)  bf16  0/1 shift/stride/zero-pad selection matrices
    w_ref : (5*9, CPAD, CPAD)    bf16  per-offset conv weights, channel-padded
    b_ref : (5, 1, CPAD)         f32   conv biases, channel-padded
    wh_ref: (CPAD, CPAD)         bf16  head weight (classes padded to 128 lanes)
    bh_ref: (1, CPAD)            f32   head bias
    o_ref : (1, 1, CPAD)         f32   padded logits for this batch element
    """
    x = x_ref[0]                                              # (HiWi, CPAD) bf16
    for s, p_ref in enumerate((p0, p1, p2, p3, p4)):
        howo = p_ref.shape[1]
        acc = jnp.zeros((howo, CPAD), jnp.float32)
        for dd in range(9):                                   # 3x3 offsets, unrolled
            # Gather the shifted/strided (zero-padded) pixels: exact 0/1 matmul,
            # then contract the channel dim against this offset's weights.
            t = jnp.dot(p_ref[dd], x, preferred_element_type=jnp.float32)
            acc = acc + jnp.dot(t.astype(jnp.bfloat16), w_ref[s * 9 + dd],
                                preferred_element_type=jnp.float32)
        # bias + ReLU epilogue in f32 on the VPU
        x = jnp.maximum(acc + b_ref[s], 0.0).astype(jnp.bfloat16)

    # Global average pool over the remaining spatial positions (1x1 here).
    pooled = jnp.mean(x.astype(jnp.float32), axis=0, keepdims=True)       # (1, CPAD)
    logits = jnp.dot(pooled.astype(jnp.bfloat16), wh_ref[...],
                     preferred_element_type=jnp.float32) + bh_ref[...]
    o_ref[0] = logits


# ----------------------- init-time constant construction ---------------------

def _selection_matrices(hi, wi, stride):
    """P[dd, i*Wo+j, r*Wi+c] = 1 iff (r, c) == (stride*i + di - 1, stride*j + dj - 1)
    lies inside the input image, dd = di*3 + dj  (3x3 kernel, 'same' zero padding)."""
    ho = (hi - 1) // stride + 1
    wo = (wi - 1) // stride + 1
    p = np.zeros((9, ho * wo, hi * wi), np.float32)
    for di in range(3):
        for dj in range(3):
            dd = di * 3 + dj
            for i in range(ho):
                r = stride * i + di - 1
                if r < 0 or r >= hi:
                    continue
                for j in range(wo):
                    c = stride * j + dj - 1
                    if c < 0 or c >= wi:
                        continue
                    p[dd, i * wo + j, r * wi + c] = 1.0
    return p, ho, wo


def init_params(key, in_ch=4, num_classes=10):
    """Deterministic (He-style) init for the 5-stage encoder + linear head (raw f32)."""
    params = {"convs": []}
    ch = in_ch
    for out_ch in _WIDTHS:
        key, kw_, kb_ = jax.random.split(key, 3)
        fan_in = 3 * 3 * ch
        w = jax.random.normal(kw_, (3, 3, ch, out_ch), jnp.float32) * (2.0 / fan_in) ** 0.5
        b = jax.random.normal(kb_, (out_ch,), jnp.float32) * 0.01
        params["convs"].append((w, b))
        ch = out_ch
    key, kw_, kb_ = jax.random.split(key, 3)
    params["head_w"] = jax.random.normal(kw_, (ch, num_classes), jnp.float32) * (1.0 / ch) ** 0.5
    params["head_b"] = jax.random.normal(kb_, (num_classes,), jnp.float32) * 0.01
    return params


def build_kernel_constants(params, in_hw):
    """One-time (outside jit): channel-pad + bf16-cast weights, build P matrices."""
    h, w = in_hw
    n_stages = len(params["convs"])

    p_mats = []
    for stride in _STRIDES:
        p, h, w = _selection_matrices(h, w, stride)
        p_mats.append(jnp.asarray(p, jnp.bfloat16))          # 0/1 exact in bf16

    wk = np.zeros((n_stages * 9, CPAD, CPAD), np.float32)
    bk = np.zeros((n_stages, 1, CPAD), np.float32)
    for s, (wgt, bias) in enumerate(params["convs"]):
        kh, kw, cin, cout = wgt.shape
        assert kh == 3 and kw == 3 and cin <= CPAD and cout <= CPAD
        wk[s * 9:(s + 1) * 9, :cin, :cout] = np.asarray(wgt).reshape(9, cin, cout)
        bk[s, 0, :cout] = np.asarray(bias)

    head_w = np.asarray(params["head_w"])
    head_b = np.asarray(params["head_b"])
    wh = np.zeros((CPAD, CPAD), np.float32)
    wh[:head_w.shape[0], :head_w.shape[1]] = head_w
    bh = np.zeros((1, CPAD), np.float32)
    bh[0, :head_b.shape[0]] = head_b

    return {"p": tuple(p_mats),
            "w": jnp.asarray(wk, jnp.bfloat16),
            "b": jnp.asarray(bk, jnp.float32),
            "wh": jnp.asarray(wh, jnp.bfloat16),
            "bh": jnp.asarray(bh, jnp.float32)}


# --------------------------------- forward -----------------------------------

def encoder_decoder_forward(kc, x_nchw, *, num_classes):
    """Mirrors EncoderDecoder.forward: feats = encoder(x); cls_head(feats[4])."""
    n, c, h, w = x_nchw.shape
    hw = h * w
    # NCHW -> flat NHWC rows; channel-pad to a dense 128-lane slab; bf16 for the MXU.
    x = jnp.transpose(x_nchw, (0, 2, 3, 1)).reshape(n, hw, c)
    x = jnp.pad(x, ((0, 0), (0, 0), (0, CPAD - c))).astype(jnp.bfloat16)

    p_mats = kc["p"]
    flops = 2 * CPAD * CPAD                                   # head matmul
    for pm in p_mats:
        _, howo, hiwi = pm.shape
        flops += 9 * 2 * (howo * hiwi * CPAD + howo * CPAD * CPAD)
    flops *= n
    bytes_accessed = (x.size * 2 + sum(pm.size * 2 for pm in p_mats)
                      + kc["w"].size * 2 + kc["b"].size * 4
                      + kc["wh"].size * 2 + kc["bh"].size * 4 + n * CPAD * 4)

    out = pl.pallas_call(
        _fused_encoder_cls_kernel,
        out_shape=jax.ShapeDtypeStruct((n, 1, CPAD), jnp.float32),
        grid=(n,),
        in_specs=[pl.BlockSpec((1, hw, CPAD), lambda b: (b, 0, 0))] + [_VMEM] * 9,
        out_specs=pl.BlockSpec((1, 1, CPAD), lambda b: (b, 0, 0)),
        compiler_params=pltpu.CompilerParams(
            dimension_semantics=("parallel",),                # batch -> megacore on v7x
            vmem_limit_bytes=32 * 1024 * 1024),               # ~4 MiB used; v7x-safe cap
        cost_estimate=pl.CostEstimate(flops=flops, transcendentals=0,
                                      bytes_accessed=bytes_accessed),
    )(x, *p_mats, kc["w"], kc["b"], kc["wh"], kc["bh"])
    return out[:, 0, :num_classes]


# ----------------------------------- main -------------------------------------

if __name__ == "__main__":
    key = jax.random.PRNGKey(0)
    k_x, k_p = jax.random.split(key)

    # small shapes: batch=2, channels=4, spatial=16x16
    x = jax.random.normal(k_x, (2, 4, 16, 16), jnp.float32)
    params = init_params(k_p, in_ch=4, num_classes=10)
    kconsts = build_kernel_constants(params, in_hw=(16, 16))

    fwd = jax.jit(functools.partial(encoder_decoder_forward, num_classes=10))
    logits = fwd(kconsts, x)
    jax.block_until_ready(logits)
    assert logits.shape == (2, 10)
    print("KERNEL_OK")
</pallas_src>

<mosaic_0001>
module attributes {stable_mosaic.version = 11 : i64} {
  func.func @_fused_encoder_cls_kernel(%arg0: i32, %arg1: memref<1x256x128xbf16, #tpu.memory_space<vmem>>, %arg2: memref<9x256x256xbf16, #tpu.memory_space<vmem>>, %arg3: memref<9x64x256xbf16, #tpu.memory_space<vmem>>, %arg4: memref<9x16x64xbf16, #tpu.memory_space<vmem>>, %arg5: memref<9x4x16xbf16, #tpu.memory_space<vmem>>, %arg6: memref<9x1x4xbf16, #tpu.memory_space<vmem>>, %arg7: memref<45x128x128xbf16, #tpu.memory_space<vmem>>, %arg8: memref<5x1x128xf32, #tpu.memory_space<vmem>>, %arg9: memref<128x128xbf16, #tpu.memory_space<vmem>>, %arg10: memref<1x128xf32, #tpu.memory_space<vmem>>, %arg11: memref<1x1x128xf32, #tpu.memory_space<vmem>>) attributes {dimension_semantics = [#tpu.dimension_semantics<parallel>], iteration_bounds = array<i64: 2>, scalar_prefetch = 0 : i64, scratch_operands = 0 : i64, tpu.core_type = #tpu.core_type<tc>, window_params = [{transform_indices = @transform_0, window_bounds = array<i64: 1, 256, 128>}, {pipeline_mode = #tpu.pipeline_mode<synchronous>, transform_indices = @transform_1, window_bounds = array<i64: 9, 256, 256>}, {pipeline_mode = #tpu.pipeline_mode<synchronous>, transform_indices = @transform_2, window_bounds = array<i64: 9, 64, 256>}, {pipeline_mode = #tpu.pipeline_mode<synchronous>, transform_indices = @transform_3, window_bounds = array<i64: 9, 16, 64>}, {pipeline_mode = #tpu.pipeline_mode<synchronous>, transform_indices = @transform_4, window_bounds = array<i64: 9, 4, 16>}, {pipeline_mode = #tpu.pipeline_mode<synchronous>, transform_indices = @transform_5, window_bounds = array<i64: 9, 1, 4>}, {pipeline_mode = #tpu.pipeline_mode<synchronous>, transform_indices = @transform_6, window_bounds = array<i64: 45, 128, 128>}, {pipeline_mode = #tpu.pipeline_mode<synchronous>, transform_indices = @transform_7, window_bounds = array<i64: 5, 1, 128>}, {pipeline_mode = #tpu.pipeline_mode<synchronous>, transform_indices = @transform_8, window_bounds = array<i64: 128, 128>}, {pipeline_mode = #tpu.pipeline_mode<synchronous>, transform_indices = @transform_9, window_bounds = array<i64: 1, 128>}, {transform_indices = @transform_10, window_bounds = array<i64: 1, 1, 128>}]} {
    %c0 = arith.constant 0 : index
    %c0_0 = arith.constant 0 : index
    %c0_1 = arith.constant 0 : index
    %0 = vector.load %arg1[%c0, %c0_0, %c0_1] : memref<1x256x128xbf16, #tpu.memory_space<vmem>>, vector<1x256x128xbf16>
    %1 = vector.shape_cast %0 : vector<1x256x128xbf16> to vector<256x128xbf16>
    %cst = arith.constant 0.000000e+00 : f32
    %2 = vector.broadcast %cst : f32 to vector<256x128xf32>
    %c0_2 = arith.constant 0 : index
    %c0_3 = arith.constant 0 : index
    %c0_4 = arith.constant 0 : index
    %3 = vector.load %arg2[%c0_2, %c0_3, %c0_4] : memref<9x256x256xbf16, #tpu.memory_space<vmem>>, vector<1x256x256xbf16>
    %4 = vector.shape_cast %3 : vector<1x256x256xbf16> to vector<256x256xbf16>
    %cst_5 = arith.constant dense<0.000000e+00> : vector<256x128xf32>
    %5 = tpu.matmul %4, %1, %cst_5 {dimension_numbers = #tpu.dot_dimension_numbers<[1], [0], [0], [1], [0, 0, 1, 1], [], []>} : vector<256x256xbf16>, vector<256x128xbf16>, vector<256x128xf32> -> vector<256x128xf32>
    %6 = arith.truncf %5 : vector<256x128xf32> to vector<256x128xbf16>
    %c0_6 = arith.constant 0 : index
    %c0_7 = arith.constant 0 : index
    %c0_8 = arith.constant 0 : index
    %7 = vector.load %arg7[%c0_6, %c0_7, %c0_8] : memref<45x128x128xbf16, #tpu.memory_space<vmem>>, vector<1x128x128xbf16>
    %8 = vector.shape_cast %7 : vector<1x128x128xbf16> to vector<128x128xbf16>
    %cst_9 = arith.constant dense<0.000000e+00> : vector<256x128xf32>
    %9 = tpu.matmul %6, %8, %cst_9 {dimension_numbers = #tpu.dot_dimension_numbers<[1], [0], [0], [1], [0, 0, 1, 1], [], []>} : vector<256x128xbf16>, vector<128x128xbf16>, vector<256x128xf32> -> vector<256x128xf32>
    %10 = arith.addf %2, %9 : vector<256x128xf32>
    %c1 = arith.constant 1 : index
    %c0_10 = arith.constant 0 : index
    %c0_11 = arith.constant 0 : index
    %11 = vector.load %arg2[%c1, %c0_10, %c0_11] : memref<9x256x256xbf16, #tpu.memory_space<vmem>>, vector<1x256x256xbf16>
    %12 = vector.shape_cast %11 : vector<1x256x256xbf16> to vector<256x256xbf16>
    %cst_12 = arith.constant dense<0.000000e+00> : vector<256x128xf32>
    %13 = tpu.matmul %12, %1, %cst_12 {dimension_numbers = #tpu.dot_dimension_numbers<[1], [0], [0], [1], [0, 0, 1, 1], [], []>} : vector<256x256xbf16>, vector<256x128xbf16>, vector<256x128xf32> -> vector<256x128xf32>
    %14 = arith.truncf %13 : vector<256x128xf32> to vector<256x128xbf16>
    %c1_13 = arith.constant 1 : index
    %c0_14 = arith.constant 0 : index
    %c0_15 = arith.constant 0 : index
    %15 = vector.load %arg7[%c1_13, %c0_14, %c0_15] : memref<45x128x128xbf16, #tpu.memory_space<vmem>>, vector<1x128x128xbf16>
    %16 = vector.shape_cast %15 : vector<1x128x128xbf16> to vector<128x128xbf16>
    %cst_16 = arith.constant dense<0.000000e+00> : vector<256x128xf32>
    %17 = tpu.matmul %14, %16, %cst_16 {dimension_numbers = #tpu.dot_dimension_numbers<[1], [0], [0], [1], [0, 0, 1, 1], [], []>} : vector<256x128xbf16>, vector<128x128xbf16>, vector<256x128xf32> -> vector<256x128xf32>
    %18 = arith.addf %10, %17 : vector<256x128xf32>
    %c2 = arith.constant 2 : index
    %c0_17 = arith.constant 0 : index
    %c0_18 = arith.constant 0 : index
    %19 = vector.load %arg2[%c2, %c0_17, %c0_18] : memref<9x256x256xbf16, #tpu.memory_space<vmem>>, vector<1x256x256xbf16>
    %20 = vector.shape_cast %19 : vector<1x256x256xbf16> to vector<256x256xbf16>
    %cst_19 = arith.constant dense<0.000000e+00> : vector<256x128xf32>
    %21 = tpu.matmul %20, %1, %cst_19 {dimension_numbers = #tpu.dot_dimension_numbers<[1], [0], [0], [1], [0, 0, 1, 1], [], []>} : vector<256x256xbf16>, vector<256x128xbf16>, vector<256x128xf32> -> vector<256x128xf32>
    %22 = arith.truncf %21 : vector<256x128xf32> to vector<256x128xbf16>
    %c2_20 = arith.constant 2 : index
    %c0_21 = arith.constant 0 : index
    %c0_22 = arith.constant 0 : index
    %23 = vector.load %arg7[%c2_20, %c0_21, %c0_22] : memref<45x128x128xbf16, #tpu.memory_space<vmem>>, vector<1x128x128xbf16>
    %24 = vector.shape_cast %23 : vector<1x128x128xbf16> to vector<128x128xbf16>
    %cst_23 = arith.constant dense<0.000000e+00> : vector<256x128xf32>
    %25 = tpu.matmul %22, %24, %cst_23 {dimension_numbers = #tpu.dot_dimension_numbers<[1], [0], [0], [1], [0, 0, 1, 1], [], []>} : vector<256x128xbf16>, vector<128x128xbf16>, vector<256x128xf32> -> vector<256x128xf32>
    %26 = arith.addf %18, %25 : vector<256x128xf32>
    %c3 = arith.constant 3 : index
    %c0_24 = arith.constant 0 : index
    %c0_25 = arith.constant 0 : index
    %27 = vector.load %arg2[%c3, %c0_24, %c0_25] : memref<9x256x256xbf16, #tpu.memory_space<vmem>>, vector<1x256x256xbf16>
    %28 = vector.shape_cast %27 : vector<1x256x256xbf16> to vector<256x256xbf16>
    %cst_26 = arith.constant dense<0.000000e+00> : vector<256x128xf32>
    %29 = tpu.matmul %28, %1, %cst_26 {dimension_numbers = #tpu.dot_dimension_numbers<[1], [0], [0], [1], [0, 0, 1, 1], [], []>} : vector<256x256xbf16>, vector<256x128xbf16>, vector<256x128xf32> -> vector<256x128xf32>
    %30 = arith.truncf %29 : vector<256x128xf32> to vector<256x128xbf16>
    %c3_27 = arith.constant 3 : index
    %c0_28 = arith.constant 0 : index
    %c0_29 = arith.constant 0 : index
    %31 = vector.load %arg7[%c3_27, %c0_28, %c0_29] : memref<45x128x128xbf16, #tpu.memory_space<vmem>>, vector<1x128x128xbf16>
    %32 = vector.shape_cast %31 : vector<1x128x128xbf16> to vector<128x128xbf16>
    %cst_30 = arith.constant dense<0.000000e+00> : vector<256x128xf32>
    %33 = tpu.matmul %30, %32, %cst_30 {dimension_numbers = #tpu.dot_dimension_numbers<[1], [0], [0], [1], [0, 0, 1, 1], [], []>} : vector<256x128xbf16>, vector<128x128xbf16>, vector<256x128xf32> -> vector<256x128xf32>
    %34 = arith.addf %26, %33 : vector<256x128xf32>
    %c4 = arith.constant 4 : index
    %c0_31 = arith.constant 0 : index
    %c0_32 = arith.constant 0 : index
    %35 = vector.load %arg2[%c4, %c0_31, %c0_32] : memref<9x256x256xbf16, #tpu.memory_space<vmem>>, vector<1x256x256xbf16>
    %36 = vector.shape_cast %35 : vector<1x256x256xbf16> to vector<256x256xbf16>
    %cst_33 = arith.constant dense<0.000000e+00> : vector<256x128xf32>
    %37 = tpu.matmul %36, %1, %cst_33 {dimension_numbers = #tpu.dot_dimension_numbers<[1], [0], [0], [1], [0, 0, 1, 1], [], []>} : vector<256x256xbf16>, vector<256x128xbf16>, vector<256x128xf32> -> vector<256x128xf32>
    %38 = arith.truncf %37 : vector<256x128xf32> to vector<256x128xbf16>
    %c4_34 = arith.constant 4 : index
    %c0_35 = arith.constant 0 : index
    %c0_36 = arith.constant 0 : index
    %39 = vector.load %arg7[%c4_34, %c0_35, %c0_36] : memref<45x128x128xbf16, #tpu.memory_space<vmem>>, vector<1x128x128xbf16>
    %40 = vector.shape_cast %39 : vector<1x128x128xbf16> to vector<128x128xbf16>
    %cst_37 = arith.constant dense<0.000000e+00> : vector<256x128xf32>
    %41 = tpu.matmul %38, %40, %cst_37 {dimension_numbers = #tpu.dot_dimension_numbers<[1], [0], [0], [1], [0, 0, 1, 1], [], []>} : vector<256x128xbf16>, vector<128x128xbf16>, vector<256x128xf32> -> vector<256x128xf32>
    %42 = arith.addf %34, %41 : vector<256x128xf32>
    %c5 = arith.constant 5 : index
    %c0_38 = arith.constant 0 : index
    %c0_39 = arith.constant 0 : index
    %43 = vector.load %arg2[%c5, %c0_38, %c0_39] : memref<9x256x256xbf16, #tpu.memory_space<vmem>>, vector<1x256x256xbf16>
    %44 = vector.shape_cast %43 : vector<1x256x256xbf16> to vector<256x256xbf16>
    %cst_40 = arith.constant dense<0.000000e+00> : vector<256x128xf32>
    %45 = tpu.matmul %44, %1, %cst_40 {dimension_numbers = #tpu.dot_dimension_numbers<[1], [0], [0], [1], [0, 0, 1, 1], [], []>} : vector<256x256xbf16>, vector<256x128xbf16>, vector<256x128xf32> -> vector<256x128xf32>
    %46 = arith.truncf %45 : vector<256x128xf32> to vector<256x128xbf16>
    %c5_41 = arith.constant 5 : index
    %c0_42 = arith.constant 0 : index
    %c0_43 = arith.constant 0 : index
    %47 = vector.load %arg7[%c5_41, %c0_42, %c0_43] : memref<45x128x128xbf16, #tpu.memory_space<vmem>>, vector<1x128x128xbf16>
    %48 = vector.shape_cast %47 : vector<1x128x128xbf16> to vector<128x128xbf16>
    %cst_44 = arith.constant dense<0.000000e+00> : vector<256x128xf32>
    %49 = tpu.matmul %46, %48, %cst_44 {dimension_numbers = #tpu.dot_dimension_numbers<[1], [0], [0], [1], [0, 0, 1, 1], [], []>} : vector<256x128xbf16>, vector<128x128xbf16>, vector<256x128xf32> -> vector<256x128xf32>
    %50 = arith.addf %42, %49 : vector<256x128xf32>
    %c6 = arith.constant 6 : index
    %c0_45 = arith.constant 0 : index
    %c0_46 = arith.constant 0 : index
    %51 = vector.load %arg2[%c6, %c0_45, %c0_46] : memref<9x256x256xbf16, #tpu.memory_space<vmem>>, vector<1x256x256xbf16>
    %52 = vector.shape_cast %51 : vector<1x256x256xbf16> to vector<256x256xbf16>
    %cst_47 = arith.constant dense<0.000000e+00> : vector<256x128xf32>
    %53 = tpu.matmul %52, %1, %cst_47 {dimension_numbers = #tpu.dot_dimension_numbers<[1], [0], [0], [1], [0, 0, 1, 1], [], []>} : vector<256x256xbf16>, vector<256x128xbf16>, vector<256x128xf32> -> vector<256x128xf32>
    %54 = arith.truncf %53 : vector<256x128xf32> to vector<256x128xbf16>
    %c6_48 = arith.constant 6 : index
    %c0_49 = arith.constant 0 : index
    %c0_50 = arith.constant 0 : index
    %55 = vector.load %arg7[%c6_48, %c0_49, %c0_50] : memref<45x128x128xbf16, #tpu.memory_space<vmem>>, vector<1x128x128xbf16>
    %56 = vector.shape_cast %55 : vector<1x128x128xbf16> to vector<128x128xbf16>
    %cst_51 = arith.constant dense<0.000000e+00> : vector<256x128xf32>
    %57 = tpu.matmul %54, %56, %cst_51 {dimension_numbers = #tpu.dot_dimension_numbers<[1], [0], [0], [1], [0, 0, 1, 1], [], []>} : vector<256x128xbf16>, vector<128x128xbf16>, vector<256x128xf32> -> vector<256x128xf32>
    %58 = arith.addf %50, %57 : vector<256x128xf32>
    %c7 = arith.constant 7 : index
    %c0_52 = arith.constant 0 : index
    %c0_53 = arith.constant 0 : index
    %59 = vector.load %arg2[%c7, %c0_52, %c0_53] : memref<9x256x256xbf16, #tpu.memory_space<vmem>>, vector<1x256x256xbf16>
    %60 = vector.shape_cast %59 : vector<1x256x256xbf16> to vector<256x256xbf16>
    %cst_54 = arith.constant dense<0.000000e+00> : vector<256x128xf32>
    %61 = tpu.matmul %60, %1, %cst_54 {dimension_numbers = #tpu.dot_dimension_numbers<[1], [0], [0], [1], [0, 0, 1, 1], [], []>} : vector<256x256xbf16>, vector<256x128xbf16>, vector<256x128xf32> -> vector<256x128xf32>
    %62 = arith.truncf %61 : vector<256x128xf32> to vector<256x128xbf16>
    %c7_55 = arith.constant 7 : index
    %c0_56 = arith.constant 0 : index
    %c0_57 = arith.constant 0 : index
    %63 = vector.load %arg7[%c7_55, %c0_56, %c0_57] : memref<45x128x128xbf16, #tpu.memory_space<vmem>>, vector<1x128x128xbf16>
    %64 = vector.shape_cast %63 : vector<1x128x128xbf16> to vector<128x128xbf16>
    %cst_58 = arith.constant dense<0.000000e+00> : vector<256x128xf32>
    %65 = tpu.matmul %62, %64, %cst_58 {dimension_numbers = #tpu.dot_dimension_numbers<[1], [0], [0], [1], [0, 0, 1, 1], [], []>} : vector<256x128xbf16>, vector<128x128xbf16>, vector<256x128xf32> -> vector<256x128xf32>
    %66 = arith.addf %58, %65 : vector<256x128xf32>
    %c8 = arith.constant 8 : index
    %c0_59 = arith.constant 0 : index
    %c0_60 = arith.constant 0 : index
    %67 = vector.load %arg2[%c8, %c0_59, %c0_60] : memref<9x256x256xbf16, #tpu.memory_space<vmem>>, vector<1x256x256xbf16>
    %68 = vector.shape_cast %67 : vector<1x256x256xbf16> to vector<256x256xbf16>
    %cst_61 = arith.constant dense<0.000000e+00> : vector<256x128xf32>
    %69 = tpu.matmul %68, %1, %cst_61 {dimension_numbers = #tpu.dot_dimension_numbers<[1], [0], [0], [1], [0, 0, 1, 1], [], []>} : vector<256x256xbf16>, vector<256x128xbf16>, vector<256x128xf32> -> vector<256x128xf32>
    %70 = arith.truncf %69 : vector<256x128xf32> to vector<256x128xbf16>
    %c8_62 = arith.constant 8 : index
    %c0_63 = arith.constant 0 : index
    %c0_64 = arith.constant 0 : index
    %71 = vector.load %arg7[%c8_62, %c0_63, %c0_64] : memref<45x128x128xbf16, #tpu.memory_space<vmem>>, vector<1x128x128xbf16>
    %72 = vector.shape_cast %71 : vector<1x128x128xbf16> to vector<128x128xbf16>
    %cst_65 = arith.constant dense<0.000000e+00> : vector<256x128xf32>
    %73 = tpu.matmul %70, %72, %cst_65 {dimension_numbers = #tpu.dot_dimension_numbers<[1], [0], [0], [1], [0, 0, 1, 1], [], []>} : vector<256x128xbf16>, vector<128x128xbf16>, vector<256x128xf32> -> vector<256x128xf32>
    %74 = arith.addf %66, %73 : vector<256x128xf32>
    %c0_66 = arith.constant 0 : index
    %c0_67 = arith.constant 0 : index
    %c0_68 = arith.constant 0 : index
    %75 = vector.load %arg8[%c0_66, %c0_67, %c0_68] : memref<5x1x128xf32, #tpu.memory_space<vmem>>, vector<1x1x128xf32>
    %76 = vector.shape_cast %75 : vector<1x1x128xf32> to vector<1x128xf32>
    %77 = vector.broadcast %76 : vector<1x128xf32> to vector<256x128xf32>
    %78 = arith.addf %74, %77 : vector<256x128xf32>
    %cst_69 = arith.constant 0.000000e+00 : f32
    %79 = vector.broadcast %cst_69 : f32 to vector<256x128xf32>
    %80 = arith.maximumf %78, %79 : vector<256x128xf32>
    %81 = arith.truncf %80 : vector<256x128xf32> to vector<256x128xbf16>
    %cst_70 = arith.constant 0.000000e+00 : f32
    %82 = vector.broadcast %cst_70 : f32 to vector<64x128xf32>
    %c0_71 = arith.constant 0 : index
    %c0_72 = arith.constant 0 : index
    %c0_73 = arith.constant 0 : index
    %83 = vector.load %arg3[%c0_71, %c0_72, %c0_73] : memref<9x64x256xbf16, #tpu.memory_space<vmem>>, vector<1x64x256xbf16>
    %84 = vector.shape_cast %83 : vector<1x64x256xbf16> to vector<64x256xbf16>
    %cst_74 = arith.constant dense<0.000000e+00> : vector<64x128xf32>
    %85 = tpu.matmul %84, %81, %cst_74 {dimension_numbers = #tpu.dot_dimension_numbers<[1], [0], [0], [1], [0, 0, 1, 1], [], []>} : vector<64x256xbf16>, vector<256x128xbf16>, vector<64x128xf32> -> vector<64x128xf32>
    %86 = arith.truncf %85 : vector<64x128xf32> to vector<64x128xbf16>
    %c9 = arith.constant 9 : index
    %c0_75 = arith.constant 0 : index
    %c0_76 = arith.constant 0 : index
    %87 = vector.load %arg7[%c9, %c0_75, %c0_76] : memref<45x128x128xbf16, #tpu.memory_space<vmem>>, vector<1x128x128xbf16>
    %88 = vector.shape_cast %87 : vector<1x128x128xbf16> to vector<128x128xbf16>
    %cst_77 = arith.constant dense<0.000000e+00> : vector<64x128xf32>
    %89 = tpu.matmul %86, %88, %cst_77 {dimension_numbers = #tpu.dot_dimension_numbers<[1], [0], [0], [1], [0, 0, 1, 1], [], []>} : vector<64x128xbf16>, vector<128x128xbf16>, vector<64x128xf32> -> vector<64x128xf32>
    %90 = arith.addf %82, %89 : vector<64x128xf32>
    %c1_78 = arith.constant 1 : index
    %c0_79 = arith.constant 0 : index
    %c0_80 = arith.constant 0 : index
    %91 = vector.load %arg3[%c1_78, %c0_79, %c0_80] : memref<9x64x256xbf16, #tpu.memory_space<vmem>>, vector<1x64x256xbf16>
    %92 = vector.shape_cast %91 : vector<1x64x256xbf16> to vector<64x256xbf16>
    %cst_81 = arith.constant dense<0.000000e+00> : vector<64x128xf32>
    %93 = tpu.matmul %92, %81, %cst_81 {dimension_numbers = #tpu.dot_dimension_numbers<[1], [0], [0], [1], [0, 0, 1, 1], [], []>} : vector<64x256xbf16>, vector<256x128xbf16>, vector<64x128xf32> -> vector<64x128xf32>
    %94 = arith.truncf %93 : vector<64x128xf32> to vector<64x128xbf16>
    %c10 = arith.constant 10 : index
    %c0_82 = arith.constant 0 : index
    %c0_83 = arith.constant 0 : index
    %95 = vector.load %arg7[%c10, %c0_82, %c0_83] : memref<45x128x128xbf16, #tpu.memory_space<vmem>>, vector<1x128x128xbf16>
    %96 = vector.shape_cast %95 : vector<1x128x128xbf16> to vector<128x128xbf16>
    %cst_84 = arith.constant dense<0.000000e+00> : vector<64x128xf32>
    %97 = tpu.matmul %94, %96, %cst_84 {dimension_numbers = #tpu.dot_dimension_numbers<[1], [0], [0], [1], [0, 0, 1, 1], [], []>} : vector<64x128xbf16>, vector<128x128xbf16>, vector<64x128xf32> -> vector<64x128xf32>
    %98 = arith.addf %90, %97 : vector<64x128xf32>
    %c2_85 = arith.constant 2 : index
    %c0_86 = arith.constant 0 : index
    %c0_87 = arith.constant 0 : index
    %99 = vector.load %arg3[%c2_85, %c0_86, %c0_87] : memref<9x64x256xbf16, #tpu.memory_space<vmem>>, vector<1x64x256xbf16>
    %100 = vector.shape_cast %99 : vector<1x64x256xbf16> to vector<64x256xbf16>
    %cst_88 = arith.constant dense<0.000000e+00> : vector<64x128xf32>
    %101 = tpu.matmul %100, %81, %cst_88 {dimension_numbers = #tpu.dot_dimension_numbers<[1], [0], [0], [1], [0, 0, 1, 1], [], []>} : vector<64x256xbf16>, vector<256x128xbf16>, vector<64x128xf32> -> vector<64x128xf32>
    %102 = arith.truncf %101 : vector<64x128xf32> to vector<64x128xbf16>
    %c11 = arith.constant 11 : index
    %c0_89 = arith.constant 0 : index
    %c0_90 = arith.constant 0 : index
    %103 = vector.load %arg7[%c11, %c0_89, %c0_90] : memref<45x128x128xbf16, #tpu.memory_space<vmem>>, vector<1x128x128xbf16>
    %104 = vector.shape_cast %103 : vector<1x128x128xbf16> to vector<128x128xbf16>
    %cst_91 = arith.constant dense<0.000000e+00> : vector<64x128xf32>
    %105 = tpu.matmul %102, %104, %cst_91 {dimension_numbers = #tpu.dot_dimension_numbers<[1], [0], [0], [1], [0, 0, 1, 1], [], []>} : vector<64x128xbf16>, vector<128x128xbf16>, vector<64x128xf32> -> vector<64x128xf32>
    %106 = arith.addf %98, %105 : vector<64x128xf32>
    %c3_92 = arith.constant 3 : index
    %c0_93 = arith.constant 0 : index
    %c0_94 = arith.constant 0 : index
    %107 = vector.load %arg3[%c3_92, %c0_93, %c0_94] : memref<9x64x256xbf16, #tpu.memory_space<vmem>>, vector<1x64x256xbf16>
    %108 = vector.shape_cast %107 : vector<1x64x256xbf16> to vector<64x256xbf16>
    %cst_95 = arith.constant dense<0.000000e+00> : vector<64x128xf32>
    %109 = tpu.matmul %108, %81, %cst_95 {dimension_numbers = #tpu.dot_dimension_numbers<[1], [0], [0], [1], [0, 0, 1, 1], [], []>} : vector<64x256xbf16>, vector<256x128xbf16>, vector<64x128xf32> -> vector<64x128xf32>
    %110 = arith.truncf %109 : vector<64x128xf32> to vector<64x128xbf16>
    %c12 = arith.constant 12 : index
    %c0_96 = arith.constant 0 : index
    %c0_97 = arith.constant 0 : index
    %111 = vector.load %arg7[%c12, %c0_96, %c0_97] : memref<45x128x128xbf16, #tpu.memory_space<vmem>>, vector<1x128x128xbf16>
    %112 = vector.shape_cast %111 : vector<1x128x128xbf16> to vector<128x128xbf16>
    %cst_98 = arith.constant dense<0.000000e+00> : vector<64x128xf32>
    %113 = tpu.matmul %110, %112, %cst_98 {dimension_numbers = #tpu.dot_dimension_numbers<[1], [0], [0], [1], [0, 0, 1, 1], [], []>} : vector<64x128xbf16>, vector<128x128xbf16>, vector<64x128xf32> -> vector<64x128xf32>
    %114 = arith.addf %106, %113 : vector<64x128xf32>
    %c4_99 = arith.constant 4 : index
    %c0_100 = arith.constant 0 : index
    %c0_101 = arith.constant 0 : index
    %115 = vector.load %arg3[%c4_99, %c0_100, %c0_101] : memref<9x64x256xbf16, #tpu.memory_space<vmem>>, vector<1x64x256xbf16>
    %116 = vector.shape_cast %115 : vector<1x64x256xbf16> to vector<64x256xbf16>
    %cst_102 = arith.constant dense<0.000000e+00> : vector<64x128xf32>
    %117 = tpu.matmul %116, %81, %cst_102 {dimension_numbers = #tpu.dot_dimension_numbers<[1], [0], [0], [1], [0, 0, 1, 1], [], []>} : vector<64x256xbf16>, vector<256x128xbf16>, vector<64x128xf32> -> vector<64x128xf32>
    %118 = arith.truncf %117 : vector<64x128xf32> to vector<64x128xbf16>
    %c13 = arith.constant 13 : index
    %c0_103 = arith.constant 0 : index
    %c0_104 = arith.constant 0 : index
    %119 = vector.load %arg7[%c13, %c0_103, %c0_104] : memref<45x128x128xbf16, #tpu.memory_space<vmem>>, vector<1x128x128xbf16>
    %120 = vector.shape_cast %119 : vector<1x128x128xbf16> to vector<128x128xbf16>
    %cst_105 = arith.constant dense<0.000000e+00> : vector<64x128xf32>
    %121 = tpu.matmul %118, %120, %cst_105 {dimension_numbers = #tpu.dot_dimension_numbers<[1], [0], [0], [1], [0, 0, 1, 1], [], []>} : vector<64x128xbf16>, vector<128x128xbf16>, vector<64x128xf32> -> vector<64x128xf32>
    %122 = arith.addf %114, %121 : vector<64x128xf32>
    %c5_106 = arith.constant 5 : index
    %c0_107 = arith.constant 0 : index
    %c0_108 = arith.constant 0 : index
    %123 = vector.load %arg3[%c5_106, %c0_107, %c0_108] : memref<9x64x256xbf16, #tpu.memory_space<vmem>>, vector<1x64x256xbf16>
    %124 = vector.shape_cast %123 : vector<1x64x256xbf16> to vector<64x256xbf16>
    %cst_109 = arith.constant dense<0.000000e+00> : vector<64x128xf32>
    %125 = tpu.matmul %124, %81, %cst_109 {dimension_numbers = #tpu.dot_dimension_numbers<[1], [0], [0], [1], [0, 0, 1, 1], [], []>} : vector<64x256xbf16>, vector<256x128xbf16>, vector<64x128xf32> -> vector<64x128xf32>
    %126 = arith.truncf %125 : vector<64x128xf32> to vector<64x128xbf16>
    %c14 = arith.constant 14 : index
    %c0_110 = arith.constant 0 : index
    %c0_111 = arith.constant 0 : index
    %127 = vector.load %arg7[%c14, %c0_110, %c0_111] : memref<45x128x128xbf16, #tpu.memory_space<vmem>>, vector<1x128x128xbf16>
    %128 = vector.shape_cast %127 : vector<1x128x128xbf16> to vector<128x128xbf16>
    %cst_112 = arith.constant dense<0.000000e+00> : vector<64x128xf32>
    %129 = tpu.matmul %126, %128, %cst_112 {dimension_numbers = #tpu.dot_dimension_numbers<[1], [0], [0], [1], [0, 0, 1, 1], [], []>} : vector<64x128xbf16>, vector<128x128xbf16>, vector<64x128xf32> -> vector<64x128xf32>
    %130 = arith.addf %122, %129 : vector<64x128xf32>
    %c6_113 = arith.constant 6 : index
    %c0_114 = arith.constant 0 : index
    %c0_115 = arith.constant 0 : index
    %131 = vector.load %arg3[%c6_113, %c0_114, %c0_115] : memref<9x64x256xbf16, #tpu.memory_space<vmem>>, vector<1x64x256xbf16>
    %132 = vector.shape_cast %131 : vector<1x64x256xbf16> to vector<64x256xbf16>
    %cst_116 = arith.constant dense<0.000000e+00> : vector<64x128xf32>
    %133 = tpu.matmul %132, %81, %cst_116 {dimension_numbers = #tpu.dot_dimension_numbers<[1], [0], [0], [1], [0, 0, 1, 1], [], []>} : vector<64x256xbf16>, vector<256x128xbf16>, vector<64x128xf32> -> vector<64x128xf32>
    %134 = arith.truncf %133 : vector<64x128xf32> to vector<64x128xbf16>
    %c15 = arith.constant 15 : index
    %c0_117 = arith.constant 0 : index
    %c0_118 = arith.constant 0 : index
    %135 = vector.load %arg7[%c15, %c0_117, %c0_118] : memref<45x128x128xbf16, #tpu.memory_space<vmem>>, vector<1x128x128xbf16>
    %136 = vector.shape_cast %135 : vector<1x128x128xbf16> to vector<128x128xbf16>
    %cst_119 = arith.constant dense<0.000000e+00> : vector<64x128xf32>
    %137 = tpu.matmul %134, %136, %cst_119 {dimension_numbers = #tpu.dot_dimension_numbers<[1], [0], [0], [1], [0, 0, 1, 1], [], []>} : vector<64x128xbf16>, vector<128x128xbf16>, vector<64x128xf32> -> vector<64x128xf32>
    %138 = arith.addf %130, %137 : vector<64x128xf32>
    %c7_120 = arith.constant 7 : index
    %c0_121 = arith.constant 0 : index
    %c0_122 = arith.constant 0 : index
    %139 = vector.load %arg3[%c7_120, %c0_121, %c0_122] : memref<9x64x256xbf16, #tpu.memory_space<vmem>>, vector<1x64x256xbf16>
    %140 = vector.shape_cast %139 : vector<1x64x256xbf16> to vector<64x256xbf16>
    %cst_123 = arith.constant dense<0.000000e+00> : vector<64x128xf32>
    %141 = tpu.matmul %140, %81, %cst_123 {dimension_numbers = #tpu.dot_dimension_numbers<[1], [0], [0], [1], [0, 0, 1, 1], [], []>} : vector<64x256xbf16>, vector<256x128xbf16>, vector<64x128xf32> -> vector<64x128xf32>
    %142 = arith.truncf %141 : vector<64x128xf32> to vector<64x128xbf16>
    %c16 = arith.constant 16 : index
    %c0_124 = arith.constant 0 : index
    %c0_125 = arith.constant 0 : index
    %143 = vector.load %arg7[%c16, %c0_124, %c0_125] : memref<45x128x128xbf16, #tpu.memory_space<vmem>>, vector<1x128x128xbf16>
    %144 = vector.shape_cast %143 : vector<1x128x128xbf16> to vector<128x128xbf16>
    %cst_126 = arith.constant dense<0.000000e+00> : vector<64x128xf32>
    %145 = tpu.matmul %142, %144, %cst_126 {dimension_numbers = #tpu.dot_dimension_numbers<[1], [0], [0], [1], [0, 0, 1, 1], [], []>} : vector<64x128xbf16>, vector<128x128xbf16>, vector<64x128xf32> -> vector<64x128xf32>
    %146 = arith.addf %138, %145 : vector<64x128xf32>
    %c8_127 = arith.constant 8 : index
    %c0_128 = arith.constant 0 : index
    %c0_129 = arith.constant 0 : index
    %147 = vector.load %arg3[%c8_127, %c0_128, %c0_129] : memref<9x64x256xbf16, #tpu.memory_space<vmem>>, vector<1x64x256xbf16>
    %148 = vector.shape_cast %147 : vector<1x64x256xbf16> to vector<64x256xbf16>
    %cst_130 = arith.constant dense<0.000000e+00> : vector<64x128xf32>
    %149 = tpu.matmul %148, %81, %cst_130 {dimension_numbers = #tpu.dot_dimension_numbers<[1], [0], [0], [1], [0, 0, 1, 1], [], []>} : vector<64x256xbf16>, vector<256x128xbf16>, vector<64x128xf32> -> vector<64x128xf32>
    %150 = arith.truncf %149 : vector<64x128xf32> to vector<64x128xbf16>
    %c17 = arith.constant 17 : index
    %c0_131 = arith.constant 0 : index
    %c0_132 = arith.constant 0 : index
    %151 = vector.load %arg7[%c17, %c0_131, %c0_132] : memref<45x128x128xbf16, #tpu.memory_space<vmem>>, vector<1x128x128xbf16>
    %152 = vector.shape_cast %151 : vector<1x128x128xbf16> to vector<128x128xbf16>
    %cst_133 = arith.constant dense<0.000000e+00> : vector<64x128xf32>
    %153 = tpu.matmul %150, %152, %cst_133 {dimension_numbers = #tpu.dot_dimension_numbers<[1], [0], [0], [1], [0, 0, 1, 1], [], []>} : vector<64x128xbf16>, vector<128x128xbf16>, vector<64x128xf32> -> vector<64x128xf32>
    %154 = arith.addf %146, %153 : vector<64x128xf32>
    %c1_134 = arith.constant 1 : index
    %c0_135 = arith.constant 0 : index
    %c0_136 = arith.constant 0 : index
    %155 = vector.load %arg8[%c1_134, %c0_135, %c0_136] : memref<5x1x128xf32, #tpu.memory_space<vmem>>, vector<1x1x128xf32>
    %156 = vector.shape_cast %155 : vector<1x1x128xf32> to vector<1x128xf32>
    %157 = vector.broadcast %156 : vector<1x128xf32> to vector<64x128xf32>
    %158 = arith.addf %154, %157 : vector<64x128xf32>
    %cst_137 = arith.constant 0.000000e+00 : f32
    %159 = vector.broadcast %cst_137 : f32 to vector<64x128xf32>
    %160 = arith.maximumf %158, %159 : vector<64x128xf32>
    %161 = arith.truncf %160 : vector<64x128xf32> to vector<64x128xbf16>
    %cst_138 = arith.constant 0.000000e+00 : f32
    %162 = vector.broadcast %cst_138 : f32 to vector<16x128xf32>
    %c0_139 = arith.constant 0 : index
    %c0_140 = arith.constant 0 : index
    %c0_141 = arith.constant 0 : index
    %163 = vector.load %arg4[%c0_139, %c0_140, %c0_141] : memref<9x16x64xbf16, #tpu.memory_space<vmem>>, vector<1x16x64xbf16>
    %164 = vector.shape_cast %163 : vector<1x16x64xbf16> to vector<16x64xbf16>
    %cst_142 = arith.constant dense<0.000000e+00> : vector<16x128xf32>
    %165 = tpu.matmul %164, %161, %cst_142 {dimension_numbers = #tpu.dot_dimension_numbers<[1], [0], [0], [1], [0, 0, 1, 1], [], []>} : vector<16x64xbf16>, vector<64x128xbf16>, vector<16x128xf32> -> vector<16x128xf32>
    %166 = arith.truncf %165 : vector<16x128xf32> to vector<16x128xbf16>
    %c18 = arith.constant 18 : index
    %c0_143 = arith.constant 0 : index
    %c0_144 = arith.constant 0 : index
    %167 = vector.load %arg7[%c18, %c0_143, %c0_144] : memref<45x128x128xbf16, #tpu.memory_space<vmem>>, vector<1x128x128xbf16>
    %168 = vector.shape_cast %167 : vector<1x128x128xbf16> to vector<128x128xbf16>
    %cst_145 = arith.constant dense<0.000000e+00> : vector<16x128xf32>
    %169 = tpu.matmul %166, %168, %cst_145 {dimension_numbers = #tpu.dot_dimension_numbers<[1], [0], [0], [1], [0, 0, 1, 1], [], []>} : vector<16x128xbf16>, vector<128x128xbf16>, vector<16x128xf32> -> vector<16x128xf32>
    %170 = arith.addf %162, %169 : vector<16x128xf32>
    %c1_146 = arith.constant 1 : index
    %c0_147 = arith.constant 0 : index
    %c0_148 = arith.constant 0 : index
    %171 = vector.load %arg4[%c1_146, %c0_147, %c0_148] : memref<9x16x64xbf16, #tpu.memory_space<vmem>>, vector<1x16x64xbf16>
    %172 = vector.shape_cast %171 : vector<1x16x64xbf16> to vector<16x64xbf16>
    %cst_149 = arith.constant dense<0.000000e+00> : vector<16x128xf32>
    %173 = tpu.matmul %172, %161, %cst_149 {dimension_numbers = #tpu.dot_dimension_numbers<[1], [0], [0], [1], [0, 0, 1, 1], [], []>} : vector<16x64xbf16>, vector<64x128xbf16>, vector<16x128xf32> -> vector<16x128xf32>
    %174 = arith.truncf %173 : vector<16x128xf32> to vector<16x128xbf16>
    %c19 = arith.constant 19 : index
    %c0_150 = arith.constant 0 : index
    %c0_151 = arith.constant 0 : index
    %175 = vector.load %arg7[%c19, %c0_150, %c0_151] : memref<45x128x128xbf16, #tpu.memory_space<vmem>>, vector<1x128x128xbf16>
    %176 = vector.shape_cast %175 : vector<1x128x128xbf16> to vector<128x128xbf16>
    %cst_152 = arith.constant dense<0.000000e+00> : vector<16x128xf32>
    %177 = tpu.matmul %174, %176, %cst_152 {dimension_numbers = #tpu.dot_dimension_numbers<[1], [0], [0], [1], [0, 0, 1, 1], [], []>} : vector<16x128xbf16>, vector<128x128xbf16>, vector<16x128xf32> -> vector<16x128xf32>
    %178 = arith.addf %170, %177 : vector<16x128xf32>
    %c2_153 = arith.constant 2 : index
    %c0_154 = arith.constant 0 : index
    %c0_155 = arith.constant 0 : index
    %179 = vector.load %arg4[%c2_153, %c0_154, %c0_155] : memref<9x16x64xbf16, #tpu.memory_space<vmem>>, vector<1x16x64xbf16>
    %180 = vector.shape_cast %179 : vector<1x16x64xbf16> to vector<16x64xbf16>
    %cst_156 = arith.constant dense<0.000000e+00> : vector<16x128xf32>
    %181 = tpu.matmul %180, %161, %cst_156 {dimension_numbers = #tpu.dot_dimension_numbers<[1], [0], [0], [1], [0, 0, 1, 1], [], []>} : vector<16x64xbf16>, vector<64x128xbf16>, vector<16x128xf32> -> vector<16x128xf32>
    %182 = arith.truncf %181 : vector<16x128xf32> to vector<16x128xbf16>
    %c20 = arith.constant 20 : index
    %c0_157 = arith.constant 0 : index
    %c0_158 = arith.constant 0 : index
    %183 = vector.load %arg7[%c20, %c0_157, %c0_158] : memref<45x128x128xbf16, #tpu.memory_space<vmem>>, vector<1x128x128xbf16>
    %184 = vector.shape_cast %183 : vector<1x128x128xbf16> to vector<128x128xbf16>
    %cst_159 = arith.constant dense<0.000000e+00> : vector<16x128xf32>
    %185 = tpu.matmul %182, %184, %cst_159 {dimension_numbers = #tpu.dot_dimension_numbers<[1], [0], [0], [1], [0, 0, 1, 1], [], []>} : vector<16x128xbf16>, vector<128x128xbf16>, vector<16x128xf32> -> vector<16x128xf32>
    %186 = arith.addf %178, %185 : vector<16x128xf32>
    %c3_160 = arith.constant 3 : index
    %c0_161 = arith.constant 0 : index
    %c0_162 = arith.constant 0 : index
    %187 = vector.load %arg4[%c3_160, %c0_161, %c0_162] : memref<9x16x64xbf16, #tpu.memory_space<vmem>>, vector<1x16x64xbf16>
    %188 = vector.shape_cast %187 : vector<1x16x64xbf16> to vector<16x64xbf16>
    %cst_163 = arith.constant dense<0.000000e+00> : vector<16x128xf32>
    %189 = tpu.matmul %188, %161, %cst_163 {dimension_numbers = #tpu.dot_dimension_numbers<[1], [0], [0], [1], [0, 0, 1, 1], [], []>} : vector<16x64xbf16>, vector<64x128xbf16>, vector<16x128xf32> -> vector<16x128xf32>
    %190 = arith.truncf %189 : vector<16x128xf32> to vector<16x128xbf16>
    %c21 = arith.constant 21 : index
    %c0_164 = arith.constant 0 : index
    %c0_165 = arith.constant 0 : index
    %191 = vector.load %arg7[%c21, %c0_164, %c0_165] : memref<45x128x128xbf16, #tpu.memory_space<vmem>>, vector<1x128x128xbf16>
    %192 = vector.shape_cast %191 : vector<1x128x128xbf16> to vector<128x128xbf16>
    %cst_166 = arith.constant dense<0.000000e+00> : vector<16x128xf32>
    %193 = tpu.matmul %190, %192, %cst_166 {dimension_numbers = #tpu.dot_dimension_numbers<[1], [0], [0], [1], [0, 0, 1, 1], [], []>} : vector<16x128xbf16>, vector<128x128xbf16>, vector<16x128xf32> -> vector<16x128xf32>
    %194 = arith.addf %186, %193 : vector<16x128xf32>
    %c4_167 = arith.constant 4 : index
    %c0_168 = arith.constant 0 : index
    %c0_169 = arith.constant 0 : index
    %195 = vector.load %arg4[%c4_167, %c0_168, %c0_169] : memref<9x16x64xbf16, #tpu.memory_space<vmem>>, vector<1x16x64xbf16>
    %196 = vector.shape_cast %195 : vector<1x16x64xbf16> to vector<16x64xbf16>
    %cst_170 = arith.constant dense<0.000000e+00> : vector<16x128xf32>
    %197 = tpu.matmul %196, %161, %cst_170 {dimension_numbers = #tpu.dot_dimension_numbers<[1], [0], [0], [1], [0, 0, 1, 1], [], []>} : vector<16x64xbf16>, vector<64x128xbf16>, vector<16x128xf32> -> vector<16x128xf32>
    %198 = arith.truncf %197 : vector<16x128xf32> to vector<16x128xbf16>
    %c22 = arith.constant 22 : index
    %c0_171 = arith.constant 0 : index
    %c0_172 = arith.constant 0 : index
    %199 = vector.load %arg7[%c22, %c0_171, %c0_172] : memref<45x128x128xbf16, #tpu.memory_space<vmem>>, vector<1x128x128xbf16>
    %200 = vector.shape_cast %199 : vector<1x128x128xbf16> to vector<128x128xbf16>
    %cst_173 = arith.constant dense<0.000000e+00> : vector<16x128xf32>
    %201 = tpu.matmul %198, %200, %cst_173 {dimension_numbers = #tpu.dot_dimension_numbers<[1], [0], [0], [1], [0, 0, 1, 1], [], []>} : vector<16x128xbf16>, vector<128x128xbf16>, vector<16x128xf32> -> vector<16x128xf32>
    %202 = arith.addf %194, %201 : vector<16x128xf32>
    %c5_174 = arith.constant 5 : index
    %c0_175 = arith.constant 0 : index
    %c0_176 = arith.constant 0 : index
    %203 = vector.load %arg4[%c5_174, %c0_175, %c0_176] : memref<9x16x64xbf16, #tpu.memory_space<vmem>>, vector<1x16x64xbf16>
    %204 = vector.shape_cast %203 : vector<1x16x64xbf16> to vector<16x64xbf16>
    %cst_177 = arith.constant dense<0.000000e+00> : vector<16x128xf32>
    %205 = tpu.matmul %204, %161, %cst_177 {dimension_numbers = #tpu.dot_dimension_numbers<[1], [0], [0], [1], [0, 0, 1, 1], [], []>} : vector<16x64xbf16>, vector<64x128xbf16>, vector<16x128xf32> -> vector<16x128xf32>
    %206 = arith.truncf %205 : vector<16x128xf32> to vector<16x128xbf16>
    %c23 = arith.constant 23 : index
    %c0_178 = arith.constant 0 : index
    %c0_179 = arith.constant 0 : index
    %207 = vector.load %arg7[%c23, %c0_178, %c0_179] : memref<45x128x128xbf16, #tpu.memory_space<vmem>>, vector<1x128x128xbf16>
    %208 = vector.shape_cast %207 : vector<1x128x128xbf16> to vector<128x128xbf16>
    %cst_180 = arith.constant dense<0.000000e+00> : vector<16x128xf32>
    %209 = tpu.matmul %206, %208, %cst_180 {dimension_numbers = #tpu.dot_dimension_numbers<[1], [0], [0], [1], [0, 0, 1, 1], [], []>} : vector<16x128xbf16>, vector<128x128xbf16>, vector<16x128xf32> -> vector<16x128xf32>
    %210 = arith.addf %202, %209 : vector<16x128xf32>
    %c6_181 = arith.constant 6 : index
    %c0_182 = arith.constant 0 : index
    %c0_183 = arith.constant 0 : index
    %211 = vector.load %arg4[%c6_181, %c0_182, %c0_183] : memref<9x16x64xbf16, #tpu.memory_space<vmem>>, vector<1x16x64xbf16>
    %212 = vector.shape_cast %211 : vector<1x16x64xbf16> to vector<16x64xbf16>
    %cst_184 = arith.constant dense<0.000000e+00> : vector<16x128xf32>
    %213 = tpu.matmul %212, %161, %cst_184 {dimension_numbers = #tpu.dot_dimension_numbers<[1], [0], [0], [1], [0, 0, 1, 1], [], []>} : vector<16x64xbf16>, vector<64x128xbf16>, vector<16x128xf32> -> vector<16x128xf32>
    %214 = arith.truncf %213 : vector<16x128xf32> to vector<16x128xbf16>
    %c24 = arith.constant 24 : index
    %c0_185 = arith.constant 0 : index
    %c0_186 = arith.constant 0 : index
    %215 = vector.load %arg7[%c24, %c0_185, %c0_186] : memref<45x128x128xbf16, #tpu.memory_space<vmem>>, vector<1x128x128xbf16>
    %216 = vector.shape_cast %215 : vector<1x128x128xbf16> to vector<128x128xbf16>
    %cst_187 = arith.constant dense<0.000000e+00> : vector<16x128xf32>
    %217 = tpu.matmul %214, %216, %cst_187 {dimension_numbers = #tpu.dot_dimension_numbers<[1], [0], [0], [1], [0, 0, 1, 1], [], []>} : vector<16x128xbf16>, vector<128x128xbf16>, vector<16x128xf32> -> vector<16x128xf32>
    %218 = arith.addf %210, %217 : vector<16x128xf32>
    %c7_188 = arith.constant 7 : index
    %c0_189 = arith.constant 0 : index
    %c0_190 = arith.constant 0 : index
    %219 = vector.load %arg4[%c7_188, %c0_189, %c0_190] : memref<9x16x64xbf16, #tpu.memory_space<vmem>>, vector<1x16x64xbf16>
    %220 = vector.shape_cast %219 : vector<1x16x64xbf16> to vector<16x64xbf16>
    %cst_191 = arith.constant dense<0.000000e+00> : vector<16x128xf32>
    %221 = tpu.matmul %220, %161, %cst_191 {dimension_numbers = #tpu.dot_dimension_numbers<[1], [0], [0], [1], [0, 0, 1, 1], [], []>} : vector<16x64xbf16>, vector<64x128xbf16>, vector<16x128xf32> -> vector<16x128xf32>
    %222 = arith.truncf %221 : vector<16x128xf32> to vector<16x128xbf16>
    %c25 = arith.constant 25 : index
    %c0_192 = arith.constant 0 : index
    %c0_193 = arith.constant 0 : index
    %223 = vector.load %arg7[%c25, %c0_192, %c0_193] : memref<45x128x128xbf16, #tpu.memory_space<vmem>>, vector<1x128x128xbf16>
    %224 = vector.shape_cast %223 : vector<1x128x128xbf16> to vector<128x128xbf16>
    %cst_194 = arith.constant dense<0.000000e+00> : vector<16x128xf32>
    %225 = tpu.matmul %222, %224, %cst_194 {dimension_numbers = #tpu.dot_dimension_numbers<[1], [0], [0], [1], [0, 0, 1, 1], [], []>} : vector<16x128xbf16>, vector<128x128xbf16>, vector<16x128xf32> -> vector<16x128xf32>
    %226 = arith.addf %218, %225 : vector<16x128xf32>
    %c8_195 = arith.constant 8 : index
    %c0_196 = arith.constant 0 : index
    %c0_197 = arith.constant 0 : index
    %227 = vector.load %arg4[%c8_195, %c0_196, %c0_197] : memref<9x16x64xbf16, #tpu.memory_space<vmem>>, vector<1x16x64xbf16>
    %228 = vector.shape_cast %227 : vector<1x16x64xbf16> to vector<16x64xbf16>
    %cst_198 = arith.constant dense<0.000000e+00> : vector<16x128xf32>
    %229 = tpu.matmul %228, %161, %cst_198 {dimension_numbers = #tpu.dot_dimension_numbers<[1], [0], [0], [1], [0, 0, 1, 1], [], []>} : vector<16x64xbf16>, vector<64x128xbf16>, vector<16x128xf32> -> vector<16x128xf32>
    %230 = arith.truncf %229 : vector<16x128xf32> to vector<16x128xbf16>
    %c26 = arith.constant 26 : index
    %c0_199 = arith.constant 0 : index
    %c0_200 = arith.constant 0 : index
    %231 = vector.load %arg7[%c26, %c0_199, %c0_200] : memref<45x128x128xbf16, #tpu.memory_space<vmem>>, vector<1x128x128xbf16>
    %232 = vector.shape_cast %231 : vector<1x128x128xbf16> to vector<128x128xbf16>
    %cst_201 = arith.constant dense<0.000000e+00> : vector<16x128xf32>
    %233 = tpu.matmul %230, %232, %cst_201 {dimension_numbers = #tpu.dot_dimension_numbers<[1], [0], [0], [1], [0, 0, 1, 1], [], []>} : vector<16x128xbf16>, vector<128x128xbf16>, vector<16x128xf32> -> vector<16x128xf32>
    %234 = arith.addf %226, %233 : vector<16x128xf32>
    %c2_202 = arith.constant 2 : index
    %c0_203 = arith.constant 0 : index
    %c0_204 = arith.constant 0 : index
    %235 = vector.load %arg8[%c2_202, %c0_203, %c0_204] : memref<5x1x128xf32, #tpu.memory_space<vmem>>, vector<1x1x128xf32>
    %236 = vector.shape_cast %235 : vector<1x1x128xf32> to vector<1x128xf32>
    %237 = vector.broadcast %236 : vector<1x128xf32> to vector<16x128xf32>
    %238 = arith.addf %234, %237 : vector<16x128xf32>
    %cst_205 = arith.constant 0.000000e+00 : f32
    %239 = vector.broadcast %cst_205 : f32 to vector<16x128xf32>
    %240 = arith.maximumf %238, %239 : vector<16x128xf32>
    %241 = arith.truncf %240 : vector<16x128xf32> to vector<16x128xbf16>
    %cst_206 = arith.constant 0.000000e+00 : f32
    %242 = vector.broadcast %cst_206 : f32 to vector<4x128xf32>
    %c0_207 = arith.constant 0 : index
    %c0_208 = arith.constant 0 : index
    %c0_209 = arith.constant 0 : index
    %243 = vector.load %arg5[%c0_207, %c0_208, %c0_209] : memref<9x4x16xbf16, #tpu.memory_space<vmem>>, vector<1x4x16xbf16>
    %244 = vector.shape_cast %243 : vector<1x4x16xbf16> to vector<4x16xbf16>
    %cst_210 = arith.constant dense<0.000000e+00> : vector<4x128xf32>
    %245 = tpu.matmul %244, %241, %cst_210 {dimension_numbers = #tpu.dot_dimension_numbers<[1], [0], [0], [1], [0, 0, 1, 1], [], []>} : vector<4x16xbf16>, vector<16x128xbf16>, vector<4x128xf32> -> vector<4x128xf32>
    %246 = arith.truncf %245 : vector<4x128xf32> to vector<4x128xbf16>
    %c27 = arith.constant 27 : index
    %c0_211 = arith.constant 0 : index
    %c0_212 = arith.constant 0 : index
    %247 = vector.load %arg7[%c27, %c0_211, %c0_212] : memref<45x128x128xbf16, #tpu.memory_space<vmem>>, vector<1x128x128xbf16>
    %248 = vector.shape_cast %247 : vector<1x128x128xbf16> to vector<128x128xbf16>
    %cst_213 = arith.constant dense<0.000000e+00> : vector<4x128xf32>
    %249 = tpu.matmul %246, %248, %cst_213 {dimension_numbers = #tpu.dot_dimension_numbers<[1], [0], [0], [1], [0, 0, 1, 1], [], []>} : vector<4x128xbf16>, vector<128x128xbf16>, vector<4x128xf32> -> vector<4x128xf32>
    %250 = arith.addf %242, %249 : vector<4x128xf32>
    %c1_214 = arith.constant 1 : index
    %c0_215 = arith.constant 0 : index
    %c0_216 = arith.constant 0 : index
    %251 = vector.load %arg5[%c1_214, %c0_215, %c0_216] : memref<9x4x16xbf16, #tpu.memory_space<vmem>>, vector<1x4x16xbf16>
    %252 = vector.shape_cast %251 : vector<1x4x16xbf16> to vector<4x16xbf16>
    %cst_217 = arith.constant dense<0.000000e+00> : vector<4x128xf32>
    %253 = tpu.matmul %252, %241, %cst_217 {dimension_numbers = #tpu.dot_dimension_numbers<[1], [0], [0], [1], [0, 0, 1, 1], [], []>} : vector<4x16xbf16>, vector<16x128xbf16>, vector<4x128xf32> -> vector<4x128xf32>
    %254 = arith.truncf %253 : vector<4x128xf32> to vector<4x128xbf16>
    %c28 = arith.constant 28 : index
    %c0_218 = arith.constant 0 : index
    %c0_219 = arith.constant 0 : index
    %255 = vector.load %arg7[%c28, %c0_218, %c0_219] : memref<45x128x128xbf16, #tpu.memory_space<vmem>>, vector<1x128x128xbf16>
    %256 = vector.shape_cast %255 : vector<1x128x128xbf16> to vector<128x128xbf16>
    %cst_220 = arith.constant dense<0.000000e+00> : vector<4x128xf32>
    %257 = tpu.matmul %254, %256, %cst_220 {dimension_numbers = #tpu.dot_dimension_numbers<[1], [0], [0], [1], [0, 0, 1, 1], [], []>} : vector<4x128xbf16>, vector<128x128xbf16>, vector<4x128xf32> -> vector<4x128xf32>
    %258 = arith.addf %250, %257 : vector<4x128xf32>
    %c2_221 = arith.constant 2 : index
    %c0_222 = arith.constant 0 : index
    %c0_223 = arith.constant 0 : index
    %259 = vector.load %arg5[%c2_221, %c0_222, %c0_223] : memref<9x4x16xbf16, #tpu.memory_space<vmem>>, vector<1x4x16xbf16>
    %260 = vector.shape_cast %259 : vector<1x4x16xbf16> to vector<4x16xbf16>
    %cst_224 = arith.constant dense<0.000000e+00> : vector<4x128xf32>
    %261 = tpu.matmul %260, %241, %cst_224 {dimension_numbers = #tpu.dot_dimension_numbers<[1], [0], [0], [1], [0, 0, 1, 1], [], []>} : vector<4x16xbf16>, vector<16x128xbf16>, vector<4x128xf32> -> vector<4x128xf32>
    %262 = arith.truncf %261 : vector<4x128xf32> to vector<4x128xbf16>
    %c29 = arith.constant 29 : index
    %c0_225 = arith.constant 0 : index
    %c0_226 = arith.constant 0 : index
    %263 = vector.load %arg7[%c29, %c0_225, %c0_226] : memref<45x128x128xbf16, #tpu.memory_space<vmem>>, vector<1x128x128xbf16>
    %264 = vector.shape_cast %263 : vector<1x128x128xbf16> to vector<128x128xbf16>
    %cst_227 = arith.constant dense<0.000000e+00> : vector<4x128xf32>
    %265 = tpu.matmul %262, %264, %cst_227 {dimension_numbers = #tpu.dot_dimension_numbers<[1], [0], [0], [1], [0, 0, 1, 1], [], []>} : vector<4x128xbf16>, vector<128x128xbf16>, vector<4x128xf32> -> vector<4x128xf32>
    %266 = arith.addf %258, %265 : vector<4x128xf32>
    %c3_228 = arith.constant 3 : index
    %c0_229 = arith.constant 0 : index
    %c0_230 = arith.constant 0 : index
    %267 = vector.load %arg5[%c3_228, %c0_229, %c0_230] : memref<9x4x16xbf16, #tpu.memory_space<vmem>>, vector<1x4x16xbf16>
    %268 = vector.shape_cast %267 : vector<1x4x16xbf16> to vector<4x16xbf16>
    %cst_231 = arith.constant dense<0.000000e+00> : vector<4x128xf32>
    %269 = tpu.matmul %268, %241, %cst_231 {dimension_numbers = #tpu.dot_dimension_numbers<[1], [0], [0], [1], [0, 0, 1, 1], [], []>} : vector<4x16xbf16>, vector<16x128xbf16>, vector<4x128xf32> -> vector<4x128xf32>
    %270 = arith.truncf %269 : vector<4x128xf32> to vector<4x128xbf16>
    %c30 = arith.constant 30 : index
    %c0_232 = arith.constant 0 : index
    %c0_233 = arith.constant 0 : index
    %271 = vector.load %arg7[%c30, %c0_232, %c0_233] : memref<45x128x128xbf16, #tpu.memory_space<vmem>>, vector<1x128x128xbf16>
    %272 = vector.shape_cast %271 : vector<1x128x128xbf16> to vector<128x128xbf16>
    %cst_234 = arith.constant dense<0.000000e+00> : vector<4x128xf32>
    %273 = tpu.matmul %270, %272, %cst_234 {dimension_numbers = #tpu.dot_dimension_numbers<[1], [0], [0], [1], [0, 0, 1, 1], [], []>} : vector<4x128xbf16>, vector<128x128xbf16>, vector<4x128xf32> -> vector<4x128xf32>
    %274 = arith.addf %266, %273 : vector<4x128xf32>
    %c4_235 = arith.constant 4 : index
    %c0_236 = arith.constant 0 : index
    %c0_237 = arith.constant 0 : index
    %275 = vector.load %arg5[%c4_235, %c0_236, %c0_237] : memref<9x4x16xbf16, #tpu.memory_space<vmem>>, vector<1x4x16xbf16>
    %276 = vector.shape_cast %275 : vector<1x4x16xbf16> to vector<4x16xbf16>
    %cst_238 = arith.constant dense<0.000000e+00> : vector<4x128xf32>
    %277 = tpu.matmul %276, %241, %cst_238 {dimension_numbers = #tpu.dot_dimension_numbers<[1], [0], [0], [1], [0, 0, 1, 1], [], []>} : vector<4x16xbf16>, vector<16x128xbf16>, vector<4x128xf32> -> vector<4x128xf32>
    %278 = arith.truncf %277 : vector<4x128xf32> to vector<4x128xbf16>
    %c31 = arith.constant 31 : index
    %c0_239 = arith.constant 0 : index
    %c0_240 = arith.constant 0 : index
    %279 = vector.load %arg7[%c31, %c0_239, %c0_240] : memref<45x128x128xbf16, #tpu.memory_space<vmem>>, vector<1x128x128xbf16>
    %280 = vector.shape_cast %279 : vector<1x128x128xbf16> to vector<128x128xbf16>
    %cst_241 = arith.constant dense<0.000000e+00> : vector<4x128xf32>
    %281 = tpu.matmul %278, %280, %cst_241 {dimension_numbers = #tpu.dot_dimension_numbers<[1], [0], [0], [1], [0, 0, 1, 1], [], []>} : vector<4x128xbf16>, vector<128x128xbf16>, vector<4x128xf32> -> vector<4x128xf32>
    %282 = arith.addf %274, %281 : vector<4x128xf32>
    %c5_242 = arith.constant 5 : index
    %c0_243 = arith.constant 0 : index
    %c0_244 = arith.constant 0 : index
    %283 = vector.load %arg5[%c5_242, %c0_243, %c0_244] : memref<9x4x16xbf16, #tpu.memory_space<vmem>>, vector<1x4x16xbf16>
    %284 = vector.shape_cast %283 : vector<1x4x16xbf16> to vector<4x16xbf16>
    %cst_245 = arith.constant dense<0.000000e+00> : vector<4x128xf32>
    %285 = tpu.matmul %284, %241, %cst_245 {dimension_numbers = #tpu.dot_dimension_numbers<[1], [0], [0], [1], [0, 0, 1, 1], [], []>} : vector<4x16xbf16>, vector<16x128xbf16>, vector<4x128xf32> -> vector<4x128xf32>
    %286 = arith.truncf %285 : vector<4x128xf32> to vector<4x128xbf16>
    %c32 = arith.constant 32 : index
    %c0_246 = arith.constant 0 : index
    %c0_247 = arith.constant 0 : index
    %287 = vector.load %arg7[%c32, %c0_246, %c0_247] : memref<45x128x128xbf16, #tpu.memory_space<vmem>>, vector<1x128x128xbf16>
    %288 = vector.shape_cast %287 : vector<1x128x128xbf16> to vector<128x128xbf16>
    %cst_248 = arith.constant dense<0.000000e+00> : vector<4x128xf32>
    %289 = tpu.matmul %286, %288, %cst_248 {dimension_numbers = #tpu.dot_dimension_numbers<[1], [0], [0], [1], [0, 0, 1, 1], [], []>} : vector<4x128xbf16>, vector<128x128xbf16>, vector<4x128xf32> -> vector<4x128xf32>
    %290 = arith.addf %282, %289 : vector<4x128xf32>
    %c6_249 = arith.constant 6 : index
    %c0_250 = arith.constant 0 : index
    %c0_251 = arith.constant 0 : index
    %291 = vector.load %arg5[%c6_249, %c0_250, %c0_251] : memref<9x4x16xbf16, #tpu.memory_space<vmem>>, vector<1x4x16xbf16>
    %292 = vector.shape_cast %291 : vector<1x4x16xbf16> to vector<4x16xbf16>
    %cst_252 = arith.constant dense<0.000000e+00> : vector<4x128xf32>
    %293 = tpu.matmul %292, %241, %cst_252 {dimension_numbers = #tpu.dot_dimension_numbers<[1], [0], [0], [1], [0, 0, 1, 1], [], []>} : vector<4x16xbf16>, vector<16x128xbf16>, vector<4x128xf32> -> vector<4x128xf32>
    %294 = arith.truncf %293 : vector<4x128xf32> to vector<4x128xbf16>
    %c33 = arith.constant 33 : index
    %c0_253 = arith.constant 0 : index
    %c0_254 = arith.constant 0 : index
    %295 = vector.load %arg7[%c33, %c0_253, %c0_254] : memref<45x128x128xbf16, #tpu.memory_space<vmem>>, vector<1x128x128xbf16>
    %296 = vector.shape_cast %295 : vector<1x128x128xbf16> to vector<128x128xbf16>
    %cst_255 = arith.constant dense<0.000000e+00> : vector<4x128xf32>
    %297 = tpu.matmul %294, %296, %cst_255 {dimension_numbers = #tpu.dot_dimension_numbers<[1], [0], [0], [1], [0, 0, 1, 1], [], []>} : vector<4x128xbf16>, vector<128x128xbf16>, vector<4x128xf32> -> vector<4x128xf32>
    %298 = arith.addf %290, %297 : vector<4x128xf32>
    %c7_256 = arith.constant 7 : index
    %c0_257 = arith.constant 0 : index
    %c0_258 = arith.constant 0 : index
    %299 = vector.load %arg5[%c7_256, %c0_257, %c0_258] : memref<9x4x16xbf16, #tpu.memory_space<vmem>>, vector<1x4x16xbf16>
    %300 = vector.shape_cast %299 : vector<1x4x16xbf16> to vector<4x16xbf16>
    %cst_259 = arith.constant dense<0.000000e+00> : vector<4x128xf32>
    %301 = tpu.matmul %300, %241, %cst_259 {dimension_numbers = #tpu.dot_dimension_numbers<[1], [0], [0], [1], [0, 0, 1, 1], [], []>} : vector<4x16xbf16>, vector<16x128xbf16>, vector<4x128xf32> -> vector<4x128xf32>
    %302 = arith.truncf %301 : vector<4x128xf32> to vector<4x128xbf16>
    %c34 = arith.constant 34 : index
    %c0_260 = arith.constant 0 : index
    %c0_261 = arith.constant 0 : index
    %303 = vector.load %arg7[%c34, %c0_260, %c0_261] : memref<45x128x128xbf16, #tpu.memory_space<vmem>>, vector<1x128x128xbf16>
    %304 = vector.shape_cast %303 : vector<1x128x128xbf16> to vector<128x128xbf16>
    %cst_262 = arith.constant dense<0.000000e+00> : vector<4x128xf32>
    %305 = tpu.matmul %302, %304, %cst_262 {dimension_numbers = #tpu.dot_dimension_numbers<[1], [0], [0], [1], [0, 0, 1, 1], [], []>} : vector<4x128xbf16>, vector<128x128xbf16>, vector<4x128xf32> -> vector<4x128xf32>
    %306 = arith.addf %298, %305 : vector<4x128xf32>
    %c8_263 = arith.constant 8 : index
    %c0_264 = arith.constant 0 : index
    %c0_265 = arith.constant 0 : index
    %307 = vector.load %arg5[%c8_263, %c0_264, %c0_265] : memref<9x4x16xbf16, #tpu.memory_space<vmem>>, vector<1x4x16xbf16>
    %308 = vector.shape_cast %307 : vector<1x4x16xbf16> to vector<4x16xbf16>
    %cst_266 = arith.constant dense<0.000000e+00> : vector<4x128xf32>
    %309 = tpu.matmul %308, %241, %cst_266 {dimension_numbers = #tpu.dot_dimension_numbers<[1], [0], [0], [1], [0, 0, 1, 1], [], []>} : vector<4x16xbf16>, vector<16x128xbf16>, vector<4x128xf32> -> vector<4x128xf32>
    %310 = arith.truncf %309 : vector<4x128xf32> to vector<4x128xbf16>
    %c35 = arith.constant 35 : index
    %c0_267 = arith.constant 0 : index
    %c0_268 = arith.constant 0 : index
    %311 = vector.load %arg7[%c35, %c0_267, %c0_268] : memref<45x128x128xbf16, #tpu.memory_space<vmem>>, vector<1x128x128xbf16>
    %312 = vector.shape_cast %311 : vector<1x128x128xbf16> to vector<128x128xbf16>
    %cst_269 = arith.constant dense<0.000000e+00> : vector<4x128xf32>
    %313 = tpu.matmul %310, %312, %cst_269 {dimension_numbers = #tpu.dot_dimension_numbers<[1], [0], [0], [1], [0, 0, 1, 1], [], []>} : vector<4x128xbf16>, vector<128x128xbf16>, vector<4x128xf32> -> vector<4x128xf32>
    %314 = arith.addf %306, %313 : vector<4x128xf32>
    %c3_270 = arith.constant 3 : index
    %c0_271 = arith.constant 0 : index
    %c0_272 = arith.constant 0 : index
    %315 = vector.load %arg8[%c3_270, %c0_271, %c0_272] : memref<5x1x128xf32, #tpu.memory_space<vmem>>, vector<1x1x128xf32>
    %316 = vector.shape_cast %315 : vector<1x1x128xf32> to vector<1x128xf32>
    %317 = vector.broadcast %316 : vector<1x128xf32> to vector<4x128xf32>
    %318 = arith.addf %314, %317 : vector<4x128xf32>
    %cst_273 = arith.constant 0.000000e+00 : f32
    %319 = vector.broadcast %cst_273 : f32 to vector<4x128xf32>
    %320 = arith.maximumf %318, %319 : vector<4x128xf32>
    %321 = arith.truncf %320 : vector<4x128xf32> to vector<4x128xbf16>
    %cst_274 = arith.constant 0.000000e+00 : f32
    %322 = vector.broadcast %cst_274 : f32 to vector<1x128xf32>
    %c0_275 = arith.constant 0 : index
    %c0_276 = arith.constant 0 : index
    %c0_277 = arith.constant 0 : index
    %323 = vector.load %arg6[%c0_275, %c0_276, %c0_277] : memref<9x1x4xbf16, #tpu.memory_space<vmem>>, vector<1x1x4xbf16>
    %324 = vector.shape_cast %323 : vector<1x1x4xbf16> to vector<1x4xbf16>
    %cst_278 = arith.constant dense<0.000000e+00> : vector<1x128xf32>
    %325 = tpu.matmul %324, %321, %cst_278 {dimension_numbers = #tpu.dot_dimension_numbers<[1], [0], [0], [1], [0, 0, 1, 1], [], []>} : vector<1x4xbf16>, vector<4x128xbf16>, vector<1x128xf32> -> vector<1x128xf32>
    %326 = arith.truncf %325 : vector<1x128xf32> to vector<1x128xbf16>
    %c36 = arith.constant 36 : index
    %c0_279 = arith.constant 0 : index
    %c0_280 = arith.constant 0 : index
    %327 = vector.load %arg7[%c36, %c0_279, %c0_280] : memref<45x128x128xbf16, #tpu.memory_space<vmem>>, vector<1x128x128xbf16>
    %328 = vector.shape_cast %327 : vector<1x128x128xbf16> to vector<128x128xbf16>
    %cst_281 = arith.constant dense<0.000000e+00> : vector<1x128xf32>
    %329 = tpu.matmul %326, %328, %cst_281 {dimension_numbers = #tpu.dot_dimension_numbers<[1], [0], [0], [1], [0, 0, 1, 1], [], []>} : vector<1x128xbf16>, vector<128x128xbf16>, vector<1x128xf32> -> vector<1x128xf32>
    %330 = arith.addf %322, %329 : vector<1x128xf32>
    %c1_282 = arith.constant 1 : index
    %c0_283 = arith.constant 0 : index
    %c0_284 = arith.constant 0 : index
    %331 = vector.load %arg6[%c1_282, %c0_283, %c0_284] : memref<9x1x4xbf16, #tpu.memory_space<vmem>>, vector<1x1x4xbf16>
    %332 = vector.shape_cast %331 : vector<1x1x4xbf16> to vector<1x4xbf16>
    %cst_285 = arith.constant dense<0.000000e+00> : vector<1x128xf32>
    %333 = tpu.matmul %332, %321, %cst_285 {dimension_numbers = #tpu.dot_dimension_numbers<[1], [0], [0], [1], [0, 0, 1, 1], [], []>} : vector<1x4xbf16>, vector<4x128xbf16>, vector<1x128xf32> -> vector<1x128xf32>
    %334 = arith.truncf %333 : vector<1x128xf32> to vector<1x128xbf16>
    %c37 = arith.constant 37 : index
    %c0_286 = arith.constant 0 : index
    %c0_287 = arith.constant 0 : index
    %335 = vector.load %arg7[%c37, %c0_286, %c0_287] : memref<45x128x128xbf16, #tpu.memory_space<vmem>>, vector<1x128x128xbf16>
    %336 = vector.shape_cast %335 : vector<1x128x128xbf16> to vector<128x128xbf16>
    %cst_288 = arith.constant dense<0.000000e+00> : vector<1x128xf32>
    %337 = tpu.matmul %334, %336, %cst_288 {dimension_numbers = #tpu.dot_dimension_numbers<[1], [0], [0], [1], [0, 0, 1, 1], [], []>} : vector<1x128xbf16>, vector<128x128xbf16>, vector<1x128xf32> -> vector<1x128xf32>
    %338 = arith.addf %330, %337 : vector<1x128xf32>
    %c2_289 = arith.constant 2 : index
    %c0_290 = arith.constant 0 : index
    %c0_291 = arith.constant 0 : index
    %339 = vector.load %arg6[%c2_289, %c0_290, %c0_291] : memref<9x1x4xbf16, #tpu.memory_space<vmem>>, vector<1x1x4xbf16>
    %340 = vector.shape_cast %339 : vector<1x1x4xbf16> to vector<1x4xbf16>
    %cst_292 = arith.constant dense<0.000000e+00> : vector<1x128xf32>
    %341 = tpu.matmul %340, %321, %cst_292 {dimension_numbers = #tpu.dot_dimension_numbers<[1], [0], [0], [1], [0, 0, 1, 1], [], []>} : vector<1x4xbf16>, vector<4x128xbf16>, vector<1x128xf32> -> vector<1x128xf32>
    %342 = arith.truncf %341 : vector<1x128xf32> to vector<1x128xbf16>
    %c38 = arith.constant 38 : index
    %c0_293 = arith.constant 0 : index
    %c0_294 = arith.constant 0 : index
    %343 = vector.load %arg7[%c38, %c0_293, %c0_294] : memref<45x128x128xbf16, #tpu.memory_space<vmem>>, vector<1x128x128xbf16>
    %344 = vector.shape_cast %343 : vector<1x128x128xbf16> to vector<128x128xbf16>
    %cst_295 = arith.constant dense<0.000000e+00> : vector<1x128xf32>
    %345 = tpu.matmul %342, %344, %cst_295 {dimension_numbers = #tpu.dot_dimension_numbers<[1], [0], [0], [1], [0, 0, 1, 1], [], []>} : vector<1x128xbf16>, vector<128x128xbf16>, vector<1x128xf32> -> vector<1x128xf32>
    %346 = arith.addf %338, %345 : vector<1x128xf32>
    %c3_296 = arith.constant 3 : index
    %c0_297 = arith.constant 0 : index
    %c0_298 = arith.constant 0 : index
    %347 = vector.load %arg6[%c3_296, %c0_297, %c0_298] : memref<9x1x4xbf16, #tpu.memory_space<vmem>>, vector<1x1x4xbf16>
    %348 = vector.shape_cast %347 : vector<1x1x4xbf16> to vector<1x4xbf16>
    %cst_299 = arith.constant dense<0.000000e+00> : vector<1x128xf32>
    %349 = tpu.matmul %348, %321, %cst_299 {dimension_numbers = #tpu.dot_dimension_numbers<[1], [0], [0], [1], [0, 0, 1, 1], [], []>} : vector<1x4xbf16>, vector<4x128xbf16>, vector<1x128xf32> -> vector<1x128xf32>
    %350 = arith.truncf %349 : vector<1x128xf32> to vector<1x128xbf16>
    %c39 = arith.constant 39 : index
    %c0_300 = arith.constant 0 : index
    %c0_301 = arith.constant 0 : index
    %351 = vector.load %arg7[%c39, %c0_300, %c0_301] : memref<45x128x128xbf16, #tpu.memory_space<vmem>>, vector<1x128x128xbf16>
    %352 = vector.shape_cast %351 : vector<1x128x128xbf16> to vector<128x128xbf16>
    %cst_302 = arith.constant dense<0.000000e+00> : vector<1x128xf32>
    %353 = tpu.matmul %350, %352, %cst_302 {dimension_numbers = #tpu.dot_dimension_numbers<[1], [0], [0], [1], [0, 0, 1, 1], [], []>} : vector<1x128xbf16>, vector<128x128xbf16>, vector<1x128xf32> -> vector<1x128xf32>
    %354 = arith.addf %346, %353 : vector<1x128xf32>
    %c4_303 = arith.constant 4 : index
    %c0_304 = arith.constant 0 : index
    %c0_305 = arith.constant 0 : index
    %355 = vector.load %arg6[%c4_303, %c0_304, %c0_305] : memref<9x1x4xbf16, #tpu.memory_space<vmem>>, vector<1x1x4xbf16>
    %356 = vector.shape_cast %355 : vector<1x1x4xbf16> to vector<1x4xbf16>
    %cst_306 = arith.constant dense<0.000000e+00> : vector<1x128xf32>
    %357 = tpu.matmul %356, %321, %cst_306 {dimension_numbers = #tpu.dot_dimension_numbers<[1], [0], [0], [1], [0, 0, 1, 1], [], []>} : vector<1x4xbf16>, vector<4x128xbf16>, vector<1x128xf32> -> vector<1x128xf32>
    %358 = arith.truncf %357 : vector<1x128xf32> to vector<1x128xbf16>
    %c40 = arith.constant 40 : index
    %c0_307 = arith.constant 0 : index
    %c0_308 = arith.constant 0 : index
    %359 = vector.load %arg7[%c40, %c0_307, %c0_308] : memref<45x128x128xbf16, #tpu.memory_space<vmem>>, vector<1x128x128xbf16>
    %360 = vector.shape_cast %359 : vector<1x128x128xbf16> to vector<128x128xbf16>
    %cst_309 = arith.constant dense<0.000000e+00> : vector<1x128xf32>
    %361 = tpu.matmul %358, %360, %cst_309 {dimension_numbers = #tpu.dot_dimension_numbers<[1], [0], [0], [1], [0, 0, 1, 1], [], []>} : vector<1x128xbf16>, vector<128x128xbf16>, vector<1x128xf32> -> vector<1x128xf32>
    %362 = arith.addf %354, %361 : vector<1x128xf32>
    %c5_310 = arith.constant 5 : index
    %c0_311 = arith.constant 0 : index
    %c0_312 = arith.constant 0 : index
    %363 = vector.load %arg6[%c5_310, %c0_311, %c0_312] : memref<9x1x4xbf16, #tpu.memory_space<vmem>>, vector<1x1x4xbf16>
    %364 = vector.shape_cast %363 : vector<1x1x4xbf16> to vector<1x4xbf16>
    %cst_313 = arith.constant dense<0.000000e+00> : vector<1x128xf32>
    %365 = tpu.matmul %364, %321, %cst_313 {dimension_numbers = #tpu.dot_dimension_numbers<[1], [0], [0], [1], [0, 0, 1, 1], [], []>} : vector<1x4xbf16>, vector<4x128xbf16>, vector<1x128xf32> -> vector<1x128xf32>
    %366 = arith.truncf %365 : vector<1x128xf32> to vector<1x128xbf16>
    %c41 = arith.constant 41 : index
    %c0_314 = arith.constant 0 : index
    %c0_315 = arith.constant 0 : index
    %367 = vector.load %arg7[%c41, %c0_314, %c0_315] : memref<45x128x128xbf16, #tpu.memory_space<vmem>>, vector<1x128x128xbf16>
    %368 = vector.shape_cast %367 : vector<1x128x128xbf16> to vector<128x128xbf16>
    %cst_316 = arith.constant dense<0.000000e+00> : vector<1x128xf32>
    %369 = tpu.matmul %366, %368, %cst_316 {dimension_numbers = #tpu.dot_dimension_numbers<[1], [0], [0], [1], [0, 0, 1, 1], [], []>} : vector<1x128xbf16>, vector<128x128xbf16>, vector<1x128xf32> -> vector<1x128xf32>
    %370 = arith.addf %362, %369 : vector<1x128xf32>
    %c6_317 = arith.constant 6 : index
    %c0_318 = arith.constant 0 : index
    %c0_319 = arith.constant 0 : index
    %371 = vector.load %arg6[%c6_317, %c0_318, %c0_319] : memref<9x1x4xbf16, #tpu.memory_space<vmem>>, vector<1x1x4xbf16>
    %372 = vector.shape_cast %371 : vector<1x1x4xbf16> to vector<1x4xbf16>
    %cst_320 = arith.constant dense<0.000000e+00> : vector<1x128xf32>
    %373 = tpu.matmul %372, %321, %cst_320 {dimension_numbers = #tpu.dot_dimension_numbers<[1], [0], [0], [1], [0, 0, 1, 1], [], []>} : vector<1x4xbf16>, vector<4x128xbf16>, vector<1x128xf32> -> vector<1x128xf32>
    %374 = arith.truncf %373 : vector<1x128xf32> to vector<1x128xbf16>
    %c42 = arith.constant 42 : index
    %c0_321 = arith.constant 0 : index
    %c0_322 = arith.constant 0 : index
    %375 = vector.load %arg7[%c42, %c0_321, %c0_322] : memref<45x128x128xbf16, #tpu.memory_space<vmem>>, vector<1x128x128xbf16>
    %376 = vector.shape_cast %375 : vector<1x128x128xbf16> to vector<128x128xbf16>
    %cst_323 = arith.constant dense<0.000000e+00> : vector<1x128xf32>
    %377 = tpu.matmul %374, %376, %cst_323 {dimension_numbers = #tpu.dot_dimension_numbers<[1], [0], [0], [1], [0, 0, 1, 1], [], []>} : vector<1x128xbf16>, vector<128x128xbf16>, vector<1x128xf32> -> vector<1x128xf32>
    %378 = arith.addf %370, %377 : vector<1x128xf32>
    %c7_324 = arith.constant 7 : index
    %c0_325 = arith.constant 0 : index
    %c0_326 = arith.constant 0 : index
    %379 = vector.load %arg6[%c7_324, %c0_325, %c0_326] : memref<9x1x4xbf16, #tpu.memory_space<vmem>>, vector<1x1x4xbf16>
    %380 = vector.shape_cast %379 : vector<1x1x4xbf16> to vector<1x4xbf16>
    %cst_327 = arith.constant dense<0.000000e+00> : vector<1x128xf32>
    %381 = tpu.matmul %380, %321, %cst_327 {dimension_numbers = #tpu.dot_dimension_numbers<[1], [0], [0], [1], [0, 0, 1, 1], [], []>} : vector<1x4xbf16>, vector<4x128xbf16>, vector<1x128xf32> -> vector<1x128xf32>
    %382 = arith.truncf %381 : vector<1x128xf32> to vector<1x128xbf16>
    %c43 = arith.constant 43 : index
    %c0_328 = arith.constant 0 : index
    %c0_329 = arith.constant 0 : index
    %383 = vector.load %arg7[%c43, %c0_328, %c0_329] : memref<45x128x128xbf16, #tpu.memory_space<vmem>>, vector<1x128x128xbf16>
    %384 = vector.shape_cast %383 : vector<1x128x128xbf16> to vector<128x128xbf16>
    %cst_330 = arith.constant dense<0.000000e+00> : vector<1x128xf32>
    %385 = tpu.matmul %382, %384, %cst_330 {dimension_numbers = #tpu.dot_dimension_numbers<[1], [0], [0], [1], [0, 0, 1, 1], [], []>} : vector<1x128xbf16>, vector<128x128xbf16>, vector<1x128xf32> -> vector<1x128xf32>
    %386 = arith.addf %378, %385 : vector<1x128xf32>
    %c8_331 = arith.constant 8 : index
    %c0_332 = arith.constant 0 : index
    %c0_333 = arith.constant 0 : index
    %387 = vector.load %arg6[%c8_331, %c0_332, %c0_333] : memref<9x1x4xbf16, #tpu.memory_space<vmem>>, vector<1x1x4xbf16>
    %388 = vector.shape_cast %387 : vector<1x1x4xbf16> to vector<1x4xbf16>
    %cst_334 = arith.constant dense<0.000000e+00> : vector<1x128xf32>
    %389 = tpu.matmul %388, %321, %cst_334 {dimension_numbers = #tpu.dot_dimension_numbers<[1], [0], [0], [1], [0, 0, 1, 1], [], []>} : vector<1x4xbf16>, vector<4x128xbf16>, vector<1x128xf32> -> vector<1x128xf32>
    %390 = arith.truncf %389 : vector<1x128xf32> to vector<1x128xbf16>
    %c44 = arith.constant 44 : index
    %c0_335 = arith.constant 0 : index
    %c0_336 = arith.constant 0 : index
    %391 = vector.load %arg7[%c44, %c0_335, %c0_336] : memref<45x128x128xbf16, #tpu.memory_space<vmem>>, vector<1x128x128xbf16>
    %392 = vector.shape_cast %391 : vector<1x128x128xbf16> to vector<128x128xbf16>
    %cst_337 = arith.constant dense<0.000000e+00> : vector<1x128xf32>
    %393 = tpu.matmul %390, %392, %cst_337 {dimension_numbers = #tpu.dot_dimension_numbers<[1], [0], [0], [1], [0, 0, 1, 1], [], []>} : vector<1x128xbf16>, vector<128x128xbf16>, vector<1x128xf32> -> vector<1x128xf32>
    %394 = arith.addf %386, %393 : vector<1x128xf32>
    %c4_338 = arith.constant 4 : index
    %c0_339 = arith.constant 0 : index
    %c0_340 = arith.constant 0 : index
    %395 = vector.load %arg8[%c4_338, %c0_339, %c0_340] : memref<5x1x128xf32, #tpu.memory_space<vmem>>, vector<1x1x128xf32>
    %396 = vector.shape_cast %395 : vector<1x1x128xf32> to vector<1x128xf32>
    %397 = arith.addf %394, %396 : vector<1x128xf32>
    %cst_341 = arith.constant 0.000000e+00 : f32
    %398 = vector.broadcast %cst_341 : f32 to vector<1x128xf32>
    %399 = arith.maximumf %397, %398 : vector<1x128xf32>
    %400 = arith.truncf %399 : vector<1x128xf32> to vector<1x128xbf16>
    %401 = arith.extf %400 : vector<1x128xbf16> to vector<1x128xf32>
    %cst_342 = arith.constant dense<0.000000e+00> : vector<128xf32>
    %402 = vector.multi_reduction <add>, %401, %cst_342 [0] : vector<1x128xf32> to vector<128xf32>
    %403 = vector.shape_cast %402 : vector<128xf32> to vector<1x128xf32>
    %cst_343 = arith.constant 1.000000e+00 : f32
    %404 = vector.broadcast %cst_343 : f32 to vector<1x128xf32>
    %405 = arith.divf %403, %404 : vector<1x128xf32>
    %406 = arith.truncf %405 : vector<1x128xf32> to vector<1x128xbf16>
    %c0_344 = arith.constant 0 : index
    %c0_345 = arith.constant 0 : index
    %407 = vector.load %arg9[%c0_344, %c0_345] : memref<128x128xbf16, #tpu.memory_space<vmem>>, vector<128x128xbf16>
    %cst_346 = arith.constant dense<0.000000e+00> : vector<1x128xf32>
    %408 = tpu.matmul %406, %407, %cst_346 {dimension_numbers = #tpu.dot_dimension_numbers<[1], [0], [0], [1], [0, 0, 1, 1], [], []>} : vector<1x128xbf16>, vector<128x128xbf16>, vector<1x128xf32> -> vector<1x128xf32>
    %c0_347 = arith.constant 0 : index
    %c0_348 = arith.constant 0 : index
    %409 = vector.load %arg10[%c0_347, %c0_348] : memref<1x128xf32, #tpu.memory_space<vmem>>, vector<1x128xf32>
    %410 = arith.addf %408, %409 : vector<1x128xf32>
    %c0_349 = arith.constant 0 : index
    %c0_350 = arith.constant 0 : index
    %c0_351 = arith.constant 0 : index
    %411 = vector.load %arg11[%c0_349, %c0_350, %c0_351] : memref<1x1x128xf32, #tpu.memory_space<vmem>>, vector<1x1x128xf32>
    %412 = vector.shape_cast %411 : vector<1x1x128xf32> to vector<1x128xf32>
    %413 = vector.shape_cast %410 : vector<1x128xf32> to vector<1x1x128xf32>
    tpu.vector_store %arg11[%c0_349, %c0_350, %c0_351], %413 {strides = array<i32>} : memref<1x1x128xf32, #tpu.memory_space<vmem>>, vector<1x1x128xf32>,
    return
  }
  func.func @transform_0(%arg0: i32) -> (i32, i32, i32) {
    %c0_i32 = arith.constant 0 : i32
    %c0_i32_0 = arith.constant 0 : i32
    %c0_i32_1 = arith.constant 0 : i32
    return %arg0, %c0_i32, %c0_i32_0 : i32, i32, i32
  }
  func.func @transform_1(%arg0: i32) -> (i32, i32, i32) {
    %c0_i32 = arith.constant 0 : i32
    %c0_i32_0 = arith.constant 0 : i32
    %c0_i32_1 = arith.constant 0 : i32
    %c0_i32_2 = arith.constant 0 : i32
    return %c0_i32, %c0_i32_0, %c0_i32_1 : i32, i32, i32
  }
  func.func @transform_2(%arg0: i32) -> (i32, i32, i32) {
    %c0_i32 = arith.constant 0 : i32
    %c0_i32_0 = arith.constant 0 : i32
    %c0_i32_1 = arith.constant 0 : i32
    %c0_i32_2 = arith.constant 0 : i32
    return %c0_i32, %c0_i32_0, %c0_i32_1 : i32, i32, i32
  }
  func.func @transform_3(%arg0: i32) -> (i32, i32, i32) {
    %c0_i32 = arith.constant 0 : i32
    %c0_i32_0 = arith.constant 0 : i32
    %c0_i32_1 = arith.constant 0 : i32
    %c0_i32_2 = arith.constant 0 : i32
    return %c0_i32, %c0_i32_0, %c0_i32_1 : i32, i32, i32
  }
  func.func @transform_4(%arg0: i32) -> (i32, i32, i32) {
    %c0_i32 = arith.constant 0 : i32
    %c0_i32_0 = arith.constant 0 : i32
    %c0_i32_1 = arith.constant 0 : i32
    %c0_i32_2 = arith.constant 0 : i32
    return %c0_i32, %c0_i32_0, %c0_i32_1 : i32, i32, i32
  }
  func.func @transform_5(%arg0: i32) -> (i32, i32, i32) {
    %c0_i32 = arith.constant 0 : i32
    %c0_i32_0 = arith.constant 0 : i32
    %c0_i32_1 = arith.constant 0 : i32
    %c0_i32_2 = arith.constant 0 : i32
    return %c0_i32, %c0_i32_0, %c0_i32_1 : i32, i32, i32
  }
  func.func @transform_6(%arg0: i32) -> (i32, i32, i32) {
    %c0_i32 = arith.constant 0 : i32
    %c0_i32_0 = arith.constant 0 : i32
    %c0_i32_1 = arith.constant 0 : i32
    %c0_i32_2 = arith.constant 0 : i32
    return %c0_i32, %c0_i32_0, %c0_i32_1 : i32, i32, i32
  }
  func.func @transform_7(%arg0: i32) -> (i32, i32, i32) {
    %c0_i32 = arith.constant 0 : i32
    %c0_i32_0 = arith.constant 0 : i32
    %c0_i32_1 = arith.constant 0 : i32
    %c0_i32_2 = arith.constant 0 : i32
    return %c0_i32, %c0_i32_0, %c0_i32_1 : i32, i32, i32
  }
  func.func @transform_8(%arg0: i32) -> (i32, i32) {
    %c0_i32 = arith.constant 0 : i32
    %c0_i32_0 = arith.constant 0 : i32
    %c0_i32_1 = arith.constant 0 : i32
    return %c0_i32, %c0_i32_0 : i32, i32
  }
  func.func @transform_9(%arg0: i32) -> (i32, i32) {
    %c0_i32 = arith.constant 0 : i32
    %c0_i32_0 = arith.constant 0 : i32
    %c0_i32_1 = arith.constant 0 : i32
    return %c0_i32, %c0_i32_0 : i32, i32
  }
  func.func @transform_10(%arg0: i32) -> (i32, i32, i32) {
    %c0_i32 = arith.constant 0 : i32
    %c0_i32_0 = arith.constant 0 : i32
    %c0_i32_1 = arith.constant 0 : i32
    return %arg0, %c0_i32, %c0_i32_0 : i32, i32, i32
  }
}

</mosaic_0001>

<llo_original>
// kernel: encoder_decoder_forward.1
$region0: #{encoder_decoder_forward.1}
  #allocation0 [shape = 'u32[]', space=smem, size = 0x4, offset = 0x4, fixed_abs, tag = 'smem constant byte address 0x4 - core index']
  #allocation1 [shape = 'u32[72,128]{1,0:T(1,128)}', space=vmem, size = 0x9000, scoped, tag = 'internal scratch']
  %s0 = inlined_call_operand.vmem [shape: bf16[2,256,128], index: 0, kind: input, shape index: {}]
  %s1 = inlined_call_operand.hbm [shape: bf16[9,256,256], index: 1, kind: input, shape index: {}]
  %s2 = inlined_call_operand.hbm [shape: bf16[9,64,256], index: 2, kind: input, shape index: {}]
  %s3 = inlined_call_operand.hbm [shape: bf16[9,16,64], index: 3, kind: input, shape index: {}]
  %s4 = inlined_call_operand.hbm [shape: bf16[9,4,16], index: 4, kind: input, shape index: {}]
  %s5 = inlined_call_operand.vmem [shape: bf16[9,1,4], index: 5, kind: input, shape index: {}]
  %s6 = inlined_call_operand.hbm [shape: bf16[45,128,128], index: 6, kind: input, shape index: {}]
  %s7 = inlined_call_operand.hbm [shape: f32[5,1,128], index: 7, kind: input, shape index: {}]
  %s8 = inlined_call_operand.hbm [shape: bf16[128,128], index: 8, kind: input, shape index: {}]
  %s9 = inlined_call_operand.hbm [shape: f32[1,128], index: 9, kind: input, shape index: {}]
  %s10 = inlined_call_operand.hbm [shape: f32[2,1,128], index: 10, kind: output, shape index: {}]
  %s11 = sld [smem:[#allocation0]]
  $region105: #{encoder_decoder_forward.1} parent=0
    _
  %s13 = ssub.s32 1, %s11
  %s14 = scalar_select 0, %s13, %s11
  $region1: #{encoder_decoder_forward.1} parent=0
    #allocation2 [shape = 'u8[1179648]{0}', space=vmem, size = 0x120000, scoped, tag = 'input window, operand 1, single buffered']
    #allocation3 [shape = 's32[2]{0}', space=sflag, size = 0x8, scoped, tag = 'scoped memory for encoder_decoder_forward.1']
    #allocation4 [shape = 's32[2]{0}', space=sflag, size = 0x8, scoped, tag = 'scoped memory for encoder_decoder_forward.1']
    #allocation5 [shape = 'u8[294912]{0}', space=vmem, size = 0x48000, scoped, tag = 'input window, operand 2, single buffered']
    #allocation6 [shape = 's32[1]{0}', space=sflag, size = 0x4, scoped, tag = 'scoped memory for encoder_decoder_forward.1']
    #allocation7 [shape = 'u8[36864]{0}', space=vmem, size = 0x9000, scoped, tag = 'input window, operand 3, single buffered']
    #allocation8 [shape = 'u8[9216]{0}', space=vmem, size = 0x2400, scoped, tag = 'input window, operand 4, single buffered']
    #allocation9 [shape = 's32[1]{0}', space=sflag, size = 0x4, scoped, tag = 'scoped memory for encoder_decoder_forward.1']
    #allocation10 [shape = 'u8[1474560]{0}', space=vmem, size = 0x168000, scoped, tag = 'input window, operand 6, single buffered']
    #allocation11 [shape = 'u8[2560]{0}', space=vmem, size = 0xc00, scoped, tag = 'input window, operand 7, single buffered']
    #allocation12 [shape = 's32[1]{0}', space=sflag, size = 0x4, scoped, tag = 'scoped memory for encoder_decoder_forward.1']
    #allocation13 [shape = 'u8[32768]{0}', space=vmem, size = 0x8000, scoped, tag = 'input window, operand 8, single buffered']
    #allocation14 [shape = 'u8[512]{0}', space=vmem, size = 0x400, scoped, tag = 'input window, operand 9, single buffered']
    #allocation15 [shape = 's32[1]{0}', space=sflag, size = 0x4, scoped, tag = 'scoped memory for encoder_decoder_forward.1']
    #allocation16 [shape = 'u8[1024]{0}', space=vmem, size = 0x400, scoped, tag = 'output window, operand 0']
    %15 = vsyncpa [#allocation3], 0
    %16 = vsyncpa [#allocation6], 0
    %17 = vsyncpa [#allocation9], 0
    %18 = vsyncpa [#allocation12], 0
    %19 = vsyncpa [#allocation15], 0
    %20 = vsyncpa [#allocation4], 0
    %s21 = scalar_lea.sflag [#allocation4], 1
    %22 = vsyncpa %s21, 0
    loop: start=0, step=1, limit=4
    $region2: #{encoder_decoder_forward.1} parent=1 // loop_pre_header
      _
    $region3: #{encoder_decoder_forward.1} parent=1 // loop_header
      %s24 = sphi 0, %s28
      %p25 = scmp.ge.s32.totalorder %s24, 4
      %s34 = sphi 0, %s36
      %s37 = sphi 0, %s34
      %s38 = sphi 0, %s37
      %s54 = sphi 0, %s38
      %s58 = sphi 0, %s58
      %s60 = sphi 0, %s58
      %s61 = sphi 0, %s60
      %s75 = sphi 0, %s61
      %s79 = sphi 0, %s79
      %s81 = sphi 0, %s79
      %s82 = sphi 0, %s81
      %s96 = sphi 0, %s82
      %s100 = sphi 0, %s100
      %s102 = sphi 0, %s100
      %s103 = sphi 0, %s102
      %s117 = sphi 0, %s103
      %s121 = sphi 0, %s121
      %s123 = sphi 0, %s121
      %s124 = sphi 0, %s123
      %s138 = sphi 0, %s124
      %s142 = sphi 0, %s142
      %s144 = sphi 0, %s142
      %s145 = sphi 0, %s144
      %s159 = sphi 0, %s145
      %s163 = sphi 0, %s163
      %s165 = sphi 0, %s163
      %s166 = sphi 0, %s165
      %s180 = sphi 0, %s166
      %s184 = sphi 0, %s184
      %s186 = sphi 0, %s184
      %s187 = sphi 0, %s186
      %s201 = sphi 0, %s187
      %s205 = sphi 0, %s205
      %s207 = sphi 0, %s205
      %s208 = sphi 0, %s207
      %s222 = sphi 0, %s208
      %s226 = sphi 0, %s226
      %s228 = sphi 0, %s226
      %s229 = sphi 0, %s228
      %s243 = sphi 0, %s229
      %s249 = sphi 0, %s251
      %s252 = sphi 0, %s249
      %s253 = sphi 0, %s252
      %s269 = sphi 0, %s253
    $region4: #{encoder_decoder_forward.1} parent=1 // loop_header_branch
      %27 = sbr.rel (%p25) target = $region8
    $region5: #{encoder_decoder_forward.1} parent=1 // loop_body
      %s29 = ssub.s32 %s24, 1
      %s30 = ssub.s32 %s24, 2
      %s31 = sadd.s32 %s24, 1
      %s32 = ssub.s32 %s24, %s31
      %p33 = scmp.eq.s32.totalorder %s32, 0
      %s35 = sadd.s32 %s34, 1
      %s36 = scalar_select %p33, %s34, %s35
      %p39 = pneg %p33
      %p40 = scmp.eq.s32.totalorder %s24, 1
      %p41 = por %p39, %p40
      %p42 = scmp.ne.s32.totalorder %s34, %s37
      %p43 = scmp.eq.s32.totalorder %s24, 0
      %p44 = por %p42, %p43
      %p45 = scmp.ne.s32.totalorder %s34, %s37
      %p46 = scmp.eq.s32.totalorder %s29, 1
      %p47 = por %p45, %p46
      %p48 = scmp.ne.s32.totalorder %s37, %s38
      %p49 = scmp.eq.s32.totalorder %s29, 0
      %p50 = por %p48, %p49
      %p51 = scmp.ne.s32.totalorder %s37, %s38
      %p52 = scmp.eq.s32.totalorder %s30, 1
      %p53 = por %p51, %p52
      %p55 = scmp.ne.s32.totalorder %s38, %s54
      %p56 = scmp.eq.s32.totalorder %s30, 0
      %p57 = por %p55, %p56
      %s59 = sadd.s32 %s58, 1
      %p62 = scmp.eq.s32.totalorder %s24, 1
      %p63 = scmp.ne.s32.totalorder %s58, %s60
      %p64 = scmp.eq.s32.totalorder %s24, 0
      %p65 = por %p63, %p64
      %p66 = scmp.ne.s32.totalorder %s58, %s60
      %p67 = scmp.eq.s32.totalorder %s29, 1
      %p68 = por %p66, %p67
      %p69 = scmp.ne.s32.totalorder %s60, %s61
      %p70 = scmp.eq.s32.totalorder %s29, 0
      %p71 = por %p69, %p70
      %p72 = scmp.ne.s32.totalorder %s60, %s61
      %p73 = scmp.eq.s32.totalorder %s30, 1
      %p74 = por %p72, %p73
      %p76 = scmp.ne.s32.totalorder %s61, %s75
      %p77 = scmp.eq.s32.totalorder %s30, 0
      %p78 = por %p76, %p77
      %s80 = sadd.s32 %s79, 1
      %p83 = scmp.eq.s32.totalorder %s24, 1
      %p84 = scmp.ne.s32.totalorder %s79, %s81
      %p85 = scmp.eq.s32.totalorder %s24, 0
      %p86 = por %p84, %p85
      %p87 = scmp.ne.s32.totalorder %s79, %s81
      %p88 = scmp.eq.s32.totalorder %s29, 1
      %p89 = por %p87, %p88
      %p90 = scmp.ne.s32.totalorder %s81, %s82
      %p91 = scmp.eq.s32.totalorder %s29, 0
      %p92 = por %p90, %p91
      %p93 = scmp.ne.s32.totalorder %s81, %s82
      %p94 = scmp.eq.s32.totalorder %s30, 1
      %p95 = por %p93, %p94
      %p97 = scmp.ne.s32.totalorder %s82, %s96
      %p98 = scmp.eq.s32.totalorder %s30, 0
      %p99 = por %p97, %p98
      %s101 = sadd.s32 %s100, 1
      %p104 = scmp.eq.s32.totalorder %s24, 1
      %p105 = scmp.ne.s32.totalorder %s100, %s102
      %p106 = scmp.eq.s32.totalorder %s24, 0
      %p107 = por %p105, %p106
      %p108 = scmp.ne.s32.totalorder %s100, %s102
      %p109 = scmp.eq.s32.totalorder %s29, 1
      %p110 = por %p108, %p109
      %p111 = scmp.ne.s32.totalorder %s102, %s103
      %p112 = scmp.eq.s32.totalorder %s29, 0
      %p113 = por %p111, %p112
      %p114 = scmp.ne.s32.totalorder %s102, %s103
      %p115 = scmp.eq.s32.totalorder %s30, 1
      %p116 = por %p114, %p115
      %p118 = scmp.ne.s32.totalorder %s103, %s117
      %p119 = scmp.eq.s32.totalorder %s30, 0
      %p120 = por %p118, %p119
      %s122 = sadd.s32 %s121, 1
      %p125 = scmp.eq.s32.totalorder %s24, 1
      %p126 = scmp.ne.s32.totalorder %s121, %s123
      %p127 = scmp.eq.s32.totalorder %s24, 0
      %p128 = por %p126, %p127
      %p129 = scmp.ne.s32.totalorder %s121, %s123
      %p130 = scmp.eq.s32.totalorder %s29, 1
      %p131 = por %p129, %p130
      %p132 = scmp.ne.s32.totalorder %s123, %s124
      %p133 = scmp.eq.s32.totalorder %s29, 0
      %p134 = por %p132, %p133
      %p135 = scmp.ne.s32.totalorder %s123, %s124
      %p136 = scmp.eq.s32.totalorder %s30, 1
      %p137 = por %p135, %p136
      %p139 = scmp.ne.s32.totalorder %s124, %s138
      %p140 = scmp.eq.s32.totalorder %s30, 0
      %p141 = por %p139, %p140
      %s143 = sadd.s32 %s142, 1
      %p146 = scmp.eq.s32.totalorder %s24, 1
      %p147 = scmp.ne.s32.totalorder %s142, %s144
      %p148 = scmp.eq.s32.totalorder %s24, 0
      %p149 = por %p147, %p148
      %p150 = scmp.ne.s32.totalorder %s142, %s144
      %p151 = scmp.eq.s32.totalorder %s29, 1
      %p152 = por %p150, %p151
      %p153 = scmp.ne.s32.totalorder %s144, %s145
      %p154 = scmp.eq.s32.totalorder %s29, 0
      %p155 = por %p153, %p154
      %p156 = scmp.ne.s32.totalorder %s144, %s145
      %p157 = scmp.eq.s32.totalorder %s30, 1
      %p158 = por %p156, %p157
      %p160 = scmp.ne.s32.totalorder %s145, %s159
      %p161 = scmp.eq.s32.totalorder %s30, 0
      %p162 = por %p160, %p161
      %s164 = sadd.s32 %s163, 1
      %p167 = scmp.eq.s32.totalorder %s24, 1
      %p168 = scmp.ne.s32.totalorder %s163, %s165
      %p169 = scmp.eq.s32.totalorder %s24, 0
      %p170 = por %p168, %p169
      %p171 = scmp.ne.s32.totalorder %s163, %s165
      %p172 = scmp.eq.s32.totalorder %s29, 1
      %p173 = por %p171, %p172
      %p174 = scmp.ne.s32.totalorder %s165, %s166
      %p175 = scmp.eq.s32.totalorder %s29, 0
      %p176 = por %p174, %p175
      %p177 = scmp.ne.s32.totalorder %s165, %s166
      %p178 = scmp.eq.s32.totalorder %s30, 1
      %p179 = por %p177, %p178
      %p181 = scmp.ne.s32.totalorder %s166, %s180
      %p182 = scmp.eq.s32.totalorder %s30, 0
      %p183 = por %p181, %p182
      %s185 = sadd.s32 %s184, 1
      %p188 = scmp.eq.s32.totalorder %s24, 1
      %p189 = scmp.ne.s32.totalorder %s184, %s186
      %p190 = scmp.eq.s32.totalorder %s24, 0
      %p191 = por %p189, %p190
      %p192 = scmp.ne.s32.totalorder %s184, %s186
      %p193 = scmp.eq.s32.totalorder %s29, 1
      %p194 = por %p192, %p193
      %p195 = scmp.ne.s32.totalorder %s186, %s187
      %p196 = scmp.eq.s32.totalorder %s29, 0
      %p197 = por %p195, %p196
      %p198 = scmp.ne.s32.totalorder %s186, %s187
      %p199 = scmp.eq.s32.totalorder %s30, 1
      %p200 = por %p198, %p199
      %p202 = scmp.ne.s32.totalorder %s187, %s201
      %p203 = scmp.eq.s32.totalorder %s30, 0
      %p204 = por %p202, %p203
      %s206 = sadd.s32 %s205, 1
      %p209 = scmp.eq.s32.totalorder %s24, 1
      %p210 = scmp.ne.s32.totalorder %s205, %s207
      %p211 = scmp.eq.s32.totalorder %s24, 0
      %p212 = por %p210, %p211
      %p213 = scmp.ne.s32.totalorder %s205, %s207
      %p214 = scmp.eq.s32.totalorder %s29, 1
      %p215 = por %p213, %p214
      %p216 = scmp.ne.s32.totalorder %s207, %s208
      %p217 = scmp.eq.s32.totalorder %s29, 0
      %p218 = por %p216, %p217
      %p219 = scmp.ne.s32.totalorder %s207, %s208
      %p220 = scmp.eq.s32.totalorder %s30, 1
      %p221 = por %p219, %p220
      %p223 = scmp.ne.s32.totalorder %s208, %s222
      %p224 = scmp.eq.s32.totalorder %s30, 0
      %p225 = por %p223, %p224
      %s227 = sadd.s32 %s226, 1
      %p230 = scmp.eq.s32.totalorder %s24, 1
      %p231 = scmp.ne.s32.totalorder %s226, %s228
      %p232 = scmp.eq.s32.totalorder %s24, 0
      %p233 = por %p231, %p232
      %p234 = scmp.ne.s32.totalorder %s226, %s228
      %p235 = scmp.eq.s32.totalorder %s29, 1
      %p236 = por %p234, %p235
      %p237 = scmp.ne.s32.totalorder %s228, %s229
      %p238 = scmp.eq.s32.totalorder %s29, 0
      %p239 = por %p237, %p238
      %p240 = scmp.ne.s32.totalorder %s228, %s229
      %p241 = scmp.eq.s32.totalorder %s30, 1
      %p242 = por %p240, %p241
      %p244 = scmp.ne.s32.totalorder %s229, %s243
      %p245 = scmp.eq.s32.totalorder %s30, 0
      %p246 = por %p244, %p245
      %s247 = ssub.s32 %s24, %s31
      %p248 = scmp.eq.s32.totalorder %s247, 0
      %s250 = sadd.s32 %s249, 1
      %s251 = scalar_select %p248, %s249, %s250
      %p254 = pneg %p248
      %p255 = scmp.eq.s32.totalorder %s24, 1
      %p256 = por %p254, %p255
      %p257 = scmp.ne.s32.totalorder %s249, %s252
      %p258 = scmp.eq.s32.totalorder %s24, 0
      %p259 = por %p257, %p258
      %p260 = scmp.ne.s32.totalorder %s249, %s252
      %p261 = scmp.eq.s32.totalorder %s29, 1
      %p262 = por %p260, %p261
      %p263 = scmp.ne.s32.totalorder %s252, %s253
      %p264 = scmp.eq.s32.totalorder %s29, 0
      %p265 = por %p263, %p264
      %p266 = scmp.ne.s32.totalorder %s252, %s253
      %p267 = scmp.eq.s32.totalorder %s30, 1
      %p268 = por %p266, %p267
      %p270 = scmp.ne.s32.totalorder %s253, %s269
      %p271 = scmp.eq.s32.totalorder %s30, 0
      %p272 = por %p270, %p271
      %p273 = scmp.le.s32.totalorder 1, %s24
      %p274 = scmp.lt.s32.totalorder %s24, 3
      %p275 = pnand %p273, %p274
      %p276 = pneg %p275
      // Predicated region
      $region9: #{encoder_decoder_forward.1} parent=5 // pred_check
        _
      $region10: #{encoder_decoder_forward.1} parent=5 // pred_check_branch
        %278 = sbr.rel (%p275) target = $region12
      $region11: #{encoder_decoder_forward.1} parent=5 // pred_region
        %s279 = ssub.s32 %s24, 1
        // Predicated region
        $region13: #{encoder_decoder_forward.1} parent=11 // pred_check
          %p280 = pneg %p71
        $region14: #{encoder_decoder_forward.1} parent=11 // pred_check_branch
          %282 = sbr.rel (%p280) target = $region16
        $region15: #{encoder_decoder_forward.1} parent=11 // pred_region
          %284 = vsyncadd [#allocation3], 0
          %s285 = sshll.u32 %s1, 4
          %s286 = int_to_ptr.hbm [resolvable:$true] %s285
          %s287 = sshll.u32 [#allocation2], 4
          %s288 = int_to_ptr.vmem [resolvable:$true] %s287
          %293 = dma.hbm_to_vmem [thread:$0]  %s286, 36864, %s288, [#allocation3], 128, 128, 8
        $region16: #{encoder_decoder_forward.1} parent=11 // pred_fallthru
          _
        // Predicated region
        $region17: #{encoder_decoder_forward.1} parent=11 // pred_check
          %p294 = pneg %p92
        $region18: #{encoder_decoder_forward.1} parent=11 // pred_check_branch
          %296 = sbr.rel (%p294) target = $region20
        $region19: #{encoder_decoder_forward.1} parent=11 // pred_region
          %298 = vsyncadd [#allocation6], 0
          %s299 = sshll.u32 %s2, 4
          %s300 = int_to_ptr.hbm [resolvable:$true] %s299
          %s301 = sshll.u32 [#allocation5], 4
          %s302 = int_to_ptr.vmem [resolvable:$true] %s301
          %307 = dma.hbm_to_vmem [thread:$0]  %s300, 9216, %s302, [#allocation6], 128, 128, 8
        $region20: #{encoder_decoder_forward.1} parent=11 // pred_fallthru
          _
        // Predicated region
        $region21: #{encoder_decoder_forward.1} parent=11 // pred_check
          %p308 = pneg %p113
        $region22: #{encoder_decoder_forward.1} parent=11 // pred_check_branch
          %310 = sbr.rel (%p308) target = $region24
        $region23: #{encoder_decoder_forward.1} parent=11 // pred_region
          %312 = vsyncadd [#allocation6], 0
          %s313 = sshll.u32 %s3, 4
          %s314 = int_to_ptr.hbm [resolvable:$true] %s313
          %s315 = sshll.u32 [#allocation7], 4
          %s316 = int_to_ptr.vmem [resolvable:$true] %s315
          %321 = dma.hbm_to_vmem [thread:$0]  %s314, 1152, %s316, [#allocation6], 64, 64, 4
        $region24: #{encoder_decoder_forward.1} parent=11 // pred_fallthru
          _
        // Predicated region
        $region25: #{encoder_decoder_forward.1} parent=11 // pred_check
          %p322 = pneg %p134
        $region26: #{encoder_decoder_forward.1} parent=11 // pred_check_branch
          %324 = sbr.rel (%p322) target = $region28
        $region27: #{encoder_decoder_forward.1} parent=11 // pred_region
          %326 = vsyncadd [#allocation9], 0
          %s327 = sshll.u32 %s4, 4
          %s328 = int_to_ptr.hbm [resolvable:$true] %s327
          %s329 = sshll.u32 [#allocation8], 4
          %s330 = int_to_ptr.vmem [resolvable:$true] %s329
          %335 = dma.hbm_to_vmem [thread:$0]  %s328, 288, %s330, [#allocation9], 32, 32, 2
        $region28: #{encoder_decoder_forward.1} parent=11 // pred_fallthru
          _
        // Predicated region
        $region29: #{encoder_decoder_forward.1} parent=11 // pred_check
          %p336 = pneg %p155
        $region30: #{encoder_decoder_forward.1} parent=11 // pred_check_branch
          %338 = sbr.rel (%p336) target = $region32
        $region31: #{encoder_decoder_forward.1} parent=11 // pred_region
          _
        $region32: #{encoder_decoder_forward.1} parent=11 // pred_fallthru
          _
        // Predicated region
        $region33: #{encoder_decoder_forward.1} parent=11 // pred_check
          %p339 = pneg %p176
        $region34: #{encoder_decoder_forward.1} parent=11 // pred_check_branch
          %341 = sbr.rel (%p339) target = $region36
        $region35: #{encoder_decoder_forward.1} parent=11 // pred_region
          %343 = vsyncadd [#allocation9], 0
          %s344 = sshll.u32 %s6, 4
          %s345 = int_to_ptr.hbm [resolvable:$true] %s344
          %s346 = sshll.u32 [#allocation10], 4
          %s347 = int_to_ptr.vmem [resolvable:$true] %s346
          %352 = dma.hbm_to_vmem [thread:$0]  %s345, 46080, %s347, [#allocation9], 64, 64, 4
        $region36: #{encoder_decoder_forward.1} parent=11 // pred_fallthru
          _
        // Predicated region
        $region37: #{encoder_decoder_forward.1} parent=11 // pred_check
          %p353 = pneg %p197
        $region38: #{encoder_decoder_forward.1} parent=11 // pred_check_branch
          %355 = sbr.rel (%p353) target = $region40
        $region39: #{encoder_decoder_forward.1} parent=11 // pred_region
          %357 = vsyncadd [#allocation12], 0
          %s358 = sshll.u32 %s7, 4
          %s359 = int_to_ptr.hbm [resolvable:$true] %s358
          %s360 = sshll.u32 [#allocation11], 4
          %s361 = int_to_ptr.vmem [resolvable:$true] %s360
          %366 = dma.hbm_to_vmem [thread:$0]  %s359, 80, %s361, [#allocation12], 16, 16, 1
        $region40: #{encoder_decoder_forward.1} parent=11 // pred_fallthru
          _
        // Predicated region
        $region41: #{encoder_decoder_forward.1} parent=11 // pred_check
          %p367 = pneg %p218
        $region42: #{encoder_decoder_forward.1} parent=11 // pred_check_branch
          %369 = sbr.rel (%p367) target = $region44
        $region43: #{encoder_decoder_forward.1} parent=11 // pred_region
          %371 = vsyncadd [#allocation12], 0
          %s372 = sshll.u32 %s8, 4
          %s373 = int_to_ptr.hbm [resolvable:$true] %s372
          %s374 = sshll.u32 [#allocation13], 4
          %s375 = int_to_ptr.vmem [resolvable:$true] %s374
          %380 = dma.hbm_to_vmem [thread:$0]  %s373, 1024, %s375, [#allocation12], 64, 64, 4
        $region44: #{encoder_decoder_forward.1} parent=11 // pred_fallthru
          _
        // Predicated region
        $region45: #{encoder_decoder_forward.1} parent=11 // pred_check
          %p381 = pneg %p239
        $region46: #{encoder_decoder_forward.1} parent=11 // pred_check_branch
          %383 = sbr.rel (%p381) target = $region48
        $region47: #{encoder_decoder_forward.1} parent=11 // pred_region
          %385 = vsyncadd [#allocation15], 0
          %s387 = sshll.u32 %s9, 4
          %s388 = int_to_ptr.hbm [resolvable:$true] %s387
          %s389 = sshll.u32 [#allocation14], 4
          %s390 = int_to_ptr.vmem [resolvable:$true] %s389
          %392 = dma.hbm_to_vmem [thread:$0]  %s388, 16, %s390, [#allocation15]
        $region48: #{encoder_decoder_forward.1} parent=11 // pred_fallthru
          _
      $region12: #{encoder_decoder_forward.1} parent=5 // pred_fallthru
        _
      %p393 = scmp.lt.s32.totalorder %s24, 2
      // Predicated region
      $region49: #{encoder_decoder_forward.1} parent=5 // pred_check
        %p394 = pneg %p393
      $region50: #{encoder_decoder_forward.1} parent=5 // pred_check_branch
        %396 = sbr.rel (%p394) target = $region52
      $region51: #{encoder_decoder_forward.1} parent=5 // pred_region
        // Predicated region
        $region53: #{encoder_decoder_forward.1} parent=51 // pred_check
          %p397 = pneg %p44
        $region54: #{encoder_decoder_forward.1} parent=51 // pred_check_branch
          %399 = sbr.rel (%p397) target = $region56
        $region55: #{encoder_decoder_forward.1} parent=51 // pred_region
          %p400 = scmp.lt.s32.totalorder %s24, 1
          %s401 = scalar_select %p400, %s24, 1
          %s402 = smul.addr %s401, 32
          %s403 = smul.addr %s402, 4
          %s404 = scalar_lea.vmem %s0, %s403
        $region56: #{encoder_decoder_forward.1} parent=51 // pred_fallthru
          _
      $region52: #{encoder_decoder_forward.1} parent=5 // pred_fallthru
        _
      %p405 = scmp.le.s32.totalorder 1, %s24
      %p406 = scmp.lt.s32.totalorder %s24, 3
      %p407 = pnand %p405, %p406
      %p408 = pneg %p407
      // Predicated region
      $region57: #{encoder_decoder_forward.1} parent=5 // pred_check
        _
      $region58: #{encoder_decoder_forward.1} parent=5 // pred_check_branch
        %410 = sbr.rel (%p407) target = $region60
      $region59: #{encoder_decoder_forward.1} parent=5 // pred_region
        %s411 = ssub.s32 %s24, 1
        // Predicated region
        $region61: #{encoder_decoder_forward.1} parent=59 // pred_check
          %p412 = pneg %p71
        $region62: #{encoder_decoder_forward.1} parent=59 // pred_check_branch
          %414 = sbr.rel (%p412) target = $region64
        $region63: #{encoder_decoder_forward.1} parent=59 // pred_region
          %416 = dma.done [#allocation3], 36864
        $region64: #{encoder_decoder_forward.1} parent=59 // pred_fallthru
          _
        // Predicated region
        $region65: #{encoder_decoder_forward.1} parent=59 // pred_check
          %p417 = pneg %p92
        $region66: #{encoder_decoder_forward.1} parent=59 // pred_check_branch
          %419 = sbr.rel (%p417) target = $region68
        $region67: #{encoder_decoder_forward.1} parent=59 // pred_region
          %421 = dma.done [#allocation6], 9216
        $region68: #{encoder_decoder_forward.1} parent=59 // pred_fallthru
          _
        // Predicated region
        $region69: #{encoder_decoder_forward.1} parent=59 // pred_check
          %p422 = pneg %p113
        $region70: #{encoder_decoder_forward.1} parent=59 // pred_check_branch
          %424 = sbr.rel (%p422) target = $region72
        $region71: #{encoder_decoder_forward.1} parent=59 // pred_region
          %426 = dma.done [#allocation6], 1152
        $region72: #{encoder_decoder_forward.1} parent=59 // pred_fallthru
          _
        // Predicated region
        $region73: #{encoder_decoder_forward.1} parent=59 // pred_check
          %p427 = pneg %p134
        $region74: #{encoder_decoder_forward.1} parent=59 // pred_check_branch
          %429 = sbr.rel (%p427) target = $region76
        $region75: #{encoder_decoder_forward.1} parent=59 // pred_region
          %431 = dma.done [#allocation9], 288
        $region76: #{encoder_decoder_forward.1} parent=59 // pred_fallthru
          _
        // Predicated region
        $region77: #{encoder_decoder_forward.1} parent=59 // pred_check
          %p432 = pneg %p176
        $region78: #{encoder_decoder_forward.1} parent=59 // pred_check_branch
          %434 = sbr.rel (%p432) target = $region80
        $region79: #{encoder_decoder_forward.1} parent=59 // pred_region
          %436 = dma.done [#allocation9], 46080
        $region80: #{encoder_decoder_forward.1} parent=59 // pred_fallthru
          _
        // Predicated region
        $region81: #{encoder_decoder_forward.1} parent=59 // pred_check
          %p437 = pneg %p197
        $region82: #{encoder_decoder_forward.1} parent=59 // pred_check_branch
          %439 = sbr.rel (%p437) target = $region84
        $region83: #{encoder_decoder_forward.1} parent=59 // pred_region
          %441 = dma.done [#allocation12], 80
        $region84: #{encoder_decoder_forward.1} parent=59 // pred_fallthru
          _
        // Predicated region
        $region85: #{encoder_decoder_forward.1} parent=59 // pred_check
          %p442 = pneg %p218
        $region86: #{encoder_decoder_forward.1} parent=59 // pred_check_branch
          %444 = sbr.rel (%p442) target = $region88
        $region87: #{encoder_decoder_forward.1} parent=59 // pred_region
          %446 = dma.done [#allocation12], 1024
        $region88: #{encoder_decoder_forward.1} parent=59 // pred_fallthru
          _
        // Predicated region
        $region89: #{encoder_decoder_forward.1} parent=59 // pred_check
          %p447 = pneg %p239
        $region90: #{encoder_decoder_forward.1} parent=59 // pred_check_branch
          %449 = sbr.rel (%p447) target = $region92
        $region91: #{encoder_decoder_forward.1} parent=59 // pred_region
          %451 = dma.done [#allocation15], 16
        $region92: #{encoder_decoder_forward.1} parent=59 // pred_fallthru
          _
        %p452 = scmp.lt.s32.totalorder %s29, 1
        %s453 = scalar_select %p452, %s29, 1
        %s454 = smul.addr %s453, 32
        %s455 = smul.addr %s454, 4
        %s456 = scalar_lea.vmem %s0, %s455
        %p457 = pneg %p50
        %p458 = pneg %p47
        %p459 = pneg %p71
        %p460 = pneg %p68
        %p461 = pneg %p92
        %p462 = pneg %p89
        %p463 = pneg %p113
        %p464 = pneg %p110
        %p465 = pneg %p134
        %p466 = pneg %p131
        %p467 = pneg %p155
        %p468 = pneg %p152
        %p469 = pneg %p176
        %p470 = pneg %p173
        %p471 = pneg %p197
        %p472 = pneg %p194
        %p473 = pneg %p218
        %p474 = pneg %p215
        %p475 = pneg %p239
        %p476 = pneg %p236
        %p477 = pneg %p265
        %p478 = pneg %p262
        %s479 = sand.u32 %s252, 1
        %s480 = scalar_lea.sflag [#allocation4], %s479
        %s481 = sand.u32 %s252, 1
        %s482 = scalar_lea.vmem [#allocation16], %s481
        %p483 = scmp.lt.s32.totalorder %s29, 1
        %s484 = scalar_select %p483, %s29, 1
        %s485 = smul.addr %s484, 32
        %s486 = smul.addr %s485, 4
        %s487 = scalar_lea.vmem %s0, %s486
        %v489 = vld [vmem:[%s487] sm:$0xf]
        %v490 = vld [vmem:[%s487 + $0x4] sm:$0xf]
        %v491 = vld [vmem:[%s487 + $0x8] sm:$0xf]
        %v492 = vld [vmem:[%s487 + $0xc] sm:$0xf]
        %v493 = vld [vmem:[%s487 + $0x10] sm:$0xf]
        %v494 = vld [vmem:[%s487 + $0x14] sm:$0xf]
        %v495 = vld [vmem:[%s487 + $0x18] sm:$0xf]
        %v496 = vld [vmem:[%s487 + $0x1c] sm:$0xf]
        %v497 = vld [vmem:[%s487 + $0x20] sm:$0xf]
        %v498 = vld [vmem:[%s487 + $0x24] sm:$0xf]
        %v499 = vld [vmem:[%s487 + $0x28] sm:$0xf]
        %v500 = vld [vmem:[%s487 + $0x2c] sm:$0xf]
        %v501 = vld [vmem:[%s487 + $0x30] sm:$0xf]
        %v502 = vld [vmem:[%s487 + $0x34] sm:$0xf]
        %v503 = vld [vmem:[%s487 + $0x38] sm:$0xf]
        %v504 = vld [vmem:[%s487 + $0x3c] sm:$0xf]
        %v505 = vld [vmem:[%s487 + $0x40] sm:$0xf]
        %v506 = vld [vmem:[%s487 + $0x44] sm:$0xf]
        %v507 = vld [vmem:[%s487 + $0x48] sm:$0xf]
        %v508 = vld [vmem:[%s487 + $0x4c] sm:$0xf]
        %v509 = vld [vmem:[%s487 + $0x50] sm:$0xf]
        %v510 = vld [vmem:[%s487 + $0x54] sm:$0xf]
        %v511 = vld [vmem:[%s487 + $0x58] sm:$0xf]
        %v512 = vld [vmem:[%s487 + $0x5c] sm:$0xf]
        %v513 = vld [vmem:[%s487 + $0x60] sm:$0xf]
        %v514 = vld [vmem:[%s487 + $0x64] sm:$0xf]
        %v515 = vld [vmem:[%s487 + $0x68] sm:$0xf]
        %v516 = vld [vmem:[%s487 + $0x6c] sm:$0xf]
        %v517 = vld [vmem:[%s487 + $0x70] sm:$0xf]
        %v518 = vld [vmem:[%s487 + $0x74] sm:$0xf]
        %v519 = vld [vmem:[%s487 + $0x78] sm:$0xf]
        %v520 = vld [vmem:[%s487 + $0x7c] sm:$0xf]
        %v521 = vld [vmem:[#allocation2] sm:$0xff]
        %v522 = vld [vmem:[#allocation2 + $0x8] sm:$0xff]
        %v523 = vld [vmem:[#allocation2 + $0x10] sm:$0xff]
        %v524 = vld [vmem:[#allocation2 + $0x18] sm:$0xff]
        %v525 = vld [vmem:[#allocation2 + $0x20] sm:$0xff]
        %v526 = vld [vmem:[#allocation2 + $0x28] sm:$0xff]
        %v527 = vld [vmem:[#allocation2 + $0x30] sm:$0xff]
        %v528 = vld [vmem:[#allocation2 + $0x38] sm:$0xff]
        %v529 = vld [vmem:[#allocation2 + $0x40] sm:$0xff]
        %v530 = vld [vmem:[#allocation2 + $0x48] sm:$0xff]
        %v531 = vld [vmem:[#allocation2 + $0x50] sm:$0xff]
        %v532 = vld [vmem:[#allocation2 + $0x58] sm:$0xff]
        %v533 = vld [vmem:[#allocation2 + $0x60] sm:$0xff]
        %v534 = vld [vmem:[#allocation2 + $0x68] sm:$0xff]
        %v535 = vld [vmem:[#allocation2 + $0x70] sm:$0xff]
        %v536 = vld [vmem:[#allocation2 + $0x78] sm:$0xff]
        %v537 = vld [vmem:[#allocation2 + $0x80] sm:$0xff]
        %v538 = vld [vmem:[#allocation2 + $0x88] sm:$0xff]
        %v539 = vld [vmem:[#allocation2 + $0x90] sm:$0xff]
        %v540 = vld [vmem:[#allocation2 + $0x98] sm:$0xff]
        %v541 = vld [vmem:[#allocation2 + $0xa0] sm:$0xff]
        %v542 = vld [vmem:[#allocation2 + $0xa8] sm:$0xff]
        %v543 = vld [vmem:[#allocation2 + $0xb0] sm:$0xff]
        %v544 = vld [vmem:[#allocation2 + $0xb8] sm:$0xff]
        %v545 = vld [vmem:[#allocation2 + $0xc0] sm:$0xff]
        %v546 = vld [vmem:[#allocation2 + $0xc8] sm:$0xff]
        %v547 = vld [vmem:[#allocation2 + $0xd0] sm:$0xff]
        %v548 = vld [vmem:[#allocation2 + $0xd8] sm:$0xff]
        %v549 = vld [vmem:[#allocation2 + $0xe0] sm:$0xff]
        %v550 = vld [vmem:[#allocation2 + $0xe8] sm:$0xff]
        %v551 = vld [vmem:[#allocation2 + $0xf0] sm:$0xff]
        %v552 = vld [vmem:[#allocation2 + $0xf8] sm:$0xff]
        %v585 = vunpack.c.l.b16 %v521
        %v586 = vunpack.c.h.b16 %v521
        %v587 = vunpack.c.l.b16 %v522
        %v588 = vunpack.c.h.b16 %v522
        %v589 = vunpack.c.l.b16 %v523
        %v590 = vunpack.c.h.b16 %v523
        %v591 = vunpack.c.l.b16 %v524
        %v592 = vunpack.c.h.b16 %v524
        %v593 = vunpack.c.l.b16 %v525
        %v594 = vunpack.c.h.b16 %v525
        %v595 = vunpack.c.l.b16 %v526
        %v596 = vunpack.c.h.b16 %v526
        %v597 = vunpack.c.l.b16 %v527
        %v598 = vunpack.c.h.b16 %v527
        %v599 = vunpack.c.l.b16 %v528
        %v600 = vunpack.c.h.b16 %v528
        %v601 = vunpack.c.l.b16 %v529
        %v602 = vunpack.c.h.b16 %v529
        %v603 = vunpack.c.l.b16 %v530
        %v604 = vunpack.c.h.b16 %v530
        %v605 = vunpack.c.l.b16 %v531
        %v606 = vunpack.c.h.b16 %v531
        %v607 = vunpack.c.l.b16 %v532
        %v608 = vunpack.c.h.b16 %v532
        %v609 = vunpack.c.l.b16 %v533
        %v610 = vunpack.c.h.b16 %v533
        %v611 = vunpack.c.l.b16 %v534
        %v612 = vunpack.c.h.b16 %v534
        %v613 = vunpack.c.l.b16 %v535
        %v614 = vunpack.c.h.b16 %v535
        %v615 = vunpack.c.l.b16 %v536
        %v616 = vunpack.c.h.b16 %v536
        %v617 = vunpack.c.l.b16 %v537
        %v618 = vunpack.c.h.b16 %v537
        %v619 = vunpack.c.l.b16 %v538
        %v620 = vunpack.c.h.b16 %v538
        %v621 = vunpack.c.l.b16 %v539
        %v622 = vunpack.c.h.b16 %v539
        %v623 = vunpack.c.l.b16 %v540
        %v624 = vunpack.c.h.b16 %v540
        %v625 = vunpack.c.l.b16 %v541
        %v626 = vunpack.c.h.b16 %v541
        %v627 = vunpack.c.l.b16 %v542
        %v628 = vunpack.c.h.b16 %v542
        %v629 = vunpack.c.l.b16 %v543
        %v630 = vunpack.c.h.b16 %v543
        %v631 = vunpack.c.l.b16 %v544
        %v632 = vunpack.c.h.b16 %v544
        %v633 = vunpack.c.l.b16 %v545
        %v634 = vunpack.c.h.b16 %v545
        %v635 = vunpack.c.l.b16 %v546
        %v636 = vunpack.c.h.b16 %v546
        %v637 = vunpack.c.l.b16 %v547
        %v638 = vunpack.c.h.b16 %v547
        %v639 = vunpack.c.l.b16 %v548
        %v640 = vunpack.c.h.b16 %v548
        %v641 = vunpack.c.l.b16 %v549
        %v642 = vunpack.c.h.b16 %v549
        %v643 = vunpack.c.l.b16 %v550
        %v644 = vunpack.c.h.b16 %v550
        %v645 = vunpack.c.l.b16 %v551
        %v646 = vunpack.c.h.b16 %v551
        %v647 = vunpack.c.l.b16 %v552
        %v648 = vunpack.c.h.b16 %v552
        %v649 = vpack.c.b16 %v587, %v585
        %v650 = vpack.c.b16 %v588, %v586
        %v651 = vpack.c.b16 %v591, %v589
        %v652 = vpack.c.b16 %v592, %v590
        %v653 = vpack.c.b16 %v595, %v593
        %v654 = vpack.c.b16 %v596, %v594
        %v655 = vpack.c.b16 %v599, %v597
        %v656 = vpack.c.b16 %v600, %v598
        %v657 = vpack.c.b16 %v603, %v601
        %v658 = vpack.c.b16 %v604, %v602
        %v659 = vpack.c.b16 %v607, %v605
        %v660 = vpack.c.b16 %v608, %v606
        %v661 = vpack.c.b16 %v611, %v609
        %v662 = vpack.c.b16 %v612, %v610
        %v663 = vpack.c.b16 %v615, %v613
        %v664 = vpack.c.b16 %v616, %v614
        %v665 = vpack.c.b16 %v619, %v617
        %v666 = vpack.c.b16 %v620, %v618
        %v667 = vpack.c.b16 %v623, %v621
        %v668 = vpack.c.b16 %v624, %v622
        %v669 = vpack.c.b16 %v627, %v625
        %v670 = vpack.c.b16 %v628, %v626
        %v671 = vpack.c.b16 %v631, %v629
        %v672 = vpack.c.b16 %v632, %v630
        %v673 = vpack.c.b16 %v635, %v633
        %v674 = vpack.c.b16 %v636, %v634
        %v675 = vpack.c.b16 %v639, %v637
        %v676 = vpack.c.b16 %v640, %v638
        %v677 = vpack.c.b16 %v643, %v641
        %v678 = vpack.c.b16 %v644, %v642
        %v679 = vpack.c.b16 %v647, %v645
        %v680 = vpack.c.b16 %v648, %v646
        %v745 = vunpack.c.l.b16 %v489
        %v746 = vunpack.c.l.b16 %v490
        %v747 = vunpack.c.l.b16 %v491
        %v748 = vunpack.c.l.b16 %v492
        %v749 = vunpack.c.l.b16 %v493
        %v750 = vunpack.c.l.b16 %v494
        %v751 = vunpack.c.l.b16 %v495
        %v752 = vunpack.c.l.b16 %v496
        %v753 = vunpack.c.l.b16 %v497
        %v754 = vunpack.c.l.b16 %v498
        %v755 = vunpack.c.l.b16 %v499
        %v756 = vunpack.c.l.b16 %v500
        %v757 = vunpack.c.l.b16 %v501
        %v758 = vunpack.c.l.b16 %v502
        %v759 = vunpack.c.l.b16 %v503
        %v760 = vunpack.c.l.b16 %v504
        %v761 = vunpack.c.l.b16 %v505
        %v762 = vunpack.c.l.b16 %v506
        %v763 = vunpack.c.l.b16 %v507
        %v764 = vunpack.c.l.b16 %v508
        %v765 = vunpack.c.l.b16 %v509
        %v766 = vunpack.c.l.b16 %v510
        %v767 = vunpack.c.l.b16 %v511
        %v768 = vunpack.c.l.b16 %v512
        %v769 = vunpack.c.l.b16 %v513
        %v770 = vunpack.c.l.b16 %v514
        %v771 = vunpack.c.l.b16 %v515
        %v772 = vunpack.c.l.b16 %v516
        %v773 = vunpack.c.l.b16 %v517
        %v774 = vunpack.c.l.b16 %v518
        %v775 = vunpack.c.l.b16 %v519
        %v776 = vunpack.c.l.b16 %v520
        %v777 = vpack.c.b16 %v746, %v745
        %v778 = vpack.c.b16 %v748, %v747
        %v779 = vpack.c.b16 %v750, %v749
        %v780 = vpack.c.b16 %v752, %v751
        %v781 = vpack.c.b16 %v754, %v753
        %v782 = vpack.c.b16 %v756, %v755
        %v783 = vpack.c.b16 %v758, %v757
        %v784 = vpack.c.b16 %v760, %v759
        %v785 = vpack.c.b16 %v762, %v761
        %v786 = vpack.c.b16 %v764, %v763
        %v787 = vpack.c.b16 %v766, %v765
        %v788 = vpack.c.b16 %v768, %v767
        %v789 = vpack.c.b16 %v770, %v769
        %v790 = vpack.c.b16 %v772, %v771
        %v791 = vpack.c.b16 %v774, %v773
        %v792 = vpack.c.b16 %v776, %v775
        %809 = vmatpush.bf16.msra.mxu0 %v784
        %810 = vmatpush.bf16.msra.mxu0 %v783
        %811 = vmatpush.bf16.msra.mxu0 %v782
        %812 = vmatpush.bf16.msra.mxu0 %v781
        %813 = vmatpush.bf16.msra.mxu0 %v780
        %814 = vmatpush.bf16.msra.mxu0 %v779
        %815 = vmatpush.bf16.msra.mxu0 %v778
        %816 = vmatpush.bf16.msra.mxu0 %v777
        %817 = vmatmul.bf16.gmra.mxu0 %v649
        %v818 = vpop.f32.mrf.mxu0
        %v819 = vadd.f32 0.0, %v818
        %v820 = vpop.f32.mrf.mxu0
        %v821 = vadd.f32 0.0, %v820
        %822 = vmatmul.bf16.gmra.mxu0 %v651
        %v823 = vpop.f32.mrf.mxu0
        %v824 = vadd.f32 0.0, %v823
        %v825 = vpop.f32.mrf.mxu0
        %v826 = vadd.f32 0.0, %v825
        %827 = vmatmul.bf16.gmra.mxu0 %v653
        %v828 = vpop.f32.mrf.mxu0
        %v829 = vadd.f32 0.0, %v828
        %v830 = vpop.f32.mrf.mxu0
        %v831 = vadd.f32 0.0, %v830
        %832 = vmatmul.bf16.gmra.mxu0 %v655
        %v833 = vpop.f32.mrf.mxu0
        %v834 = vadd.f32 0.0, %v833
        %v835 = vpop.f32.mrf.mxu0
        %v836 = vadd.f32 0.0, %v835
        %837 = vmatmul.bf16.gmra.mxu0 %v657
        %v838 = vpop.f32.mrf.mxu0
        %v839 = vadd.f32 0.0, %v838
        %v840 = vpop.f32.mrf.mxu0
        %v841 = vadd.f32 0.0, %v840
        %842 = vmatmul.bf16.gmra.mxu0 %v659
        %v843 = vpop.f32.mrf.mxu0
        %v844 = vadd.f32 0.0, %v843
        %v845 = vpop.f32.mrf.mxu0
        %v846 = vadd.f32 0.0, %v845
        %847 = vmatmul.bf16.gmra.mxu0 %v661
        %v848 = vpop.f32.mrf.mxu0
        %v849 = vadd.f32 0.0, %v848
        %v850 = vpop.f32.mrf.mxu0
        %v851 = vadd.f32 0.0, %v850
        %852 = vmatmul.bf16.gmra.mxu0 %v663
        %v853 = vpop.f32.mrf.mxu0
        %v854 = vadd.f32 0.0, %v853
        %v855 = vpop.f32.mrf.mxu0
        %v856 = vadd.f32 0.0, %v855
        %857 = vmatmul.bf16.gmra.mxu0 %v665
        %v858 = vpop.f32.mrf.mxu0
        %v859 = vadd.f32 0.0, %v858
        %v860 = vpop.f32.mrf.mxu0
        %v861 = vadd.f32 0.0, %v860
        %862 = vmatmul.bf16.gmra.mxu0 %v667
        %v863 = vpop.f32.mrf.mxu0
        %v864 = vadd.f32 0.0, %v863
        %v865 = vpop.f32.mrf.mxu0
        %v866 = vadd.f32 0.0, %v865
        %867 = vmatmul.bf16.gmra.mxu0 %v669
        %v868 = vpop.f32.mrf.mxu0
        %v869 = vadd.f32 0.0, %v868
        %v870 = vpop.f32.mrf.mxu0
        %v871 = vadd.f32 0.0, %v870
        %872 = vmatmul.bf16.gmra.mxu0 %v671
        %v873 = vpop.f32.mrf.mxu0
        %v874 = vadd.f32 0.0, %v873
        %v875 = vpop.f32.mrf.mxu0
        %v876 = vadd.f32 0.0, %v875
        %877 = vmatmul.bf16.gmra.mxu0 %v673
        %v878 = vpop.f32.mrf.mxu0
        %v879 = vadd.f32 0.0, %v878
        %v880 = vpop.f32.mrf.mxu0
        %v881 = vadd.f32 0.0, %v880
        %882 = vmatmul.bf16.gmra.mxu0 %v675
        %v883 = vpop.f32.mrf.mxu0
        %v884 = vadd.f32 0.0, %v883
        %v885 = vpop.f32.mrf.mxu0
        %v886 = vadd.f32 0.0, %v885
        %887 = vmatmul.bf16.gmra.mxu0 %v677
        %v888 = vpop.f32.mrf.mxu0
        %v889 = vadd.f32 0.0, %v888
        %v890 = vpop.f32.mrf.mxu0
        %v891 = vadd.f32 0.0, %v890
        %892 = vmatmul.bf16.gmra.mxu0 %v679
        %v893 = vpop.f32.mrf.mxu0
        %v894 = vadd.f32 0.0, %v893
        %v895 = vpop.f32.mrf.mxu0
        %v896 = vadd.f32 0.0, %v895
        %897 = vdwg.mxu0
        %898 = vmatpush.bf16.msra.mxu0 %v792
        %899 = vmatpush.bf16.msra.mxu0 %v791
        %900 = vmatpush.bf16.msra.mxu0 %v790
        %901 = vmatpush.bf16.msra.mxu0 %v789
        %902 = vmatpush.bf16.msra.mxu0 %v788
        %903 = vmatpush.bf16.msra.mxu0 %v787
        %904 = vmatpush.bf16.msra.mxu0 %v786
        %905 = vmatpush.bf16.msra.mxu0 %v785
        %906 = vmatmul.bf16.gmra.mxu0 %v650
        %v907 = vpop.f32.mrf.mxu0
        %v908 = vadd.f32 %v819, %v907
        %v909 = vpop.f32.mrf.mxu0
        %v910 = vadd.f32 %v821, %v909
        %911 = vmatmul.bf16.gmra.mxu0 %v652
        %v912 = vpop.f32.mrf.mxu0
        %v913 = vadd.f32 %v824, %v912
        %v914 = vpop.f32.mrf.mxu0
        %v915 = vadd.f32 %v826, %v914
        %916 = vmatmul.bf16.gmra.mxu0 %v654
        %v917 = vpop.f32.mrf.mxu0
        %v918 = vadd.f32 %v829, %v917
        %v919 = vpop.f32.mrf.mxu0
        %v920 = vadd.f32 %v831, %v919
        %921 = vmatmul.bf16.gmra.mxu0 %v656
        %v922 = vpop.f32.mrf.mxu0
        %v923 = vadd.f32 %v834, %v922
        %v924 = vpop.f32.mrf.mxu0
        %v925 = vadd.f32 %v836, %v924
        %926 = vmatmul.bf16.gmra.mxu0 %v658
        %v927 = vpop.f32.mrf.mxu0
        %v928 = vadd.f32 %v839, %v927
        %v929 = vpop.f32.mrf.mxu0
        %v930 = vadd.f32 %v841, %v929
        %931 = vmatmul.bf16.gmra.mxu0 %v660
        %v932 = vpop.f32.mrf.mxu0
        %v933 = vadd.f32 %v844, %v932
        %v934 = vpop.f32.mrf.mxu0
        %v935 = vadd.f32 %v846, %v934
        %936 = vmatmul.bf16.gmra.mxu0 %v662
        %v937 = vpop.f32.mrf.mxu0
        %v938 = vadd.f32 %v849, %v937
        %v939 = vpop.f32.mrf.mxu0
        %v940 = vadd.f32 %v851, %v939
        %941 = vmatmul.bf16.gmra.mxu0 %v664
        %v942 = vpop.f32.mrf.mxu0
        %v943 = vadd.f32 %v854, %v942
        %v944 = vpop.f32.mrf.mxu0
        %v945 = vadd.f32 %v856, %v944
        %946 = vmatmul.bf16.gmra.mxu0 %v666
        %v947 = vpop.f32.mrf.mxu0
        %v948 = vadd.f32 %v859, %v947
        %v949 = vpop.f32.mrf.mxu0
        %v950 = vadd.f32 %v861, %v949
        %951 = vmatmul.bf16.gmra.mxu0 %v668
        %v952 = vpop.f32.mrf.mxu0
        %v953 = vadd.f32 %v864, %v952
        %v954 = vpop.f32.mrf.mxu0
        %v955 = vadd.f32 %v866, %v954
        %956 = vmatmul.bf16.gmra.mxu0 %v670
        %v957 = vpop.f32.mrf.mxu0
        %v958 = vadd.f32 %v869, %v957
        %v959 = vpop.f32.mrf.mxu0
        %v960 = vadd.f32 %v871, %v959
        %961 = vmatmul.bf16.gmra.mxu0 %v672
        %v962 = vpop.f32.mrf.mxu0
        %v963 = vadd.f32 %v874, %v962
        %v964 = vpop.f32.mrf.mxu0
        %v965 = vadd.f32 %v876, %v964
        %966 = vmatmul.bf16.gmra.mxu0 %v674
        %v967 = vpop.f32.mrf.mxu0
        %v968 = vadd.f32 %v879, %v967
        %v969 = vpop.f32.mrf.mxu0
        %v970 = vadd.f32 %v881, %v969
        %971 = vmatmul.bf16.gmra.mxu0 %v676
        %v972 = vpop.f32.mrf.mxu0
        %v973 = vadd.f32 %v884, %v972
        %v974 = vpop.f32.mrf.mxu0
        %v975 = vadd.f32 %v886, %v974
        %976 = vmatmul.bf16.gmra.mxu0 %v678
        %v977 = vpop.f32.mrf.mxu0
        %v978 = vadd.f32 %v889, %v977
        %v979 = vpop.f32.mrf.mxu0
        %v980 = vadd.f32 %v891, %v979
        %981 = vmatmul.bf16.gmra.mxu0 %v680
        %v982 = vpop.f32.mrf.mxu0
        %v983 = vadd.f32 %v894, %v982
        %v984 = vpop.f32.mrf.mxu0
        %v985 = vadd.f32 %v896, %v984
        %986 = vdwg.mxu0
        %v987 = vpack.c.bf16 %v910, %v908
        %v988 = vpack.c.bf16 %v915, %v913
        %v989 = vpack.c.bf16 %v920, %v918
        %v990 = vpack.c.bf16 %v925, %v923
        %v991 = vpack.c.bf16 %v930, %v928
        %v992 = vpack.c.bf16 %v935, %v933
        %v993 = vpack.c.bf16 %v940, %v938
        %v994 = vpack.c.bf16 %v945, %v943
        %v995 = vpack.c.bf16 %v950, %v948
        %v996 = vpack.c.bf16 %v955, %v953
        %v997 = vpack.c.bf16 %v960, %v958
        %v998 = vpack.c.bf16 %v965, %v963
        %v999 = vpack.c.bf16 %v970, %v968
        %v1000 = vpack.c.bf16 %v975, %v973
        %v1001 = vpack.c.bf16 %v980, %v978
        %v1002 = vpack.c.bf16 %v985, %v983
        %v1003 = vld [vmem:[#allocation10] sm:$0xf]
        %v1004 = vld [vmem:[#allocation10 + $0x4] sm:$0xf]
        %v1005 = vld [vmem:[#allocation10 + $0x8] sm:$0xf]
        %v1006 = vld [vmem:[#allocation10 + $0xc] sm:$0xf]
        %v1007 = vld [vmem:[#allocation10 + $0x10] sm:$0xf]
        %v1008 = vld [vmem:[#allocation10 + $0x14] sm:$0xf]
        %v1009 = vld [vmem:[#allocation10 + $0x18] sm:$0xf]
        %v1010 = vld [vmem:[#allocation10 + $0x1c] sm:$0xf]
        %v1011 = vld [vmem:[#allocation10 + $0x20] sm:$0xf]
        %v1012 = vld [vmem:[#allocation10 + $0x24] sm:$0xf]
        %v1013 = vld [vmem:[#allocation10 + $0x28] sm:$0xf]
        %v1014 = vld [vmem:[#allocation10 + $0x2c] sm:$0xf]
        %v1015 = vld [vmem:[#allocation10 + $0x30] sm:$0xf]
        %v1016 = vld [vmem:[#allocation10 + $0x34] sm:$0xf]
        %v1017 = vld [vmem:[#allocation10 + $0x38] sm:$0xf]
        %v1018 = vld [vmem:[#allocation10 + $0x3c] sm:$0xf]
        %s1019 = scalar_lea.vmem [#allocation2], 256
        %v1020 = vld [vmem:[%s1019] sm:$0xff]
        %v1021 = vld [vmem:[%s1019 + $0x8] sm:$0xff]
        %v1022 = vld [vmem:[%s1019 + $0x10] sm:$0xff]
        %v1023 = vld [vmem:[%s1019 + $0x18] sm:$0xff]
        %v1024 = vld [vmem:[%s1019 + $0x20] sm:$0xff]
        %v1025 = vld [vmem:[%s1019 + $0x28] sm:$0xff]
        %v1026 = vld [vmem:[%s1019 + $0x30] sm:$0xff]
        %v1027 = vld [vmem:[%s1019 + $0x38] sm:$0xff]
        %v1028 = vld [vmem:[%s1019 + $0x40] sm:$0xff]
        %v1029 = vld [vmem:[%s1019 + $0x48] sm:$0xff]
        %v1030 = vld [vmem:[%s1019 + $0x50] sm:$0xff]
        %v1031 = vld [vmem:[%s1019 + $0x58] sm:$0xff]
        %v1032 = vld [vmem:[%s1019 + $0x60] sm:$0xff]
        %v1033 = vld [vmem:[%s1019 + $0x68] sm:$0xff]
        %v1034 = vld [vmem:[%s1019 + $0x70] sm:$0xff]
        %v1035 = vld [vmem:[%s1019 + $0x78] sm:$0xff]
        %v1036 = vld [vmem:[%s1019 + $0x80] sm:$0xff]
        %v1037 = vld [vmem:[%s1019 + $0x88] sm:$0xff]
        %v1038 = vld [vmem:[%s1019 + $0x90] sm:$0xff]
        %v1039 = vld [vmem:[%s1019 + $0x98] sm:$0xff]
        %v1040 = vld [vmem:[%s1019 + $0xa0] sm:$0xff]
        %v1041 = vld [vmem:[%s1019 + $0xa8] sm:$0xff]
        %v1042 = vld [vmem:[%s1019 + $0xb0] sm:$0xff]
        %v1043 = vld [vmem:[%s1019 + $0xb8] sm:$0xff]
        %v1044 = vld [vmem:[%s1019 + $0xc0] sm:$0xff]
        %v1045 = vld [vmem:[%s1019 + $0xc8] sm:$0xff]
        %v1046 = vld [vmem:[%s1019 + $0xd0] sm:$0xff]
        %v1047 = vld [vmem:[%s1019 + $0xd8] sm:$0xff]
        %v1048 = vld [vmem:[%s1019 + $0xe0] sm:$0xff]
        %v1049 = vld [vmem:[%s1019 + $0xe8] sm:$0xff]
        %v1050 = vld [vmem:[%s1019 + $0xf0] sm:$0xff]
        %v1051 = vld [vmem:[%s1019 + $0xf8] sm:$0xff]
        %v1084 = vunpack.c.l.b16 %v1020
        %v1085 = vunpack.c.h.b16 %v1020
        %v1086 = vunpack.c.l.b16 %v1021
        %v1087 = vunpack.c.h.b16 %v1021
        %v1088 = vunpack.c.l.b16 %v1022
        %v1089 = vunpack.c.h.b16 %v1022
        %v1090 = vunpack.c.l.b16 %v1023
        %v1091 = vunpack.c.h.b16 %v1023
        %v1092 = vunpack.c.l.b16 %v1024
        %v1093 = vunpack.c.h.b16 %v1024
        %v1094 = vunpack.c.l.b16 %v1025
        %v1095 = vunpack.c.h.b16 %v1025
        %v1096 = vunpack.c.l.b16 %v1026
        %v1097 = vunpack.c.h.b16 %v1026
        %v1098 = vunpack.c.l.b16 %v1027
        %v1099 = vunpack.c.h.b16 %v1027
        %v1100 = vunpack.c.l.b16 %v1028
        %v1101 = vunpack.c.h.b16 %v1028
        %v1102 = vunpack.c.l.b16 %v1029
        %v1103 = vunpack.c.h.b16 %v1029
        %v1104 = vunpack.c.l.b16 %v1030
        %v1105 = vunpack.c.h.b16 %v1030
        %v1106 = vunpack.c.l.b16 %v1031
        %v1107 = vunpack.c.h.b16 %v1031
        %v1108 = vunpack.c.l.b16 %v1032
        %v1109 = vunpack.c.h.b16 %v1032
        %v1110 = vunpack.c.l.b16 %v1033
        %v1111 = vunpack.c.h.b16 %v1033
        %v1112 = vunpack.c.l.b16 %v1034
        %v1113 = vunpack.c.h.b16 %v1034
        %v1114 = vunpack.c.l.b16 %v1035
        %v1115 = vunpack.c.h.b16 %v1035
        %v1116 = vunpack.c.l.b16 %v1036
        %v1117 = vunpack.c.h.b16 %v1036
        %v1118 = vunpack.c.l.b16 %v1037
        %v1119 = vunpack.c.h.b16 %v1037
        %v1120 = vunpack.c.l.b16 %v1038
        %v1121 = vunpack.c.h.b16 %v1038
        %v1122 = vunpack.c.l.b16 %v1039
        %v1123 = vunpack.c.h.b16 %v1039
        %v1124 = vunpack.c.l.b16 %v1040
        %v1125 = vunpack.c.h.b16 %v1040
        %v1126 = vunpack.c.l.b16 %v1041
        %v1127 = vunpack.c.h.b16 %v1041
        %v1128 = vunpack.c.l.b16 %v1042
        %v1129 = vunpack.c.h.b16 %v1042
        %v1130 = vunpack.c.l.b16 %v1043
        %v1131 = vunpack.c.h.b16 %v1043
        %v1132 = vunpack.c.l.b16 %v1044
        %v1133 = vunpack.c.h.b16 %v1044
        %v1134 = vunpack.c.l.b16 %v1045
        %v1135 = vunpack.c.h.b16 %v1045
        %v1136 = vunpack.c.l.b16 %v1046
        %v1137 = vunpack.c.h.b16 %v1046
        %v1138 = vunpack.c.l.b16 %v1047
        %v1139 = vunpack.c.h.b16 %v1047
        %v1140 = vunpack.c.l.b16 %v1048
        %v1141 = vunpack.c.h.b16 %v1048
        %v1142 = vunpack.c.l.b16 %v1049
        %v1143 = vunpack.c.h.b16 %v1049
        %v1144 = vunpack.c.l.b16 %v1050
        %v1145 = vunpack.c.h.b16 %v1050
        %v1146 = vunpack.c.l.b16 %v1051
        %v1147 = vunpack.c.h.b16 %v1051
        %v1148 = vpack.c.b16 %v1086, %v1084
        %v1149 = vpack.c.b16 %v1087, %v1085
        %v1150 = vpack.c.b16 %v1090, %v1088
        %v1151 = vpack.c.b16 %v1091, %v1089
        %v1152 = vpack.c.b16 %v1094, %v1092
        %v1153 = vpack.c.b16 %v1095, %v1093
        %v1154 = vpack.c.b16 %v1098, %v1096
        %v1155 = vpack.c.b16 %v1099, %v1097
        %v1156 = vpack.c.b16 %v1102, %v1100
        %v1157 = vpack.c.b16 %v1103, %v1101
        %v1158 = vpack.c.b16 %v1106, %v1104
        %v1159 = vpack.c.b16 %v1107, %v1105
        %v1160 = vpack.c.b16 %v1110, %v1108
        %v1161 = vpack.c.b16 %v1111, %v1109
        %v1162 = vpack.c.b16 %v1114, %v1112
        %v1163 = vpack.c.b16 %v1115, %v1113
        %v1164 = vpack.c.b16 %v1118, %v1116
        %v1165 = vpack.c.b16 %v1119, %v1117
        %v1166 = vpack.c.b16 %v1122, %v1120
        %v1167 = vpack.c.b16 %v1123, %v1121
        %v1168 = vpack.c.b16 %v1126, %v1124
        %v1169 = vpack.c.b16 %v1127, %v1125
        %v1170 = vpack.c.b16 %v1130, %v1128
        %v1171 = vpack.c.b16 %v1131, %v1129
        %v1172 = vpack.c.b16 %v1134, %v1132
        %v1173 = vpack.c.b16 %v1135, %v1133
        %v1174 = vpack.c.b16 %v1138, %v1136
        %v1175 = vpack.c.b16 %v1139, %v1137
        %v1176 = vpack.c.b16 %v1142, %v1140
        %v1177 = vpack.c.b16 %v1143, %v1141
        %v1178 = vpack.c.b16 %v1146, %v1144
        %v1179 = vpack.c.b16 %v1147, %v1145
        %1212 = vmatpush.bf16.msra.mxu0 %v784
        %1213 = vmatpush.bf16.msra.mxu0 %v783
        %1214 = vmatpush.bf16.msra.mxu0 %v782
        %1215 = vmatpush.bf16.msra.mxu0 %v781
        %1216 = vmatpush.bf16.msra.mxu0 %v780
        %1217 = vmatpush.bf16.msra.mxu0 %v779
        %1218 = vmatpush.bf16.msra.mxu0 %v778
        %1219 = vmatpush.bf16.msra.mxu0 %v777
        %1220 = vmatmul.bf16.gmra.mxu0 %v1148
        %v1221 = vpop.f32.mrf.mxu0
        %v1222 = vadd.f32 0.0, %v1221
        %v1223 = vpop.f32.mrf.mxu0
        %v1224 = vadd.f32 0.0, %v1223
        %1225 = vmatmul.bf16.gmra.mxu0 %v1150
        %v1226 = vpop.f32.mrf.mxu0
        %v1227 = vadd.f32 0.0, %v1226
        %v1228 = vpop.f32.mrf.mxu0
        %v1229 = vadd.f32 0.0, %v1228
        %1230 = vmatmul.bf16.gmra.mxu0 %v1152
        %v1231 = vpop.f32.mrf.mxu0
        %v1232 = vadd.f32 0.0, %v1231
        %v1233 = vpop.f32.mrf.mxu0
        %v1234 = vadd.f32 0.0, %v1233
        %1235 = vmatmul.bf16.gmra.mxu0 %v1154
        %v1236 = vpop.f32.mrf.mxu0
        %v1237 = vadd.f32 0.0, %v1236
        %v1238 = vpop.f32.mrf.mxu0
        %v1239 = vadd.f32 0.0, %v1238
        %1240 = vmatmul.bf16.gmra.mxu0 %v1156
        %v1241 = vpop.f32.mrf.mxu0
        %v1242 = vadd.f32 0.0, %v1241
        %v1243 = vpop.f32.mrf.mxu0
        %v1244 = vadd.f32 0.0, %v1243
        %1245 = vmatmul.bf16.gmra.mxu0 %v1158
        %v1246 = vpop.f32.mrf.mxu0
        %v1247 = vadd.f32 0.0, %v1246
        %v1248 = vpop.f32.mrf.mxu0
        %v1249 = vadd.f32 0.0, %v1248
        %1250 = vmatmul.bf16.gmra.mxu0 %v1160
        %v1251 = vpop.f32.mrf.mxu0
        %v1252 = vadd.f32 0.0, %v1251
        %v1253 = vpop.f32.mrf.mxu0
        %v1254 = vadd.f32 0.0, %v1253
        %1255 = vmatmul.bf16.gmra.mxu0 %v1162
        %v1256 = vpop.f32.mrf.mxu0
        %v1257 = vadd.f32 0.0, %v1256
        %v1258 = vpop.f32.mrf.mxu0
        %v1259 = vadd.f32 0.0, %v1258
        %1260 = vmatmul.bf16.gmra.mxu0 %v1164
        %v1261 = vpop.f32.mrf.mxu0
        %v1262 = vadd.f32 0.0, %v1261
        %v1263 = vpop.f32.mrf.mxu0
        %v1264 = vadd.f32 0.0, %v1263
        %1265 = vmatmul.bf16.gmra.mxu0 %v1166
        %v1266 = vpop.f32.mrf.mxu0
        %v1267 = vadd.f32 0.0, %v1266
        %v1268 = vpop.f32.mrf.mxu0
        %v1269 = vadd.f32 0.0, %v1268
        %1270 = vmatmul.bf16.gmra.mxu0 %v1168
        %v1271 = vpop.f32.mrf.mxu0
        %v1272 = vadd.f32 0.0, %v1271
        %v1273 = vpop.f32.mrf.mxu0
        %v1274 = vadd.f32 0.0, %v1273
        %1275 = vmatmul.bf16.gmra.mxu0 %v1170
        %v1276 = vpop.f32.mrf.mxu0
        %v1277 = vadd.f32 0.0, %v1276
        %v1278 = vpop.f32.mrf.mxu0
        %v1279 = vadd.f32 0.0, %v1278
        %1280 = vmatmul.bf16.gmra.mxu0 %v1172
        %v1281 = vpop.f32.mrf.mxu0
        %v1282 = vadd.f32 0.0, %v1281
        %v1283 = vpop.f32.mrf.mxu0
        %v1284 = vadd.f32 0.0, %v1283
        %1285 = vmatmul.bf16.gmra.mxu0 %v1174
        %v1286 = vpop.f32.mrf.mxu0
        %v1287 = vadd.f32 0.0, %v1286
        %v1288 = vpop.f32.mrf.mxu0
        %v1289 = vadd.f32 0.0, %v1288
        %1290 = vmatmul.bf16.gmra.mxu0 %v1176
        %v1291 = vpop.f32.mrf.mxu0
        %v1292 = vadd.f32 0.0, %v1291
        %v1293 = vpop.f32.mrf.mxu0
        %v1294 = vadd.f32 0.0, %v1293
        %1295 = vmatmul.bf16.gmra.mxu0 %v1178
        %v1296 = vpop.f32.mrf.mxu0
        %v1297 = vadd.f32 0.0, %v1296
        %v1298 = vpop.f32.mrf.mxu0
        %v1299 = vadd.f32 0.0, %v1298
        %1300 = vdwg.mxu0
        %1301 = vmatpush.bf16.msra.mxu0 %v792
        %1302 = vmatpush.bf16.msra.mxu0 %v791
        %1303 = vmatpush.bf16.msra.mxu0 %v790
        %1304 = vmatpush.bf16.msra.mxu0 %v789
        %1305 = vmatpush.bf16.msra.mxu0 %v788
        %1306 = vmatpush.bf16.msra.mxu0 %v787
        %1307 = vmatpush.bf16.msra.mxu0 %v786
        %1308 = vmatpush.bf16.msra.mxu0 %v785
        %1309 = vmatmul.bf16.gmra.mxu0 %v1149
        %v1310 = vpop.f32.mrf.mxu0
        %v1311 = vadd.f32 %v1222, %v1310
        %v1312 = vpop.f32.mrf.mxu0
        %v1313 = vadd.f32 %v1224, %v1312
        %1314 = vmatmul.bf16.gmra.mxu0 %v1151
        %v1315 = vpop.f32.mrf.mxu0
        %v1316 = vadd.f32 %v1227, %v1315
        %v1317 = vpop.f32.mrf.mxu0
        %v1318 = vadd.f32 %v1229, %v1317
        %1319 = vmatmul.bf16.gmra.mxu0 %v1153
        %v1320 = vpop.f32.mrf.mxu0
        %v1321 = vadd.f32 %v1232, %v1320
        %v1322 = vpop.f32.mrf.mxu0
        %v1323 = vadd.f32 %v1234, %v1322
        %1324 = vmatmul.bf16.gmra.mxu0 %v1155
        %v1325 = vpop.f32.mrf.mxu0
        %v1326 = vadd.f32 %v1237, %v1325
        %v1327 = vpop.f32.mrf.mxu0
        %v1328 = vadd.f32 %v1239, %v1327
        %1329 = vmatmul.bf16.gmra.mxu0 %v1157
        %v1330 = vpop.f32.mrf.mxu0
        %v1331 = vadd.f32 %v1242, %v1330
        %v1332 = vpop.f32.mrf.mxu0
        %v1333 = vadd.f32 %v1244, %v1332
        %1334 = vmatmul.bf16.gmra.mxu0 %v1159
        %v1335 = vpop.f32.mrf.mxu0
        %v1336 = vadd.f32 %v1247, %v1335
        %v1337 = vpop.f32.mrf.mxu0
        %v1338 = vadd.f32 %v1249, %v1337
        %1339 = vmatmul.bf16.gmra.mxu0 %v1161
        %v1340 = vpop.f32.mrf.mxu0
        %v1341 = vadd.f32 %v1252, %v1340
        %v1342 = vpop.f32.mrf.mxu0
        %v1343 = vadd.f32 %v1254, %v1342
        %1344 = vmatmul.bf16.gmra.mxu0 %v1163
        %v1345 = vpop.f32.mrf.mxu0
        %v1346 = vadd.f32 %v1257, %v1345
        %v1347 = vpop.f32.mrf.mxu0
        %v1348 = vadd.f32 %v1259, %v1347
        %1349 = vmatmul.bf16.gmra.mxu0 %v1165
        %v1350 = vpop.f32.mrf.mxu0
        %v1351 = vadd.f32 %v1262, %v1350
        %v1352 = vpop.f32.mrf.mxu0
        %v1353 = vadd.f32 %v1264, %v1352
        %1354 = vmatmul.bf16.gmra.mxu0 %v1167
        %v1355 = vpop.f32.mrf.mxu0
        %v1356 = vadd.f32 %v1267, %v1355
        %v1357 = vpop.f32.mrf.mxu0
        %v1358 = vadd.f32 %v1269, %v1357
        %1359 = vmatmul.bf16.gmra.mxu0 %v1169
        %v1360 = vpop.f32.mrf.mxu0
        %v1361 = vadd.f32 %v1272, %v1360
        %v1362 = vpop.f32.mrf.mxu0
        %v1363 = vadd.f32 %v1274, %v1362
        %1364 = vmatmul.bf16.gmra.mxu0 %v1171
        %v1365 = vpop.f32.mrf.mxu0
        %v1366 = vadd.f32 %v1277, %v1365
        %v1367 = vpop.f32.mrf.mxu0
        %v1368 = vadd.f32 %v1279, %v1367
        %1369 = vmatmul.bf16.gmra.mxu0 %v1173
        %v1370 = vpop.f32.mrf.mxu0
        %v1371 = vadd.f32 %v1282, %v1370
        %v1372 = vpop.f32.mrf.mxu0
        %v1373 = vadd.f32 %v1284, %v1372
        %1374 = vmatmul.bf16.gmra.mxu0 %v1175
        %v1375 = vpop.f32.mrf.mxu0
        %v1376 = vadd.f32 %v1287, %v1375
        %v1377 = vpop.f32.mrf.mxu0
        %v1378 = vadd.f32 %v1289, %v1377
        %1379 = vmatmul.bf16.gmra.mxu0 %v1177
        %v1380 = vpop.f32.mrf.mxu0
        %v1381 = vadd.f32 %v1292, %v1380
        %v1382 = vpop.f32.mrf.mxu0
        %v1383 = vadd.f32 %v1294, %v1382
        %1384 = vmatmul.bf16.gmra.mxu0 %v1179
        %v1385 = vpop.f32.mrf.mxu0
        %v1386 = vadd.f32 %v1297, %v1385
        %v1387 = vpop.f32.mrf.mxu0
        %v1388 = vadd.f32 %v1299, %v1387
        %1389 = vdwg.mxu0
        %v1390 = vpack.c.bf16 %v1313, %v1311
        %v1391 = vpack.c.bf16 %v1318, %v1316
        %v1392 = vpack.c.bf16 %v1323, %v1321
        %v1393 = vpack.c.bf16 %v1328, %v1326
        %v1394 = vpack.c.bf16 %v1333, %v1331
        %v1395 = vpack.c.bf16 %v1338, %v1336
        %v1396 = vpack.c.bf16 %v1343, %v1341
        %v1397 = vpack.c.bf16 %v1348, %v1346
        %v1398 = vpack.c.bf16 %v1353, %v1351
        %v1399 = vpack.c.bf16 %v1358, %v1356
        %v1400 = vpack.c.bf16 %v1363, %v1361
        %v1401 = vpack.c.bf16 %v1368, %v1366
        %v1402 = vpack.c.bf16 %v1373, %v1371
        %v1403 = vpack.c.bf16 %v1378, %v1376
        %v1404 = vpack.c.bf16 %v1383, %v1381
        %v1405 = vpack.c.bf16 %v1388, %v1386
        %s1406 = scalar_lea.vmem [#allocation10], 64
        %v1407 = vld [vmem:[%s1406] sm:$0xf]
        %v1408 = vld [vmem:[%s1406 + $0x4] sm:$0xf]
        %v1409 = vld [vmem:[%s1406 + $0x8] sm:$0xf]
        %v1410 = vld [vmem:[%s1406 + $0xc] sm:$0xf]
        %v1411 = vld [vmem:[%s1406 + $0x10] sm:$0xf]
        %v1412 = vld [vmem:[%s1406 + $0x14] sm:$0xf]
        %v1413 = vld [vmem:[%s1406 + $0x18] sm:$0xf]
        %v1414 = vld [vmem:[%s1406 + $0x1c] sm:$0xf]
        %v1415 = vld [vmem:[%s1406 + $0x20] sm:$0xf]
        %v1416 = vld [vmem:[%s1406 + $0x24] sm:$0xf]
        %v1417 = vld [vmem:[%s1406 + $0x28] sm:$0xf]
        %v1418 = vld [vmem:[%s1406 + $0x2c] sm:$0xf]
        %v1419 = vld [vmem:[%s1406 + $0x30] sm:$0xf]
        %v1420 = vld [vmem:[%s1406 + $0x34] sm:$0xf]
        %v1421 = vld [vmem:[%s1406 + $0x38] sm:$0xf]
        %v1422 = vld [vmem:[%s1406 + $0x3c] sm:$0xf]
        %v1439 = vunpack.c.l.b16 %v1407
        %v1440 = vunpack.c.l.b16 %v1408
        %v1441 = vunpack.c.l.b16 %v1409
        %v1442 = vunpack.c.l.b16 %v1410
        %v1443 = vunpack.c.l.b16 %v1411
        %v1444 = vunpack.c.l.b16 %v1412
        %v1445 = vunpack.c.l.b16 %v1413
        %v1446 = vunpack.c.l.b16 %v1414
        %v1447 = vunpack.c.l.b16 %v1415
        %v1448 = vunpack.c.l.b16 %v1416
        %v1449 = vunpack.c.l.b16 %v1417
        %v1450 = vunpack.c.l.b16 %v1418
        %v1451 = vunpack.c.l.b16 %v1419
        %v1452 = vunpack.c.l.b16 %v1420
        %v1453 = vunpack.c.l.b16 %v1421
        %v1454 = vunpack.c.l.b16 %v1422
        %v1455 = vpack.c.b16 %v1440, %v1439
        %v1456 = vpack.c.b16 %v1442, %v1441
        %v1457 = vpack.c.b16 %v1444, %v1443
        %v1458 = vpack.c.b16 %v1446, %v1445
        %v1459 = vpack.c.b16 %v1448, %v1447
        %v1460 = vpack.c.b16 %v1450, %v1449
        %v1461 = vpack.c.b16 %v1452, %v1451
        %v1462 = vpack.c.b16 %v1454, %v1453
        %1471 = vmatpush.bf16.msra.mxu0 %v1462
        %1472 = vmatpush.bf16.msra.mxu0 %v1461
        %1473 = vmatpush.bf16.msra.mxu0 %v1460
        %1474 = vmatpush.bf16.msra.mxu0 %v1459
        %1475 = vmatpush.bf16.msra.mxu0 %v1458
        %1476 = vmatpush.bf16.msra.mxu0 %v1457
        %1477 = vmatpush.bf16.msra.mxu0 %v1456
        %1478 = vmatpush.bf16.msra.mxu0 %v1455
        %1479 = vmatmul.bf16.gmra.mxu0 %v1390
        %v1480 = vpop.f32.mrf.mxu0
        %v1481 = vadd.f32 0.0, %v1480
        %v1482 = vpop.f32.mrf.mxu0
        %v1483 = vadd.f32 0.0, %v1482
        %1484 = vmatmul.bf16.gmra.mxu0 %v1391
        %v1485 = vpop.f32.mrf.mxu0
        %v1486 = vadd.f32 0.0, %v1485
        %v1487 = vpop.f32.mrf.mxu0
        %v1488 = vadd.f32 0.0, %v1487
        %1489 = vmatmul.bf16.gmra.mxu0 %v1392
        %v1490 = vpop.f32.mrf.mxu0
        %v1491 = vadd.f32 0.0, %v1490
        %v1492 = vpop.f32.mrf.mxu0
        %v1493 = vadd.f32 0.0, %v1492
        %1494 = vmatmul.bf16.gmra.mxu0 %v1393
        %v1495 = vpop.f32.mrf.mxu0
        %v1496 = vadd.f32 0.0, %v1495
        %v1497 = vpop.f32.mrf.mxu0
        %v1498 = vadd.f32 0.0, %v1497
        %1499 = vmatmul.bf16.gmra.mxu0 %v1394
        %v1500 = vpop.f32.mrf.mxu0
        %v1501 = vadd.f32 0.0, %v1500
        %v1502 = vpop.f32.mrf.mxu0
        %v1503 = vadd.f32 0.0, %v1502
        %1504 = vmatmul.bf16.gmra.mxu0 %v1395
        %v1505 = vpop.f32.mrf.mxu0
        %v1506 = vadd.f32 0.0, %v1505
        %v1507 = vpop.f32.mrf.mxu0
        %v1508 = vadd.f32 0.0, %v1507
        %1509 = vmatmul.bf16.gmra.mxu0 %v1396
        %v1510 = vpop.f32.mrf.mxu0
        %v1511 = vadd.f32 0.0, %v1510
        %v1512 = vpop.f32.mrf.mxu0
        %v1513 = vadd.f32 0.0, %v1512
        %1514 = vmatmul.bf16.gmra.mxu0 %v1397
        %v1515 = vpop.f32.mrf.mxu0
        %v1516 = vadd.f32 0.0, %v1515
        %v1517 = vpop.f32.mrf.mxu0
        %v1518 = vadd.f32 0.0, %v1517
        %1519 = vmatmul.bf16.gmra.mxu0 %v1398
        %v1520 = vpop.f32.mrf.mxu0
        %v1521 = vadd.f32 0.0, %v1520
        %v1522 = vpop.f32.mrf.mxu0
        %v1523 = vadd.f32 0.0, %v1522
        %1524 = vmatmul.bf16.gmra.mxu0 %v1399
        %v1525 = vpop.f32.mrf.mxu0
        %v1526 = vadd.f32 0.0, %v1525
        %v1527 = vpop.f32.mrf.mxu0
        %v1528 = vadd.f32 0.0, %v1527
        %1529 = vmatmul.bf16.gmra.mxu0 %v1400
        %v1530 = vpop.f32.mrf.mxu0
        %v1531 = vadd.f32 0.0, %v1530
        %v1532 = vpop.f32.mrf.mxu0
        %v1533 = vadd.f32 0.0, %v1532
        %1534 = vmatmul.bf16.gmra.mxu0 %v1401
        %v1535 = vpop.f32.mrf.mxu0
        %v1536 = vadd.f32 0.0, %v1535
        %v1537 = vpop.f32.mrf.mxu0
        %v1538 = vadd.f32 0.0, %v1537
        %1539 = vmatmul.bf16.gmra.mxu0 %v1402
        %v1540 = vpop.f32.mrf.mxu0
        %v1541 = vadd.f32 0.0, %v1540
        %v1542 = vpop.f32.mrf.mxu0
        %v1543 = vadd.f32 0.0, %v1542
        %1544 = vmatmul.bf16.gmra.mxu0 %v1403
        %v1545 = vpop.f32.mrf.mxu0
        %v1546 = vadd.f32 0.0, %v1545
        %v1547 = vpop.f32.mrf.mxu0
        %v1548 = vadd.f32 0.0, %v1547
        %1549 = vmatmul.bf16.gmra.mxu0 %v1404
        %v1550 = vpop.f32.mrf.mxu0
        %v1551 = vadd.f32 0.0, %v1550
        %v1552 = vpop.f32.mrf.mxu0
        %v1553 = vadd.f32 0.0, %v1552
        %1554 = vmatmul.bf16.gmra.mxu0 %v1405
        %v1555 = vpop.f32.mrf.mxu0
        %v1556 = vadd.f32 0.0, %v1555
        %v1557 = vpop.f32.mrf.mxu0
        %v1558 = vadd.f32 0.0, %v1557
        %1559 = vdwg.mxu0
        %v1576 = vunpack.c.l.b16 %v1003
        %v1577 = vunpack.c.l.b16 %v1004
        %v1578 = vunpack.c.l.b16 %v1005
        %v1579 = vunpack.c.l.b16 %v1006
        %v1580 = vunpack.c.l.b16 %v1007
        %v1581 = vunpack.c.l.b16 %v1008
        %v1582 = vunpack.c.l.b16 %v1009
        %v1583 = vunpack.c.l.b16 %v1010
        %v1584 = vunpack.c.l.b16 %v1011
        %v1585 = vunpack.c.l.b16 %v1012
        %v1586 = vunpack.c.l.b16 %v1013
        %v1587 = vunpack.c.l.b16 %v1014
        %v1588 = vunpack.c.l.b16 %v1015
        %v1589 = vunpack.c.l.b16 %v1016
        %v1590 = vunpack.c.l.b16 %v1017
        %v1591 = vunpack.c.l.b16 %v1018
        %v1592 = vpack.c.b16 %v1577, %v1576
        %v1593 = vpack.c.b16 %v1579, %v1578
        %v1594 = vpack.c.b16 %v1581, %v1580
        %v1595 = vpack.c.b16 %v1583, %v1582
        %v1596 = vpack.c.b16 %v1585, %v1584
        %v1597 = vpack.c.b16 %v1587, %v1586
        %v1598 = vpack.c.b16 %v1589, %v1588
        %v1599 = vpack.c.b16 %v1591, %v1590
        %1608 = vmatpush.bf16.msra.mxu0 %v1599
        %1609 = vmatpush.bf16.msra.mxu0 %v1598
        %1610 = vmatpush.bf16.msra.mxu0 %v1597
        %1611 = vmatpush.bf16.msra.mxu0 %v1596
        %1612 = vmatpush.bf16.msra.mxu0 %v1595
        %1613 = vmatpush.bf16.msra.mxu0 %v1594
        %1614 = vmatpush.bf16.msra.mxu0 %v1593
        %1615 = vmatpush.bf16.msra.mxu0 %v1592
        %1616 = vmatmul.bf16.gmra.mxu0 %v987
        %v1617 = vpop.f32.mrf.mxu0
        %v1618 = vadd.f32 %v1481, %v1617
        %v1619 = vpop.f32.mrf.mxu0
        %v1620 = vadd.f32 %v1483, %v1619
        %1621 = vmatmul.bf16.gmra.mxu0 %v988
        %v1622 = vpop.f32.mrf.mxu0
        %v1623 = vadd.f32 %v1486, %v1622
        %v1624 = vpop.f32.mrf.mxu0
        %v1625 = vadd.f32 %v1488, %v1624
        %1626 = vmatmul.bf16.gmra.mxu0 %v989
        %v1627 = vpop.f32.mrf.mxu0
        %v1628 = vadd.f32 %v1491, %v1627
        %v1629 = vpop.f32.mrf.mxu0
        %v1630 = vadd.f32 %v1493, %v1629
        %1631 = vmatmul.bf16.gmra.mxu0 %v990
        %v1632 = vpop.f32.mrf.mxu0
        %v1633 = vadd.f32 %v1496, %v1632
        %v1634 = vpop.f32.mrf.mxu0
        %v1635 = vadd.f32 %v1498, %v1634
        %1636 = vmatmul.bf16.gmra.mxu0 %v991
        %v1637 = vpop.f32.mrf.mxu0
        %v1638 = vadd.f32 %v1501, %v1637
        %v1639 = vpop.f32.mrf.mxu0
        %v1640 = vadd.f32 %v1503, %v1639
        %1641 = vmatmul.bf16.gmra.mxu0 %v992
        %v1642 = vpop.f32.mrf.mxu0
        %v1643 = vadd.f32 %v1506, %v1642
        %v1644 = vpop.f32.mrf.mxu0
        %v1645 = vadd.f32 %v1508, %v1644
        %1646 = vmatmul.bf16.gmra.mxu0 %v993
        %v1647 = vpop.f32.mrf.mxu0
        %v1648 = vadd.f32 %v1511, %v1647
        %v1649 = vpop.f32.mrf.mxu0
        %v1650 = vadd.f32 %v1513, %v1649
        %1651 = vmatmul.bf16.gmra.mxu0 %v994
        %v1652 = vpop.f32.mrf.mxu0
        %v1653 = vadd.f32 %v1516, %v1652
        %v1654 = vpop.f32.mrf.mxu0
        %v1655 = vadd.f32 %v1518, %v1654
        %1656 = vmatmul.bf16.gmra.mxu0 %v995
        %v1657 = vpop.f32.mrf.mxu0
        %v1658 = vadd.f32 %v1521, %v1657
        %v1659 = vpop.f32.mrf.mxu0
        %v1660 = vadd.f32 %v1523, %v1659
        %1661 = vmatmul.bf16.gmra.mxu0 %v996
        %v1662 = vpop.f32.mrf.mxu0
        %v1663 = vadd.f32 %v1526, %v1662
        %v1664 = vpop.f32.mrf.mxu0
        %v1665 = vadd.f32 %v1528, %v1664
        %1666 = vmatmul.bf16.gmra.mxu0 %v997
        %v1667 = vpop.f32.mrf.mxu0
        %v1668 = vadd.f32 %v1531, %v1667
        %v1669 = vpop.f32.mrf.mxu0
        %v1670 = vadd.f32 %v1533, %v1669
        %1671 = vmatmul.bf16.gmra.mxu0 %v998
        %v1672 = vpop.f32.mrf.mxu0
        %v1673 = vadd.f32 %v1536, %v1672
        %v1674 = vpop.f32.mrf.mxu0
        %v1675 = vadd.f32 %v1538, %v1674
        %1676 = vmatmul.bf16.gmra.mxu0 %v999
        %v1677 = vpop.f32.mrf.mxu0
        %v1678 = vadd.f32 %v1541, %v1677
        %v1679 = vpop.f32.mrf.mxu0
        %v1680 = vadd.f32 %v1543, %v1679
        %1681 = vmatmul.bf16.gmra.mxu0 %v1000
        %v1682 = vpop.f32.mrf.mxu0
        %v1683 = vadd.f32 %v1546, %v1682
        %v1684 = vpop.f32.mrf.mxu0
        %v1685 = vadd.f32 %v1548, %v1684
        %1686 = vmatmul.bf16.gmra.mxu0 %v1001
        %v1687 = vpop.f32.mrf.mxu0
        %v1688 = vadd.f32 %v1551, %v1687
        %v1689 = vpop.f32.mrf.mxu0
        %v1690 = vadd.f32 %v1553, %v1689
        %1691 = vmatmul.bf16.gmra.mxu0 %v1002
        %v1692 = vpop.f32.mrf.mxu0
        %v1693 = vadd.f32 %v1556, %v1692
        %v1694 = vpop.f32.mrf.mxu0
        %v1695 = vadd.f32 %v1558, %v1694
        %1696 = vdwg.mxu0
        %s1697 = scalar_lea.vmem [#allocation2], 512
        %v1698 = vld [vmem:[%s1697] sm:$0xff]
        %v1699 = vld [vmem:[%s1697 + $0x8] sm:$0xff]
        %v1700 = vld [vmem:[%s1697 + $0x10] sm:$0xff]
        %v1701 = vld [vmem:[%s1697 + $0x18] sm:$0xff]
        %v1702 = vld [vmem:[%s1697 + $0x20] sm:$0xff]
        %v1703 = vld [vmem:[%s1697 + $0x28] sm:$0xff]
        %v1704 = vld [vmem:[%s1697 + $0x30] sm:$0xff]
        %v1705 = vld [vmem:[%s1697 + $0x38] sm:$0xff]
        %v1706 = vld [vmem:[%s1697 + $0x40] sm:$0xff]
        %v1707 = vld [vmem:[%s1697 + $0x48] sm:$0xff]
        %v1708 = vld [vmem:[%s1697 + $0x50] sm:$0xff]
        %v1709 = vld [vmem:[%s1697 + $0x58] sm:$0xff]
        %v1710 = vld [vmem:[%s1697 + $0x60] sm:$0xff]
        %v1711 = vld [vmem:[%s1697 + $0x68] sm:$0xff]
        %v1712 = vld [vmem:[%s1697 + $0x70] sm:$0xff]
        %v1713 = vld [vmem:[%s1697 + $0x78] sm:$0xff]
        %v1714 = vld [vmem:[%s1697 + $0x80] sm:$0xff]
        %v1715 = vld [vmem:[%s1697 + $0x88] sm:$0xff]
        %v1716 = vld [vmem:[%s1697 + $0x90] sm:$0xff]
        %v1717 = vld [vmem:[%s1697 + $0x98] sm:$0xff]
        %v1718 = vld [vmem:[%s1697 + $0xa0] sm:$0xff]
        %v1719 = vld [vmem:[%s1697 + $0xa8] sm:$0xff]
        %v1720 = vld [vmem:[%s1697 + $0xb0] sm:$0xff]
        %v1721 = vld [vmem:[%s1697 + $0xb8] sm:$0xff]
        %v1722 = vld [vmem:[%s1697 + $0xc0] sm:$0xff]
        %v1723 = vld [vmem:[%s1697 + $0xc8] sm:$0xff]
        %v1724 = vld [vmem:[%s1697 + $0xd0] sm:$0xff]
        %v1725 = vld [vmem:[%s1697 + $0xd8] sm:$0xff]
        %v1726 = vld [vmem:[%s1697 + $0xe0] sm:$0xff]
        %v1727 = vld [vmem:[%s1697 + $0xe8] sm:$0xff]
        %v1728 = vld [vmem:[%s1697 + $0xf0] sm:$0xff]
        %v1729 = vld [vmem:[%s1697 + $0xf8] sm:$0xff]
        %v1762 = vunpack.c.l.b16 %v1698
        %v1763 = vunpack.c.h.b16 %v1698
        %v1764 = vunpack.c.l.b16 %v1699
        %v1765 = vunpack.c.h.b16 %v1699
        %v1766 = vunpack.c.l.b16 %v1700
        %v1767 = vunpack.c.h.b16 %v1700
        %v1768 = vunpack.c.l.b16 %v1701
        %v1769 = vunpack.c.h.b16 %v1701
        %v1770 = vunpack.c.l.b16 %v1702
        %v1771 = vunpack.c.h.b16 %v1702
        %v1772 = vunpack.c.l.b16 %v1703
        %v1773 = vunpack.c.h.b16 %v1703
        %v1774 = vunpack.c.l.b16 %v1704
        %v1775 = vunpack.c.h.b16 %v1704
        %v1776 = vunpack.c.l.b16 %v1705
        %v1777 = vunpack.c.h.b16 %v1705
        %v1778 = vunpack.c.l.b16 %v1706
        %v1779 = vunpack.c.h.b16 %v1706
        %v1780 = vunpack.c.l.b16 %v1707
        %v1781 = vunpack.c.h.b16 %v1707
        %v1782 = vunpack.c.l.b16 %v1708
        %v1783 = vunpack.c.h.b16 %v1708
        %v1784 = vunpack.c.l.b16 %v1709
        %v1785 = vunpack.c.h.b16 %v1709
        %v1786 = vunpack.c.l.b16 %v1710
        %v1787 = vunpack.c.h.b16 %v1710
        %v1788 = vunpack.c.l.b16 %v1711
        %v1789 = vunpack.c.h.b16 %v1711
        %v1790 = vunpack.c.l.b16 %v1712
        %v1791 = vunpack.c.h.b16 %v1712
        %v1792 = vunpack.c.l.b16 %v1713
        %v1793 = vunpack.c.h.b16 %v1713
        %v1794 = vunpack.c.l.b16 %v1714
        %v1795 = vunpack.c.h.b16 %v1714
        %v1796 = vunpack.c.l.b16 %v1715
        %v1797 = vunpack.c.h.b16 %v1715
        %v1798 = vunpack.c.l.b16 %v1716
        %v1799 = vunpack.c.h.b16 %v1716
        %v1800 = vunpack.c.l.b16 %v1717
        %v1801 = vunpack.c.h.b16 %v1717
        %v1802 = vunpack.c.l.b16 %v1718
        %v1803 = vunpack.c.h.b16 %v1718
        %v1804 = vunpack.c.l.b16 %v1719
        %v1805 = vunpack.c.h.b16 %v1719
        %v1806 = vunpack.c.l.b16 %v1720
        %v1807 = vunpack.c.h.b16 %v1720
        %v1808 = vunpack.c.l.b16 %v1721
        %v1809 = vunpack.c.h.b16 %v1721
        %v1810 = vunpack.c.l.b16 %v1722
        %v1811 = vunpack.c.h.b16 %v1722
        %v1812 = vunpack.c.l.b16 %v1723
        %v1813 = vunpack.c.h.b16 %v1723
        %v1814 = vunpack.c.l.b16 %v1724
        %v1815 = vunpack.c.h.b16 %v1724
        %v1816 = vunpack.c.l.b16 %v1725
        %v1817 = vunpack.c.h.b16 %v1725
        %v1818 = vunpack.c.l.b16 %v1726
        %v1819 = vunpack.c.h.b16 %v1726
        %v1820 = vunpack.c.l.b16 %v1727
        %v1821 = vunpack.c.h.b16 %v1727
        %v1822 = vunpack.c.l.b16 %v1728
        %v1823 = vunpack.c.h.b16 %v1728
        %v1824 = vunpack.c.l.b16 %v1729
        %v1825 = vunpack.c.h.b16 %v1729
        %v1826 = vpack.c.b16 %v1764, %v1762
        %v1827 = vpack.c.b16 %v1765, %v1763
        %v1828 = vpack.c.b16 %v1768, %v1766
        %v1829 = vpack.c.b16 %v1769, %v1767
        %v1830 = vpack.c.b16 %v1772, %v1770
        %v1831 = vpack.c.b16 %v1773, %v1771
        %v1832 = vpack.c.b16 %v1776, %v1774
        %v1833 = vpack.c.b16 %v1777, %v1775
        %v1834 = vpack.c.b16 %v1780, %v1778
        %v1835 = vpack.c.b16 %v1781, %v1779
        %v1836 = vpack.c.b16 %v1784, %v1782
        %v1837 = vpack.c.b16 %v1785, %v1783
        %v1838 = vpack.c.b16 %v1788, %v1786
        %v1839 = vpack.c.b16 %v1789, %v1787
        %v1840 = vpack.c.b16 %v1792, %v1790
        %v1841 = vpack.c.b16 %v1793, %v1791
        %v1842 = vpack.c.b16 %v1796, %v1794
        %v1843 = vpack.c.b16 %v1797, %v1795
        %v1844 = vpack.c.b16 %v1800, %v1798
        %v1845 = vpack.c.b16 %v1801, %v1799
        %v1846 = vpack.c.b16 %v1804, %v1802
        %v1847 = vpack.c.b16 %v1805, %v1803
        %v1848 = vpack.c.b16 %v1808, %v1806
        %v1849 = vpack.c.b16 %v1809, %v1807
        %v1850 = vpack.c.b16 %v1812, %v1810
        %v1851 = vpack.c.b16 %v1813, %v1811
        %v1852 = vpack.c.b16 %v1816, %v1814
        %v1853 = vpack.c.b16 %v1817, %v1815
        %v1854 = vpack.c.b16 %v1820, %v1818
        %v1855 = vpack.c.b16 %v1821, %v1819
        %v1856 = vpack.c.b16 %v1824, %v1822
        %v1857 = vpack.c.b16 %v1825, %v1823
        %1890 = vmatpush.bf16.msra.mxu0 %v784
        %1891 = vmatpush.bf16.msra.mxu0 %v783
        %1892 = vmatpush.bf16.msra.mxu0 %v782
        %1893 = vmatpush.bf16.msra.mxu0 %v781
        %1894 = vmatpush.bf16.msra.mxu0 %v780
        %1895 = vmatpush.bf16.msra.mxu0 %v779
        %1896 = vmatpush.bf16.msra.mxu0 %v778
        %1897 = vmatpush.bf16.msra.mxu0 %v777
        %1898 = vmatmul.bf16.gmra.mxu0 %v1826
        %v1899 = vpop.f32.mrf.mxu0
        %v1900 = vadd.f32 0.0, %v1899
        %v1901 = vpop.f32.mrf.mxu0
        %v1902 = vadd.f32 0.0, %v1901
        %1903 = vmatmul.bf16.gmra.mxu0 %v1828
        %v1904 = vpop.f32.mrf.mxu0
        %v1905 = vadd.f32 0.0, %v1904
        %v1906 = vpop.f32.mrf.mxu0
        %v1907 = vadd.f32 0.0, %v1906
        %1908 = vmatmul.bf16.gmra.mxu0 %v1830
        %v1909 = vpop.f32.mrf.mxu0
        %v1910 = vadd.f32 0.0, %v1909
        %v1911 = vpop.f32.mrf.mxu0
        %v1912 = vadd.f32 0.0, %v1911
        %1913 = vmatmul.bf16.gmra.mxu0 %v1832
        %v1914 = vpop.f32.mrf.mxu0
        %v1915 = vadd.f32 0.0, %v1914
        %v1916 = vpop.f32.mrf.mxu0
        %v1917 = vadd.f32 0.0, %v1916
        %1918 = vmatmul.bf16.gmra.mxu0 %v1834
        %v1919 = vpop.f32.mrf.mxu0
        %v1920 = vadd.f32 0.0, %v1919
        %v1921 = vpop.f32.mrf.mxu0
        %v1922 = vadd.f32 0.0, %v1921
        %1923 = vmatmul.bf16.gmra.mxu0 %v1836
        %v1924 = vpop.f32.mrf.mxu0
        %v1925 = vadd.f32 0.0, %v1924
        %v1926 = vpop.f32.mrf.mxu0
        %v1927 = vadd.f32 0.0, %v1926
        %1928 = vmatmul.bf16.gmra.mxu0 %v1838
        %v1929 = vpop.f32.mrf.mxu0
        %v1930 = vadd.f32 0.0, %v1929
        %v1931 = vpop.f32.mrf.mxu0
        %v1932 = vadd.f32 0.0, %v1931
        %1933 = vmatmul.bf16.gmra.mxu0 %v1840
        %v1934 = vpop.f32.mrf.mxu0
        %v1935 = vadd.f32 0.0, %v1934
        %v1936 = vpop.f32.mrf.mxu0
        %v1937 = vadd.f32 0.0, %v1936
        %1938 = vmatmul.bf16.gmra.mxu0 %v1842
        %v1939 = vpop.f32.mrf.mxu0
        %v1940 = vadd.f32 0.0, %v1939
        %v1941 = vpop.f32.mrf.mxu0
        %v1942 = vadd.f32 0.0, %v1941
        %1943 = vmatmul.bf16.gmra.mxu0 %v1844
        %v1944 = vpop.f32.mrf.mxu0
        %v1945 = vadd.f32 0.0, %v1944
        %v1946 = vpop.f32.mrf.mxu0
        %v1947 = vadd.f32 0.0, %v1946
        %1948 = vmatmul.bf16.gmra.mxu0 %v1846
        %v1949 = vpop.f32.mrf.mxu0
        %v1950 = vadd.f32 0.0, %v1949
        %v1951 = vpop.f32.mrf.mxu0
        %v1952 = vadd.f32 0.0, %v1951
        %1953 = vmatmul.bf16.gmra.mxu0 %v1848
        %v1954 = vpop.f32.mrf.mxu0
        %v1955 = vadd.f32 0.0, %v1954
        %v1956 = vpop.f32.mrf.mxu0
        %v1957 = vadd.f32 0.0, %v1956
        %1958 = vmatmul.bf16.gmra.mxu0 %v1850
        %v1959 = vpop.f32.mrf.mxu0
        %v1960 = vadd.f32 0.0, %v1959
        %v1961 = vpop.f32.mrf.mxu0
        %v1962 = vadd.f32 0.0, %v1961
        %1963 = vmatmul.bf16.gmra.mxu0 %v1852
        %v1964 = vpop.f32.mrf.mxu0
        %v1965 = vadd.f32 0.0, %v1964
        %v1966 = vpop.f32.mrf.mxu0
        %v1967 = vadd.f32 0.0, %v1966
        %1968 = vmatmul.bf16.gmra.mxu0 %v1854
        %v1969 = vpop.f32.mrf.mxu0
        %v1970 = vadd.f32 0.0, %v1969
        %v1971 = vpop.f32.mrf.mxu0
        %v1972 = vadd.f32 0.0, %v1971
        %1973 = vmatmul.bf16.gmra.mxu0 %v1856
        %v1974 = vpop.f32.mrf.mxu0
        %v1975 = vadd.f32 0.0, %v1974
        %v1976 = vpop.f32.mrf.mxu0
        %v1977 = vadd.f32 0.0, %v1976
        %1978 = vdwg.mxu0
        %1979 = vmatpush.bf16.msra.mxu0 %v792
        %1980 = vmatpush.bf16.msra.mxu0 %v791
        %1981 = vmatpush.bf16.msra.mxu0 %v790
        %1982 = vmatpush.bf16.msra.mxu0 %v789
        %1983 = vmatpush.bf16.msra.mxu0 %v788
        %1984 = vmatpush.bf16.msra.mxu0 %v787
        %1985 = vmatpush.bf16.msra.mxu0 %v786
        %1986 = vmatpush.bf16.msra.mxu0 %v785
        %1987 = vmatmul.bf16.gmra.mxu0 %v1827
        %v1988 = vpop.f32.mrf.mxu0
        %v1989 = vadd.f32 %v1900, %v1988
        %v1990 = vpop.f32.mrf.mxu0
        %v1991 = vadd.f32 %v1902, %v1990
        %1992 = vmatmul.bf16.gmra.mxu0 %v1829
        %v1993 = vpop.f32.mrf.mxu0
        %v1994 = vadd.f32 %v1905, %v1993
        %v1995 = vpop.f32.mrf.mxu0
        %v1996 = vadd.f32 %v1907, %v1995
        %1997 = vmatmul.bf16.gmra.mxu0 %v1831
        %v1998 = vpop.f32.mrf.mxu0
        %v1999 = vadd.f32 %v1910, %v1998
        %v2000 = vpop.f32.mrf.mxu0
        %v2001 = vadd.f32 %v1912, %v2000
        %2002 = vmatmul.bf16.gmra.mxu0 %v1833
        %v2003 = vpop.f32.mrf.mxu0
        %v2004 = vadd.f32 %v1915, %v2003
        %v2005 = vpop.f32.mrf.mxu0
        %v2006 = vadd.f32 %v1917, %v2005
        %2007 = vmatmul.bf16.gmra.mxu0 %v1835
        %v2008 = vpop.f32.mrf.mxu0
        %v2009 = vadd.f32 %v1920, %v2008
        %v2010 = vpop.f32.mrf.mxu0
        %v2011 = vadd.f32 %v1922, %v2010
        %2012 = vmatmul.bf16.gmra.mxu0 %v1837
        %v2013 = vpop.f32.mrf.mxu0
        %v2014 = vadd.f32 %v1925, %v2013
        %v2015 = vpop.f32.mrf.mxu0
        %v2016 = vadd.f32 %v1927, %v2015
        %2017 = vmatmul.bf16.gmra.mxu0 %v1839
        %v2018 = vpop.f32.mrf.mxu0
        %v2019 = vadd.f32 %v1930, %v2018
        %v2020 = vpop.f32.mrf.mxu0
        %v2021 = vadd.f32 %v1932, %v2020
        %2022 = vmatmul.bf16.gmra.mxu0 %v1841
        %v2023 = vpop.f32.mrf.mxu0
        %v2024 = vadd.f32 %v1935, %v2023
        %v2025 = vpop.f32.mrf.mxu0
        %v2026 = vadd.f32 %v1937, %v2025
        %2027 = vmatmul.bf16.gmra.mxu0 %v1843
        %v2028 = vpop.f32.mrf.mxu0
        %v2029 = vadd.f32 %v1940, %v2028
        %v2030 = vpop.f32.mrf.mxu0
        %v2031 = vadd.f32 %v1942, %v2030
        %2032 = vmatmul.bf16.gmra.mxu0 %v1845
        %v2033 = vpop.f32.mrf.mxu0
        %v2034 = vadd.f32 %v1945, %v2033
        %v2035 = vpop.f32.mrf.mxu0
        %v2036 = vadd.f32 %v1947, %v2035
        %2037 = vmatmul.bf16.gmra.mxu0 %v1847
        %v2038 = vpop.f32.mrf.mxu0
        %v2039 = vadd.f32 %v1950, %v2038
        %v2040 = vpop.f32.mrf.mxu0
        %v2041 = vadd.f32 %v1952, %v2040
        %2042 = vmatmul.bf16.gmra.mxu0 %v1849
        %v2043 = vpop.f32.mrf.mxu0
        %v2044 = vadd.f32 %v1955, %v2043
        %v2045 = vpop.f32.mrf.mxu0
        %v2046 = vadd.f32 %v1957, %v2045
        %2047 = vmatmul.bf16.gmra.mxu0 %v1851
        %v2048 = vpop.f32.mrf.mxu0
        %v2049 = vadd.f32 %v1960, %v2048
        %v2050 = vpop.f32.mrf.mxu0
        %v2051 = vadd.f32 %v1962, %v2050
        %2052 = vmatmul.bf16.gmra.mxu0 %v1853
        %v2053 = vpop.f32.mrf.mxu0
        %v2054 = vadd.f32 %v1965, %v2053
        %v2055 = vpop.f32.mrf.mxu0
        %v2056 = vadd.f32 %v1967, %v2055
        %2057 = vmatmul.bf16.gmra.mxu0 %v1855
        %v2058 = vpop.f32.mrf.mxu0
        %v2059 = vadd.f32 %v1970, %v2058
        %v2060 = vpop.f32.mrf.mxu0
        %v2061 = vadd.f32 %v1972, %v2060
        %2062 = vmatmul.bf16.gmra.mxu0 %v1857
        %v2063 = vpop.f32.mrf.mxu0
        %v2064 = vadd.f32 %v1975, %v2063
        %v2065 = vpop.f32.mrf.mxu0
        %v2066 = vadd.f32 %v1977, %v2065
        %2067 = vdwg.mxu0
        %v2068 = vpack.c.bf16 %v1991, %v1989
        %v2069 = vpack.c.bf16 %v1996, %v1994
        %v2070 = vpack.c.bf16 %v2001, %v1999
        %v2071 = vpack.c.bf16 %v2006, %v2004
        %v2072 = vpack.c.bf16 %v2011, %v2009
        %v2073 = vpack.c.bf16 %v2016, %v2014
        %v2074 = vpack.c.bf16 %v2021, %v2019
        %v2075 = vpack.c.bf16 %v2026, %v2024
        %v2076 = vpack.c.bf16 %v2031, %v2029
        %v2077 = vpack.c.bf16 %v2036, %v2034
        %v2078 = vpack.c.bf16 %v2041, %v2039
        %v2079 = vpack.c.bf16 %v2046, %v2044
        %v2080 = vpack.c.bf16 %v2051, %v2049
        %v2081 = vpack.c.bf16 %v2056, %v2054
        %v2082 = vpack.c.bf16 %v2061, %v2059
        %v2083 = vpack.c.bf16 %v2066, %v2064
        %s2084 = scalar_lea.vmem [#allocation10], 128
        %v2085 = vld [vmem:[%s2084] sm:$0xf]
        %v2086 = vld [vmem:[%s2084 + $0x4] sm:$0xf]
        %v2087 = vld [vmem:[%s2084 + $0x8] sm:$0xf]
        %v2088 = vld [vmem:[%s2084 + $0xc] sm:$0xf]
        %v2089 = vld [vmem:[%s2084 + $0x10] sm:$0xf]
        %v2090 = vld [vmem:[%s2084 + $0x14] sm:$0xf]
        %v2091 = vld [vmem:[%s2084 + $0x18] sm:$0xf]
        %v2092 = vld [vmem:[%s2084 + $0x1c] sm:$0xf]
        %v2093 = vld [vmem:[%s2084 + $0x20] sm:$0xf]
        %v2094 = vld [vmem:[%s2084 + $0x24] sm:$0xf]
        %v2095 = vld [vmem:[%s2084 + $0x28] sm:$0xf]
        %v2096 = vld [vmem:[%s2084 + $0x2c] sm:$0xf]
        %v2097 = vld [vmem:[%s2084 + $0x30] sm:$0xf]
        %v2098 = vld [vmem:[%s2084 + $0x34] sm:$0xf]
        %v2099 = vld [vmem:[%s2084 + $0x38] sm:$0xf]
        %v2100 = vld [vmem:[%s2084 + $0x3c] sm:$0xf]
        %v2117 = vunpack.c.l.b16 %v2085
        %v2118 = vunpack.c.l.b16 %v2086
        %v2119 = vunpack.c.l.b16 %v2087
        %v2120 = vunpack.c.l.b16 %v2088
        %v2121 = vunpack.c.l.b16 %v2089
        %v2122 = vunpack.c.l.b16 %v2090
        %v2123 = vunpack.c.l.b16 %v2091
        %v2124 = vunpack.c.l.b16 %v2092
        %v2125 = vunpack.c.l.b16 %v2093
        %v2126 = vunpack.c.l.b16 %v2094
        %v2127 = vunpack.c.l.b16 %v2095
        %v2128 = vunpack.c.l.b16 %v2096
        %v2129 = vunpack.c.l.b16 %v2097
        %v2130 = vunpack.c.l.b16 %v2098
        %v2131 = vunpack.c.l.b16 %v2099
        %v2132 = vunpack.c.l.b16 %v2100
        %v2133 = vpack.c.b16 %v2118, %v2117
        %v2134 = vpack.c.b16 %v2120, %v2119
        %v2135 = vpack.c.b16 %v2122, %v2121
        %v2136 = vpack.c.b16 %v2124, %v2123
        %v2137 = vpack.c.b16 %v2126, %v2125
        %v2138 = vpack.c.b16 %v2128, %v2127
        %v2139 = vpack.c.b16 %v2130, %v2129
        %v2140 = vpack.c.b16 %v2132, %v2131
        %2149 = vmatpush.bf16.msra.mxu0 %v2140
        %2150 = vmatpush.bf16.msra.mxu0 %v2139
        %2151 = vmatpush.bf16.msra.mxu0 %v2138
        %2152 = vmatpush.bf16.msra.mxu0 %v2137
        %2153 = vmatpush.bf16.msra.mxu0 %v2136
        %2154 = vmatpush.bf16.msra.mxu0 %v2135
        %2155 = vmatpush.bf16.msra.mxu0 %v2134
        %2156 = vmatpush.bf16.msra.mxu0 %v2133
        %2157 = vmatmul.bf16.gmra.mxu0 %v2068
        %v2158 = vpop.f32.mrf.mxu0
        %v2159 = vadd.f32 0.0, %v2158
        %v2160 = vpop.f32.mrf.mxu0
        %v2161 = vadd.f32 0.0, %v2160
        %2162 = vmatmul.bf16.gmra.mxu0 %v2069
        %v2163 = vpop.f32.mrf.mxu0
        %v2164 = vadd.f32 0.0, %v2163
        %v2165 = vpop.f32.mrf.mxu0
        %v2166 = vadd.f32 0.0, %v2165
        %2167 = vmatmul.bf16.gmra.mxu0 %v2070
        %v2168 = vpop.f32.mrf.mxu0
        %v2169 = vadd.f32 0.0, %v2168
        %v2170 = vpop.f32.mrf.mxu0
        %v2171 = vadd.f32 0.0, %v2170
        %2172 = vmatmul.bf16.gmra.mxu0 %v2071
        %v2173 = vpop.f32.mrf.mxu0
        %v2174 = vadd.f32 0.0, %v2173
        %v2175 = vpop.f32.mrf.mxu0
        %v2176 = vadd.f32 0.0, %v2175
        %2177 = vmatmul.bf16.gmra.mxu0 %v2072
        %v2178 = vpop.f32.mrf.mxu0
        %v2179 = vadd.f32 0.0, %v2178
        %v2180 = vpop.f32.mrf.mxu0
        %v2181 = vadd.f32 0.0, %v2180
        %2182 = vmatmul.bf16.gmra.mxu0 %v2073
        %v2183 = vpop.f32.mrf.mxu0
        %v2184 = vadd.f32 0.0, %v2183
        %v2185 = vpop.f32.mrf.mxu0
        %v2186 = vadd.f32 0.0, %v2185
        %2187 = vmatmul.bf16.gmra.mxu0 %v2074
        %v2188 = vpop.f32.mrf.mxu0
        %v2189 = vadd.f32 0.0, %v2188
        %v2190 = vpop.f32.mrf.mxu0
        %v2191 = vadd.f32 0.0, %v2190
        %2192 = vmatmul.bf16.gmra.mxu0 %v2075
        %v2193 = vpop.f32.mrf.mxu0
        %v2194 = vadd.f32 0.0, %v2193
        %v2195 = vpop.f32.mrf.mxu0
        %v2196 = vadd.f32 0.0, %v2195
        %2197 = vmatmul.bf16.gmra.mxu0 %v2076
        %v2198 = vpop.f32.mrf.mxu0
        %v2199 = vadd.f32 0.0, %v2198
        %v2200 = vpop.f32.mrf.mxu0
        %v2201 = vadd.f32 0.0, %v2200
        %2202 = vmatmul.bf16.gmra.mxu0 %v2077
        %v2203 = vpop.f32.mrf.mxu0
        %v2204 = vadd.f32 0.0, %v2203
        %v2205 = vpop.f32.mrf.mxu0
        %v2206 = vadd.f32 0.0, %v2205
        %2207 = vmatmul.bf16.gmra.mxu0 %v2078
        %v2208 = vpop.f32.mrf.mxu0
        %v2209 = vadd.f32 0.0, %v2208
        %v2210 = vpop.f32.mrf.mxu0
        %v2211 = vadd.f32 0.0, %v2210
        %2212 = vmatmul.bf16.gmra.mxu0 %v2079
        %v2213 = vpop.f32.mrf.mxu0
        %v2214 = vadd.f32 0.0, %v2213
        %v2215 = vpop.f32.mrf.mxu0
        %v2216 = vadd.f32 0.0, %v2215
        %2217 = vmatmul.bf16.gmra.mxu0 %v2080
        %v2218 = vpop.f32.mrf.mxu0
        %v2219 = vadd.f32 0.0, %v2218
        %v2220 = vpop.f32.mrf.mxu0
        %v2221 = vadd.f32 0.0, %v2220
        %2222 = vmatmul.bf16.gmra.mxu0 %v2081
        %v2223 = vpop.f32.mrf.mxu0
        %v2224 = vadd.f32 0.0, %v2223
        %v2225 = vpop.f32.mrf.mxu0
        %v2226 = vadd.f32 0.0, %v2225
        %2227 = vmatmul.bf16.gmra.mxu0 %v2082
        %v2228 = vpop.f32.mrf.mxu0
        %v2229 = vadd.f32 0.0, %v2228
        %v2230 = vpop.f32.mrf.mxu0
        %v2231 = vadd.f32 0.0, %v2230
        %2232 = vmatmul.bf16.gmra.mxu0 %v2083
        %v2233 = vpop.f32.mrf.mxu0
        %v2234 = vadd.f32 0.0, %v2233
        %v2235 = vpop.f32.mrf.mxu0
        %v2236 = vadd.f32 0.0, %v2235
        %2237 = vdwg.mxu0
        %v2238 = vadd.f32 %v1618, %v2159
        %v2239 = vadd.f32 %v1620, %v2161
        %v2240 = vadd.f32 %v1623, %v2164
        %v2241 = vadd.f32 %v1625, %v2166
        %v2242 = vadd.f32 %v1628, %v2169
        %v2243 = vadd.f32 %v1630, %v2171
        %v2244 = vadd.f32 %v1633, %v2174
        %v2245 = vadd.f32 %v1635, %v2176
        %v2246 = vadd.f32 %v1638, %v2179
        %v2247 = vadd.f32 %v1640, %v2181
        %v2248 = vadd.f32 %v1643, %v2184
        %v2249 = vadd.f32 %v1645, %v2186
        %v2250 = vadd.f32 %v1648, %v2189
        %v2251 = vadd.f32 %v1650, %v2191
        %v2252 = vadd.f32 %v1653, %v2194
        %v2253 = vadd.f32 %v1655, %v2196
        %v2254 = vadd.f32 %v1658, %v2199
        %v2255 = vadd.f32 %v1660, %v2201
        %v2256 = vadd.f32 %v1663, %v2204
        %v2257 = vadd.f32 %v1665, %v2206
        %v2258 = vadd.f32 %v1668, %v2209
        %v2259 = vadd.f32 %v1670, %v2211
        %v2260 = vadd.f32 %v1673, %v2214
        %v2261 = vadd.f32 %v1675, %v2216
        %v2262 = vadd.f32 %v1678, %v2219
        %v2263 = vadd.f32 %v1680, %v2221
        %v2264 = vadd.f32 %v1683, %v2224
        %v2265 = vadd.f32 %v1685, %v2226
        %v2266 = vadd.f32 %v1688, %v2229
        %v2267 = vadd.f32 %v1690, %v2231
        %v2268 = vadd.f32 %v1693, %v2234
        %v2269 = vadd.f32 %v1695, %v2236
        %s2270 = scalar_lea.vmem [#allocation2], 768
        %v2271 = vld [vmem:[%s2270] sm:$0xff]
        %v2272 = vld [vmem:[%s2270 + $0x8] sm:$0xff]
        %v2273 = vld [vmem:[%s2270 + $0x10] sm:$0xff]
        %v2274 = vld [vmem:[%s2270 + $0x18] sm:$0xff]
        %v2275 = vld [vmem:[%s2270 + $0x20] sm:$0xff]
        %v2276 = vld [vmem:[%s2270 + $0x28] sm:$0xff]
        %v2277 = vld [vmem:[%s2270 + $0x30] sm:$0xff]
        %v2278 = vld [vmem:[%s2270 + $0x38] sm:$0xff]
        %v2279 = vld [vmem:[%s2270 + $0x40] sm:$0xff]
        %v2280 = vld [vmem:[%s2270 + $0x48] sm:$0xff]
        %v2281 = vld [vmem:[%s2270 + $0x50] sm:$0xff]
        %v2282 = vld [vmem:[%s2270 + $0x58] sm:$0xff]
        %v2283 = vld [vmem:[%s2270 + $0x60] sm:$0xff]
        %v2284 = vld [vmem:[%s2270 + $0x68] sm:$0xff]
        %v2285 = vld [vmem:[%s2270 + $0x70] sm:$0xff]
        %v2286 = vld [vmem:[%s2270 + $0x78] sm:$0xff]
        %v2287 = vld [vmem:[%s2270 + $0x80] sm:$0xff]
        %v2288 = vld [vmem:[%s2270 + $0x88] sm:$0xff]
        %v2289 = vld [vmem:[%s2270 + $0x90] sm:$0xff]
        %v2290 = vld [vmem:[%s2270 + $0x98] sm:$0xff]
        %v2291 = vld [vmem:[%s2270 + $0xa0] sm:$0xff]
        %v2292 = vld [vmem:[%s2270 + $0xa8] sm:$0xff]
        %v2293 = vld [vmem:[%s2270 + $0xb0] sm:$0xff]
        %v2294 = vld [vmem:[%s2270 + $0xb8] sm:$0xff]
        %v2295 = vld [vmem:[%s2270 + $0xc0] sm:$0xff]
        %v2296 = vld [vmem:[%s2270 + $0xc8] sm:$0xff]
        %v2297 = vld [vmem:[%s2270 + $0xd0] sm:$0xff]
        %v2298 = vld [vmem:[%s2270 + $0xd8] sm:$0xff]
        %v2299 = vld [vmem:[%s2270 + $0xe0] sm:$0xff]
        %v2300 = vld [vmem:[%s2270 + $0xe8] sm:$0xff]
        %v2301 = vld [vmem:[%s2270 + $0xf0] sm:$0xff]
        %v2302 = vld [vmem:[%s2270 + $0xf8] sm:$0xff]
        %v2335 = vunpack.c.l.b16 %v2271
        %v2336 = vunpack.c.h.b16 %v2271
        %v2337 = vunpack.c.l.b16 %v2272
        %v2338 = vunpack.c.h.b16 %v2272
        %v2339 = vunpack.c.l.b16 %v2273
        %v2340 = vunpack.c.h.b16 %v2273
        %v2341 = vunpack.c.l.b16 %v2274
        %v2342 = vunpack.c.h.b16 %v2274
        %v2343 = vunpack.c.l.b16 %v2275
        %v2344 = vunpack.c.h.b16 %v2275
        %v2345 = vunpack.c.l.b16 %v2276
        %v2346 = vunpack.c.h.b16 %v2276
        %v2347 = vunpack.c.l.b16 %v2277
        %v2348 = vunpack.c.h.b16 %v2277
        %v2349 = vunpack.c.l.b16 %v2278
        %v2350 = vunpack.c.h.b16 %v2278
        %v2351 = vunpack.c.l.b16 %v2279
        %v2352 = vunpack.c.h.b16 %v2279
        %v2353 = vunpack.c.l.b16 %v2280
        %v2354 = vunpack.c.h.b16 %v2280
        %v2355 = vunpack.c.l.b16 %v2281
        %v2356 = vunpack.c.h.b16 %v2281
        %v2357 = vunpack.c.l.b16 %v2282
        %v2358 = vunpack.c.h.b16 %v2282
        %v2359 = vunpack.c.l.b16 %v2283
        %v2360 = vunpack.c.h.b16 %v2283
        %v2361 = vunpack.c.l.b16 %v2284
        %v2362 = vunpack.c.h.b16 %v2284
        %v2363 = vunpack.c.l.b16 %v2285
        %v2364 = vunpack.c.h.b16 %v2285
        %v2365 = vunpack.c.l.b16 %v2286
        %v2366 = vunpack.c.h.b16 %v2286
        %v2367 = vunpack.c.l.b16 %v2287
        %v2368 = vunpack.c.h.b16 %v2287
        %v2369 = vunpack.c.l.b16 %v2288
        %v2370 = vunpack.c.h.b16 %v2288
        %v2371 = vunpack.c.l.b16 %v2289
        %v2372 = vunpack.c.h.b16 %v2289
        %v2373 = vunpack.c.l.b16 %v2290
        %v2374 = vunpack.c.h.b16 %v2290
        %v2375 = vunpack.c.l.b16 %v2291
        %v2376 = vunpack.c.h.b16 %v2291
        %v2377 = vunpack.c.l.b16 %v2292
        %v2378 = vunpack.c.h.b16 %v2292
        %v2379 = vunpack.c.l.b16 %v2293
        %v2380 = vunpack.c.h.b16 %v2293
        %v2381 = vunpack.c.l.b16 %v2294
        %v2382 = vunpack.c.h.b16 %v2294
        %v2383 = vunpack.c.l.b16 %v2295
        %v2384 = vunpack.c.h.b16 %v2295
        %v2385 = vunpack.c.l.b16 %v2296
        %v2386 = vunpack.c.h.b16 %v2296
        %v2387 = vunpack.c.l.b16 %v2297
        %v2388 = vunpack.c.h.b16 %v2297
        %v2389 = vunpack.c.l.b16 %v2298
        %v2390 = vunpack.c.h.b16 %v2298
        %v2391 = vunpack.c.l.b16 %v2299
        %v2392 = vunpack.c.h.b16 %v2299
        %v2393 = vunpack.c.l.b16 %v2300
        %v2394 = vunpack.c.h.b16 %v2300
        %v2395 = vunpack.c.l.b16 %v2301
        %v2396 = vunpack.c.h.b16 %v2301
        %v2397 = vunpack.c.l.b16 %v2302
        %v2398 = vunpack.c.h.b16 %v2302
        %v2399 = vpack.c.b16 %v2337, %v2335
        %v2400 = vpack.c.b16 %v2338, %v2336
        %v2401 = vpack.c.b16 %v2341, %v2339
        %v2402 = vpack.c.b16 %v2342, %v2340
        %v2403 = vpack.c.b16 %v2345, %v2343
        %v2404 = vpack.c.b16 %v2346, %v2344
        %v2405 = vpack.c.b16 %v2349, %v2347
        %v2406 = vpack.c.b16 %v2350, %v2348
        %v2407 = vpack.c.b16 %v2353, %v2351
        %v2408 = vpack.c.b16 %v2354, %v2352
        %v2409 = vpack.c.b16 %v2357, %v2355
        %v2410 = vpack.c.b16 %v2358, %v2356
        %v2411 = vpack.c.b16 %v2361, %v2359
        %v2412 = vpack.c.b16 %v2362, %v2360
        %v2413 = vpack.c.b16 %v2365, %v2363
        %v2414 = vpack.c.b16 %v2366, %v2364
        %v2415 = vpack.c.b16 %v2369, %v2367
        %v2416 = vpack.c.b16 %v2370, %v2368
        %v2417 = vpack.c.b16 %v2373, %v2371
        %v2418 = vpack.c.b16 %v2374, %v2372
        %v2419 = vpack.c.b16 %v2377, %v2375
        %v2420 = vpack.c.b16 %v2378, %v2376
        %v2421 = vpack.c.b16 %v2381, %v2379
        %v2422 = vpack.c.b16 %v2382, %v2380
        %v2423 = vpack.c.b16 %v2385, %v2383
        %v2424 = vpack.c.b16 %v2386, %v2384
        %v2425 = vpack.c.b16 %v2389, %v2387
        %v2426 = vpack.c.b16 %v2390, %v2388
        %v2427 = vpack.c.b16 %v2393, %v2391
        %v2428 = vpack.c.b16 %v2394, %v2392
        %v2429 = vpack.c.b16 %v2397, %v2395
        %v2430 = vpack.c.b16 %v2398, %v2396
        %2463 = vmatpush.bf16.msra.mxu0 %v784
        %2464 = vmatpush.bf16.msra.mxu0 %v783
        %2465 = vmatpush.bf16.msra.mxu0 %v782
        %2466 = vmatpush.bf16.msra.mxu0 %v781
        %2467 = vmatpush.bf16.msra.mxu0 %v780
        %2468 = vmatpush.bf16.msra.mxu0 %v779
        %2469 = vmatpush.bf16.msra.mxu0 %v778
        %2470 = vmatpush.bf16.msra.mxu0 %v777
        %2471 = vmatmul.bf16.gmra.mxu0 %v2399
        %v2472 = vpop.f32.mrf.mxu0
        %v2473 = vadd.f32 0.0, %v2472
        %v2474 = vpop.f32.mrf.mxu0
        %v2475 = vadd.f32 0.0, %v2474
        %2476 = vmatmul.bf16.gmra.mxu0 %v2401
        %v2477 = vpop.f32.mrf.mxu0
        %v2478 = vadd.f32 0.0, %v2477
        %v2479 = vpop.f32.mrf.mxu0
        %v2480 = vadd.f32 0.0, %v2479
        %2481 = vmatmul.bf16.gmra.mxu0 %v2403
        %v2482 = vpop.f32.mrf.mxu0
        %v2483 = vadd.f32 0.0, %v2482
        %v2484 = vpop.f32.mrf.mxu0
        %v2485 = vadd.f32 0.0, %v2484
        %2486 = vmatmul.bf16.gmra.mxu0 %v2405
        %v2487 = vpop.f32.mrf.mxu0
        %v2488 = vadd.f32 0.0, %v2487
        %v2489 = vpop.f32.mrf.mxu0
        %v2490 = vadd.f32 0.0, %v2489
        %2491 = vmatmul.bf16.gmra.mxu0 %v2407
        %v2492 = vpop.f32.mrf.mxu0
        %v2493 = vadd.f32 0.0, %v2492
        %v2494 = vpop.f32.mrf.mxu0
        %v2495 = vadd.f32 0.0, %v2494
        %2496 = vmatmul.bf16.gmra.mxu0 %v2409
        %v2497 = vpop.f32.mrf.mxu0
        %v2498 = vadd.f32 0.0, %v2497
        %v2499 = vpop.f32.mrf.mxu0
        %v2500 = vadd.f32 0.0, %v2499
        %2501 = vmatmul.bf16.gmra.mxu0 %v2411
        %v2502 = vpop.f32.mrf.mxu0
        %v2503 = vadd.f32 0.0, %v2502
        %v2504 = vpop.f32.mrf.mxu0
        %v2505 = vadd.f32 0.0, %v2504
        %2506 = vmatmul.bf16.gmra.mxu0 %v2413
        %v2507 = vpop.f32.mrf.mxu0
        %v2508 = vadd.f32 0.0, %v2507
        %v2509 = vpop.f32.mrf.mxu0
        %v2510 = vadd.f32 0.0, %v2509
        %2511 = vmatmul.bf16.gmra.mxu0 %v2415
        %v2512 = vpop.f32.mrf.mxu0
        %v2513 = vadd.f32 0.0, %v2512
        %v2514 = vpop.f32.mrf.mxu0
        %v2515 = vadd.f32 0.0, %v2514
        %2516 = vmatmul.bf16.gmra.mxu0 %v2417
        %v2517 = vpop.f32.mrf.mxu0
        %v2518 = vadd.f32 0.0, %v2517
        %v2519 = vpop.f32.mrf.mxu0
        %v2520 = vadd.f32 0.0, %v2519
        %2521 = vmatmul.bf16.gmra.mxu0 %v2419
        %v2522 = vpop.f32.mrf.mxu0
        %v2523 = vadd.f32 0.0, %v2522
        %v2524 = vpop.f32.mrf.mxu0
        %v2525 = vadd.f32 0.0, %v2524
        %2526 = vmatmul.bf16.gmra.mxu0 %v2421
        %v2527 = vpop.f32.mrf.mxu0
        %v2528 = vadd.f32 0.0, %v2527
        %v2529 = vpop.f32.mrf.mxu0
        %v2530 = vadd.f32 0.0, %v2529
        %2531 = vmatmul.bf16.gmra.mxu0 %v2423
        %v2532 = vpop.f32.mrf.mxu0
        %v2533 = vadd.f32 0.0, %v2532
        %v2534 = vpop.f32.mrf.mxu0
        %v2535 = vadd.f32 0.0, %v2534
        %2536 = vmatmul.bf16.gmra.mxu0 %v2425
        %v2537 = vpop.f32.mrf.mxu0
        %v2538 = vadd.f32 0.0, %v2537
        %v2539 = vpop.f32.mrf.mxu0
        %v2540 = vadd.f32 0.0, %v2539
        %2541 = vmatmul.bf16.gmra.mxu0 %v2427
        %v2542 = vpop.f32.mrf.mxu0
        %v2543 = vadd.f32 0.0, %v2542
        %v2544 = vpop.f32.mrf.mxu0
        %v2545 = vadd.f32 0.0, %v2544
        %2546 = vmatmul.bf16.gmra.mxu0 %v2429
        %v2547 = vpop.f32.mrf.mxu0
        %v2548 = vadd.f32 0.0, %v2547
        %v2549 = vpop.f32.mrf.mxu0
        %v2550 = vadd.f32 0.0, %v2549
        %2551 = vdwg.mxu0
        %2552 = vmatpush.bf16.msra.mxu0 %v792
        %2553 = vmatpush.bf16.msra.mxu0 %v791
        %2554 = vmatpush.bf16.msra.mxu0 %v790
        %2555 = vmatpush.bf16.msra.mxu0 %v789
        %2556 = vmatpush.bf16.msra.mxu0 %v788
        %2557 = vmatpush.bf16.msra.mxu0 %v787
        %2558 = vmatpush.bf16.msra.mxu0 %v786
        %2559 = vmatpush.bf16.msra.mxu0 %v785
        %2560 = vmatmul.bf16.gmra.mxu0 %v2400
        %v2561 = vpop.f32.mrf.mxu0
        %v2562 = vadd.f32 %v2473, %v2561
        %v2563 = vpop.f32.mrf.mxu0
        %v2564 = vadd.f32 %v2475, %v2563
        %2565 = vmatmul.bf16.gmra.mxu0 %v2402
        %v2566 = vpop.f32.mrf.mxu0
        %v2567 = vadd.f32 %v2478, %v2566
        %v2568 = vpop.f32.mrf.mxu0
        %v2569 = vadd.f32 %v2480, %v2568
        %2570 = vmatmul.bf16.gmra.mxu0 %v2404
        %v2571 = vpop.f32.mrf.mxu0
        %v2572 = vadd.f32 %v2483, %v2571
        %v2573 = vpop.f32.mrf.mxu0
        %v2574 = vadd.f32 %v2485, %v2573
        %2575 = vmatmul.bf16.gmra.mxu0 %v2406
        %v2576 = vpop.f32.mrf.mxu0
        %v2577 = vadd.f32 %v2488, %v2576
        %v2578 = vpop.f32.mrf.mxu0
        %v2579 = vadd.f32 %v2490, %v2578
        %2580 = vmatmul.bf16.gmra.mxu0 %v2408
        %v2581 = vpop.f32.mrf.mxu0
        %v2582 = vadd.f32 %v2493, %v2581
        %v2583 = vpop.f32.mrf.mxu0
        %v2584 = vadd.f32 %v2495, %v2583
        %2585 = vmatmul.bf16.gmra.mxu0 %v2410
        %v2586 = vpop.f32.mrf.mxu0
        %v2587 = vadd.f32 %v2498, %v2586
        %v2588 = vpop.f32.mrf.mxu0
        %v2589 = vadd.f32 %v2500, %v2588
        %2590 = vmatmul.bf16.gmra.mxu0 %v2412
        %v2591 = vpop.f32.mrf.mxu0
        %v2592 = vadd.f32 %v2503, %v2591
        %v2593 = vpop.f32.mrf.mxu0
        %v2594 = vadd.f32 %v2505, %v2593
        %2595 = vmatmul.bf16.gmra.mxu0 %v2414
        %v2596 = vpop.f32.mrf.mxu0
        %v2597 = vadd.f32 %v2508, %v2596
        %v2598 = vpop.f32.mrf.mxu0
        %v2599 = vadd.f32 %v2510, %v2598
        %2600 = vmatmul.bf16.gmra.mxu0 %v2416
        %v2601 = vpop.f32.mrf.mxu0
        %v2602 = vadd.f32 %v2513, %v2601
        %v2603 = vpop.f32.mrf.mxu0
        %v2604 = vadd.f32 %v2515, %v2603
        %2605 = vmatmul.bf16.gmra.mxu0 %v2418
        %v2606 = vpop.f32.mrf.mxu0
        %v2607 = vadd.f32 %v2518, %v2606
        %v2608 = vpop.f32.mrf.mxu0
        %v2609 = vadd.f32 %v2520, %v2608
        %2610 = vmatmul.bf16.gmra.mxu0 %v2420
        %v2611 = vpop.f32.mrf.mxu0
        %v2612 = vadd.f32 %v2523, %v2611
        %v2613 = vpop.f32.mrf.mxu0
        %v2614 = vadd.f32 %v2525, %v2613
        %2615 = vmatmul.bf16.gmra.mxu0 %v2422
        %v2616 = vpop.f32.mrf.mxu0
        %v2617 = vadd.f32 %v2528, %v2616
        %v2618 = vpop.f32.mrf.mxu0
        %v2619 = vadd.f32 %v2530, %v2618
        %2620 = vmatmul.bf16.gmra.mxu0 %v2424
        %v2621 = vpop.f32.mrf.mxu0
        %v2622 = vadd.f32 %v2533, %v2621
        %v2623 = vpop.f32.mrf.mxu0
        %v2624 = vadd.f32 %v2535, %v2623
        %2625 = vmatmul.bf16.gmra.mxu0 %v2426
        %v2626 = vpop.f32.mrf.mxu0
        %v2627 = vadd.f32 %v2538, %v2626
        %v2628 = vpop.f32.mrf.mxu0
        %v2629 = vadd.f32 %v2540, %v2628
        %2630 = vmatmul.bf16.gmra.mxu0 %v2428
        %v2631 = vpop.f32.mrf.mxu0
        %v2632 = vadd.f32 %v2543, %v2631
        %v2633 = vpop.f32.mrf.mxu0
        %v2634 = vadd.f32 %v2545, %v2633
        %2635 = vmatmul.bf16.gmra.mxu0 %v2430
        %v2636 = vpop.f32.mrf.mxu0
        %v2637 = vadd.f32 %v2548, %v2636
        %v2638 = vpop.f32.mrf.mxu0
        %v2639 = vadd.f32 %v2550, %v2638
        %2640 = vdwg.mxu0
        %v2641 = vpack.c.bf16 %v2564, %v2562
        %v2642 = vpack.c.bf16 %v2569, %v2567
        %v2643 = vpack.c.bf16 %v2574, %v2572
        %v2644 = vpack.c.bf16 %v2579, %v2577
        %v2645 = vpack.c.bf16 %v2584, %v2582
        %v2646 = vpack.c.bf16 %v2589, %v2587
        %v2647 = vpack.c.bf16 %v2594, %v2592
        %v2648 = vpack.c.bf16 %v2599, %v2597
        %v2649 = vpack.c.bf16 %v2604, %v2602
        %v2650 = vpack.c.bf16 %v2609, %v2607
        %v2651 = vpack.c.bf16 %v2614, %v2612
        %v2652 = vpack.c.bf16 %v2619, %v2617
        %v2653 = vpack.c.bf16 %v2624, %v2622
        %v2654 = vpack.c.bf16 %v2629, %v2627
        %v2655 = vpack.c.bf16 %v2634, %v2632
        %v2656 = vpack.c.bf16 %v2639, %v2637
        %s2657 = scalar_lea.vmem [#allocation10], 192
        %v2658 = vld [vmem:[%s2657] sm:$0xf]
        %v2659 = vld [vmem:[%s2657 + $0x4] sm:$0xf]
        %v2660 = vld [vmem:[%s2657 + $0x8] sm:$0xf]
        %v2661 = vld [vmem:[%s2657 + $0xc] sm:$0xf]
        %v2662 = vld [vmem:[%s2657 + $0x10] sm:$0xf]
        %v2663 = vld [vmem:[%s2657 + $0x14] sm:$0xf]
        %v2664 = vld [vmem:[%s2657 + $0x18] sm:$0xf]
        %v2665 = vld [vmem:[%s2657 + $0x1c] sm:$0xf]
        %v2666 = vld [vmem:[%s2657 + $0x20] sm:$0xf]
        %v2667 = vld [vmem:[%s2657 + $0x24] sm:$0xf]
        %v2668 = vld [vmem:[%s2657 + $0x28] sm:$0xf]
        %v2669 = vld [vmem:[%s2657 + $0x2c] sm:$0xf]
        %v2670 = vld [vmem:[%s2657 + $0x30] sm:$0xf]
        %v2671 = vld [vmem:[%s2657 + $0x34] sm:$0xf]
        %v2672 = vld [vmem:[%s2657 + $0x38] sm:$0xf]
        %v2673 = vld [vmem:[%s2657 + $0x3c] sm:$0xf]
        %v2690 = vunpack.c.l.b16 %v2658
        %v2691 = vunpack.c.l.b16 %v2659
        %v2692 = vunpack.c.l.b16 %v2660
        %v2693 = vunpack.c.l.b16 %v2661
        %v2694 = vunpack.c.l.b16 %v2662
        %v2695 = vunpack.c.l.b16 %v2663
        %v2696 = vunpack.c.l.b16 %v2664
        %v2697 = vunpack.c.l.b16 %v2665
        %v2698 = vunpack.c.l.b16 %v2666
        %v2699 = vunpack.c.l.b16 %v2667
        %v2700 = vunpack.c.l.b16 %v2668
        %v2701 = vunpack.c.l.b16 %v2669
        %v2702 = vunpack.c.l.b16 %v2670
        %v2703 = vunpack.c.l.b16 %v2671
        %v2704 = vunpack.c.l.b16 %v2672
        %v2705 = vunpack.c.l.b16 %v2673
        %v2706 = vpack.c.b16 %v2691, %v2690
        %v2707 = vpack.c.b16 %v2693, %v2692
        %v2708 = vpack.c.b16 %v2695, %v2694
        %v2709 = vpack.c.b16 %v2697, %v2696
        %v2710 = vpack.c.b16 %v2699, %v2698
        %v2711 = vpack.c.b16 %v2701, %v2700
        %v2712 = vpack.c.b16 %v2703, %v2702
        %v2713 = vpack.c.b16 %v2705, %v2704
        %2722 = vmatpush.bf16.msra.mxu0 %v2713
        %2723 = vmatpush.bf16.msra.mxu0 %v2712
        %2724 = vmatpush.bf16.msra.mxu0 %v2711
        %2725 = vmatpush.bf16.msra.mxu0 %v2710
        %2726 = vmatpush.bf16.msra.mxu0 %v2709
        %2727 = vmatpush.bf16.msra.mxu0 %v2708
        %2728 = vmatpush.bf16.msra.mxu0 %v2707
        %2729 = vmatpush.bf16.msra.mxu0 %v2706
        %2730 = vmatmul.bf16.gmra.mxu0 %v2641
        %v2731 = vpop.f32.mrf.mxu0
        %v2732 = vadd.f32 0.0, %v2731
        %v2733 = vpop.f32.mrf.mxu0
        %v2734 = vadd.f32 0.0, %v2733
        %2735 = vmatmul.bf16.gmra.mxu0 %v2642
        %v2736 = vpop.f32.mrf.mxu0
        %v2737 = vadd.f32 0.0, %v2736
        %v2738 = vpop.f32.mrf.mxu0
        %v2739 = vadd.f32 0.0, %v2738
        %2740 = vmatmul.bf16.gmra.mxu0 %v2643
        %v2741 = vpop.f32.mrf.mxu0
        %v2742 = vadd.f32 0.0, %v2741
        %v2743 = vpop.f32.mrf.mxu0
        %v2744 = vadd.f32 0.0, %v2743
        %2745 = vmatmul.bf16.gmra.mxu0 %v2644
        %v2746 = vpop.f32.mrf.mxu0
        %v2747 = vadd.f32 0.0, %v2746
        %v2748 = vpop.f32.mrf.mxu0
        %v2749 = vadd.f32 0.0, %v2748
        %2750 = vmatmul.bf16.gmra.mxu0 %v2645
        %v2751 = vpop.f32.mrf.mxu0
        %v2752 = vadd.f32 0.0, %v2751
        %v2753 = vpop.f32.mrf.mxu0
        %v2754 = vadd.f32 0.0, %v2753
        %2755 = vmatmul.bf16.gmra.mxu0 %v2646
        %v2756 = vpop.f32.mrf.mxu0
        %v2757 = vadd.f32 0.0, %v2756
        %v2758 = vpop.f32.mrf.mxu0
        %v2759 = vadd.f32 0.0, %v2758
        %2760 = vmatmul.bf16.gmra.mxu0 %v2647
        %v2761 = vpop.f32.mrf.mxu0
        %v2762 = vadd.f32 0.0, %v2761
        %v2763 = vpop.f32.mrf.mxu0
        %v2764 = vadd.f32 0.0, %v2763
        %2765 = vmatmul.bf16.gmra.mxu0 %v2648
        %v2766 = vpop.f32.mrf.mxu0
        %v2767 = vadd.f32 0.0, %v2766
        %v2768 = vpop.f32.mrf.mxu0
        %v2769 = vadd.f32 0.0, %v2768
        %2770 = vmatmul.bf16.gmra.mxu0 %v2649
        %v2771 = vpop.f32.mrf.mxu0
        %v2772 = vadd.f32 0.0, %v2771
        %v2773 = vpop.f32.mrf.mxu0
        %v2774 = vadd.f32 0.0, %v2773
        %2775 = vmatmul.bf16.gmra.mxu0 %v2650
        %v2776 = vpop.f32.mrf.mxu0
        %v2777 = vadd.f32 0.0, %v2776
        %v2778 = vpop.f32.mrf.mxu0
        %v2779 = vadd.f32 0.0, %v2778
        %2780 = vmatmul.bf16.gmra.mxu0 %v2651
        %v2781 = vpop.f32.mrf.mxu0
        %v2782 = vadd.f32 0.0, %v2781
        %v2783 = vpop.f32.mrf.mxu0
        %v2784 = vadd.f32 0.0, %v2783
        %2785 = vmatmul.bf16.gmra.mxu0 %v2652
        %v2786 = vpop.f32.mrf.mxu0
        %v2787 = vadd.f32 0.0, %v2786
        %v2788 = vpop.f32.mrf.mxu0
        %v2789 = vadd.f32 0.0, %v2788
        %2790 = vmatmul.bf16.gmra.mxu0 %v2653
        %v2791 = vpop.f32.mrf.mxu0
        %v2792 = vadd.f32 0.0, %v2791
        %v2793 = vpop.f32.mrf.mxu0
        %v2794 = vadd.f32 0.0, %v2793
        %2795 = vmatmul.bf16.gmra.mxu0 %v2654
        %v2796 = vpop.f32.mrf.mxu0
        %v2797 = vadd.f32 0.0, %v2796
        %v2798 = vpop.f32.mrf.mxu0
        %v2799 = vadd.f32 0.0, %v2798
        %2800 = vmatmul.bf16.gmra.mxu0 %v2655
        %v2801 = vpop.f32.mrf.mxu0
        %v2802 = vadd.f32 0.0, %v2801
        %v2803 = vpop.f32.mrf.mxu0
        %v2804 = vadd.f32 0.0, %v2803
        %2805 = vmatmul.bf16.gmra.mxu0 %v2656
        %v2806 = vpop.f32.mrf.mxu0
        %v2807 = vadd.f32 0.0, %v2806
        %v2808 = vpop.f32.mrf.mxu0
        %v2809 = vadd.f32 0.0, %v2808
        %2810 = vdwg.mxu0
        %v2811 = vadd.f32 %v2238, %v2732
        %v2812 = vadd.f32 %v2239, %v2734
        %v2813 = vadd.f32 %v2240, %v2737
        %v2814 = vadd.f32 %v2241, %v2739
        %v2815 = vadd.f32 %v2242, %v2742
        %v2816 = vadd.f32 %v2243, %v2744
        %v2817 = vadd.f32 %v2244, %v2747
        %v2818 = vadd.f32 %v2245, %v2749
        %v2819 = vadd.f32 %v2246, %v2752
        %v2820 = vadd.f32 %v2247, %v2754
        %v2821 = vadd.f32 %v2248, %v2757
        %v2822 = vadd.f32 %v2249, %v2759
        %v2823 = vadd.f32 %v2250, %v2762
        %v2824 = vadd.f32 %v2251, %v2764
        %v2825 = vadd.f32 %v2252, %v2767
        %v2826 = vadd.f32 %v2253, %v2769
        %v2827 = vadd.f32 %v2254, %v2772
        %v2828 = vadd.f32 %v2255, %v2774
        %v2829 = vadd.f32 %v2256, %v2777
        %v2830 = vadd.f32 %v2257, %v2779
        %v2831 = vadd.f32 %v2258, %v2782
        %v2832 = vadd.f32 %v2259, %v2784
        %v2833 = vadd.f32 %v2260, %v2787
        %v2834 = vadd.f32 %v2261, %v2789
        %v2835 = vadd.f32 %v2262, %v2792
        %v2836 = vadd.f32 %v2263, %v2794
        %v2837 = vadd.f32 %v2264, %v2797
        %v2838 = vadd.f32 %v2265, %v2799
        %v2839 = vadd.f32 %v2266, %v2802
        %v2840 = vadd.f32 %v2267, %v2804
        %v2841 = vadd.f32 %v2268, %v2807
        %v2842 = vadd.f32 %v2269, %v2809
        %s2843 = scalar_lea.vmem [#allocation2], 1024
        %v2844 = vld [vmem:[%s2843] sm:$0xff]
        %v2845 = vld [vmem:[%s2843 + $0x8] sm:$0xff]
        %v2846 = vld [vmem:[%s2843 + $0x10] sm:$0xff]
        %v2847 = vld [vmem:[%s2843 + $0x18] sm:$0xff]
        %v2848 = vld [vmem:[%s2843 + $0x20] sm:$0xff]
        %v2849 = vld [vmem:[%s2843 + $0x28] sm:$0xff]
        %v2850 = vld [vmem:[%s2843 + $0x30] sm:$0xff]
        %v2851 = vld [vmem:[%s2843 + $0x38] sm:$0xff]
        %v2852 = vld [vmem:[%s2843 + $0x40] sm:$0xff]
        %v2853 = vld [vmem:[%s2843 + $0x48] sm:$0xff]
        %v2854 = vld [vmem:[%s2843 + $0x50] sm:$0xff]
        %v2855 = vld [vmem:[%s2843 + $0x58] sm:$0xff]
        %v2856 = vld [vmem:[%s2843 + $0x60] sm:$0xff]
        %v2857 = vld [vmem:[%s2843 + $0x68] sm:$0xff]
        %v2858 = vld [vmem:[%s2843 + $0x70] sm:$0xff]
        %v2859 = vld [vmem:[%s2843 + $0x78] sm:$0xff]
        %v2860 = vld [vmem:[%s2843 + $0x80] sm:$0xff]
        %v2861 = vld [vmem:[%s2843 + $0x88] sm:$0xff]
        %v2862 = vld [vmem:[%s2843 + $0x90] sm:$0xff]
        %v2863 = vld [vmem:[%s2843 + $0x98] sm:$0xff]
        %v2864 = vld [vmem:[%s2843 + $0xa0] sm:$0xff]
        %v2865 = vld [vmem:[%s2843 + $0xa8] sm:$0xff]
        %v2866 = vld [vmem:[%s2843 + $0xb0] sm:$0xff]
        %v2867 = vld [vmem:[%s2843 + $0xb8] sm:$0xff]
        %v2868 = vld [vmem:[%s2843 + $0xc0] sm:$0xff]
        %v2869 = vld [vmem:[%s2843 + $0xc8] sm:$0xff]
        %v2870 = vld [vmem:[%s2843 + $0xd0] sm:$0xff]
        %v2871 = vld [vmem:[%s2843 + $0xd8] sm:$0xff]
        %v2872 = vld [vmem:[%s2843 + $0xe0] sm:$0xff]
        %v2873 = vld [vmem:[%s2843 + $0xe8] sm:$0xff]
        %v2874 = vld [vmem:[%s2843 + $0xf0] sm:$0xff]
        %v2875 = vld [vmem:[%s2843 + $0xf8] sm:$0xff]
        %v2908 = vunpack.c.l.b16 %v2844
        %v2909 = vunpack.c.h.b16 %v2844
        %v2910 = vunpack.c.l.b16 %v2845
        %v2911 = vunpack.c.h.b16 %v2845
        %v2912 = vunpack.c.l.b16 %v2846
        %v2913 = vunpack.c.h.b16 %v2846
        %v2914 = vunpack.c.l.b16 %v2847
        %v2915 = vunpack.c.h.b16 %v2847
        %v2916 = vunpack.c.l.b16 %v2848
        %v2917 = vunpack.c.h.b16 %v2848
        %v2918 = vunpack.c.l.b16 %v2849
        %v2919 = vunpack.c.h.b16 %v2849
        %v2920 = vunpack.c.l.b16 %v2850
        %v2921 = vunpack.c.h.b16 %v2850
        %v2922 = vunpack.c.l.b16 %v2851
        %v2923 = vunpack.c.h.b16 %v2851
        %v2924 = vunpack.c.l.b16 %v2852
        %v2925 = vunpack.c.h.b16 %v2852
        %v2926 = vunpack.c.l.b16 %v2853
        %v2927 = vunpack.c.h.b16 %v2853
        %v2928 = vunpack.c.l.b16 %v2854
        %v2929 = vunpack.c.h.b16 %v2854
        %v2930 = vunpack.c.l.b16 %v2855
        %v2931 = vunpack.c.h.b16 %v2855
        %v2932 = vunpack.c.l.b16 %v2856
        %v2933 = vunpack.c.h.b16 %v2856
        %v2934 = vunpack.c.l.b16 %v2857
        %v2935 = vunpack.c.h.b16 %v2857
        %v2936 = vunpack.c.l.b16 %v2858
        %v2937 = vunpack.c.h.b16 %v2858
        %v2938 = vunpack.c.l.b16 %v2859
        %v2939 = vunpack.c.h.b16 %v2859
        %v2940 = vunpack.c.l.b16 %v2860
        %v2941 = vunpack.c.h.b16 %v2860
        %v2942 = vunpack.c.l.b16 %v2861
        %v2943 = vunpack.c.h.b16 %v2861
        %v2944 = vunpack.c.l.b16 %v2862
        %v2945 = vunpack.c.h.b16 %v2862
        %v2946 = vunpack.c.l.b16 %v2863
        %v2947 = vunpack.c.h.b16 %v2863
        %v2948 = vunpack.c.l.b16 %v2864
        %v2949 = vunpack.c.h.b16 %v2864
        %v2950 = vunpack.c.l.b16 %v2865
        %v2951 = vunpack.c.h.b16 %v2865
        %v2952 = vunpack.c.l.b16 %v2866
        %v2953 = vunpack.c.h.b16 %v2866
        %v2954 = vunpack.c.l.b16 %v2867
        %v2955 = vunpack.c.h.b16 %v2867
        %v2956 = vunpack.c.l.b16 %v2868
        %v2957 = vunpack.c.h.b16 %v2868
        %v2958 = vunpack.c.l.b16 %v2869
        %v2959 = vunpack.c.h.b16 %v2869
        %v2960 = vunpack.c.l.b16 %v2870
        %v2961 = vunpack.c.h.b16 %v2870
        %v2962 = vunpack.c.l.b16 %v2871
        %v2963 = vunpack.c.h.b16 %v2871
        %v2964 = vunpack.c.l.b16 %v2872
        %v2965 = vunpack.c.h.b16 %v2872
        %v2966 = vunpack.c.l.b16 %v2873
        %v2967 = vunpack.c.h.b16 %v2873
        %v2968 = vunpack.c.l.b16 %v2874
        %v2969 = vunpack.c.h.b16 %v2874
        %v2970 = vunpack.c.l.b16 %v2875
        %v2971 = vunpack.c.h.b16 %v2875
        %v2972 = vpack.c.b16 %v2910, %v2908
        %v2973 = vpack.c.b16 %v2911, %v2909
        %v2974 = vpack.c.b16 %v2914, %v2912
        %v2975 = vpack.c.b16 %v2915, %v2913
        %v2976 = vpack.c.b16 %v2918, %v2916
        %v2977 = vpack.c.b16 %v2919, %v2917
        %v2978 = vpack.c.b16 %v2922, %v2920
        %v2979 = vpack.c.b16 %v2923, %v2921
        %v2980 = vpack.c.b16 %v2926, %v2924
        %v2981 = vpack.c.b16 %v2927, %v2925
        %v2982 = vpack.c.b16 %v2930, %v2928
        %v2983 = vpack.c.b16 %v2931, %v2929
        %v2984 = vpack.c.b16 %v2934, %v2932
        %v2985 = vpack.c.b16 %v2935, %v2933
        %v2986 = vpack.c.b16 %v2938, %v2936
        %v2987 = vpack.c.b16 %v2939, %v2937
        %v2988 = vpack.c.b16 %v2942, %v2940
        %v2989 = vpack.c.b16 %v2943, %v2941
        %v2990 = vpack.c.b16 %v2946, %v2944
        %v2991 = vpack.c.b16 %v2947, %v2945
        %v2992 = vpack.c.b16 %v2950, %v2948
        %v2993 = vpack.c.b16 %v2951, %v2949
        %v2994 = vpack.c.b16 %v2954, %v2952
        %v2995 = vpack.c.b16 %v2955, %v2953
        %v2996 = vpack.c.b16 %v2958, %v2956
        %v2997 = vpack.c.b16 %v2959, %v2957
        %v2998 = vpack.c.b16 %v2962, %v2960
        %v2999 = vpack.c.b16 %v2963, %v2961
        %v3000 = vpack.c.b16 %v2966, %v2964
        %v3001 = vpack.c.b16 %v2967, %v2965
        %v3002 = vpack.c.b16 %v2970, %v2968
        %v3003 = vpack.c.b16 %v2971, %v2969
        %3036 = vmatpush.bf16.msra.mxu0 %v784
        %3037 = vmatpush.bf16.msra.mxu0 %v783
        %3038 = vmatpush.bf16.msra.mxu0 %v782
        %3039 = vmatpush.bf16.msra.mxu0 %v781
        %3040 = vmatpush.bf16.msra.mxu0 %v780
        %3041 = vmatpush.bf16.msra.mxu0 %v779
        %3042 = vmatpush.bf16.msra.mxu0 %v778
        %3043 = vmatpush.bf16.msra.mxu0 %v777
        %3044 = vmatmul.bf16.gmra.mxu0 %v2972
        %v3045 = vpop.f32.mrf.mxu0
        %v3046 = vadd.f32 0.0, %v3045
        %v3047 = vpop.f32.mrf.mxu0
        %v3048 = vadd.f32 0.0, %v3047
        %3049 = vmatmul.bf16.gmra.mxu0 %v2974
        %v3050 = vpop.f32.mrf.mxu0
        %v3051 = vadd.f32 0.0, %v3050
        %v3052 = vpop.f32.mrf.mxu0
        %v3053 = vadd.f32 0.0, %v3052
        %3054 = vmatmul.bf16.gmra.mxu0 %v2976
        %v3055 = vpop.f32.mrf.mxu0
        %v3056 = vadd.f32 0.0, %v3055
        %v3057 = vpop.f32.mrf.mxu0
        %v3058 = vadd.f32 0.0, %v3057
        %3059 = vmatmul.bf16.gmra.mxu0 %v2978
        %v3060 = vpop.f32.mrf.mxu0
        %v3061 = vadd.f32 0.0, %v3060
        %v3062 = vpop.f32.mrf.mxu0
        %v3063 = vadd.f32 0.0, %v3062
        %3064 = vmatmul.bf16.gmra.mxu0 %v2980
        %v3065 = vpop.f32.mrf.mxu0
        %v3066 = vadd.f32 0.0, %v3065
        %v3067 = vpop.f32.mrf.mxu0
        %v3068 = vadd.f32 0.0, %v3067
        %3069 = vmatmul.bf16.gmra.mxu0 %v2982
        %v3070 = vpop.f32.mrf.mxu0
        %v3071 = vadd.f32 0.0, %v3070
        %v3072 = vpop.f32.mrf.mxu0
        %v3073 = vadd.f32 0.0, %v3072
        %3074 = vmatmul.bf16.gmra.mxu0 %v2984
        %v3075 = vpop.f32.mrf.mxu0
        %v3076 = vadd.f32 0.0, %v3075
        %v3077 = vpop.f32.mrf.mxu0
        %v3078 = vadd.f32 0.0, %v3077
        %3079 = vmatmul.bf16.gmra.mxu0 %v2986
        %v3080 = vpop.f32.mrf.mxu0
        %v3081 = vadd.f32 0.0, %v3080
        %v3082 = vpop.f32.mrf.mxu0
        %v3083 = vadd.f32 0.0, %v3082
        %3084 = vmatmul.bf16.gmra.mxu0 %v2988
        %v3085 = vpop.f32.mrf.mxu0
        %v3086 = vadd.f32 0.0, %v3085
        %v3087 = vpop.f32.mrf.mxu0
        %v3088 = vadd.f32 0.0, %v3087
        %3089 = vmatmul.bf16.gmra.mxu0 %v2990
        %v3090 = vpop.f32.mrf.mxu0
        %v3091 = vadd.f32 0.0, %v3090
        %v3092 = vpop.f32.mrf.mxu0
        %v3093 = vadd.f32 0.0, %v3092
        %3094 = vmatmul.bf16.gmra.mxu0 %v2992
        %v3095 = vpop.f32.mrf.mxu0
        %v3096 = vadd.f32 0.0, %v3095
        %v3097 = vpop.f32.mrf.mxu0
        %v3098 = vadd.f32 0.0, %v3097
        %3099 = vmatmul.bf16.gmra.mxu0 %v2994
        %v3100 = vpop.f32.mrf.mxu0
        %v3101 = vadd.f32 0.0, %v3100
        %v3102 = vpop.f32.mrf.mxu0
        %v3103 = vadd.f32 0.0, %v3102
        %3104 = vmatmul.bf16.gmra.mxu0 %v2996
        %v3105 = vpop.f32.mrf.mxu0
        %v3106 = vadd.f32 0.0, %v3105
        %v3107 = vpop.f32.mrf.mxu0
        %v3108 = vadd.f32 0.0, %v3107
        %3109 = vmatmul.bf16.gmra.mxu0 %v2998
        %v3110 = vpop.f32.mrf.mxu0
        %v3111 = vadd.f32 0.0, %v3110
        %v3112 = vpop.f32.mrf.mxu0
        %v3113 = vadd.f32 0.0, %v3112
        %3114 = vmatmul.bf16.gmra.mxu0 %v3000
        %v3115 = vpop.f32.mrf.mxu0
        %v3116 = vadd.f32 0.0, %v3115
        %v3117 = vpop.f32.mrf.mxu0
        %v3118 = vadd.f32 0.0, %v3117
        %3119 = vmatmul.bf16.gmra.mxu0 %v3002
        %v3120 = vpop.f32.mrf.mxu0
        %v3121 = vadd.f32 0.0, %v3120
        %v3122 = vpop.f32.mrf.mxu0
        %v3123 = vadd.f32 0.0, %v3122
        %3124 = vdwg.mxu0
        %3125 = vmatpush.bf16.msra.mxu0 %v792
        %3126 = vmatpush.bf16.msra.mxu0 %v791
        %3127 = vmatpush.bf16.msra.mxu0 %v790
        %3128 = vmatpush.bf16.msra.mxu0 %v789
        %3129 = vmatpush.bf16.msra.mxu0 %v788
        %3130 = vmatpush.bf16.msra.mxu0 %v787
        %3131 = vmatpush.bf16.msra.mxu0 %v786
        %3132 = vmatpush.bf16.msra.mxu0 %v785
        %3133 = vmatmul.bf16.gmra.mxu0 %v2973
        %v3134 = vpop.f32.mrf.mxu0
        %v3135 = vadd.f32 %v3046, %v3134
        %v3136 = vpop.f32.mrf.mxu0
        %v3137 = vadd.f32 %v3048, %v3136
        %3138 = vmatmul.bf16.gmra.mxu0 %v2975
        %v3139 = vpop.f32.mrf.mxu0
        %v3140 = vadd.f32 %v3051, %v3139
        %v3141 = vpop.f32.mrf.mxu0
        %v3142 = vadd.f32 %v3053, %v3141
        %3143 = vmatmul.bf16.gmra.mxu0 %v2977
        %v3144 = vpop.f32.mrf.mxu0
        %v3145 = vadd.f32 %v3056, %v3144
        %v3146 = vpop.f32.mrf.mxu0
        %v3147 = vadd.f32 %v3058, %v3146
        %3148 = vmatmul.bf16.gmra.mxu0 %v2979
        %v3149 = vpop.f32.mrf.mxu0
        %v3150 = vadd.f32 %v3061, %v3149
        %v3151 = vpop.f32.mrf.mxu0
        %v3152 = vadd.f32 %v3063, %v3151
        %3153 = vmatmul.bf16.gmra.mxu0 %v2981
        %v3154 = vpop.f32.mrf.mxu0
        %v3155 = vadd.f32 %v3066, %v3154
        %v3156 = vpop.f32.mrf.mxu0
        %v3157 = vadd.f32 %v3068, %v3156
        %3158 = vmatmul.bf16.gmra.mxu0 %v2983
        %v3159 = vpop.f32.mrf.mxu0
        %v3160 = vadd.f32 %v3071, %v3159
        %v3161 = vpop.f32.mrf.mxu0
        %v3162 = vadd.f32 %v3073, %v3161
        %3163 = vmatmul.bf16.gmra.mxu0 %v2985
        %v3164 = vpop.f32.mrf.mxu0
        %v3165 = vadd.f32 %v3076, %v3164
        %v3166 = vpop.f32.mrf.mxu0
        %v3167 = vadd.f32 %v3078, %v3166
        %3168 = vmatmul.bf16.gmra.mxu0 %v2987
        %v3169 = vpop.f32.mrf.mxu0
        %v3170 = vadd.f32 %v3081, %v3169
        %v3171 = vpop.f32.mrf.mxu0
        %v3172 = vadd.f32 %v3083, %v3171
        %3173 = vmatmul.bf16.gmra.mxu0 %v2989
        %v3174 = vpop.f32.mrf.mxu0
        %v3175 = vadd.f32 %v3086, %v3174
        %v3176 = vpop.f32.mrf.mxu0
        %v3177 = vadd.f32 %v3088, %v3176
        %3178 = vmatmul.bf16.gmra.mxu0 %v2991
        %v3179 = vpop.f32.mrf.mxu0
        %v3180 = vadd.f32 %v3091, %v3179
        %v3181 = vpop.f32.mrf.mxu0
        %v3182 = vadd.f32 %v3093, %v3181
        %3183 = vmatmul.bf16.gmra.mxu0 %v2993
        %v3184 = vpop.f32.mrf.mxu0
        %v3185 = vadd.f32 %v3096, %v3184
        %v3186 = vpop.f32.mrf.mxu0
        %v3187 = vadd.f32 %v3098, %v3186
        %3188 = vmatmul.bf16.gmra.mxu0 %v2995
        %v3189 = vpop.f32.mrf.mxu0
        %v3190 = vadd.f32 %v3101, %v3189
        %v3191 = vpop.f32.mrf.mxu0
        %v3192 = vadd.f32 %v3103, %v3191
        %3193 = vmatmul.bf16.gmra.mxu0 %v2997
        %v3194 = vpop.f32.mrf.mxu0
        %v3195 = vadd.f32 %v3106, %v3194
        %v3196 = vpop.f32.mrf.mxu0
        %v3197 = vadd.f32 %v3108, %v3196
        %3198 = vmatmul.bf16.gmra.mxu0 %v2999
        %v3199 = vpop.f32.mrf.mxu0
        %v3200 = vadd.f32 %v3111, %v3199
        %v3201 = vpop.f32.mrf.mxu0
        %v3202 = vadd.f32 %v3113, %v3201
        %3203 = vmatmul.bf16.gmra.mxu0 %v3001
        %v3204 = vpop.f32.mrf.mxu0
        %v3205 = vadd.f32 %v3116, %v3204
        %v3206 = vpop.f32.mrf.mxu0
        %v3207 = vadd.f32 %v3118, %v3206
        %3208 = vmatmul.bf16.gmra.mxu0 %v3003
        %v3209 = vpop.f32.mrf.mxu0
        %v3210 = vadd.f32 %v3121, %v3209
        %v3211 = vpop.f32.mrf.mxu0
        %v3212 = vadd.f32 %v3123, %v3211
        %3213 = vdwg.mxu0
        %v3214 = vpack.c.bf16 %v3137, %v3135
        %v3215 = vpack.c.bf16 %v3142, %v3140
        %v3216 = vpack.c.bf16 %v3147, %v3145
        %v3217 = vpack.c.bf16 %v3152, %v3150
        %v3218 = vpack.c.bf16 %v3157, %v3155
        %v3219 = vpack.c.bf16 %v3162, %v3160
        %v3220 = vpack.c.bf16 %v3167, %v3165
        %v3221 = vpack.c.bf16 %v3172, %v3170
        %v3222 = vpack.c.bf16 %v3177, %v3175
        %v3223 = vpack.c.bf16 %v3182, %v3180
        %v3224 = vpack.c.bf16 %v3187, %v3185
        %v3225 = vpack.c.bf16 %v3192, %v3190
        %v3226 = vpack.c.bf16 %v3197, %v3195
        %v3227 = vpack.c.bf16 %v3202, %v3200
        %v3228 = vpack.c.bf16 %v3207, %v3205
        %v3229 = vpack.c.bf16 %v3212, %v3210
        %s3230 = scalar_lea.vmem [#allocation10], 256
        %v3231 = vld [vmem:[%s3230] sm:$0xf]
        %v3232 = vld [vmem:[%s3230 + $0x4] sm:$0xf]
        %v3233 = vld [vmem:[%s3230 + $0x8] sm:$0xf]
        %v3234 = vld [vmem:[%s3230 + $0xc] sm:$0xf]
        %v3235 = vld [vmem:[%s3230 + $0x10] sm:$0xf]
        %v3236 = vld [vmem:[%s3230 + $0x14] sm:$0xf]
        %v3237 = vld [vmem:[%s3230 + $0x18] sm:$0xf]
        %v3238 = vld [vmem:[%s3230 + $0x1c] sm:$0xf]
        %v3239 = vld [vmem:[%s3230 + $0x20] sm:$0xf]
        %v3240 = vld [vmem:[%s3230 + $0x24] sm:$0xf]
        %v3241 = vld [vmem:[%s3230 + $0x28] sm:$0xf]
        %v3242 = vld [vmem:[%s3230 + $0x2c] sm:$0xf]
        %v3243 = vld [vmem:[%s3230 + $0x30] sm:$0xf]
        %v3244 = vld [vmem:[%s3230 + $0x34] sm:$0xf]
        %v3245 = vld [vmem:[%s3230 + $0x38] sm:$0xf]
        %v3246 = vld [vmem:[%s3230 + $0x3c] sm:$0xf]
        %v3263 = vunpack.c.l.b16 %v3231
        %v3264 = vunpack.c.l.b16 %v3232
        %v3265 = vunpack.c.l.b16 %v3233
        %v3266 = vunpack.c.l.b16 %v3234
        %v3267 = vunpack.c.l.b16 %v3235
        %v3268 = vunpack.c.l.b16 %v3236
        %v3269 = vunpack.c.l.b16 %v3237
        %v3270 = vunpack.c.l.b16 %v3238
        %v3271 = vunpack.c.l.b16 %v3239
        %v3272 = vunpack.c.l.b16 %v3240
        %v3273 = vunpack.c.l.b16 %v3241
        %v3274 = vunpack.c.l.b16 %v3242
        %v3275 = vunpack.c.l.b16 %v3243
        %v3276 = vunpack.c.l.b16 %v3244
        %v3277 = vunpack.c.l.b16 %v3245
        %v3278 = vunpack.c.l.b16 %v3246
        %v3279 = vpack.c.b16 %v3264, %v3263
        %v3280 = vpack.c.b16 %v3266, %v3265
        %v3281 = vpack.c.b16 %v3268, %v3267
        %v3282 = vpack.c.b16 %v3270, %v3269
        %v3283 = vpack.c.b16 %v3272, %v3271
        %v3284 = vpack.c.b16 %v3274, %v3273
        %v3285 = vpack.c.b16 %v3276, %v3275
        %v3286 = vpack.c.b16 %v3278, %v3277
        %3295 = vmatpush.bf16.msra.mxu0 %v3286
        %3296 = vmatpush.bf16.msra.mxu0 %v3285
        %3297 = vmatpush.bf16.msra.mxu0 %v3284
        %3298 = vmatpush.bf16.msra.mxu0 %v3283
        %3299 = vmatpush.bf16.msra.mxu0 %v3282
        %3300 = vmatpush.bf16.msra.mxu0 %v3281
        %3301 = vmatpush.bf16.msra.mxu0 %v3280
        %3302 = vmatpush.bf16.msra.mxu0 %v3279
        %3303 = vmatmul.bf16.gmra.mxu0 %v3214
        %v3304 = vpop.f32.mrf.mxu0
        %v3305 = vadd.f32 0.0, %v3304
        %v3306 = vpop.f32.mrf.mxu0
        %v3307 = vadd.f32 0.0, %v3306
        %3308 = vmatmul.bf16.gmra.mxu0 %v3215
        %v3309 = vpop.f32.mrf.mxu0
        %v3310 = vadd.f32 0.0, %v3309
        %v3311 = vpop.f32.mrf.mxu0
        %v3312 = vadd.f32 0.0, %v3311
        %3313 = vmatmul.bf16.gmra.mxu0 %v3216
        %v3314 = vpop.f32.mrf.mxu0
        %v3315 = vadd.f32 0.0, %v3314
        %v3316 = vpop.f32.mrf.mxu0
        %v3317 = vadd.f32 0.0, %v3316
        %3318 = vmatmul.bf16.gmra.mxu0 %v3217
        %v3319 = vpop.f32.mrf.mxu0
        %v3320 = vadd.f32 0.0, %v3319
        %v3321 = vpop.f32.mrf.mxu0
        %v3322 = vadd.f32 0.0, %v3321
        %3323 = vmatmul.bf16.gmra.mxu0 %v3218
        %v3324 = vpop.f32.mrf.mxu0
        %v3325 = vadd.f32 0.0, %v3324
        %v3326 = vpop.f32.mrf.mxu0
        %v3327 = vadd.f32 0.0, %v3326
        %3328 = vmatmul.bf16.gmra.mxu0 %v3219
        %v3329 = vpop.f32.mrf.mxu0
        %v3330 = vadd.f32 0.0, %v3329
        %v3331 = vpop.f32.mrf.mxu0
        %v3332 = vadd.f32 0.0, %v3331
        %3333 = vmatmul.bf16.gmra.mxu0 %v3220
        %v3334 = vpop.f32.mrf.mxu0
        %v3335 = vadd.f32 0.0, %v3334
        %v3336 = vpop.f32.mrf.mxu0
        %v3337 = vadd.f32 0.0, %v3336
        %3338 = vmatmul.bf16.gmra.mxu0 %v3221
        %v3339 = vpop.f32.mrf.mxu0
        %v3340 = vadd.f32 0.0, %v3339
        %v3341 = vpop.f32.mrf.mxu0
        %v3342 = vadd.f32 0.0, %v3341
        %3343 = vmatmul.bf16.gmra.mxu0 %v3222
        %v3344 = vpop.f32.mrf.mxu0
        %v3345 = vadd.f32 0.0, %v3344
        %v3346 = vpop.f32.mrf.mxu0
        %v3347 = vadd.f32 0.0, %v3346
        %3348 = vmatmul.bf16.gmra.mxu0 %v3223
        %v3349 = vpop.f32.mrf.mxu0
        %v3350 = vadd.f32 0.0, %v3349
        %v3351 = vpop.f32.mrf.mxu0
        %v3352 = vadd.f32 0.0, %v3351
        %3353 = vmatmul.bf16.gmra.mxu0 %v3224
        %v3354 = vpop.f32.mrf.mxu0
        %v3355 = vadd.f32 0.0, %v3354
        %v3356 = vpop.f32.mrf.mxu0
        %v3357 = vadd.f32 0.0, %v3356
        %3358 = vmatmul.bf16.gmra.mxu0 %v3225
        %v3359 = vpop.f32.mrf.mxu0
        %v3360 = vadd.f32 0.0, %v3359
        %v3361 = vpop.f32.mrf.mxu0
        %v3362 = vadd.f32 0.0, %v3361
        %3363 = vmatmul.bf16.gmra.mxu0 %v3226
        %v3364 = vpop.f32.mrf.mxu0
        %v3365 = vadd.f32 0.0, %v3364
        %v3366 = vpop.f32.mrf.mxu0
        %v3367 = vadd.f32 0.0, %v3366
        %3368 = vmatmul.bf16.gmra.mxu0 %v3227
        %v3369 = vpop.f32.mrf.mxu0
        %v3370 = vadd.f32 0.0, %v3369
        %v3371 = vpop.f32.mrf.mxu0
        %v3372 = vadd.f32 0.0, %v3371
        %3373 = vmatmul.bf16.gmra.mxu0 %v3228
        %v3374 = vpop.f32.mrf.mxu0
        %v3375 = vadd.f32 0.0, %v3374
        %v3376 = vpop.f32.mrf.mxu0
        %v3377 = vadd.f32 0.0, %v3376
        %3378 = vmatmul.bf16.gmra.mxu0 %v3229
        %v3379 = vpop.f32.mrf.mxu0
        %v3380 = vadd.f32 0.0, %v3379
        %v3381 = vpop.f32.mrf.mxu0
        %v3382 = vadd.f32 0.0, %v3381
        %3383 = vdwg.mxu0
        %v3384 = vadd.f32 %v2811, %v3305
        %v3385 = vadd.f32 %v2812, %v3307
        %v3386 = vadd.f32 %v2813, %v3310
        %v3387 = vadd.f32 %v2814, %v3312
        %v3388 = vadd.f32 %v2815, %v3315
        %v3389 = vadd.f32 %v2816, %v3317
        %v3390 = vadd.f32 %v2817, %v3320
        %v3391 = vadd.f32 %v2818, %v3322
        %v3392 = vadd.f32 %v2819, %v3325
        %v3393 = vadd.f32 %v2820, %v3327
        %v3394 = vadd.f32 %v2821, %v3330
        %v3395 = vadd.f32 %v2822, %v3332
        %v3396 = vadd.f32 %v2823, %v3335
        %v3397 = vadd.f32 %v2824, %v3337
        %v3398 = vadd.f32 %v2825, %v3340
        %v3399 = vadd.f32 %v2826, %v3342
        %v3400 = vadd.f32 %v2827, %v3345
        %v3401 = vadd.f32 %v2828, %v3347
        %v3402 = vadd.f32 %v2829, %v3350
        %v3403 = vadd.f32 %v2830, %v3352
        %v3404 = vadd.f32 %v2831, %v3355
        %v3405 = vadd.f32 %v2832, %v3357
        %v3406 = vadd.f32 %v2833, %v3360
        %v3407 = vadd.f32 %v2834, %v3362
        %v3408 = vadd.f32 %v2835, %v3365
        %v3409 = vadd.f32 %v2836, %v3367
        %v3410 = vadd.f32 %v2837, %v3370
        %v3411 = vadd.f32 %v2838, %v3372
        %v3412 = vadd.f32 %v2839, %v3375
        %v3413 = vadd.f32 %v2840, %v3377
        %v3414 = vadd.f32 %v2841, %v3380
        %v3415 = vadd.f32 %v2842, %v3382
        %s3416 = scalar_lea.vmem [#allocation2], 1280
        %v3417 = vld [vmem:[%s3416] sm:$0xff]
        %v3418 = vld [vmem:[%s3416 + $0x8] sm:$0xff]
        %v3419 = vld [vmem:[%s3416 + $0x10] sm:$0xff]
        %v3420 = vld [vmem:[%s3416 + $0x18] sm:$0xff]
        %v3421 = vld [vmem:[%s3416 + $0x20] sm:$0xff]
        %v3422 = vld [vmem:[%s3416 + $0x28] sm:$0xff]
        %v3423 = vld [vmem:[%s3416 + $0x30] sm:$0xff]
        %v3424 = vld [vmem:[%s3416 + $0x38] sm:$0xff]
        %v3425 = vld [vmem:[%s3416 + $0x40] sm:$0xff]
        %v3426 = vld [vmem:[%s3416 + $0x48] sm:$0xff]
        %v3427 = vld [vmem:[%s3416 + $0x50] sm:$0xff]
        %v3428 = vld [vmem:[%s3416 + $0x58] sm:$0xff]
        %v3429 = vld [vmem:[%s3416 + $0x60] sm:$0xff]
        %v3430 = vld [vmem:[%s3416 + $0x68] sm:$0xff]
        %v3431 = vld [vmem:[%s3416 + $0x70] sm:$0xff]
        %v3432 = vld [vmem:[%s3416 + $0x78] sm:$0xff]
        %v3433 = vld [vmem:[%s3416 + $0x80] sm:$0xff]
        %v3434 = vld [vmem:[%s3416 + $0x88] sm:$0xff]
        %v3435 = vld [vmem:[%s3416 + $0x90] sm:$0xff]
        %v3436 = vld [vmem:[%s3416 + $0x98] sm:$0xff]
        %v3437 = vld [vmem:[%s3416 + $0xa0] sm:$0xff]
        %v3438 = vld [vmem:[%s3416 + $0xa8] sm:$0xff]
        %v3439 = vld [vmem:[%s3416 + $0xb0] sm:$0xff]
        %v3440 = vld [vmem:[%s3416 + $0xb8] sm:$0xff]
        %v3441 = vld [vmem:[%s3416 + $0xc0] sm:$0xff]
        %v3442 = vld [vmem:[%s3416 + $0xc8] sm:$0xff]
        %v3443 = vld [vmem:[%s3416 + $0xd0] sm:$0xff]
        %v3444 = vld [vmem:[%s3416 + $0xd8] sm:$0xff]
        %v3445 = vld [vmem:[%s3416 + $0xe0] sm:$0xff]
        %v3446 = vld [vmem:[%s3416 + $0xe8] sm:$0xff]
        %v3447 = vld [vmem:[%s3416 + $0xf0] sm:$0xff]
        %v3448 = vld [vmem:[%s3416 + $0xf8] sm:$0xff]
        %v3481 = vunpack.c.l.b16 %v3417
        %v3482 = vunpack.c.h.b16 %v3417
        %v3483 = vunpack.c.l.b16 %v3418
        %v3484 = vunpack.c.h.b16 %v3418
        %v3485 = vunpack.c.l.b16 %v3419
        %v3486 = vunpack.c.h.b16 %v3419
        %v3487 = vunpack.c.l.b16 %v3420
        %v3488 = vunpack.c.h.b16 %v3420
        %v3489 = vunpack.c.l.b16 %v3421
        %v3490 = vunpack.c.h.b16 %v3421
        %v3491 = vunpack.c.l.b16 %v3422
        %v3492 = vunpack.c.h.b16 %v3422
        %v3493 = vunpack.c.l.b16 %v3423
        %v3494 = vunpack.c.h.b16 %v3423
        %v3495 = vunpack.c.l.b16 %v3424
        %v3496 = vunpack.c.h.b16 %v3424
        %v3497 = vunpack.c.l.b16 %v3425
        %v3498 = vunpack.c.h.b16 %v3425
        %v3499 = vunpack.c.l.b16 %v3426
        %v3500 = vunpack.c.h.b16 %v3426
        %v3501 = vunpack.c.l.b16 %v3427
        %v3502 = vunpack.c.h.b16 %v3427
        %v3503 = vunpack.c.l.b16 %v3428
        %v3504 = vunpack.c.h.b16 %v3428
        %v3505 = vunpack.c.l.b16 %v3429
        %v3506 = vunpack.c.h.b16 %v3429
        %v3507 = vunpack.c.l.b16 %v3430
        %v3508 = vunpack.c.h.b16 %v3430
        %v3509 = vunpack.c.l.b16 %v3431
        %v3510 = vunpack.c.h.b16 %v3431
        %v3511 = vunpack.c.l.b16 %v3432
        %v3512 = vunpack.c.h.b16 %v3432
        %v3513 = vunpack.c.l.b16 %v3433
        %v3514 = vunpack.c.h.b16 %v3433
        %v3515 = vunpack.c.l.b16 %v3434
        %v3516 = vunpack.c.h.b16 %v3434
        %v3517 = vunpack.c.l.b16 %v3435
        %v3518 = vunpack.c.h.b16 %v3435
        %v3519 = vunpack.c.l.b16 %v3436
        %v3520 = vunpack.c.h.b16 %v3436
        %v3521 = vunpack.c.l.b16 %v3437
        %v3522 = vunpack.c.h.b16 %v3437
        %v3523 = vunpack.c.l.b16 %v3438
        %v3524 = vunpack.c.h.b16 %v3438
        %v3525 = vunpack.c.l.b16 %v3439
        %v3526 = vunpack.c.h.b16 %v3439
        %v3527 = vunpack.c.l.b16 %v3440
        %v3528 = vunpack.c.h.b16 %v3440
        %v3529 = vunpack.c.l.b16 %v3441
        %v3530 = vunpack.c.h.b16 %v3441
        %v3531 = vunpack.c.l.b16 %v3442
        %v3532 = vunpack.c.h.b16 %v3442
        %v3533 = vunpack.c.l.b16 %v3443
        %v3534 = vunpack.c.h.b16 %v3443
        %v3535 = vunpack.c.l.b16 %v3444
        %v3536 = vunpack.c.h.b16 %v3444
        %v3537 = vunpack.c.l.b16 %v3445
        %v3538 = vunpack.c.h.b16 %v3445
        %v3539 = vunpack.c.l.b16 %v3446
        %v3540 = vunpack.c.h.b16 %v3446
        %v3541 = vunpack.c.l.b16 %v3447
        %v3542 = vunpack.c.h.b16 %v3447
        %v3543 = vunpack.c.l.b16 %v3448
        %v3544 = vunpack.c.h.b16 %v3448
        %v3545 = vpack.c.b16 %v3483, %v3481
        %v3546 = vpack.c.b16 %v3484, %v3482
        %v3547 = vpack.c.b16 %v3487, %v3485
        %v3548 = vpack.c.b16 %v3488, %v3486
        %v3549 = vpack.c.b16 %v3491, %v3489
        %v3550 = vpack.c.b16 %v3492, %v3490
        %v3551 = vpack.c.b16 %v3495, %v3493
        %v3552 = vpack.c.b16 %v3496, %v3494
        %v3553 = vpack.c.b16 %v3499, %v3497
        %v3554 = vpack.c.b16 %v3500, %v3498
        %v3555 = vpack.c.b16 %v3503, %v3501
        %v3556 = vpack.c.b16 %v3504, %v3502
        %v3557 = vpack.c.b16 %v3507, %v3505
        %v3558 = vpack.c.b16 %v3508, %v3506
        %v3559 = vpack.c.b16 %v3511, %v3509
        %v3560 = vpack.c.b16 %v3512, %v3510
        %v3561 = vpack.c.b16 %v3515, %v3513
        %v3562 = vpack.c.b16 %v3516, %v3514
        %v3563 = vpack.c.b16 %v3519, %v3517
        %v3564 = vpack.c.b16 %v3520, %v3518
        %v3565 = vpack.c.b16 %v3523, %v3521
        %v3566 = vpack.c.b16 %v3524, %v3522
        %v3567 = vpack.c.b16 %v3527, %v3525
        %v3568 = vpack.c.b16 %v3528, %v3526
        %v3569 = vpack.c.b16 %v3531, %v3529
        %v3570 = vpack.c.b16 %v3532, %v3530
        %v3571 = vpack.c.b16 %v3535, %v3533
        %v3572 = vpack.c.b16 %v3536, %v3534
        %v3573 = vpack.c.b16 %v3539, %v3537
        %v3574 = vpack.c.b16 %v3540, %v3538
        %v3575 = vpack.c.b16 %v3543, %v3541
        %v3576 = vpack.c.b16 %v3544, %v3542
        %3609 = vmatpush.bf16.msra.mxu0 %v784
        %3610 = vmatpush.bf16.msra.mxu0 %v783
        %3611 = vmatpush.bf16.msra.mxu0 %v782
        %3612 = vmatpush.bf16.msra.mxu0 %v781
        %3613 = vmatpush.bf16.msra.mxu0 %v780
        %3614 = vmatpush.bf16.msra.mxu0 %v779
        %3615 = vmatpush.bf16.msra.mxu0 %v778
        %3616 = vmatpush.bf16.msra.mxu0 %v777
        %3617 = vmatmul.bf16.gmra.mxu0 %v3545
        %v3618 = vpop.f32.mrf.mxu0
        %v3619 = vadd.f32 0.0, %v3618
        %v3620 = vpop.f32.mrf.mxu0
        %v3621 = vadd.f32 0.0, %v3620
        %3622 = vmatmul.bf16.gmra.mxu0 %v3547
        %v3623 = vpop.f32.mrf.mxu0
        %v3624 = vadd.f32 0.0, %v3623
        %v3625 = vpop.f32.mrf.mxu0
        %v3626 = vadd.f32 0.0, %v3625
        %3627 = vmatmul.bf16.gmra.mxu0 %v3549
        %v3628 = vpop.f32.mrf.mxu0
        %v3629 = vadd.f32 0.0, %v3628
        %v3630 = vpop.f32.mrf.mxu0
        %v3631 = vadd.f32 0.0, %v3630
        %3632 = vmatmul.bf16.gmra.mxu0 %v3551
        %v3633 = vpop.f32.mrf.mxu0
        %v3634 = vadd.f32 0.0, %v3633
        %v3635 = vpop.f32.mrf.mxu0
        %v3636 = vadd.f32 0.0, %v3635
        %3637 = vmatmul.bf16.gmra.mxu0 %v3553
        %v3638 = vpop.f32.mrf.mxu0
        %v3639 = vadd.f32 0.0, %v3638
        %v3640 = vpop.f32.mrf.mxu0
        %v3641 = vadd.f32 0.0, %v3640
        %3642 = vmatmul.bf16.gmra.mxu0 %v3555
        %v3643 = vpop.f32.mrf.mxu0
        %v3644 = vadd.f32 0.0, %v3643
        %v3645 = vpop.f32.mrf.mxu0
        %v3646 = vadd.f32 0.0, %v3645
        %3647 = vmatmul.bf16.gmra.mxu0 %v3557
        %v3648 = vpop.f32.mrf.mxu0
        %v3649 = vadd.f32 0.0, %v3648
        %v3650 = vpop.f32.mrf.mxu0
        %v3651 = vadd.f32 0.0, %v3650
        %3652 = vmatmul.bf16.gmra.mxu0 %v3559
        %v3653 = vpop.f32.mrf.mxu0
        %v3654 = vadd.f32 0.0, %v3653
        %v3655 = vpop.f32.mrf.mxu0
        %v3656 = vadd.f32 0.0, %v3655
        %3657 = vmatmul.bf16.gmra.mxu0 %v3561
        %v3658 = vpop.f32.mrf.mxu0
        %v3659 = vadd.f32 0.0, %v3658
        %v3660 = vpop.f32.mrf.mxu0
        %v3661 = vadd.f32 0.0, %v3660
        %3662 = vmatmul.bf16.gmra.mxu0 %v3563
        %v3663 = vpop.f32.mrf.mxu0
        %v3664 = vadd.f32 0.0, %v3663
        %v3665 = vpop.f32.mrf.mxu0
        %v3666 = vadd.f32 0.0, %v3665
        %3667 = vmatmul.bf16.gmra.mxu0 %v3565
        %v3668 = vpop.f32.mrf.mxu0
        %v3669 = vadd.f32 0.0, %v3668
        %v3670 = vpop.f32.mrf.mxu0
        %v3671 = vadd.f32 0.0, %v3670
        %3672 = vmatmul.bf16.gmra.mxu0 %v3567
        %v3673 = vpop.f32.mrf.mxu0
        %v3674 = vadd.f32 0.0, %v3673
        %v3675 = vpop.f32.mrf.mxu0
        %v3676 = vadd.f32 0.0, %v3675
        %3677 = vmatmul.bf16.gmra.mxu0 %v3569
        %v3678 = vpop.f32.mrf.mxu0
        %v3679 = vadd.f32 0.0, %v3678
        %v3680 = vpop.f32.mrf.mxu0
        %v3681 = vadd.f32 0.0, %v3680
        %3682 = vmatmul.bf16.gmra.mxu0 %v3571
        %v3683 = vpop.f32.mrf.mxu0
        %v3684 = vadd.f32 0.0, %v3683
        %v3685 = vpop.f32.mrf.mxu0
        %v3686 = vadd.f32 0.0, %v3685
        %3687 = vmatmul.bf16.gmra.mxu0 %v3573
        %v3688 = vpop.f32.mrf.mxu0
        %v3689 = vadd.f32 0.0, %v3688
        %v3690 = vpop.f32.mrf.mxu0
        %v3691 = vadd.f32 0.0, %v3690
        %3692 = vmatmul.bf16.gmra.mxu0 %v3575
        %v3693 = vpop.f32.mrf.mxu0
        %v3694 = vadd.f32 0.0, %v3693
        %v3695 = vpop.f32.mrf.mxu0
        %v3696 = vadd.f32 0.0, %v3695
        %3697 = vdwg.mxu0
        %3698 = vmatpush.bf16.msra.mxu0 %v792
        %3699 = vmatpush.bf16.msra.mxu0 %v791
        %3700 = vmatpush.bf16.msra.mxu0 %v790
        %3701 = vmatpush.bf16.msra.mxu0 %v789
        %3702 = vmatpush.bf16.msra.mxu0 %v788
        %3703 = vmatpush.bf16.msra.mxu0 %v787
        %3704 = vmatpush.bf16.msra.mxu0 %v786
        %3705 = vmatpush.bf16.msra.mxu0 %v785
        %3706 = vmatmul.bf16.gmra.mxu0 %v3546
        %v3707 = vpop.f32.mrf.mxu0
        %v3708 = vadd.f32 %v3619, %v3707
        %v3709 = vpop.f32.mrf.mxu0
        %v3710 = vadd.f32 %v3621, %v3709
        %3711 = vmatmul.bf16.gmra.mxu0 %v3548
        %v3712 = vpop.f32.mrf.mxu0
        %v3713 = vadd.f32 %v3624, %v3712
        %v3714 = vpop.f32.mrf.mxu0
        %v3715 = vadd.f32 %v3626, %v3714
        %3716 = vmatmul.bf16.gmra.mxu0 %v3550
        %v3717 = vpop.f32.mrf.mxu0
        %v3718 = vadd.f32 %v3629, %v3717
        %v3719 = vpop.f32.mrf.mxu0
        %v3720 = vadd.f32 %v3631, %v3719
        %3721 = vmatmul.bf16.gmra.mxu0 %v3552
        %v3722 = vpop.f32.mrf.mxu0
        %v3723 = vadd.f32 %v3634, %v3722
        %v3724 = vpop.f32.mrf.mxu0
        %v3725 = vadd.f32 %v3636, %v3724
        %3726 = vmatmul.bf16.gmra.mxu0 %v3554
        %v3727 = vpop.f32.mrf.mxu0
        %v3728 = vadd.f32 %v3639, %v3727
        %v3729 = vpop.f32.mrf.mxu0
        %v3730 = vadd.f32 %v3641, %v3729
        %3731 = vmatmul.bf16.gmra.mxu0 %v3556
        %v3732 = vpop.f32.mrf.mxu0
        %v3733 = vadd.f32 %v3644, %v3732
        %v3734 = vpop.f32.mrf.mxu0
        %v3735 = vadd.f32 %v3646, %v3734
        %3736 = vmatmul.bf16.gmra.mxu0 %v3558
        %v3737 = vpop.f32.mrf.mxu0
        %v3738 = vadd.f32 %v3649, %v3737
        %v3739 = vpop.f32.mrf.mxu0
        %v3740 = vadd.f32 %v3651, %v3739
        %3741 = vmatmul.bf16.gmra.mxu0 %v3560
        %v3742 = vpop.f32.mrf.mxu0
        %v3743 = vadd.f32 %v3654, %v3742
        %v3744 = vpop.f32.mrf.mxu0
        %v3745 = vadd.f32 %v3656, %v3744
        %3746 = vmatmul.bf16.gmra.mxu0 %v3562
        %v3747 = vpop.f32.mrf.mxu0
        %v3748 = vadd.f32 %v3659, %v3747
        %v3749 = vpop.f32.mrf.mxu0
        %v3750 = vadd.f32 %v3661, %v3749
        %3751 = vmatmul.bf16.gmra.mxu0 %v3564
        %v3752 = vpop.f32.mrf.mxu0
        %v3753 = vadd.f32 %v3664, %v3752
        %v3754 = vpop.f32.mrf.mxu0
        %v3755 = vadd.f32 %v3666, %v3754
        %3756 = vmatmul.bf16.gmra.mxu0 %v3566
        %v3757 = vpop.f32.mrf.mxu0
        %v3758 = vadd.f32 %v3669, %v3757
        %v3759 = vpop.f32.mrf.mxu0
        %v3760 = vadd.f32 %v3671, %v3759
        %3761 = vmatmul.bf16.gmra.mxu0 %v3568
        %v3762 = vpop.f32.mrf.mxu0
        %v3763 = vadd.f32 %v3674, %v3762
        %v3764 = vpop.f32.mrf.mxu0
        %v3765 = vadd.f32 %v3676, %v3764
        %3766 = vmatmul.bf16.gmra.mxu0 %v3570
        %v3767 = vpop.f32.mrf.mxu0
        %v3768 = vadd.f32 %v3679, %v3767
        %v3769 = vpop.f32.mrf.mxu0
        %v3770 = vadd.f32 %v3681, %v3769
        %3771 = vmatmul.bf16.gmra.mxu0 %v3572
        %v3772 = vpop.f32.mrf.mxu0
        %v3773 = vadd.f32 %v3684, %v3772
        %v3774 = vpop.f32.mrf.mxu0
        %v3775 = vadd.f32 %v3686, %v3774
        %3776 = vmatmul.bf16.gmra.mxu0 %v3574
        %v3777 = vpop.f32.mrf.mxu0
        %v3778 = vadd.f32 %v3689, %v3777
        %v3779 = vpop.f32.mrf.mxu0
        %v3780 = vadd.f32 %v3691, %v3779
        %3781 = vmatmul.bf16.gmra.mxu0 %v3576
        %v3782 = vpop.f32.mrf.mxu0
        %v3783 = vadd.f32 %v3694, %v3782
        %v3784 = vpop.f32.mrf.mxu0
        %v3785 = vadd.f32 %v3696, %v3784
        %3786 = vdwg.mxu0
        %v3787 = vpack.c.bf16 %v3710, %v3708
        %v3788 = vpack.c.bf16 %v3715, %v3713
        %v3789 = vpack.c.bf16 %v3720, %v3718
        %v3790 = vpack.c.bf16 %v3725, %v3723
        %v3791 = vpack.c.bf16 %v3730, %v3728
        %v3792 = vpack.c.bf16 %v3735, %v3733
        %v3793 = vpack.c.bf16 %v3740, %v3738
        %v3794 = vpack.c.bf16 %v3745, %v3743
        %v3795 = vpack.c.bf16 %v3750, %v3748
        %v3796 = vpack.c.bf16 %v3755, %v3753
        %v3797 = vpack.c.bf16 %v3760, %v3758
        %v3798 = vpack.c.bf16 %v3765, %v3763
        %v3799 = vpack.c.bf16 %v3770, %v3768
        %v3800 = vpack.c.bf16 %v3775, %v3773
        %v3801 = vpack.c.bf16 %v3780, %v3778
        %v3802 = vpack.c.bf16 %v3785, %v3783
        %s3803 = scalar_lea.vmem [#allocation10], 320
        %v3804 = vld [vmem:[%s3803] sm:$0xf]
        %v3805 = vld [vmem:[%s3803 + $0x4] sm:$0xf]
        %v3806 = vld [vmem:[%s3803 + $0x8] sm:$0xf]
        %v3807 = vld [vmem:[%s3803 + $0xc] sm:$0xf]
        %v3808 = vld [vmem:[%s3803 + $0x10] sm:$0xf]
        %v3809 = vld [vmem:[%s3803 + $0x14] sm:$0xf]
        %v3810 = vld [vmem:[%s3803 + $0x18] sm:$0xf]
        %v3811 = vld [vmem:[%s3803 + $0x1c] sm:$0xf]
        %v3812 = vld [vmem:[%s3803 + $0x20] sm:$0xf]
        %v3813 = vld [vmem:[%s3803 + $0x24] sm:$0xf]
        %v3814 = vld [vmem:[%s3803 + $0x28] sm:$0xf]
        %v3815 = vld [vmem:[%s3803 + $0x2c] sm:$0xf]
        %v3816 = vld [vmem:[%s3803 + $0x30] sm:$0xf]
        %v3817 = vld [vmem:[%s3803 + $0x34] sm:$0xf]
        %v3818 = vld [vmem:[%s3803 + $0x38] sm:$0xf]
        %v3819 = vld [vmem:[%s3803 + $0x3c] sm:$0xf]
        %v3836 = vunpack.c.l.b16 %v3804
        %v3837 = vunpack.c.l.b16 %v3805
        %v3838 = vunpack.c.l.b16 %v3806
        %v3839 = vunpack.c.l.b16 %v3807
        %v3840 = vunpack.c.l.b16 %v3808
        %v3841 = vunpack.c.l.b16 %v3809
        %v3842 = vunpack.c.l.b16 %v3810
        %v3843 = vunpack.c.l.b16 %v3811
        %v3844 = vunpack.c.l.b16 %v3812
        %v3845 = vunpack.c.l.b16 %v3813
        %v3846 = vunpack.c.l.b16 %v3814
        %v3847 = vunpack.c.l.b16 %v3815
        %v3848 = vunpack.c.l.b16 %v3816
        %v3849 = vunpack.c.l.b16 %v3817
        %v3850 = vunpack.c.l.b16 %v3818
        %v3851 = vunpack.c.l.b16 %v3819
        %v3852 = vpack.c.b16 %v3837, %v3836
        %v3853 = vpack.c.b16 %v3839, %v3838
        %v3854 = vpack.c.b16 %v3841, %v3840
        %v3855 = vpack.c.b16 %v3843, %v3842
        %v3856 = vpack.c.b16 %v3845, %v3844
        %v3857 = vpack.c.b16 %v3847, %v3846
        %v3858 = vpack.c.b16 %v3849, %v3848
        %v3859 = vpack.c.b16 %v3851, %v3850
        %3868 = vmatpush.bf16.msra.mxu0 %v3859
        %3869 = vmatpush.bf16.msra.mxu0 %v3858
        %3870 = vmatpush.bf16.msra.mxu0 %v3857
        %3871 = vmatpush.bf16.msra.mxu0 %v3856
        %3872 = vmatpush.bf16.msra.mxu0 %v3855
        %3873 = vmatpush.bf16.msra.mxu0 %v3854
        %3874 = vmatpush.bf16.msra.mxu0 %v3853
        %3875 = vmatpush.bf16.msra.mxu0 %v3852
        %3876 = vmatmul.bf16.gmra.mxu0 %v3787
        %v3877 = vpop.f32.mrf.mxu0
        %v3878 = vadd.f32 0.0, %v3877
        %v3879 = vpop.f32.mrf.mxu0
        %v3880 = vadd.f32 0.0, %v3879
        %3881 = vmatmul.bf16.gmra.mxu0 %v3788
        %v3882 = vpop.f32.mrf.mxu0
        %v3883 = vadd.f32 0.0, %v3882
        %v3884 = vpop.f32.mrf.mxu0
        %v3885 = vadd.f32 0.0, %v3884
        %3886 = vmatmul.bf16.gmra.mxu0 %v3789
        %v3887 = vpop.f32.mrf.mxu0
        %v3888 = vadd.f32 0.0, %v3887
        %v3889 = vpop.f32.mrf.mxu0
        %v3890 = vadd.f32 0.0, %v3889
        %3891 = vmatmul.bf16.gmra.mxu0 %v3790
        %v3892 = vpop.f32.mrf.mxu0
        %v3893 = vadd.f32 0.0, %v3892
        %v3894 = vpop.f32.mrf.mxu0
        %v3895 = vadd.f32 0.0, %v3894
        %3896 = vmatmul.bf16.gmra.mxu0 %v3791
        %v3897 = vpop.f32.mrf.mxu0
        %v3898 = vadd.f32 0.0, %v3897
        %v3899 = vpop.f32.mrf.mxu0
        %v3900 = vadd.f32 0.0, %v3899
        %3901 = vmatmul.bf16.gmra.mxu0 %v3792
        %v3902 = vpop.f32.mrf.mxu0
        %v3903 = vadd.f32 0.0, %v3902
        %v3904 = vpop.f32.mrf.mxu0
        %v3905 = vadd.f32 0.0, %v3904
        %3906 = vmatmul.bf16.gmra.mxu0 %v3793
        %v3907 = vpop.f32.mrf.mxu0
        %v3908 = vadd.f32 0.0, %v3907
        %v3909 = vpop.f32.mrf.mxu0
        %v3910 = vadd.f32 0.0, %v3909
        %3911 = vmatmul.bf16.gmra.mxu0 %v3794
        %v3912 = vpop.f32.mrf.mxu0
        %v3913 = vadd.f32 0.0, %v3912
        %v3914 = vpop.f32.mrf.mxu0
        %v3915 = vadd.f32 0.0, %v3914
        %3916 = vmatmul.bf16.gmra.mxu0 %v3795
        %v3917 = vpop.f32.mrf.mxu0
        %v3918 = vadd.f32 0.0, %v3917
        %v3919 = vpop.f32.mrf.mxu0
        %v3920 = vadd.f32 0.0, %v3919
        %3921 = vmatmul.bf16.gmra.mxu0 %v3796
        %v3922 = vpop.f32.mrf.mxu0
        %v3923 = vadd.f32 0.0, %v3922
        %v3924 = vpop.f32.mrf.mxu0
        %v3925 = vadd.f32 0.0, %v3924
        %3926 = vmatmul.bf16.gmra.mxu0 %v3797
        %v3927 = vpop.f32.mrf.mxu0
        %v3928 = vadd.f32 0.0, %v3927
        %v3929 = vpop.f32.mrf.mxu0
        %v3930 = vadd.f32 0.0, %v3929
        %3931 = vmatmul.bf16.gmra.mxu0 %v3798
        %v3932 = vpop.f32.mrf.mxu0
        %v3933 = vadd.f32 0.0, %v3932
        %v3934 = vpop.f32.mrf.mxu0
        %v3935 = vadd.f32 0.0, %v3934
        %3936 = vmatmul.bf16.gmra.mxu0 %v3799
        %v3937 = vpop.f32.mrf.mxu0
        %v3938 = vadd.f32 0.0, %v3937
        %v3939 = vpop.f32.mrf.mxu0
        %v3940 = vadd.f32 0.0, %v3939
        %3941 = vmatmul.bf16.gmra.mxu0 %v3800
        %v3942 = vpop.f32.mrf.mxu0
        %v3943 = vadd.f32 0.0, %v3942
        %v3944 = vpop.f32.mrf.mxu0
        %v3945 = vadd.f32 0.0, %v3944
        %3946 = vmatmul.bf16.gmra.mxu0 %v3801
        %v3947 = vpop.f32.mrf.mxu0
        %v3948 = vadd.f32 0.0, %v3947
        %v3949 = vpop.f32.mrf.mxu0
        %v3950 = vadd.f32 0.0, %v3949
        %3951 = vmatmul.bf16.gmra.mxu0 %v3802
        %v3952 = vpop.f32.mrf.mxu0
        %v3953 = vadd.f32 0.0, %v3952
        %v3954 = vpop.f32.mrf.mxu0
        %v3955 = vadd.f32 0.0, %v3954
        %3956 = vdwg.mxu0
        %v3957 = vadd.f32 %v3384, %v3878
        %v3958 = vadd.f32 %v3385, %v3880
        %v3959 = vadd.f32 %v3386, %v3883
        %v3960 = vadd.f32 %v3387, %v3885
        %v3961 = vadd.f32 %v3388, %v3888
        %v3962 = vadd.f32 %v3389, %v3890
        %v3963 = vadd.f32 %v3390, %v3893
        %v3964 = vadd.f32 %v3391, %v3895
        %v3965 = vadd.f32 %v3392, %v3898
        %v3966 = vadd.f32 %v3393, %v3900
        %v3967 = vadd.f32 %v3394, %v3903
        %v3968 = vadd.f32 %v3395, %v3905
        %v3969 = vadd.f32 %v3396, %v3908
        %v3970 = vadd.f32 %v3397, %v3910
        %v3971 = vadd.f32 %v3398, %v3913
        %v3972 = vadd.f32 %v3399, %v3915
        %v3973 = vadd.f32 %v3400, %v3918
        %v3974 = vadd.f32 %v3401, %v3920
        %v3975 = vadd.f32 %v3402, %v3923
        %v3976 = vadd.f32 %v3403, %v3925
        %v3977 = vadd.f32 %v3404, %v3928
        %v3978 = vadd.f32 %v3405, %v3930
        %v3979 = vadd.f32 %v3406, %v3933
        %v3980 = vadd.f32 %v3407, %v3935
        %v3981 = vadd.f32 %v3408, %v3938
        %v3982 = vadd.f32 %v3409, %v3940
        %v3983 = vadd.f32 %v3410, %v3943
        %v3984 = vadd.f32 %v3411, %v3945
        %v3985 = vadd.f32 %v3412, %v3948
        %v3986 = vadd.f32 %v3413, %v3950
        %v3987 = vadd.f32 %v3414, %v3953
        %v3988 = vadd.f32 %v3415, %v3955
        %s3989 = scalar_lea.vmem [#allocation2], 1536
        %v3990 = vld [vmem:[%s3989] sm:$0xff]
        %v3991 = vld [vmem:[%s3989 + $0x8] sm:$0xff]
        %v3992 = vld [vmem:[%s3989 + $0x10] sm:$0xff]
        %v3993 = vld [vmem:[%s3989 + $0x18] sm:$0xff]
        %v3994 = vld [vmem:[%s3989 + $0x20] sm:$0xff]
        %v3995 = vld [vmem:[%s3989 + $0x28] sm:$0xff]
        %v3996 = vld [vmem:[%s3989 + $0x30] sm:$0xff]
        %v3997 = vld [vmem:[%s3989 + $0x38] sm:$0xff]
        %v3998 = vld [vmem:[%s3989 + $0x40] sm:$0xff]
        %v3999 = vld [vmem:[%s3989 + $0x48] sm:$0xff]
        %v4000 = vld [vmem:[%s3989 + $0x50] sm:$0xff]
        %v4001 = vld [vmem:[%s3989 + $0x58] sm:$0xff]
        %v4002 = vld [vmem:[%s3989 + $0x60] sm:$0xff]
        %v4003 = vld [vmem:[%s3989 + $0x68] sm:$0xff]
        %v4004 = vld [vmem:[%s3989 + $0x70] sm:$0xff]
        %v4005 = vld [vmem:[%s3989 + $0x78] sm:$0xff]
        %v4006 = vld [vmem:[%s3989 + $0x80] sm:$0xff]
        %v4007 = vld [vmem:[%s3989 + $0x88] sm:$0xff]
        %v4008 = vld [vmem:[%s3989 + $0x90] sm:$0xff]
        %v4009 = vld [vmem:[%s3989 + $0x98] sm:$0xff]
        %v4010 = vld [vmem:[%s3989 + $0xa0] sm:$0xff]
        %v4011 = vld [vmem:[%s3989 + $0xa8] sm:$0xff]
        %v4012 = vld [vmem:[%s3989 + $0xb0] sm:$0xff]
        %v4013 = vld [vmem:[%s3989 + $0xb8] sm:$0xff]
        %v4014 = vld [vmem:[%s3989 + $0xc0] sm:$0xff]
        %v4015 = vld [vmem:[%s3989 + $0xc8] sm:$0xff]
        %v4016 = vld [vmem:[%s3989 + $0xd0] sm:$0xff]
        %v4017 = vld [vmem:[%s3989 + $0xd8] sm:$0xff]
        %v4018 = vld [vmem:[%s3989 + $0xe0] sm:$0xff]
        %v4019 = vld [vmem:[%s3989 + $0xe8] sm:$0xff]
        %v4020 = vld [vmem:[%s3989 + $0xf0] sm:$0xff]
        %v4021 = vld [vmem:[%s3989 + $0xf8] sm:$0xff]
        %v4054 = vunpack.c.l.b16 %v3990
        %v4055 = vunpack.c.h.b16 %v3990
        %v4056 = vunpack.c.l.b16 %v3991
        %v4057 = vunpack.c.h.b16 %v3991
        %v4058 = vunpack.c.l.b16 %v3992
        %v4059 = vunpack.c.h.b16 %v3992
        %v4060 = vunpack.c.l.b16 %v3993
        %v4061 = vunpack.c.h.b16 %v3993
        %v4062 = vunpack.c.l.b16 %v3994
        %v4063 = vunpack.c.h.b16 %v3994
        %v4064 = vunpack.c.l.b16 %v3995
        %v4065 = vunpack.c.h.b16 %v3995
        %v4066 = vunpack.c.l.b16 %v3996
        %v4067 = vunpack.c.h.b16 %v3996
        %v4068 = vunpack.c.l.b16 %v3997
        %v4069 = vunpack.c.h.b16 %v3997
        %v4070 = vunpack.c.l.b16 %v3998
        %v4071 = vunpack.c.h.b16 %v3998
        %v4072 = vunpack.c.l.b16 %v3999
        %v4073 = vunpack.c.h.b16 %v3999
        %v4074 = vunpack.c.l.b16 %v4000
        %v4075 = vunpack.c.h.b16 %v4000
        %v4076 = vunpack.c.l.b16 %v4001
        %v4077 = vunpack.c.h.b16 %v4001
        %v4078 = vunpack.c.l.b16 %v4002
        %v4079 = vunpack.c.h.b16 %v4002
        %v4080 = vunpack.c.l.b16 %v4003
        %v4081 = vunpack.c.h.b16 %v4003
        %v4082 = vunpack.c.l.b16 %v4004
        %v4083 = vunpack.c.h.b16 %v4004
        %v4084 = vunpack.c.l.b16 %v4005
        %v4085 = vunpack.c.h.b16 %v4005
        %v4086 = vunpack.c.l.b16 %v4006
        %v4087 = vunpack.c.h.b16 %v4006
        %v4088 = vunpack.c.l.b16 %v4007
        %v4089 = vunpack.c.h.b16 %v4007
        %v4090 = vunpack.c.l.b16 %v4008
        %v4091 = vunpack.c.h.b16 %v4008
        %v4092 = vunpack.c.l.b16 %v4009
        %v4093 = vunpack.c.h.b16 %v4009
        %v4094 = vunpack.c.l.b16 %v4010
        %v4095 = vunpack.c.h.b16 %v4010
        %v4096 = vunpack.c.l.b16 %v4011
        %v4097 = vunpack.c.h.b16 %v4011
        %v4098 = vunpack.c.l.b16 %v4012
        %v4099 = vunpack.c.h.b16 %v4012
        %v4100 = vunpack.c.l.b16 %v4013
        %v4101 = vunpack.c.h.b16 %v4013
        %v4102 = vunpack.c.l.b16 %v4014
        %v4103 = vunpack.c.h.b16 %v4014
        %v4104 = vunpack.c.l.b16 %v4015
        %v4105 = vunpack.c.h.b16 %v4015
        %v4106 = vunpack.c.l.b16 %v4016
        %v4107 = vunpack.c.h.b16 %v4016
        %v4108 = vunpack.c.l.b16 %v4017
        %v4109 = vunpack.c.h.b16 %v4017
        %v4110 = vunpack.c.l.b16 %v4018
        %v4111 = vunpack.c.h.b16 %v4018
        %v4112 = vunpack.c.l.b16 %v4019
        %v4113 = vunpack.c.h.b16 %v4019
        %v4114 = vunpack.c.l.b16 %v4020
        %v4115 = vunpack.c.h.b16 %v4020
        %v4116 = vunpack.c.l.b16 %v4021
        %v4117 = vunpack.c.h.b16 %v4021
        %v4118 = vpack.c.b16 %v4056, %v4054
        %v4119 = vpack.c.b16 %v4057, %v4055
        %v4120 = vpack.c.b16 %v4060, %v4058
        %v4121 = vpack.c.b16 %v4061, %v4059
        %v4122 = vpack.c.b16 %v4064, %v4062
        %v4123 = vpack.c.b16 %v4065, %v4063
        %v4124 = vpack.c.b16 %v4068, %v4066
        %v4125 = vpack.c.b16 %v4069, %v4067
        %v4126 = vpack.c.b16 %v4072, %v4070
        %v4127 = vpack.c.b16 %v4073, %v4071
        %v4128 = vpack.c.b16 %v4076, %v4074
        %v4129 = vpack.c.b16 %v4077, %v4075
        %v4130 = vpack.c.b16 %v4080, %v4078
        %v4131 = vpack.c.b16 %v4081, %v4079
        %v4132 = vpack.c.b16 %v4084, %v4082
        %v4133 = vpack.c.b16 %v4085, %v4083
        %v4134 = vpack.c.b16 %v4088, %v4086
        %v4135 = vpack.c.b16 %v4089, %v4087
        %v4136 = vpack.c.b16 %v4092, %v4090
        %v4137 = vpack.c.b16 %v4093, %v4091
        %v4138 = vpack.c.b16 %v4096, %v4094
        %v4139 = vpack.c.b16 %v4097, %v4095
        %v4140 = vpack.c.b16 %v4100, %v4098
        %v4141 = vpack.c.b16 %v4101, %v4099
        %v4142 = vpack.c.b16 %v4104, %v4102
        %v4143 = vpack.c.b16 %v4105, %v4103
        %v4144 = vpack.c.b16 %v4108, %v4106
        %v4145 = vpack.c.b16 %v4109, %v4107
        %v4146 = vpack.c.b16 %v4112, %v4110
        %v4147 = vpack.c.b16 %v4113, %v4111
        %v4148 = vpack.c.b16 %v4116, %v4114
        %v4149 = vpack.c.b16 %v4117, %v4115
        %4182 = vmatpush.bf16.msra.mxu0 %v784
        %4183 = vmatpush.bf16.msra.mxu0 %v783
        %4184 = vmatpush.bf16.msra.mxu0 %v782
        %4185 = vmatpush.bf16.msra.mxu0 %v781
        %4186 = vmatpush.bf16.msra.mxu0 %v780
        %4187 = vmatpush.bf16.msra.mxu0 %v779
        %4188 = vmatpush.bf16.msra.mxu0 %v778
        %4189 = vmatpush.bf16.msra.mxu0 %v777
        %4190 = vmatmul.bf16.gmra.mxu0 %v4118
        %v4191 = vpop.f32.mrf.mxu0
        %v4192 = vadd.f32 0.0, %v4191
        %v4193 = vpop.f32.mrf.mxu0
        %v4194 = vadd.f32 0.0, %v4193
        %4195 = vmatmul.bf16.gmra.mxu0 %v4120
        %v4196 = vpop.f32.mrf.mxu0
        %v4197 = vadd.f32 0.0, %v4196
        %v4198 = vpop.f32.mrf.mxu0
        %v4199 = vadd.f32 0.0, %v4198
        %4200 = vmatmul.bf16.gmra.mxu0 %v4122
        %v4201 = vpop.f32.mrf.mxu0
        %v4202 = vadd.f32 0.0, %v4201
        %v4203 = vpop.f32.mrf.mxu0
        %v4204 = vadd.f32 0.0, %v4203
        %4205 = vmatmul.bf16.gmra.mxu0 %v4124
        %v4206 = vpop.f32.mrf.mxu0
        %v4207 = vadd.f32 0.0, %v4206
        %v4208 = vpop.f32.mrf.mxu0
        %v4209 = vadd.f32 0.0, %v4208
        %4210 = vmatmul.bf16.gmra.mxu0 %v4126
        %v4211 = vpop.f32.mrf.mxu0
        %v4212 = vadd.f32 0.0, %v4211
        %v4213 = vpop.f32.mrf.mxu0
        %v4214 = vadd.f32 0.0, %v4213
        %4215 = vmatmul.bf16.gmra.mxu0 %v4128
        %v4216 = vpop.f32.mrf.mxu0
        %v4217 = vadd.f32 0.0, %v4216
        %v4218 = vpop.f32.mrf.mxu0
        %v4219 = vadd.f32 0.0, %v4218
        %4220 = vmatmul.bf16.gmra.mxu0 %v4130
        %v4221 = vpop.f32.mrf.mxu0
        %v4222 = vadd.f32 0.0, %v4221
        %v4223 = vpop.f32.mrf.mxu0
        %v4224 = vadd.f32 0.0, %v4223
        %4225 = vmatmul.bf16.gmra.mxu0 %v4132
        %v4226 = vpop.f32.mrf.mxu0
        %v4227 = vadd.f32 0.0, %v4226
        %v4228 = vpop.f32.mrf.mxu0
        %v4229 = vadd.f32 0.0, %v4228
        %4230 = vmatmul.bf16.gmra.mxu0 %v4134
        %v4231 = vpop.f32.mrf.mxu0
        %v4232 = vadd.f32 0.0, %v4231
        %v4233 = vpop.f32.mrf.mxu0
        %v4234 = vadd.f32 0.0, %v4233
        %4235 = vmatmul.bf16.gmra.mxu0 %v4136
        %v4236 = vpop.f32.mrf.mxu0
        %v4237 = vadd.f32 0.0, %v4236
        %v4238 = vpop.f32.mrf.mxu0
        %v4239 = vadd.f32 0.0, %v4238
        %4240 = vmatmul.bf16.gmra.mxu0 %v4138
        %v4241 = vpop.f32.mrf.mxu0
        %v4242 = vadd.f32 0.0, %v4241
        %v4243 = vpop.f32.mrf.mxu0
        %v4244 = vadd.f32 0.0, %v4243
        %4245 = vmatmul.bf16.gmra.mxu0 %v4140
        %v4246 = vpop.f32.mrf.mxu0
        %v4247 = vadd.f32 0.0, %v4246
        %v4248 = vpop.f32.mrf.mxu0
        %v4249 = vadd.f32 0.0, %v4248
        %4250 = vmatmul.bf16.gmra.mxu0 %v4142
        %v4251 = vpop.f32.mrf.mxu0
        %v4252 = vadd.f32 0.0, %v4251
        %v4253 = vpop.f32.mrf.mxu0
        %v4254 = vadd.f32 0.0, %v4253
        %4255 = vmatmul.bf16.gmra.mxu0 %v4144
        %v4256 = vpop.f32.mrf.mxu0
        %v4257 = vadd.f32 0.0, %v4256
        %v4258 = vpop.f32.mrf.mxu0
        %v4259 = vadd.f32 0.0, %v4258
        %4260 = vmatmul.bf16.gmra.mxu0 %v4146
        %v4261 = vpop.f32.mrf.mxu0
        %v4262 = vadd.f32 0.0, %v4261
        %v4263 = vpop.f32.mrf.mxu0
        %v4264 = vadd.f32 0.0, %v4263
        %4265 = vmatmul.bf16.gmra.mxu0 %v4148
        %v4266 = vpop.f32.mrf.mxu0
        %v4267 = vadd.f32 0.0, %v4266
        %v4268 = vpop.f32.mrf.mxu0
        %v4269 = vadd.f32 0.0, %v4268
        %4270 = vdwg.mxu0
        %4271 = vmatpush.bf16.msra.mxu0 %v792
        %4272 = vmatpush.bf16.msra.mxu0 %v791
        %4273 = vmatpush.bf16.msra.mxu0 %v790
        %4274 = vmatpush.bf16.msra.mxu0 %v789
        %4275 = vmatpush.bf16.msra.mxu0 %v788
        %4276 = vmatpush.bf16.msra.mxu0 %v787
        %4277 = vmatpush.bf16.msra.mxu0 %v786
        %4278 = vmatpush.bf16.msra.mxu0 %v785
        %4279 = vmatmul.bf16.gmra.mxu0 %v4119
        %v4280 = vpop.f32.mrf.mxu0
        %v4281 = vadd.f32 %v4192, %v4280
        %v4282 = vpop.f32.mrf.mxu0
        %v4283 = vadd.f32 %v4194, %v4282
        %4284 = vmatmul.bf16.gmra.mxu0 %v4121
        %v4285 = vpop.f32.mrf.mxu0
        %v4286 = vadd.f32 %v4197, %v4285
        %v4287 = vpop.f32.mrf.mxu0
        %v4288 = vadd.f32 %v4199, %v4287
        %4289 = vmatmul.bf16.gmra.mxu0 %v4123
        %v4290 = vpop.f32.mrf.mxu0
        %v4291 = vadd.f32 %v4202, %v4290
        %v4292 = vpop.f32.mrf.mxu0
        %v4293 = vadd.f32 %v4204, %v4292
        %4294 = vmatmul.bf16.gmra.mxu0 %v4125
        %v4295 = vpop.f32.mrf.mxu0
        %v4296 = vadd.f32 %v4207, %v4295
        %v4297 = vpop.f32.mrf.mxu0
        %v4298 = vadd.f32 %v4209, %v4297
        %4299 = vmatmul.bf16.gmra.mxu0 %v4127
        %v4300 = vpop.f32.mrf.mxu0
        %v4301 = vadd.f32 %v4212, %v4300
        %v4302 = vpop.f32.mrf.mxu0
        %v4303 = vadd.f32 %v4214, %v4302
        %4304 = vmatmul.bf16.gmra.mxu0 %v4129
        %v4305 = vpop.f32.mrf.mxu0
        %v4306 = vadd.f32 %v4217, %v4305
        %v4307 = vpop.f32.mrf.mxu0
        %v4308 = vadd.f32 %v4219, %v4307
        %4309 = vmatmul.bf16.gmra.mxu0 %v4131
        %v4310 = vpop.f32.mrf.mxu0
        %v4311 = vadd.f32 %v4222, %v4310
        %v4312 = vpop.f32.mrf.mxu0
        %v4313 = vadd.f32 %v4224, %v4312
        %4314 = vmatmul.bf16.gmra.mxu0 %v4133
        %v4315 = vpop.f32.mrf.mxu0
        %v4316 = vadd.f32 %v4227, %v4315
        %v4317 = vpop.f32.mrf.mxu0
        %v4318 = vadd.f32 %v4229, %v4317
        %4319 = vmatmul.bf16.gmra.mxu0 %v4135
        %v4320 = vpop.f32.mrf.mxu0
        %v4321 = vadd.f32 %v4232, %v4320
        %v4322 = vpop.f32.mrf.mxu0
        %v4323 = vadd.f32 %v4234, %v4322
        %4324 = vmatmul.bf16.gmra.mxu0 %v4137
        %v4325 = vpop.f32.mrf.mxu0
        %v4326 = vadd.f32 %v4237, %v4325
        %v4327 = vpop.f32.mrf.mxu0
        %v4328 = vadd.f32 %v4239, %v4327
        %4329 = vmatmul.bf16.gmra.mxu0 %v4139
        %v4330 = vpop.f32.mrf.mxu0
        %v4331 = vadd.f32 %v4242, %v4330
        %v4332 = vpop.f32.mrf.mxu0
        %v4333 = vadd.f32 %v4244, %v4332
        %4334 = vmatmul.bf16.gmra.mxu0 %v4141
        %v4335 = vpop.f32.mrf.mxu0
        %v4336 = vadd.f32 %v4247, %v4335
        %v4337 = vpop.f32.mrf.mxu0
        %v4338 = vadd.f32 %v4249, %v4337
        %4339 = vmatmul.bf16.gmra.mxu0 %v4143
        %v4340 = vpop.f32.mrf.mxu0
        %v4341 = vadd.f32 %v4252, %v4340
        %v4342 = vpop.f32.mrf.mxu0
        %v4343 = vadd.f32 %v4254, %v4342
        %4344 = vmatmul.bf16.gmra.mxu0 %v4145
        %v4345 = vpop.f32.mrf.mxu0
        %v4346 = vadd.f32 %v4257, %v4345
        %v4347 = vpop.f32.mrf.mxu0
        %v4348 = vadd.f32 %v4259, %v4347
        %4349 = vmatmul.bf16.gmra.mxu0 %v4147
        %v4350 = vpop.f32.mrf.mxu0
        %v4351 = vadd.f32 %v4262, %v4350
        %v4352 = vpop.f32.mrf.mxu0
        %v4353 = vadd.f32 %v4264, %v4352
        %4354 = vmatmul.bf16.gmra.mxu0 %v4149
        %v4355 = vpop.f32.mrf.mxu0
        %v4356 = vadd.f32 %v4267, %v4355
        %v4357 = vpop.f32.mrf.mxu0
        %v4358 = vadd.f32 %v4269, %v4357
        %4359 = vdwg.mxu0
        %v4360 = vpack.c.bf16 %v4283, %v4281
        %v4361 = vpack.c.bf16 %v4288, %v4286
        %v4362 = vpack.c.bf16 %v4293, %v4291
        %v4363 = vpack.c.bf16 %v4298, %v4296
        %v4364 = vpack.c.bf16 %v4303, %v4301
        %v4365 = vpack.c.bf16 %v4308, %v4306
        %v4366 = vpack.c.bf16 %v4313, %v4311
        %v4367 = vpack.c.bf16 %v4318, %v4316
        %v4368 = vpack.c.bf16 %v4323, %v4321
        %v4369 = vpack.c.bf16 %v4328, %v4326
        %v4370 = vpack.c.bf16 %v4333, %v4331
        %v4371 = vpack.c.bf16 %v4338, %v4336
        %v4372 = vpack.c.bf16 %v4343, %v4341
        %v4373 = vpack.c.bf16 %v4348, %v4346
        %v4374 = vpack.c.bf16 %v4353, %v4351
        %v4375 = vpack.c.bf16 %v4358, %v4356
        %s4376 = scalar_lea.vmem [#allocation10], 384
        %v4377 = vld [vmem:[%s4376] sm:$0xf]
        %v4378 = vld [vmem:[%s4376 + $0x4] sm:$0xf]
        %v4379 = vld [vmem:[%s4376 + $0x8] sm:$0xf]
        %v4380 = vld [vmem:[%s4376 + $0xc] sm:$0xf]
        %v4381 = vld [vmem:[%s4376 + $0x10] sm:$0xf]
        %v4382 = vld [vmem:[%s4376 + $0x14] sm:$0xf]
        %v4383 = vld [vmem:[%s4376 + $0x18] sm:$0xf]
        %v4384 = vld [vmem:[%s4376 + $0x1c] sm:$0xf]
        %v4385 = vld [vmem:[%s4376 + $0x20] sm:$0xf]
        %v4386 = vld [vmem:[%s4376 + $0x24] sm:$0xf]
        %v4387 = vld [vmem:[%s4376 + $0x28] sm:$0xf]
        %v4388 = vld [vmem:[%s4376 + $0x2c] sm:$0xf]
        %v4389 = vld [vmem:[%s4376 + $0x30] sm:$0xf]
        %v4390 = vld [vmem:[%s4376 + $0x34] sm:$0xf]
        %v4391 = vld [vmem:[%s4376 + $0x38] sm:$0xf]
        %v4392 = vld [vmem:[%s4376 + $0x3c] sm:$0xf]
        %v4409 = vunpack.c.l.b16 %v4377
        %v4410 = vunpack.c.l.b16 %v4378
        %v4411 = vunpack.c.l.b16 %v4379
        %v4412 = vunpack.c.l.b16 %v4380
        %v4413 = vunpack.c.l.b16 %v4381
        %v4414 = vunpack.c.l.b16 %v4382
        %v4415 = vunpack.c.l.b16 %v4383
        %v4416 = vunpack.c.l.b16 %v4384
        %v4417 = vunpack.c.l.b16 %v4385
        %v4418 = vunpack.c.l.b16 %v4386
        %v4419 = vunpack.c.l.b16 %v4387
        %v4420 = vunpack.c.l.b16 %v4388
        %v4421 = vunpack.c.l.b16 %v4389
        %v4422 = vunpack.c.l.b16 %v4390
        %v4423 = vunpack.c.l.b16 %v4391
        %v4424 = vunpack.c.l.b16 %v4392
        %v4425 = vpack.c.b16 %v4410, %v4409
        %v4426 = vpack.c.b16 %v4412, %v4411
        %v4427 = vpack.c.b16 %v4414, %v4413
        %v4428 = vpack.c.b16 %v4416, %v4415
        %v4429 = vpack.c.b16 %v4418, %v4417
        %v4430 = vpack.c.b16 %v4420, %v4419
        %v4431 = vpack.c.b16 %v4422, %v4421
        %v4432 = vpack.c.b16 %v4424, %v4423
        %4441 = vmatpush.bf16.msra.mxu0 %v4432
        %4442 = vmatpush.bf16.msra.mxu0 %v4431
        %4443 = vmatpush.bf16.msra.mxu0 %v4430
        %4444 = vmatpush.bf16.msra.mxu0 %v4429
        %4445 = vmatpush.bf16.msra.mxu0 %v4428
        %4446 = vmatpush.bf16.msra.mxu0 %v4427
        %4447 = vmatpush.bf16.msra.mxu0 %v4426
        %4448 = vmatpush.bf16.msra.mxu0 %v4425
        %4449 = vmatmul.bf16.gmra.mxu0 %v4360
        %v4450 = vpop.f32.mrf.mxu0
        %v4451 = vadd.f32 0.0, %v4450
        %v4452 = vpop.f32.mrf.mxu0
        %v4453 = vadd.f32 0.0, %v4452
        %4454 = vmatmul.bf16.gmra.mxu0 %v4361
        %v4455 = vpop.f32.mrf.mxu0
        %v4456 = vadd.f32 0.0, %v4455
        %v4457 = vpop.f32.mrf.mxu0
        %v4458 = vadd.f32 0.0, %v4457
        %4459 = vmatmul.bf16.gmra.mxu0 %v4362
        %v4460 = vpop.f32.mrf.mxu0
        %v4461 = vadd.f32 0.0, %v4460
        %v4462 = vpop.f32.mrf.mxu0
        %v4463 = vadd.f32 0.0, %v4462
        %4464 = vmatmul.bf16.gmra.mxu0 %v4363
        %v4465 = vpop.f32.mrf.mxu0
        %v4466 = vadd.f32 0.0, %v4465
        %v4467 = vpop.f32.mrf.mxu0
        %v4468 = vadd.f32 0.0, %v4467
        %4469 = vmatmul.bf16.gmra.mxu0 %v4364
        %v4470 = vpop.f32.mrf.mxu0
        %v4471 = vadd.f32 0.0, %v4470
        %v4472 = vpop.f32.mrf.mxu0
        %v4473 = vadd.f32 0.0, %v4472
        %4474 = vmatmul.bf16.gmra.mxu0 %v4365
        %v4475 = vpop.f32.mrf.mxu0
        %v4476 = vadd.f32 0.0, %v4475
        %v4477 = vpop.f32.mrf.mxu0
        %v4478 = vadd.f32 0.0, %v4477
        %4479 = vmatmul.bf16.gmra.mxu0 %v4366
        %v4480 = vpop.f32.mrf.mxu0
        %v4481 = vadd.f32 0.0, %v4480
        %v4482 = vpop.f32.mrf.mxu0
        %v4483 = vadd.f32 0.0, %v4482
        %4484 = vmatmul.bf16.gmra.mxu0 %v4367
        %v4485 = vpop.f32.mrf.mxu0
        %v4486 = vadd.f32 0.0, %v4485
        %v4487 = vpop.f32.mrf.mxu0
        %v4488 = vadd.f32 0.0, %v4487
        %4489 = vmatmul.bf16.gmra.mxu0 %v4368
        %v4490 = vpop.f32.mrf.mxu0
        %v4491 = vadd.f32 0.0, %v4490
        %v4492 = vpop.f32.mrf.mxu0
        %v4493 = vadd.f32 0.0, %v4492
        %4494 = vmatmul.bf16.gmra.mxu0 %v4369
        %v4495 = vpop.f32.mrf.mxu0
        %v4496 = vadd.f32 0.0, %v4495
        %v4497 = vpop.f32.mrf.mxu0
        %v4498 = vadd.f32 0.0, %v4497
        %4499 = vmatmul.bf16.gmra.mxu0 %v4370
        %v4500 = vpop.f32.mrf.mxu0
        %v4501 = vadd.f32 0.0, %v4500
        %v4502 = vpop.f32.mrf.mxu0
        %v4503 = vadd.f32 0.0, %v4502
        %4504 = vmatmul.bf16.gmra.mxu0 %v4371
        %v4505 = vpop.f32.mrf.mxu0
        %v4506 = vadd.f32 0.0, %v4505
        %v4507 = vpop.f32.mrf.mxu0
        %v4508 = vadd.f32 0.0, %v4507
        %4509 = vmatmul.bf16.gmra.mxu0 %v4372
        %v4510 = vpop.f32.mrf.mxu0
        %v4511 = vadd.f32 0.0, %v4510
        %v4512 = vpop.f32.mrf.mxu0
        %v4513 = vadd.f32 0.0, %v4512
        %4514 = vmatmul.bf16.gmra.mxu0 %v4373
        %v4515 = vpop.f32.mrf.mxu0
        %v4516 = vadd.f32 0.0, %v4515
        %v4517 = vpop.f32.mrf.mxu0
        %v4518 = vadd.f32 0.0, %v4517
        %4519 = vmatmul.bf16.gmra.mxu0 %v4374
        %v4520 = vpop.f32.mrf.mxu0
        %v4521 = vadd.f32 0.0, %v4520
        %v4522 = vpop.f32.mrf.mxu0
        %v4523 = vadd.f32 0.0, %v4522
        %4524 = vmatmul.bf16.gmra.mxu0 %v4375
        %v4525 = vpop.f32.mrf.mxu0
        %v4526 = vadd.f32 0.0, %v4525
        %v4527 = vpop.f32.mrf.mxu0
        %v4528 = vadd.f32 0.0, %v4527
        %4529 = vdwg.mxu0
        %v4530 = vadd.f32 %v3957, %v4451
        %v4531 = vadd.f32 %v3958, %v4453
        %v4532 = vadd.f32 %v3959, %v4456
        %v4533 = vadd.f32 %v3960, %v4458
        %v4534 = vadd.f32 %v3961, %v4461
        %v4535 = vadd.f32 %v3962, %v4463
        %v4536 = vadd.f32 %v3963, %v4466
        %v4537 = vadd.f32 %v3964, %v4468
        %v4538 = vadd.f32 %v3965, %v4471
        %v4539 = vadd.f32 %v3966, %v4473
        %v4540 = vadd.f32 %v3967, %v4476
        %v4541 = vadd.f32 %v3968, %v4478
        %v4542 = vadd.f32 %v3969, %v4481
        %v4543 = vadd.f32 %v3970, %v4483
        %v4544 = vadd.f32 %v3971, %v4486
        %v4545 = vadd.f32 %v3972, %v4488
        %v4546 = vadd.f32 %v3973, %v4491
        %v4547 = vadd.f32 %v3974, %v4493
        %v4548 = vadd.f32 %v3975, %v4496
        %v4549 = vadd.f32 %v3976, %v4498
        %v4550 = vadd.f32 %v3977, %v4501
        %v4551 = vadd.f32 %v3978, %v4503
        %v4552 = vadd.f32 %v3979, %v4506
        %v4553 = vadd.f32 %v3980, %v4508
        %v4554 = vadd.f32 %v3981, %v4511
        %v4555 = vadd.f32 %v3982, %v4513
        %v4556 = vadd.f32 %v3983, %v4516
        %v4557 = vadd.f32 %v3984, %v4518
        %v4558 = vadd.f32 %v3985, %v4521
        %v4559 = vadd.f32 %v3986, %v4523
        %v4560 = vadd.f32 %v3987, %v4526
        %v4561 = vadd.f32 %v3988, %v4528
        %s4562 = scalar_lea.vmem [#allocation2], 1792
        %v4563 = vld [vmem:[%s4562] sm:$0xff]
        %v4564 = vld [vmem:[%s4562 + $0x8] sm:$0xff]
        %v4565 = vld [vmem:[%s4562 + $0x10] sm:$0xff]
        %v4566 = vld [vmem:[%s4562 + $0x18] sm:$0xff]
        %v4567 = vld [vmem:[%s4562 + $0x20] sm:$0xff]
        %v4568 = vld [vmem:[%s4562 + $0x28] sm:$0xff]
        %v4569 = vld [vmem:[%s4562 + $0x30] sm:$0xff]
        %v4570 = vld [vmem:[%s4562 + $0x38] sm:$0xff]
        %v4571 = vld [vmem:[%s4562 + $0x40] sm:$0xff]
        %v4572 = vld [vmem:[%s4562 + $0x48] sm:$0xff]
        %v4573 = vld [vmem:[%s4562 + $0x50] sm:$0xff]
        %v4574 = vld [vmem:[%s4562 + $0x58] sm:$0xff]
        %v4575 = vld [vmem:[%s4562 + $0x60] sm:$0xff]
        %v4576 = vld [vmem:[%s4562 + $0x68] sm:$0xff]
        %v4577 = vld [vmem:[%s4562 + $0x70] sm:$0xff]
        %v4578 = vld [vmem:[%s4562 + $0x78] sm:$0xff]
        %v4579 = vld [vmem:[%s4562 + $0x80] sm:$0xff]
        %v4580 = vld [vmem:[%s4562 + $0x88] sm:$0xff]
        %v4581 = vld [vmem:[%s4562 + $0x90] sm:$0xff]
        %v4582 = vld [vmem:[%s4562 + $0x98] sm:$0xff]
        %v4583 = vld [vmem:[%s4562 + $0xa0] sm:$0xff]
        %v4584 = vld [vmem:[%s4562 + $0xa8] sm:$0xff]
        %v4585 = vld [vmem:[%s4562 + $0xb0] sm:$0xff]
        %v4586 = vld [vmem:[%s4562 + $0xb8] sm:$0xff]
        %v4587 = vld [vmem:[%s4562 + $0xc0] sm:$0xff]
        %v4588 = vld [vmem:[%s4562 + $0xc8] sm:$0xff]
        %v4589 = vld [vmem:[%s4562 + $0xd0] sm:$0xff]
        %v4590 = vld [vmem:[%s4562 + $0xd8] sm:$0xff]
        %v4591 = vld [vmem:[%s4562 + $0xe0] sm:$0xff]
        %v4592 = vld [vmem:[%s4562 + $0xe8] sm:$0xff]
        %v4593 = vld [vmem:[%s4562 + $0xf0] sm:$0xff]
        %v4594 = vld [vmem:[%s4562 + $0xf8] sm:$0xff]
        %v4627 = vunpack.c.l.b16 %v4563
        %v4628 = vunpack.c.h.b16 %v4563
        %v4629 = vunpack.c.l.b16 %v4564
        %v4630 = vunpack.c.h.b16 %v4564
        %v4631 = vunpack.c.l.b16 %v4565
        %v4632 = vunpack.c.h.b16 %v4565
        %v4633 = vunpack.c.l.b16 %v4566
        %v4634 = vunpack.c.h.b16 %v4566
        %v4635 = vunpack.c.l.b16 %v4567
        %v4636 = vunpack.c.h.b16 %v4567
        %v4637 = vunpack.c.l.b16 %v4568
        %v4638 = vunpack.c.h.b16 %v4568
        %v4639 = vunpack.c.l.b16 %v4569
        %v4640 = vunpack.c.h.b16 %v4569
        %v4641 = vunpack.c.l.b16 %v4570
        %v4642 = vunpack.c.h.b16 %v4570
        %v4643 = vunpack.c.l.b16 %v4571
        %v4644 = vunpack.c.h.b16 %v4571
        %v4645 = vunpack.c.l.b16 %v4572
        %v4646 = vunpack.c.h.b16 %v4572
        %v4647 = vunpack.c.l.b16 %v4573
        %v4648 = vunpack.c.h.b16 %v4573
        %v4649 = vunpack.c.l.b16 %v4574
        %v4650 = vunpack.c.h.b16 %v4574
        %v4651 = vunpack.c.l.b16 %v4575
        %v4652 = vunpack.c.h.b16 %v4575
        %v4653 = vunpack.c.l.b16 %v4576
        %v4654 = vunpack.c.h.b16 %v4576
        %v4655 = vunpack.c.l.b16 %v4577
        %v4656 = vunpack.c.h.b16 %v4577
        %v4657 = vunpack.c.l.b16 %v4578
        %v4658 = vunpack.c.h.b16 %v4578
        %v4659 = vunpack.c.l.b16 %v4579
        %v4660 = vunpack.c.h.b16 %v4579
        %v4661 = vunpack.c.l.b16 %v4580
        %v4662 = vunpack.c.h.b16 %v4580
        %v4663 = vunpack.c.l.b16 %v4581
        %v4664 = vunpack.c.h.b16 %v4581
        %v4665 = vunpack.c.l.b16 %v4582
        %v4666 = vunpack.c.h.b16 %v4582
        %v4667 = vunpack.c.l.b16 %v4583
        %v4668 = vunpack.c.h.b16 %v4583
        %v4669 = vunpack.c.l.b16 %v4584
        %v4670 = vunpack.c.h.b16 %v4584
        %v4671 = vunpack.c.l.b16 %v4585
        %v4672 = vunpack.c.h.b16 %v4585
        %v4673 = vunpack.c.l.b16 %v4586
        %v4674 = vunpack.c.h.b16 %v4586
        %v4675 = vunpack.c.l.b16 %v4587
        %v4676 = vunpack.c.h.b16 %v4587
        %v4677 = vunpack.c.l.b16 %v4588
        %v4678 = vunpack.c.h.b16 %v4588
        %v4679 = vunpack.c.l.b16 %v4589
        %v4680 = vunpack.c.h.b16 %v4589
        %v4681 = vunpack.c.l.b16 %v4590
        %v4682 = vunpack.c.h.b16 %v4590
        %v4683 = vunpack.c.l.b16 %v4591
        %v4684 = vunpack.c.h.b16 %v4591
        %v4685 = vunpack.c.l.b16 %v4592
        %v4686 = vunpack.c.h.b16 %v4592
        %v4687 = vunpack.c.l.b16 %v4593
        %v4688 = vunpack.c.h.b16 %v4593
        %v4689 = vunpack.c.l.b16 %v4594
        %v4690 = vunpack.c.h.b16 %v4594
        %v4691 = vpack.c.b16 %v4629, %v4627
        %v4692 = vpack.c.b16 %v4630, %v4628
        %v4693 = vpack.c.b16 %v4633, %v4631
        %v4694 = vpack.c.b16 %v4634, %v4632
        %v4695 = vpack.c.b16 %v4637, %v4635
        %v4696 = vpack.c.b16 %v4638, %v4636
        %v4697 = vpack.c.b16 %v4641, %v4639
        %v4698 = vpack.c.b16 %v4642, %v4640
        %v4699 = vpack.c.b16 %v4645, %v4643
        %v4700 = vpack.c.b16 %v4646, %v4644
        %v4701 = vpack.c.b16 %v4649, %v4647
        %v4702 = vpack.c.b16 %v4650, %v4648
        %v4703 = vpack.c.b16 %v4653, %v4651
        %v4704 = vpack.c.b16 %v4654, %v4652
        %v4705 = vpack.c.b16 %v4657, %v4655
        %v4706 = vpack.c.b16 %v4658, %v4656
        %v4707 = vpack.c.b16 %v4661, %v4659
        %v4708 = vpack.c.b16 %v4662, %v4660
        %v4709 = vpack.c.b16 %v4665, %v4663
        %v4710 = vpack.c.b16 %v4666, %v4664
        %v4711 = vpack.c.b16 %v4669, %v4667
        %v4712 = vpack.c.b16 %v4670, %v4668
        %v4713 = vpack.c.b16 %v4673, %v4671
        %v4714 = vpack.c.b16 %v4674, %v4672
        %v4715 = vpack.c.b16 %v4677, %v4675
        %v4716 = vpack.c.b16 %v4678, %v4676
        %v4717 = vpack.c.b16 %v4681, %v4679
        %v4718 = vpack.c.b16 %v4682, %v4680
        %v4719 = vpack.c.b16 %v4685, %v4683
        %v4720 = vpack.c.b16 %v4686, %v4684
        %v4721 = vpack.c.b16 %v4689, %v4687
        %v4722 = vpack.c.b16 %v4690, %v4688
        %4755 = vmatpush.bf16.msra.mxu0 %v784
        %4756 = vmatpush.bf16.msra.mxu0 %v783
        %4757 = vmatpush.bf16.msra.mxu0 %v782
        %4758 = vmatpush.bf16.msra.mxu0 %v781
        %4759 = vmatpush.bf16.msra.mxu0 %v780
        %4760 = vmatpush.bf16.msra.mxu0 %v779
        %4761 = vmatpush.bf16.msra.mxu0 %v778
        %4762 = vmatpush.bf16.msra.mxu0 %v777
        %4763 = vmatmul.bf16.gmra.mxu0 %v4691
        %v4764 = vpop.f32.mrf.mxu0
        %v4765 = vadd.f32 0.0, %v4764
        %v4766 = vpop.f32.mrf.mxu0
        %v4767 = vadd.f32 0.0, %v4766
        %4768 = vmatmul.bf16.gmra.mxu0 %v4693
        %v4769 = vpop.f32.mrf.mxu0
        %v4770 = vadd.f32 0.0, %v4769
        %v4771 = vpop.f32.mrf.mxu0
        %v4772 = vadd.f32 0.0, %v4771
        %4773 = vmatmul.bf16.gmra.mxu0 %v4695
        %v4774 = vpop.f32.mrf.mxu0
        %v4775 = vadd.f32 0.0, %v4774
        %v4776 = vpop.f32.mrf.mxu0
        %v4777 = vadd.f32 0.0, %v4776
        %4778 = vmatmul.bf16.gmra.mxu0 %v4697
        %v4779 = vpop.f32.mrf.mxu0
        %v4780 = vadd.f32 0.0, %v4779
        %v4781 = vpop.f32.mrf.mxu0
        %v4782 = vadd.f32 0.0, %v4781
        %4783 = vmatmul.bf16.gmra.mxu0 %v4699
        %v4784 = vpop.f32.mrf.mxu0
        %v4785 = vadd.f32 0.0, %v4784
        %v4786 = vpop.f32.mrf.mxu0
        %v4787 = vadd.f32 0.0, %v4786
        %4788 = vmatmul.bf16.gmra.mxu0 %v4701
        %v4789 = vpop.f32.mrf.mxu0
        %v4790 = vadd.f32 0.0, %v4789
        %v4791 = vpop.f32.mrf.mxu0
        %v4792 = vadd.f32 0.0, %v4791
        %4793 = vmatmul.bf16.gmra.mxu0 %v4703
        %v4794 = vpop.f32.mrf.mxu0
        %v4795 = vadd.f32 0.0, %v4794
        %v4796 = vpop.f32.mrf.mxu0
        %v4797 = vadd.f32 0.0, %v4796
        %4798 = vmatmul.bf16.gmra.mxu0 %v4705
        %v4799 = vpop.f32.mrf.mxu0
        %v4800 = vadd.f32 0.0, %v4799
        %v4801 = vpop.f32.mrf.mxu0
        %v4802 = vadd.f32 0.0, %v4801
        %4803 = vmatmul.bf16.gmra.mxu0 %v4707
        %v4804 = vpop.f32.mrf.mxu0
        %v4805 = vadd.f32 0.0, %v4804
        %v4806 = vpop.f32.mrf.mxu0
        %v4807 = vadd.f32 0.0, %v4806
        %4808 = vmatmul.bf16.gmra.mxu0 %v4709
        %v4809 = vpop.f32.mrf.mxu0
        %v4810 = vadd.f32 0.0, %v4809
        %v4811 = vpop.f32.mrf.mxu0
        %v4812 = vadd.f32 0.0, %v4811
        %4813 = vmatmul.bf16.gmra.mxu0 %v4711
        %v4814 = vpop.f32.mrf.mxu0
        %v4815 = vadd.f32 0.0, %v4814
        %v4816 = vpop.f32.mrf.mxu0
        %v4817 = vadd.f32 0.0, %v4816
        %4818 = vmatmul.bf16.gmra.mxu0 %v4713
        %v4819 = vpop.f32.mrf.mxu0
        %v4820 = vadd.f32 0.0, %v4819
        %v4821 = vpop.f32.mrf.mxu0
        %v4822 = vadd.f32 0.0, %v4821
        %4823 = vmatmul.bf16.gmra.mxu0 %v4715
        %v4824 = vpop.f32.mrf.mxu0
        %v4825 = vadd.f32 0.0, %v4824
        %v4826 = vpop.f32.mrf.mxu0
        %v4827 = vadd.f32 0.0, %v4826
        %4828 = vmatmul.bf16.gmra.mxu0 %v4717
        %v4829 = vpop.f32.mrf.mxu0
        %v4830 = vadd.f32 0.0, %v4829
        %v4831 = vpop.f32.mrf.mxu0
        %v4832 = vadd.f32 0.0, %v4831
        %4833 = vmatmul.bf16.gmra.mxu0 %v4719
        %v4834 = vpop.f32.mrf.mxu0
        %v4835 = vadd.f32 0.0, %v4834
        %v4836 = vpop.f32.mrf.mxu0
        %v4837 = vadd.f32 0.0, %v4836
        %4838 = vmatmul.bf16.gmra.mxu0 %v4721
        %v4839 = vpop.f32.mrf.mxu0
        %v4840 = vadd.f32 0.0, %v4839
        %v4841 = vpop.f32.mrf.mxu0
        %v4842 = vadd.f32 0.0, %v4841
        %4843 = vdwg.mxu0
        %4844 = vmatpush.bf16.msra.mxu0 %v792
        %4845 = vmatpush.bf16.msra.mxu0 %v791
        %4846 = vmatpush.bf16.msra.mxu0 %v790
        %4847 = vmatpush.bf16.msra.mxu0 %v789
        %4848 = vmatpush.bf16.msra.mxu0 %v788
        %4849 = vmatpush.bf16.msra.mxu0 %v787
        %4850 = vmatpush.bf16.msra.mxu0 %v786
        %4851 = vmatpush.bf16.msra.mxu0 %v785
        %4852 = vmatmul.bf16.gmra.mxu0 %v4692
        %v4853 = vpop.f32.mrf.mxu0
        %v4854 = vadd.f32 %v4765, %v4853
        %v4855 = vpop.f32.mrf.mxu0
        %v4856 = vadd.f32 %v4767, %v4855
        %4857 = vmatmul.bf16.gmra.mxu0 %v4694
        %v4858 = vpop.f32.mrf.mxu0
        %v4859 = vadd.f32 %v4770, %v4858
        %v4860 = vpop.f32.mrf.mxu0
        %v4861 = vadd.f32 %v4772, %v4860
        %4862 = vmatmul.bf16.gmra.mxu0 %v4696
        %v4863 = vpop.f32.mrf.mxu0
        %v4864 = vadd.f32 %v4775, %v4863
        %v4865 = vpop.f32.mrf.mxu0
        %v4866 = vadd.f32 %v4777, %v4865
        %4867 = vmatmul.bf16.gmra.mxu0 %v4698
        %v4868 = vpop.f32.mrf.mxu0
        %v4869 = vadd.f32 %v4780, %v4868
        %v4870 = vpop.f32.mrf.mxu0
        %v4871 = vadd.f32 %v4782, %v4870
        %4872 = vmatmul.bf16.gmra.mxu0 %v4700
        %v4873 = vpop.f32.mrf.mxu0
        %v4874 = vadd.f32 %v4785, %v4873
        %v4875 = vpop.f32.mrf.mxu0
        %v4876 = vadd.f32 %v4787, %v4875
        %4877 = vmatmul.bf16.gmra.mxu0 %v4702
        %v4878 = vpop.f32.mrf.mxu0
        %v4879 = vadd.f32 %v4790, %v4878
        %v4880 = vpop.f32.mrf.mxu0
        %v4881 = vadd.f32 %v4792, %v4880
        %4882 = vmatmul.bf16.gmra.mxu0 %v4704
        %v4883 = vpop.f32.mrf.mxu0
        %v4884 = vadd.f32 %v4795, %v4883
        %v4885 = vpop.f32.mrf.mxu0
        %v4886 = vadd.f32 %v4797, %v4885
        %4887 = vmatmul.bf16.gmra.mxu0 %v4706
        %v4888 = vpop.f32.mrf.mxu0
        %v4889 = vadd.f32 %v4800, %v4888
        %v4890 = vpop.f32.mrf.mxu0
        %v4891 = vadd.f32 %v4802, %v4890
        %4892 = vmatmul.bf16.gmra.mxu0 %v4708
        %v4893 = vpop.f32.mrf.mxu0
        %v4894 = vadd.f32 %v4805, %v4893
        %v4895 = vpop.f32.mrf.mxu0
        %v4896 = vadd.f32 %v4807, %v4895
        %4897 = vmatmul.bf16.gmra.mxu0 %v4710
        %v4898 = vpop.f32.mrf.mxu0
        %v4899 = vadd.f32 %v4810, %v4898
        %v4900 = vpop.f32.mrf.mxu0
        %v4901 = vadd.f32 %v4812, %v4900
        %4902 = vmatmul.bf16.gmra.mxu0 %v4712
        %v4903 = vpop.f32.mrf.mxu0
        %v4904 = vadd.f32 %v4815, %v4903
        %v4905 = vpop.f32.mrf.mxu0
        %v4906 = vadd.f32 %v4817, %v4905
        %4907 = vmatmul.bf16.gmra.mxu0 %v4714
        %v4908 = vpop.f32.mrf.mxu0
        %v4909 = vadd.f32 %v4820, %v4908
        %v4910 = vpop.f32.mrf.mxu0
        %v4911 = vadd.f32 %v4822, %v4910
        %4912 = vmatmul.bf16.gmra.mxu0 %v4716
        %v4913 = vpop.f32.mrf.mxu0
        %v4914 = vadd.f32 %v4825, %v4913
        %v4915 = vpop.f32.mrf.mxu0
        %v4916 = vadd.f32 %v4827, %v4915
        %4917 = vmatmul.bf16.gmra.mxu0 %v4718
        %v4918 = vpop.f32.mrf.mxu0
        %v4919 = vadd.f32 %v4830, %v4918
        %v4920 = vpop.f32.mrf.mxu0
        %v4921 = vadd.f32 %v4832, %v4920
        %4922 = vmatmul.bf16.gmra.mxu0 %v4720
        %v4923 = vpop.f32.mrf.mxu0
        %v4924 = vadd.f32 %v4835, %v4923
        %v4925 = vpop.f32.mrf.mxu0
        %v4926 = vadd.f32 %v4837, %v4925
        %4927 = vmatmul.bf16.gmra.mxu0 %v4722
        %v4928 = vpop.f32.mrf.mxu0
        %v4929 = vadd.f32 %v4840, %v4928
        %v4930 = vpop.f32.mrf.mxu0
        %v4931 = vadd.f32 %v4842, %v4930
        %4932 = vdwg.mxu0
        %v4933 = vpack.c.bf16 %v4856, %v4854
        %v4934 = vpack.c.bf16 %v4861, %v4859
        %v4935 = vpack.c.bf16 %v4866, %v4864
        %v4936 = vpack.c.bf16 %v4871, %v4869
        %v4937 = vpack.c.bf16 %v4876, %v4874
        %v4938 = vpack.c.bf16 %v4881, %v4879
        %v4939 = vpack.c.bf16 %v4886, %v4884
        %v4940 = vpack.c.bf16 %v4891, %v4889
        %v4941 = vpack.c.bf16 %v4896, %v4894
        %v4942 = vpack.c.bf16 %v4901, %v4899
        %v4943 = vpack.c.bf16 %v4906, %v4904
        %v4944 = vpack.c.bf16 %v4911, %v4909
        %v4945 = vpack.c.bf16 %v4916, %v4914
        %v4946 = vpack.c.bf16 %v4921, %v4919
        %v4947 = vpack.c.bf16 %v4926, %v4924
        %v4948 = vpack.c.bf16 %v4931, %v4929
        %s4949 = scalar_lea.vmem [#allocation10], 448
        %v4950 = vld [vmem:[%s4949] sm:$0xf]
        %v4951 = vld [vmem:[%s4949 + $0x4] sm:$0xf]
        %v4952 = vld [vmem:[%s4949 + $0x8] sm:$0xf]
        %v4953 = vld [vmem:[%s4949 + $0xc] sm:$0xf]
        %v4954 = vld [vmem:[%s4949 + $0x10] sm:$0xf]
        %v4955 = vld [vmem:[%s4949 + $0x14] sm:$0xf]
        %v4956 = vld [vmem:[%s4949 + $0x18] sm:$0xf]
        %v4957 = vld [vmem:[%s4949 + $0x1c] sm:$0xf]
        %v4958 = vld [vmem:[%s4949 + $0x20] sm:$0xf]
        %v4959 = vld [vmem:[%s4949 + $0x24] sm:$0xf]
        %v4960 = vld [vmem:[%s4949 + $0x28] sm:$0xf]
        %v4961 = vld [vmem:[%s4949 + $0x2c] sm:$0xf]
        %v4962 = vld [vmem:[%s4949 + $0x30] sm:$0xf]
        %v4963 = vld [vmem:[%s4949 + $0x34] sm:$0xf]
        %v4964 = vld [vmem:[%s4949 + $0x38] sm:$0xf]
        %v4965 = vld [vmem:[%s4949 + $0x3c] sm:$0xf]
        %v4982 = vunpack.c.l.b16 %v4950
        %v4983 = vunpack.c.l.b16 %v4951
        %v4984 = vunpack.c.l.b16 %v4952
        %v4985 = vunpack.c.l.b16 %v4953
        %v4986 = vunpack.c.l.b16 %v4954
        %v4987 = vunpack.c.l.b16 %v4955
        %v4988 = vunpack.c.l.b16 %v4956
        %v4989 = vunpack.c.l.b16 %v4957
        %v4990 = vunpack.c.l.b16 %v4958
        %v4991 = vunpack.c.l.b16 %v4959
        %v4992 = vunpack.c.l.b16 %v4960
        %v4993 = vunpack.c.l.b16 %v4961
        %v4994 = vunpack.c.l.b16 %v4962
        %v4995 = vunpack.c.l.b16 %v4963
        %v4996 = vunpack.c.l.b16 %v4964
        %v4997 = vunpack.c.l.b16 %v4965
        %v4998 = vpack.c.b16 %v4983, %v4982
        %v4999 = vpack.c.b16 %v4985, %v4984
        %v5000 = vpack.c.b16 %v4987, %v4986
        %v5001 = vpack.c.b16 %v4989, %v4988
        %v5002 = vpack.c.b16 %v4991, %v4990
        %v5003 = vpack.c.b16 %v4993, %v4992
        %v5004 = vpack.c.b16 %v4995, %v4994
        %v5005 = vpack.c.b16 %v4997, %v4996
        %5014 = vmatpush.bf16.msra.mxu0 %v5005
        %5015 = vmatpush.bf16.msra.mxu0 %v5004
        %5016 = vmatpush.bf16.msra.mxu0 %v5003
        %5017 = vmatpush.bf16.msra.mxu0 %v5002
        %5018 = vmatpush.bf16.msra.mxu0 %v5001
        %5019 = vmatpush.bf16.msra.mxu0 %v5000
        %5020 = vmatpush.bf16.msra.mxu0 %v4999
        %5021 = vmatpush.bf16.msra.mxu0 %v4998
        %5022 = vmatmul.bf16.gmra.mxu0 %v4933
        %v5023 = vpop.f32.mrf.mxu0
        %v5024 = vadd.f32 0.0, %v5023
        %v5025 = vpop.f32.mrf.mxu0
        %v5026 = vadd.f32 0.0, %v5025
        %5027 = vmatmul.bf16.gmra.mxu0 %v4934
        %v5028 = vpop.f32.mrf.mxu0
        %v5029 = vadd.f32 0.0, %v5028
        %v5030 = vpop.f32.mrf.mxu0
        %v5031 = vadd.f32 0.0, %v5030
        %5032 = vmatmul.bf16.gmra.mxu0 %v4935
        %v5033 = vpop.f32.mrf.mxu0
        %v5034 = vadd.f32 0.0, %v5033
        %v5035 = vpop.f32.mrf.mxu0
        %v5036 = vadd.f32 0.0, %v5035
        %5037 = vmatmul.bf16.gmra.mxu0 %v4936
        %v5038 = vpop.f32.mrf.mxu0
        %v5039 = vadd.f32 0.0, %v5038
        %v5040 = vpop.f32.mrf.mxu0
        %v5041 = vadd.f32 0.0, %v5040
        %5042 = vmatmul.bf16.gmra.mxu0 %v4937
        %v5043 = vpop.f32.mrf.mxu0
        %v5044 = vadd.f32 0.0, %v5043
        %v5045 = vpop.f32.mrf.mxu0
        %v5046 = vadd.f32 0.0, %v5045
        %5047 = vmatmul.bf16.gmra.mxu0 %v4938
        %v5048 = vpop.f32.mrf.mxu0
        %v5049 = vadd.f32 0.0, %v5048
        %v5050 = vpop.f32.mrf.mxu0
        %v5051 = vadd.f32 0.0, %v5050
        %5052 = vmatmul.bf16.gmra.mxu0 %v4939
        %v5053 = vpop.f32.mrf.mxu0
        %v5054 = vadd.f32 0.0, %v5053
        %v5055 = vpop.f32.mrf.mxu0
        %v5056 = vadd.f32 0.0, %v5055
        %5057 = vmatmul.bf16.gmra.mxu0 %v4940
        %v5058 = vpop.f32.mrf.mxu0
        %v5059 = vadd.f32 0.0, %v5058
        %v5060 = vpop.f32.mrf.mxu0
        %v5061 = vadd.f32 0.0, %v5060
        %5062 = vmatmul.bf16.gmra.mxu0 %v4941
        %v5063 = vpop.f32.mrf.mxu0
        %v5064 = vadd.f32 0.0, %v5063
        %v5065 = vpop.f32.mrf.mxu0
        %v5066 = vadd.f32 0.0, %v5065
        %5067 = vmatmul.bf16.gmra.mxu0 %v4942
        %v5068 = vpop.f32.mrf.mxu0
        %v5069 = vadd.f32 0.0, %v5068
        %v5070 = vpop.f32.mrf.mxu0
        %v5071 = vadd.f32 0.0, %v5070
        %5072 = vmatmul.bf16.gmra.mxu0 %v4943
        %v5073 = vpop.f32.mrf.mxu0
        %v5074 = vadd.f32 0.0, %v5073
        %v5075 = vpop.f32.mrf.mxu0
        %v5076 = vadd.f32 0.0, %v5075
        %5077 = vmatmul.bf16.gmra.mxu0 %v4944
        %v5078 = vpop.f32.mrf.mxu0
        %v5079 = vadd.f32 0.0, %v5078
        %v5080 = vpop.f32.mrf.mxu0
        %v5081 = vadd.f32 0.0, %v5080
        %5082 = vmatmul.bf16.gmra.mxu0 %v4945
        %v5083 = vpop.f32.mrf.mxu0
        %v5084 = vadd.f32 0.0, %v5083
        %v5085 = vpop.f32.mrf.mxu0
        %v5086 = vadd.f32 0.0, %v5085
        %5087 = vmatmul.bf16.gmra.mxu0 %v4946
        %v5088 = vpop.f32.mrf.mxu0
        %v5089 = vadd.f32 0.0, %v5088
        %v5090 = vpop.f32.mrf.mxu0
        %v5091 = vadd.f32 0.0, %v5090
        %5092 = vmatmul.bf16.gmra.mxu0 %v4947
        %v5093 = vpop.f32.mrf.mxu0
        %v5094 = vadd.f32 0.0, %v5093
        %v5095 = vpop.f32.mrf.mxu0
        %v5096 = vadd.f32 0.0, %v5095
        %5097 = vmatmul.bf16.gmra.mxu0 %v4948
        %v5098 = vpop.f32.mrf.mxu0
        %v5099 = vadd.f32 0.0, %v5098
        %v5100 = vpop.f32.mrf.mxu0
        %v5101 = vadd.f32 0.0, %v5100
        %5102 = vdwg.mxu0
        %v5103 = vadd.f32 %v4530, %v5024
        %v5104 = vadd.f32 %v4531, %v5026
        %v5105 = vadd.f32 %v4532, %v5029
        %v5106 = vadd.f32 %v4533, %v5031
        %v5107 = vadd.f32 %v4534, %v5034
        %v5108 = vadd.f32 %v4535, %v5036
        %v5109 = vadd.f32 %v4536, %v5039
        %v5110 = vadd.f32 %v4537, %v5041
        %v5111 = vadd.f32 %v4538, %v5044
        %v5112 = vadd.f32 %v4539, %v5046
        %v5113 = vadd.f32 %v4540, %v5049
        %v5114 = vadd.f32 %v4541, %v5051
        %v5115 = vadd.f32 %v4542, %v5054
        %v5116 = vadd.f32 %v4543, %v5056
        %v5117 = vadd.f32 %v4544, %v5059
        %v5118 = vadd.f32 %v4545, %v5061
        %v5119 = vadd.f32 %v4546, %v5064
        %v5120 = vadd.f32 %v4547, %v5066
        %v5121 = vadd.f32 %v4548, %v5069
        %v5122 = vadd.f32 %v4549, %v5071
        %v5123 = vadd.f32 %v4550, %v5074
        %v5124 = vadd.f32 %v4551, %v5076
        %v5125 = vadd.f32 %v4552, %v5079
        %v5126 = vadd.f32 %v4553, %v5081
        %v5127 = vadd.f32 %v4554, %v5084
        %v5128 = vadd.f32 %v4555, %v5086
        %v5129 = vadd.f32 %v4556, %v5089
        %v5130 = vadd.f32 %v4557, %v5091
        %v5131 = vadd.f32 %v4558, %v5094
        %v5132 = vadd.f32 %v4559, %v5096
        %v5133 = vadd.f32 %v4560, %v5099
        %v5134 = vadd.f32 %v4561, %v5101
        %s5135 = scalar_lea.vmem [#allocation2], 2048
        %v5136 = vld [vmem:[%s5135] sm:$0xff]
        %v5137 = vld [vmem:[%s5135 + $0x8] sm:$0xff]
        %v5138 = vld [vmem:[%s5135 + $0x10] sm:$0xff]
        %v5139 = vld [vmem:[%s5135 + $0x18] sm:$0xff]
        %v5140 = vld [vmem:[%s5135 + $0x20] sm:$0xff]
        %v5141 = vld [vmem:[%s5135 + $0x28] sm:$0xff]
        %v5142 = vld [vmem:[%s5135 + $0x30] sm:$0xff]
        %v5143 = vld [vmem:[%s5135 + $0x38] sm:$0xff]
        %v5144 = vld [vmem:[%s5135 + $0x40] sm:$0xff]
        %v5145 = vld [vmem:[%s5135 + $0x48] sm:$0xff]
        %v5146 = vld [vmem:[%s5135 + $0x50] sm:$0xff]
        %v5147 = vld [vmem:[%s5135 + $0x58] sm:$0xff]
        %v5148 = vld [vmem:[%s5135 + $0x60] sm:$0xff]
        %v5149 = vld [vmem:[%s5135 + $0x68] sm:$0xff]
        %v5150 = vld [vmem:[%s5135 + $0x70] sm:$0xff]
        %v5151 = vld [vmem:[%s5135 + $0x78] sm:$0xff]
        %v5152 = vld [vmem:[%s5135 + $0x80] sm:$0xff]
        %v5153 = vld [vmem:[%s5135 + $0x88] sm:$0xff]
        %v5154 = vld [vmem:[%s5135 + $0x90] sm:$0xff]
        %v5155 = vld [vmem:[%s5135 + $0x98] sm:$0xff]
        %v5156 = vld [vmem:[%s5135 + $0xa0] sm:$0xff]
        %v5157 = vld [vmem:[%s5135 + $0xa8] sm:$0xff]
        %v5158 = vld [vmem:[%s5135 + $0xb0] sm:$0xff]
        %v5159 = vld [vmem:[%s5135 + $0xb8] sm:$0xff]
        %v5160 = vld [vmem:[%s5135 + $0xc0] sm:$0xff]
        %v5161 = vld [vmem:[%s5135 + $0xc8] sm:$0xff]
        %v5162 = vld [vmem:[%s5135 + $0xd0] sm:$0xff]
        %v5163 = vld [vmem:[%s5135 + $0xd8] sm:$0xff]
        %v5164 = vld [vmem:[%s5135 + $0xe0] sm:$0xff]
        %v5165 = vld [vmem:[%s5135 + $0xe8] sm:$0xff]
        %v5166 = vld [vmem:[%s5135 + $0xf0] sm:$0xff]
        %v5167 = vld [vmem:[%s5135 + $0xf8] sm:$0xff]
        %v5200 = vunpack.c.l.b16 %v5136
        %v5201 = vunpack.c.h.b16 %v5136
        %v5202 = vunpack.c.l.b16 %v5137
        %v5203 = vunpack.c.h.b16 %v5137
        %v5204 = vunpack.c.l.b16 %v5138
        %v5205 = vunpack.c.h.b16 %v5138
        %v5206 = vunpack.c.l.b16 %v5139
        %v5207 = vunpack.c.h.b16 %v5139
        %v5208 = vunpack.c.l.b16 %v5140
        %v5209 = vunpack.c.h.b16 %v5140
        %v5210 = vunpack.c.l.b16 %v5141
        %v5211 = vunpack.c.h.b16 %v5141
        %v5212 = vunpack.c.l.b16 %v5142
        %v5213 = vunpack.c.h.b16 %v5142
        %v5214 = vunpack.c.l.b16 %v5143
        %v5215 = vunpack.c.h.b16 %v5143
        %v5216 = vunpack.c.l.b16 %v5144
        %v5217 = vunpack.c.h.b16 %v5144
        %v5218 = vunpack.c.l.b16 %v5145
        %v5219 = vunpack.c.h.b16 %v5145
        %v5220 = vunpack.c.l.b16 %v5146
        %v5221 = vunpack.c.h.b16 %v5146
        %v5222 = vunpack.c.l.b16 %v5147
        %v5223 = vunpack.c.h.b16 %v5147
        %v5224 = vunpack.c.l.b16 %v5148
        %v5225 = vunpack.c.h.b16 %v5148
        %v5226 = vunpack.c.l.b16 %v5149
        %v5227 = vunpack.c.h.b16 %v5149
        %v5228 = vunpack.c.l.b16 %v5150
        %v5229 = vunpack.c.h.b16 %v5150
        %v5230 = vunpack.c.l.b16 %v5151
        %v5231 = vunpack.c.h.b16 %v5151
        %v5232 = vunpack.c.l.b16 %v5152
        %v5233 = vunpack.c.h.b16 %v5152
        %v5234 = vunpack.c.l.b16 %v5153
        %v5235 = vunpack.c.h.b16 %v5153
        %v5236 = vunpack.c.l.b16 %v5154
        %v5237 = vunpack.c.h.b16 %v5154
        %v5238 = vunpack.c.l.b16 %v5155
        %v5239 = vunpack.c.h.b16 %v5155
        %v5240 = vunpack.c.l.b16 %v5156
        %v5241 = vunpack.c.h.b16 %v5156
        %v5242 = vunpack.c.l.b16 %v5157
        %v5243 = vunpack.c.h.b16 %v5157
        %v5244 = vunpack.c.l.b16 %v5158
        %v5245 = vunpack.c.h.b16 %v5158
        %v5246 = vunpack.c.l.b16 %v5159
        %v5247 = vunpack.c.h.b16 %v5159
        %v5248 = vunpack.c.l.b16 %v5160
        %v5249 = vunpack.c.h.b16 %v5160
        %v5250 = vunpack.c.l.b16 %v5161
        %v5251 = vunpack.c.h.b16 %v5161
        %v5252 = vunpack.c.l.b16 %v5162
        %v5253 = vunpack.c.h.b16 %v5162
        %v5254 = vunpack.c.l.b16 %v5163
        %v5255 = vunpack.c.h.b16 %v5163
        %v5256 = vunpack.c.l.b16 %v5164
        %v5257 = vunpack.c.h.b16 %v5164
        %v5258 = vunpack.c.l.b16 %v5165
        %v5259 = vunpack.c.h.b16 %v5165
        %v5260 = vunpack.c.l.b16 %v5166
        %v5261 = vunpack.c.h.b16 %v5166
        %v5262 = vunpack.c.l.b16 %v5167
        %v5263 = vunpack.c.h.b16 %v5167
        %v5264 = vpack.c.b16 %v5202, %v5200
        %v5265 = vpack.c.b16 %v5203, %v5201
        %v5266 = vpack.c.b16 %v5206, %v5204
        %v5267 = vpack.c.b16 %v5207, %v5205
        %v5268 = vpack.c.b16 %v5210, %v5208
        %v5269 = vpack.c.b16 %v5211, %v5209
        %v5270 = vpack.c.b16 %v5214, %v5212
        %v5271 = vpack.c.b16 %v5215, %v5213
        %v5272 = vpack.c.b16 %v5218, %v5216
        %v5273 = vpack.c.b16 %v5219, %v5217
        %v5274 = vpack.c.b16 %v5222, %v5220
        %v5275 = vpack.c.b16 %v5223, %v5221
        %v5276 = vpack.c.b16 %v5226, %v5224
        %v5277 = vpack.c.b16 %v5227, %v5225
        %v5278 = vpack.c.b16 %v5230, %v5228
        %v5279 = vpack.c.b16 %v5231, %v5229
        %v5280 = vpack.c.b16 %v5234, %v5232
        %v5281 = vpack.c.b16 %v5235, %v5233
        %v5282 = vpack.c.b16 %v5238, %v5236
        %v5283 = vpack.c.b16 %v5239, %v5237
        %v5284 = vpack.c.b16 %v5242, %v5240
        %v5285 = vpack.c.b16 %v5243, %v5241
        %v5286 = vpack.c.b16 %v5246, %v5244
        %v5287 = vpack.c.b16 %v5247, %v5245
        %v5288 = vpack.c.b16 %v5250, %v5248
        %v5289 = vpack.c.b16 %v5251, %v5249
        %v5290 = vpack.c.b16 %v5254, %v5252
        %v5291 = vpack.c.b16 %v5255, %v5253
        %v5292 = vpack.c.b16 %v5258, %v5256
        %v5293 = vpack.c.b16 %v5259, %v5257
        %v5294 = vpack.c.b16 %v5262, %v5260
        %v5295 = vpack.c.b16 %v5263, %v5261
        %5328 = vmatpush.bf16.msra.mxu0 %v784
        %5329 = vmatpush.bf16.msra.mxu0 %v783
        %5330 = vmatpush.bf16.msra.mxu0 %v782
        %5331 = vmatpush.bf16.msra.mxu0 %v781
        %5332 = vmatpush.bf16.msra.mxu0 %v780
        %5333 = vmatpush.bf16.msra.mxu0 %v779
        %5334 = vmatpush.bf16.msra.mxu0 %v778
        %5335 = vmatpush.bf16.msra.mxu0 %v777
        %5336 = vmatmul.bf16.gmra.mxu0 %v5264
        %v5337 = vpop.f32.mrf.mxu0
        %v5338 = vadd.f32 0.0, %v5337
        %v5339 = vpop.f32.mrf.mxu0
        %v5340 = vadd.f32 0.0, %v5339
        %5341 = vmatmul.bf16.gmra.mxu0 %v5266
        %v5342 = vpop.f32.mrf.mxu0
        %v5343 = vadd.f32 0.0, %v5342
        %v5344 = vpop.f32.mrf.mxu0
        %v5345 = vadd.f32 0.0, %v5344
        %5346 = vmatmul.bf16.gmra.mxu0 %v5268
        %v5347 = vpop.f32.mrf.mxu0
        %v5348 = vadd.f32 0.0, %v5347
        %v5349 = vpop.f32.mrf.mxu0
        %v5350 = vadd.f32 0.0, %v5349
        %5351 = vmatmul.bf16.gmra.mxu0 %v5270
        %v5352 = vpop.f32.mrf.mxu0
        %v5353 = vadd.f32 0.0, %v5352
        %v5354 = vpop.f32.mrf.mxu0
        %v5355 = vadd.f32 0.0, %v5354
        %5356 = vmatmul.bf16.gmra.mxu0 %v5272
        %v5357 = vpop.f32.mrf.mxu0
        %v5358 = vadd.f32 0.0, %v5357
        %v5359 = vpop.f32.mrf.mxu0
        %v5360 = vadd.f32 0.0, %v5359
        %5361 = vmatmul.bf16.gmra.mxu0 %v5274
        %v5362 = vpop.f32.mrf.mxu0
        %v5363 = vadd.f32 0.0, %v5362
        %v5364 = vpop.f32.mrf.mxu0
        %v5365 = vadd.f32 0.0, %v5364
        %5366 = vmatmul.bf16.gmra.mxu0 %v5276
        %v5367 = vpop.f32.mrf.mxu0
        %v5368 = vadd.f32 0.0, %v5367
        %v5369 = vpop.f32.mrf.mxu0
        %v5370 = vadd.f32 0.0, %v5369
        %5371 = vmatmul.bf16.gmra.mxu0 %v5278
        %v5372 = vpop.f32.mrf.mxu0
        %v5373 = vadd.f32 0.0, %v5372
        %v5374 = vpop.f32.mrf.mxu0
        %v5375 = vadd.f32 0.0, %v5374
        %5376 = vmatmul.bf16.gmra.mxu0 %v5280
        %v5377 = vpop.f32.mrf.mxu0
        %v5378 = vadd.f32 0.0, %v5377
        %v5379 = vpop.f32.mrf.mxu0
        %v5380 = vadd.f32 0.0, %v5379
        %5381 = vmatmul.bf16.gmra.mxu0 %v5282
        %v5382 = vpop.f32.mrf.mxu0
        %v5383 = vadd.f32 0.0, %v5382
        %v5384 = vpop.f32.mrf.mxu0
        %v5385 = vadd.f32 0.0, %v5384
        %5386 = vmatmul.bf16.gmra.mxu0 %v5284
        %v5387 = vpop.f32.mrf.mxu0
        %v5388 = vadd.f32 0.0, %v5387
        %v5389 = vpop.f32.mrf.mxu0
        %v5390 = vadd.f32 0.0, %v5389
        %5391 = vmatmul.bf16.gmra.mxu0 %v5286
        %v5392 = vpop.f32.mrf.mxu0
        %v5393 = vadd.f32 0.0, %v5392
        %v5394 = vpop.f32.mrf.mxu0
        %v5395 = vadd.f32 0.0, %v5394
        %5396 = vmatmul.bf16.gmra.mxu0 %v5288
        %v5397 = vpop.f32.mrf.mxu0
        %v5398 = vadd.f32 0.0, %v5397
        %v5399 = vpop.f32.mrf.mxu0
        %v5400 = vadd.f32 0.0, %v5399
        %5401 = vmatmul.bf16.gmra.mxu0 %v5290
        %v5402 = vpop.f32.mrf.mxu0
        %v5403 = vadd.f32 0.0, %v5402
        %v5404 = vpop.f32.mrf.mxu0
        %v5405 = vadd.f32 0.0, %v5404
        %5406 = vmatmul.bf16.gmra.mxu0 %v5292
        %v5407 = vpop.f32.mrf.mxu0
        %v5408 = vadd.f32 0.0, %v5407
        %v5409 = vpop.f32.mrf.mxu0
        %v5410 = vadd.f32 0.0, %v5409
        %5411 = vmatmul.bf16.gmra.mxu0 %v5294
        %v5412 = vpop.f32.mrf.mxu0
        %v5413 = vadd.f32 0.0, %v5412
        %v5414 = vpop.f32.mrf.mxu0
        %v5415 = vadd.f32 0.0, %v5414
        %5416 = vdwg.mxu0
        %5417 = vmatpush.bf16.msra.mxu0 %v792
        %5418 = vmatpush.bf16.msra.mxu0 %v791
        %5419 = vmatpush.bf16.msra.mxu0 %v790
        %5420 = vmatpush.bf16.msra.mxu0 %v789
        %5421 = vmatpush.bf16.msra.mxu0 %v788
        %5422 = vmatpush.bf16.msra.mxu0 %v787
        %5423 = vmatpush.bf16.msra.mxu0 %v786
        %5424 = vmatpush.bf16.msra.mxu0 %v785
        %5425 = vmatmul.bf16.gmra.mxu0 %v5265
        %v5426 = vpop.f32.mrf.mxu0
        %v5427 = vadd.f32 %v5338, %v5426
        %v5428 = vpop.f32.mrf.mxu0
        %v5429 = vadd.f32 %v5340, %v5428
        %5430 = vmatmul.bf16.gmra.mxu0 %v5267
        %v5431 = vpop.f32.mrf.mxu0
        %v5432 = vadd.f32 %v5343, %v5431
        %v5433 = vpop.f32.mrf.mxu0
        %v5434 = vadd.f32 %v5345, %v5433
        %5435 = vmatmul.bf16.gmra.mxu0 %v5269
        %v5436 = vpop.f32.mrf.mxu0
        %v5437 = vadd.f32 %v5348, %v5436
        %v5438 = vpop.f32.mrf.mxu0
        %v5439 = vadd.f32 %v5350, %v5438
        %5440 = vmatmul.bf16.gmra.mxu0 %v5271
        %v5441 = vpop.f32.mrf.mxu0
        %v5442 = vadd.f32 %v5353, %v5441
        %v5443 = vpop.f32.mrf.mxu0
        %v5444 = vadd.f32 %v5355, %v5443
        %5445 = vmatmul.bf16.gmra.mxu0 %v5273
        %v5446 = vpop.f32.mrf.mxu0
        %v5447 = vadd.f32 %v5358, %v5446
        %v5448 = vpop.f32.mrf.mxu0
        %v5449 = vadd.f32 %v5360, %v5448
        %5450 = vmatmul.bf16.gmra.mxu0 %v5275
        %v5451 = vpop.f32.mrf.mxu0
        %v5452 = vadd.f32 %v5363, %v5451
        %v5453 = vpop.f32.mrf.mxu0
        %v5454 = vadd.f32 %v5365, %v5453
        %5455 = vmatmul.bf16.gmra.mxu0 %v5277
        %v5456 = vpop.f32.mrf.mxu0
        %v5457 = vadd.f32 %v5368, %v5456
        %v5458 = vpop.f32.mrf.mxu0
        %v5459 = vadd.f32 %v5370, %v5458
        %5460 = vmatmul.bf16.gmra.mxu0 %v5279
        %v5461 = vpop.f32.mrf.mxu0
        %v5462 = vadd.f32 %v5373, %v5461
        %v5463 = vpop.f32.mrf.mxu0
        %v5464 = vadd.f32 %v5375, %v5463
        %5465 = vmatmul.bf16.gmra.mxu0 %v5281
        %v5466 = vpop.f32.mrf.mxu0
        %v5467 = vadd.f32 %v5378, %v5466
        %v5468 = vpop.f32.mrf.mxu0
        %v5469 = vadd.f32 %v5380, %v5468
        %5470 = vmatmul.bf16.gmra.mxu0 %v5283
        %v5471 = vpop.f32.mrf.mxu0
        %v5472 = vadd.f32 %v5383, %v5471
        %v5473 = vpop.f32.mrf.mxu0
        %v5474 = vadd.f32 %v5385, %v5473
        %5475 = vmatmul.bf16.gmra.mxu0 %v5285
        %v5476 = vpop.f32.mrf.mxu0
        %v5477 = vadd.f32 %v5388, %v5476
        %v5478 = vpop.f32.mrf.mxu0
        %v5479 = vadd.f32 %v5390, %v5478
        %5480 = vmatmul.bf16.gmra.mxu0 %v5287
        %v5481 = vpop.f32.mrf.mxu0
        %v5482 = vadd.f32 %v5393, %v5481
        %v5483 = vpop.f32.mrf.mxu0
        %v5484 = vadd.f32 %v5395, %v5483
        %5485 = vmatmul.bf16.gmra.mxu0 %v5289
        %v5486 = vpop.f32.mrf.mxu0
        %v5487 = vadd.f32 %v5398, %v5486
        %v5488 = vpop.f32.mrf.mxu0
        %v5489 = vadd.f32 %v5400, %v5488
        %5490 = vmatmul.bf16.gmra.mxu0 %v5291
        %v5491 = vpop.f32.mrf.mxu0
        %v5492 = vadd.f32 %v5403, %v5491
        %v5493 = vpop.f32.mrf.mxu0
        %v5494 = vadd.f32 %v5405, %v5493
        %5495 = vmatmul.bf16.gmra.mxu0 %v5293
        %v5496 = vpop.f32.mrf.mxu0
        %v5497 = vadd.f32 %v5408, %v5496
        %v5498 = vpop.f32.mrf.mxu0
        %v5499 = vadd.f32 %v5410, %v5498
        %5500 = vmatmul.bf16.gmra.mxu0 %v5295
        %v5501 = vpop.f32.mrf.mxu0
        %v5502 = vadd.f32 %v5413, %v5501
        %v5503 = vpop.f32.mrf.mxu0
        %v5504 = vadd.f32 %v5415, %v5503
        %5505 = vdwg.mxu0
        %v5506 = vpack.c.bf16 %v5429, %v5427
        %v5507 = vpack.c.bf16 %v5434, %v5432
        %v5508 = vpack.c.bf16 %v5439, %v5437
        %v5509 = vpack.c.bf16 %v5444, %v5442
        %v5510 = vpack.c.bf16 %v5449, %v5447
        %v5511 = vpack.c.bf16 %v5454, %v5452
        %v5512 = vpack.c.bf16 %v5459, %v5457
        %v5513 = vpack.c.bf16 %v5464, %v5462
        %v5514 = vpack.c.bf16 %v5469, %v5467
        %v5515 = vpack.c.bf16 %v5474, %v5472
        %v5516 = vpack.c.bf16 %v5479, %v5477
        %v5517 = vpack.c.bf16 %v5484, %v5482
        %v5518 = vpack.c.bf16 %v5489, %v5487
        %v5519 = vpack.c.bf16 %v5494, %v5492
        %v5520 = vpack.c.bf16 %v5499, %v5497
        %v5521 = vpack.c.bf16 %v5504, %v5502
        %s5522 = scalar_lea.vmem [#allocation10], 512
        %v5523 = vld [vmem:[%s5522] sm:$0xf]
        %v5524 = vld [vmem:[%s5522 + $0x4] sm:$0xf]
        %v5525 = vld [vmem:[%s5522 + $0x8] sm:$0xf]
        %v5526 = vld [vmem:[%s5522 + $0xc] sm:$0xf]
        %v5527 = vld [vmem:[%s5522 + $0x10] sm:$0xf]
        %v5528 = vld [vmem:[%s5522 + $0x14] sm:$0xf]
        %v5529 = vld [vmem:[%s5522 + $0x18] sm:$0xf]
        %v5530 = vld [vmem:[%s5522 + $0x1c] sm:$0xf]
        %v5531 = vld [vmem:[%s5522 + $0x20] sm:$0xf]
        %v5532 = vld [vmem:[%s5522 + $0x24] sm:$0xf]
        %v5533 = vld [vmem:[%s5522 + $0x28] sm:$0xf]
        %v5534 = vld [vmem:[%s5522 + $0x2c] sm:$0xf]
        %v5535 = vld [vmem:[%s5522 + $0x30] sm:$0xf]
        %v5536 = vld [vmem:[%s5522 + $0x34] sm:$0xf]
        %v5537 = vld [vmem:[%s5522 + $0x38] sm:$0xf]
        %v5538 = vld [vmem:[%s5522 + $0x3c] sm:$0xf]
        %v5555 = vunpack.c.l.b16 %v5523
        %v5556 = vunpack.c.l.b16 %v5524
        %v5557 = vunpack.c.l.b16 %v5525
        %v5558 = vunpack.c.l.b16 %v5526
        %v5559 = vunpack.c.l.b16 %v5527
        %v5560 = vunpack.c.l.b16 %v5528
        %v5561 = vunpack.c.l.b16 %v5529
        %v5562 = vunpack.c.l.b16 %v5530
        %v5563 = vunpack.c.l.b16 %v5531
        %v5564 = vunpack.c.l.b16 %v5532
        %v5565 = vunpack.c.l.b16 %v5533
        %v5566 = vunpack.c.l.b16 %v5534
        %v5567 = vunpack.c.l.b16 %v5535
        %v5568 = vunpack.c.l.b16 %v5536
        %v5569 = vunpack.c.l.b16 %v5537
        %v5570 = vunpack.c.l.b16 %v5538
        %v5571 = vpack.c.b16 %v5556, %v5555
        %v5572 = vpack.c.b16 %v5558, %v5557
        %v5573 = vpack.c.b16 %v5560, %v5559
        %v5574 = vpack.c.b16 %v5562, %v5561
        %v5575 = vpack.c.b16 %v5564, %v5563
        %v5576 = vpack.c.b16 %v5566, %v5565
        %v5577 = vpack.c.b16 %v5568, %v5567
        %v5578 = vpack.c.b16 %v5570, %v5569
        %5587 = vmatpush.bf16.msra.mxu0 %v5578
        %5588 = vmatpush.bf16.msra.mxu0 %v5577
        %5589 = vmatpush.bf16.msra.mxu0 %v5576
        %5590 = vmatpush.bf16.msra.mxu0 %v5575
        %5591 = vmatpush.bf16.msra.mxu0 %v5574
        %5592 = vmatpush.bf16.msra.mxu0 %v5573
        %5593 = vmatpush.bf16.msra.mxu0 %v5572
        %5594 = vmatpush.bf16.msra.mxu0 %v5571
        %5595 = vmatmul.bf16.gmra.mxu0 %v5506
        %v5596 = vpop.f32.mrf.mxu0
        %v5597 = vadd.f32 0.0, %v5596
        %v5598 = vpop.f32.mrf.mxu0
        %v5599 = vadd.f32 0.0, %v5598
        %5600 = vmatmul.bf16.gmra.mxu0 %v5507
        %v5601 = vpop.f32.mrf.mxu0
        %v5602 = vadd.f32 0.0, %v5601
        %v5603 = vpop.f32.mrf.mxu0
        %v5604 = vadd.f32 0.0, %v5603
        %5605 = vmatmul.bf16.gmra.mxu0 %v5508
        %v5606 = vpop.f32.mrf.mxu0
        %v5607 = vadd.f32 0.0, %v5606
        %v5608 = vpop.f32.mrf.mxu0
        %v5609 = vadd.f32 0.0, %v5608
        %5610 = vmatmul.bf16.gmra.mxu0 %v5509
        %v5611 = vpop.f32.mrf.mxu0
        %v5612 = vadd.f32 0.0, %v5611
        %v5613 = vpop.f32.mrf.mxu0
        %v5614 = vadd.f32 0.0, %v5613
        %5615 = vmatmul.bf16.gmra.mxu0 %v5510
        %v5616 = vpop.f32.mrf.mxu0
        %v5617 = vadd.f32 0.0, %v5616
        %v5618 = vpop.f32.mrf.mxu0
        %v5619 = vadd.f32 0.0, %v5618
        %5620 = vmatmul.bf16.gmra.mxu0 %v5511
        %v5621 = vpop.f32.mrf.mxu0
        %v5622 = vadd.f32 0.0, %v5621
        %v5623 = vpop.f32.mrf.mxu0
        %v5624 = vadd.f32 0.0, %v5623
        %5625 = vmatmul.bf16.gmra.mxu0 %v5512
        %v5626 = vpop.f32.mrf.mxu0
        %v5627 = vadd.f32 0.0, %v5626
        %v5628 = vpop.f32.mrf.mxu0
        %v5629 = vadd.f32 0.0, %v5628
        %5630 = vmatmul.bf16.gmra.mxu0 %v5513
        %v5631 = vpop.f32.mrf.mxu0
        %v5632 = vadd.f32 0.0, %v5631
        %v5633 = vpop.f32.mrf.mxu0
        %v5634 = vadd.f32 0.0, %v5633
        %5635 = vmatmul.bf16.gmra.mxu0 %v5514
        %v5636 = vpop.f32.mrf.mxu0
        %v5637 = vadd.f32 0.0, %v5636
        %v5638 = vpop.f32.mrf.mxu0
        %v5639 = vadd.f32 0.0, %v5638
        %5640 = vmatmul.bf16.gmra.mxu0 %v5515
        %v5641 = vpop.f32.mrf.mxu0
        %v5642 = vadd.f32 0.0, %v5641
        %v5643 = vpop.f32.mrf.mxu0
        %v5644 = vadd.f32 0.0, %v5643
        %5645 = vmatmul.bf16.gmra.mxu0 %v5516
        %v5646 = vpop.f32.mrf.mxu0
        %v5647 = vadd.f32 0.0, %v5646
        %v5648 = vpop.f32.mrf.mxu0
        %v5649 = vadd.f32 0.0, %v5648
        %5650 = vmatmul.bf16.gmra.mxu0 %v5517
        %v5651 = vpop.f32.mrf.mxu0
        %v5652 = vadd.f32 0.0, %v5651
        %v5653 = vpop.f32.mrf.mxu0
        %v5654 = vadd.f32 0.0, %v5653
        %5655 = vmatmul.bf16.gmra.mxu0 %v5518
        %v5656 = vpop.f32.mrf.mxu0
        %v5657 = vadd.f32 0.0, %v5656
        %v5658 = vpop.f32.mrf.mxu0
        %v5659 = vadd.f32 0.0, %v5658
        %5660 = vmatmul.bf16.gmra.mxu0 %v5519
        %v5661 = vpop.f32.mrf.mxu0
        %v5662 = vadd.f32 0.0, %v5661
        %v5663 = vpop.f32.mrf.mxu0
        %v5664 = vadd.f32 0.0, %v5663
        %5665 = vmatmul.bf16.gmra.mxu0 %v5520
        %v5666 = vpop.f32.mrf.mxu0
        %v5667 = vadd.f32 0.0, %v5666
        %v5668 = vpop.f32.mrf.mxu0
        %v5669 = vadd.f32 0.0, %v5668
        %5670 = vmatmul.bf16.gmra.mxu0 %v5521
        %v5671 = vpop.f32.mrf.mxu0
        %v5672 = vadd.f32 0.0, %v5671
        %v5673 = vpop.f32.mrf.mxu0
        %v5674 = vadd.f32 0.0, %v5673
        %5675 = vdwg.mxu0
        %v5676 = vadd.f32 %v5103, %v5597
        %v5677 = vadd.f32 %v5104, %v5599
        %v5678 = vadd.f32 %v5105, %v5602
        %v5679 = vadd.f32 %v5106, %v5604
        %v5680 = vadd.f32 %v5107, %v5607
        %v5681 = vadd.f32 %v5108, %v5609
        %v5682 = vadd.f32 %v5109, %v5612
        %v5683 = vadd.f32 %v5110, %v5614
        %v5684 = vadd.f32 %v5111, %v5617
        %v5685 = vadd.f32 %v5112, %v5619
        %v5686 = vadd.f32 %v5113, %v5622
        %v5687 = vadd.f32 %v5114, %v5624
        %v5688 = vadd.f32 %v5115, %v5627
        %v5689 = vadd.f32 %v5116, %v5629
        %v5690 = vadd.f32 %v5117, %v5632
        %v5691 = vadd.f32 %v5118, %v5634
        %v5692 = vadd.f32 %v5119, %v5637
        %v5693 = vadd.f32 %v5120, %v5639
        %v5694 = vadd.f32 %v5121, %v5642
        %v5695 = vadd.f32 %v5122, %v5644
        %v5696 = vadd.f32 %v5123, %v5647
        %v5697 = vadd.f32 %v5124, %v5649
        %v5698 = vadd.f32 %v5125, %v5652
        %v5699 = vadd.f32 %v5126, %v5654
        %v5700 = vadd.f32 %v5127, %v5657
        %v5701 = vadd.f32 %v5128, %v5659
        %v5702 = vadd.f32 %v5129, %v5662
        %v5703 = vadd.f32 %v5130, %v5664
        %v5704 = vadd.f32 %v5131, %v5667
        %v5705 = vadd.f32 %v5132, %v5669
        %v5706 = vadd.f32 %v5133, %v5672
        %v5707 = vadd.f32 %v5134, %v5674
        %v5708 = vld [vmem:[#allocation11] sm:$0x1]
        %v5710 = vperm.slane %v5708, 0
        %v5712 = vadd.f32 %v5676, %v5710
        %v5713 = vadd.f32 %v5677, %v5710
        %v5714 = vadd.f32 %v5678, %v5710
        %v5715 = vadd.f32 %v5679, %v5710
        %v5716 = vadd.f32 %v5680, %v5710
        %v5717 = vadd.f32 %v5681, %v5710
        %v5718 = vadd.f32 %v5682, %v5710
        %v5719 = vadd.f32 %v5683, %v5710
        %v5720 = vadd.f32 %v5684, %v5710
        %v5721 = vadd.f32 %v5685, %v5710
        %v5722 = vadd.f32 %v5686, %v5710
        %v5723 = vadd.f32 %v5687, %v5710
        %v5724 = vadd.f32 %v5688, %v5710
        %v5725 = vadd.f32 %v5689, %v5710
        %v5726 = vadd.f32 %v5690, %v5710
        %v5727 = vadd.f32 %v5691, %v5710
        %v5728 = vadd.f32 %v5692, %v5710
        %v5729 = vadd.f32 %v5693, %v5710
        %v5730 = vadd.f32 %v5694, %v5710
        %v5731 = vadd.f32 %v5695, %v5710
        %v5732 = vadd.f32 %v5696, %v5710
        %v5733 = vadd.f32 %v5697, %v5710
        %v5734 = vadd.f32 %v5698, %v5710
        %v5735 = vadd.f32 %v5699, %v5710
        %v5736 = vadd.f32 %v5700, %v5710
        %v5737 = vadd.f32 %v5701, %v5710
        %v5738 = vadd.f32 %v5702, %v5710
        %v5739 = vadd.f32 %v5703, %v5710
        %v5740 = vadd.f32 %v5704, %v5710
        %v5741 = vadd.f32 %v5705, %v5710
        %v5742 = vadd.f32 %v5706, %v5710
        %v5743 = vadd.f32 %v5707, %v5710
        %v5744 = vmax.f32 %v5712, 0.0
        %v5745 = vmax.f32 %v5713, 0.0
        %v5746 = vmax.f32 %v5714, 0.0
        %v5747 = vmax.f32 %v5715, 0.0
        %v5748 = vmax.f32 %v5716, 0.0
        %v5749 = vmax.f32 %v5717, 0.0
        %v5750 = vmax.f32 %v5718, 0.0
        %v5751 = vmax.f32 %v5719, 0.0
        %v5752 = vmax.f32 %v5720, 0.0
        %v5753 = vmax.f32 %v5721, 0.0
        %v5754 = vmax.f32 %v5722, 0.0
        %v5755 = vmax.f32 %v5723, 0.0
        %v5756 = vmax.f32 %v5724, 0.0
        %v5757 = vmax.f32 %v5725, 0.0
        %v5758 = vmax.f32 %v5726, 0.0
        %v5759 = vmax.f32 %v5727, 0.0
        %v5760 = vmax.f32 %v5728, 0.0
        %v5761 = vmax.f32 %v5729, 0.0
        %v5762 = vmax.f32 %v5730, 0.0
        %v5763 = vmax.f32 %v5731, 0.0
        %v5764 = vmax.f32 %v5732, 0.0
        %v5765 = vmax.f32 %v5733, 0.0
        %v5766 = vmax.f32 %v5734, 0.0
        %v5767 = vmax.f32 %v5735, 0.0
        %v5768 = vmax.f32 %v5736, 0.0
        %v5769 = vmax.f32 %v5737, 0.0
        %v5770 = vmax.f32 %v5738, 0.0
        %v5771 = vmax.f32 %v5739, 0.0
        %v5772 = vmax.f32 %v5740, 0.0
        %v5773 = vmax.f32 %v5741, 0.0
        %v5774 = vmax.f32 %v5742, 0.0
        %v5775 = vmax.f32 %v5743, 0.0
        %v5776 = vpack.c.bf16 %v5745, %v5744
        %v5777 = vpack.c.bf16 %v5747, %v5746
        %v5778 = vpack.c.bf16 %v5749, %v5748
        %v5779 = vpack.c.bf16 %v5751, %v5750
        %v5780 = vpack.c.bf16 %v5753, %v5752
        %v5781 = vpack.c.bf16 %v5755, %v5754
        %v5782 = vpack.c.bf16 %v5757, %v5756
        %v5783 = vpack.c.bf16 %v5759, %v5758
        %v5784 = vpack.c.bf16 %v5761, %v5760
        %v5785 = vpack.c.bf16 %v5763, %v5762
        %v5786 = vpack.c.bf16 %v5765, %v5764
        %v5787 = vpack.c.bf16 %v5767, %v5766
        %v5788 = vpack.c.bf16 %v5769, %v5768
        %v5789 = vpack.c.bf16 %v5771, %v5770
        %v5790 = vpack.c.bf16 %v5773, %v5772
        %v5791 = vpack.c.bf16 %v5775, %v5774
        %v5792 = vld [vmem:[#allocation5] sm:$0xff]
        %v5793 = vld [vmem:[#allocation5 + $0x8] sm:$0xff]
        %v5794 = vld [vmem:[#allocation5 + $0x10] sm:$0xff]
        %v5795 = vld [vmem:[#allocation5 + $0x18] sm:$0xff]
        %v5796 = vld [vmem:[#allocation5 + $0x20] sm:$0xff]
        %v5797 = vld [vmem:[#allocation5 + $0x28] sm:$0xff]
        %v5798 = vld [vmem:[#allocation5 + $0x30] sm:$0xff]
        %v5799 = vld [vmem:[#allocation5 + $0x38] sm:$0xff]
        %v5808 = vunpack.c.l.b16 %v5792
        %v5809 = vunpack.c.h.b16 %v5792
        %v5810 = vunpack.c.l.b16 %v5793
        %v5811 = vunpack.c.h.b16 %v5793
        %v5812 = vunpack.c.l.b16 %v5794
        %v5813 = vunpack.c.h.b16 %v5794
        %v5814 = vunpack.c.l.b16 %v5795
        %v5815 = vunpack.c.h.b16 %v5795
        %v5816 = vunpack.c.l.b16 %v5796
        %v5817 = vunpack.c.h.b16 %v5796
        %v5818 = vunpack.c.l.b16 %v5797
        %v5819 = vunpack.c.h.b16 %v5797
        %v5820 = vunpack.c.l.b16 %v5798
        %v5821 = vunpack.c.h.b16 %v5798
        %v5822 = vunpack.c.l.b16 %v5799
        %v5823 = vunpack.c.h.b16 %v5799
        %v5824 = vpack.c.b16 %v5810, %v5808
        %v5825 = vpack.c.b16 %v5811, %v5809
        %v5826 = vpack.c.b16 %v5814, %v5812
        %v5827 = vpack.c.b16 %v5815, %v5813
        %v5828 = vpack.c.b16 %v5818, %v5816
        %v5829 = vpack.c.b16 %v5819, %v5817
        %v5830 = vpack.c.b16 %v5822, %v5820
        %v5831 = vpack.c.b16 %v5823, %v5821
        %5840 = vmatpush.bf16.msra.mxu0 %v5783
        %5841 = vmatpush.bf16.msra.mxu0 %v5782
        %5842 = vmatpush.bf16.msra.mxu0 %v5781
        %5843 = vmatpush.bf16.msra.mxu0 %v5780
        %5844 = vmatpush.bf16.msra.mxu0 %v5779
        %5845 = vmatpush.bf16.msra.mxu0 %v5778
        %5846 = vmatpush.bf16.msra.mxu0 %v5777
        %5847 = vmatpush.bf16.msra.mxu0 %v5776
        %5848 = vmatmul.bf16.gmra.mxu0 %v5824
        %v5849 = vpop.f32.mrf.mxu0
        %v5850 = vadd.f32 0.0, %v5849
        %v5851 = vpop.f32.mrf.mxu0
        %v5852 = vadd.f32 0.0, %v5851
        %5853 = vmatmul.bf16.gmra.mxu0 %v5826
        %v5854 = vpop.f32.mrf.mxu0
        %v5855 = vadd.f32 0.0, %v5854
        %v5856 = vpop.f32.mrf.mxu0
        %v5857 = vadd.f32 0.0, %v5856
        %5858 = vmatmul.bf16.gmra.mxu0 %v5828
        %v5859 = vpop.f32.mrf.mxu0
        %v5860 = vadd.f32 0.0, %v5859
        %v5861 = vpop.f32.mrf.mxu0
        %v5862 = vadd.f32 0.0, %v5861
        %5863 = vmatmul.bf16.gmra.mxu0 %v5830
        %v5864 = vpop.f32.mrf.mxu0
        %v5865 = vadd.f32 0.0, %v5864
        %v5866 = vpop.f32.mrf.mxu0
        %v5867 = vadd.f32 0.0, %v5866
        %5868 = vdwg.mxu0
        %5869 = vmatpush.bf16.msra.mxu0 %v5791
        %5870 = vmatpush.bf16.msra.mxu0 %v5790
        %5871 = vmatpush.bf16.msra.mxu0 %v5789
        %5872 = vmatpush.bf16.msra.mxu0 %v5788
        %5873 = vmatpush.bf16.msra.mxu0 %v5787
        %5874 = vmatpush.bf16.msra.mxu0 %v5786
        %5875 = vmatpush.bf16.msra.mxu0 %v5785
        %5876 = vmatpush.bf16.msra.mxu0 %v5784
        %5877 = vmatmul.bf16.gmra.mxu0 %v5825
        %v5878 = vpop.f32.mrf.mxu0
        %v5879 = vadd.f32 %v5850, %v5878
        %v5880 = vpop.f32.mrf.mxu0
        %v5881 = vadd.f32 %v5852, %v5880
        %5882 = vmatmul.bf16.gmra.mxu0 %v5827
        %v5883 = vpop.f32.mrf.mxu0
        %v5884 = vadd.f32 %v5855, %v5883
        %v5885 = vpop.f32.mrf.mxu0
        %v5886 = vadd.f32 %v5857, %v5885
        %5887 = vmatmul.bf16.gmra.mxu0 %v5829
        %v5888 = vpop.f32.mrf.mxu0
        %v5889 = vadd.f32 %v5860, %v5888
        %v5890 = vpop.f32.mrf.mxu0
        %v5891 = vadd.f32 %v5862, %v5890
        %5892 = vmatmul.bf16.gmra.mxu0 %v5831
        %v5893 = vpop.f32.mrf.mxu0
        %v5894 = vadd.f32 %v5865, %v5893
        %v5895 = vpop.f32.mrf.mxu0
        %v5896 = vadd.f32 %v5867, %v5895
        %5897 = vdwg.mxu0
        %v5898 = vpack.c.bf16 %v5881, %v5879
        %v5899 = vpack.c.bf16 %v5886, %v5884
        %v5900 = vpack.c.bf16 %v5891, %v5889
        %v5901 = vpack.c.bf16 %v5896, %v5894
        %s5902 = scalar_lea.vmem [#allocation10], 576
        %v5903 = vld [vmem:[%s5902] sm:$0xf]
        %v5904 = vld [vmem:[%s5902 + $0x4] sm:$0xf]
        %v5905 = vld [vmem:[%s5902 + $0x8] sm:$0xf]
        %v5906 = vld [vmem:[%s5902 + $0xc] sm:$0xf]
        %v5907 = vld [vmem:[%s5902 + $0x10] sm:$0xf]
        %v5908 = vld [vmem:[%s5902 + $0x14] sm:$0xf]
        %v5909 = vld [vmem:[%s5902 + $0x18] sm:$0xf]
        %v5910 = vld [vmem:[%s5902 + $0x1c] sm:$0xf]
        %v5911 = vld [vmem:[%s5902 + $0x20] sm:$0xf]
        %v5912 = vld [vmem:[%s5902 + $0x24] sm:$0xf]
        %v5913 = vld [vmem:[%s5902 + $0x28] sm:$0xf]
        %v5914 = vld [vmem:[%s5902 + $0x2c] sm:$0xf]
        %v5915 = vld [vmem:[%s5902 + $0x30] sm:$0xf]
        %v5916 = vld [vmem:[%s5902 + $0x34] sm:$0xf]
        %v5917 = vld [vmem:[%s5902 + $0x38] sm:$0xf]
        %v5918 = vld [vmem:[%s5902 + $0x3c] sm:$0xf]
        %s5919 = scalar_lea.vmem [#allocation5], 64
        %v5920 = vld [vmem:[%s5919] sm:$0xff]
        %v5921 = vld [vmem:[%s5919 + $0x8] sm:$0xff]
        %v5922 = vld [vmem:[%s5919 + $0x10] sm:$0xff]
        %v5923 = vld [vmem:[%s5919 + $0x18] sm:$0xff]
        %v5924 = vld [vmem:[%s5919 + $0x20] sm:$0xff]
        %v5925 = vld [vmem:[%s5919 + $0x28] sm:$0xff]
        %v5926 = vld [vmem:[%s5919 + $0x30] sm:$0xff]
        %v5927 = vld [vmem:[%s5919 + $0x38] sm:$0xff]
        %v5936 = vunpack.c.l.b16 %v5920
        %v5937 = vunpack.c.h.b16 %v5920
        %v5938 = vunpack.c.l.b16 %v5921
        %v5939 = vunpack.c.h.b16 %v5921
        %v5940 = vunpack.c.l.b16 %v5922
        %v5941 = vunpack.c.h.b16 %v5922
        %v5942 = vunpack.c.l.b16 %v5923
        %v5943 = vunpack.c.h.b16 %v5923
        %v5944 = vunpack.c.l.b16 %v5924
        %v5945 = vunpack.c.h.b16 %v5924
        %v5946 = vunpack.c.l.b16 %v5925
        %v5947 = vunpack.c.h.b16 %v5925
        %v5948 = vunpack.c.l.b16 %v5926
        %v5949 = vunpack.c.h.b16 %v5926
        %v5950 = vunpack.c.l.b16 %v5927
        %v5951 = vunpack.c.h.b16 %v5927
        %v5952 = vpack.c.b16 %v5938, %v5936
        %v5953 = vpack.c.b16 %v5939, %v5937
        %v5954 = vpack.c.b16 %v5942, %v5940
        %v5955 = vpack.c.b16 %v5943, %v5941
        %v5956 = vpack.c.b16 %v5946, %v5944
        %v5957 = vpack.c.b16 %v5947, %v5945
        %v5958 = vpack.c.b16 %v5950, %v5948
        %v5959 = vpack.c.b16 %v5951, %v5949
        %5968 = vmatpush.bf16.msra.mxu0 %v5783
        %5969 = vmatpush.bf16.msra.mxu0 %v5782
        %5970 = vmatpush.bf16.msra.mxu0 %v5781
        %5971 = vmatpush.bf16.msra.mxu0 %v5780
        %5972 = vmatpush.bf16.msra.mxu0 %v5779
        %5973 = vmatpush.bf16.msra.mxu0 %v5778
        %5974 = vmatpush.bf16.msra.mxu0 %v5777
        %5975 = vmatpush.bf16.msra.mxu0 %v5776
        %5976 = vmatmul.bf16.gmra.mxu0 %v5952
        %v5977 = vpop.f32.mrf.mxu0
        %v5978 = vadd.f32 0.0, %v5977
        %v5979 = vpop.f32.mrf.mxu0
        %v5980 = vadd.f32 0.0, %v5979
        %5981 = vmatmul.bf16.gmra.mxu0 %v5954
        %v5982 = vpop.f32.mrf.mxu0
        %v5983 = vadd.f32 0.0, %v5982
        %v5984 = vpop.f32.mrf.mxu0
        %v5985 = vadd.f32 0.0, %v5984
        %5986 = vmatmul.bf16.gmra.mxu0 %v5956
        %v5987 = vpop.f32.mrf.mxu0
        %v5988 = vadd.f32 0.0, %v5987
        %v5989 = vpop.f32.mrf.mxu0
        %v5990 = vadd.f32 0.0, %v5989
        %5991 = vmatmul.bf16.gmra.mxu0 %v5958
        %v5992 = vpop.f32.mrf.mxu0
        %v5993 = vadd.f32 0.0, %v5992
        %v5994 = vpop.f32.mrf.mxu0
        %v5995 = vadd.f32 0.0, %v5994
        %5996 = vdwg.mxu0
        %5997 = vmatpush.bf16.msra.mxu0 %v5791
        %5998 = vmatpush.bf16.msra.mxu0 %v5790
        %5999 = vmatpush.bf16.msra.mxu0 %v5789
        %6000 = vmatpush.bf16.msra.mxu0 %v5788
        %6001 = vmatpush.bf16.msra.mxu0 %v5787
        %6002 = vmatpush.bf16.msra.mxu0 %v5786
        %6003 = vmatpush.bf16.msra.mxu0 %v5785
        %6004 = vmatpush.bf16.msra.mxu0 %v5784
        %6005 = vmatmul.bf16.gmra.mxu0 %v5953
        %v6006 = vpop.f32.mrf.mxu0
        %v6007 = vadd.f32 %v5978, %v6006
        %v6008 = vpop.f32.mrf.mxu0
        %v6009 = vadd.f32 %v5980, %v6008
        %6010 = vmatmul.bf16.gmra.mxu0 %v5955
        %v6011 = vpop.f32.mrf.mxu0
        %v6012 = vadd.f32 %v5983, %v6011
        %v6013 = vpop.f32.mrf.mxu0
        %v6014 = vadd.f32 %v5985, %v6013
        %6015 = vmatmul.bf16.gmra.mxu0 %v5957
        %v6016 = vpop.f32.mrf.mxu0
        %v6017 = vadd.f32 %v5988, %v6016
        %v6018 = vpop.f32.mrf.mxu0
        %v6019 = vadd.f32 %v5990, %v6018
        %6020 = vmatmul.bf16.gmra.mxu0 %v5959
        %v6021 = vpop.f32.mrf.mxu0
        %v6022 = vadd.f32 %v5993, %v6021
        %v6023 = vpop.f32.mrf.mxu0
        %v6024 = vadd.f32 %v5995, %v6023
        %6025 = vdwg.mxu0
        %v6026 = vpack.c.bf16 %v6009, %v6007
        %v6027 = vpack.c.bf16 %v6014, %v6012
        %v6028 = vpack.c.bf16 %v6019, %v6017
        %v6029 = vpack.c.bf16 %v6024, %v6022
        %s6030 = scalar_lea.vmem [#allocation10], 640
        %v6031 = vld [vmem:[%s6030] sm:$0xf]
        %v6032 = vld [vmem:[%s6030 + $0x4] sm:$0xf]
        %v6033 = vld [vmem:[%s6030 + $0x8] sm:$0xf]
        %v6034 = vld [vmem:[%s6030 + $0xc] sm:$0xf]
        %v6035 = vld [vmem:[%s6030 + $0x10] sm:$0xf]
        %v6036 = vld [vmem:[%s6030 + $0x14] sm:$0xf]
        %v6037 = vld [vmem:[%s6030 + $0x18] sm:$0xf]
        %v6038 = vld [vmem:[%s6030 + $0x1c] sm:$0xf]
        %v6039 = vld [vmem:[%s6030 + $0x20] sm:$0xf]
        %v6040 = vld [vmem:[%s6030 + $0x24] sm:$0xf]
        %v6041 = vld [vmem:[%s6030 + $0x28] sm:$0xf]
        %v6042 = vld [vmem:[%s6030 + $0x2c] sm:$0xf]
        %v6043 = vld [vmem:[%s6030 + $0x30] sm:$0xf]
        %v6044 = vld [vmem:[%s6030 + $0x34] sm:$0xf]
        %v6045 = vld [vmem:[%s6030 + $0x38] sm:$0xf]
        %v6046 = vld [vmem:[%s6030 + $0x3c] sm:$0xf]
        %v6063 = vunpack.c.l.b16 %v6031
        %v6064 = vunpack.c.l.b16 %v6032
        %v6065 = vunpack.c.l.b16 %v6033
        %v6066 = vunpack.c.l.b16 %v6034
        %v6067 = vunpack.c.l.b16 %v6035
        %v6068 = vunpack.c.l.b16 %v6036
        %v6069 = vunpack.c.l.b16 %v6037
        %v6070 = vunpack.c.l.b16 %v6038
        %v6071 = vunpack.c.l.b16 %v6039
        %v6072 = vunpack.c.l.b16 %v6040
        %v6073 = vunpack.c.l.b16 %v6041
        %v6074 = vunpack.c.l.b16 %v6042
        %v6075 = vunpack.c.l.b16 %v6043
        %v6076 = vunpack.c.l.b16 %v6044
        %v6077 = vunpack.c.l.b16 %v6045
        %v6078 = vunpack.c.l.b16 %v6046
        %v6079 = vpack.c.b16 %v6064, %v6063
        %v6080 = vpack.c.b16 %v6066, %v6065
        %v6081 = vpack.c.b16 %v6068, %v6067
        %v6082 = vpack.c.b16 %v6070, %v6069
        %v6083 = vpack.c.b16 %v6072, %v6071
        %v6084 = vpack.c.b16 %v6074, %v6073
        %v6085 = vpack.c.b16 %v6076, %v6075
        %v6086 = vpack.c.b16 %v6078, %v6077
        %6095 = vmatpush.bf16.msra.mxu0 %v6086
        %6096 = vmatpush.bf16.msra.mxu0 %v6085
        %6097 = vmatpush.bf16.msra.mxu0 %v6084
        %6098 = vmatpush.bf16.msra.mxu0 %v6083
        %6099 = vmatpush.bf16.msra.mxu0 %v6082
        %6100 = vmatpush.bf16.msra.mxu0 %v6081
        %6101 = vmatpush.bf16.msra.mxu0 %v6080
        %6102 = vmatpush.bf16.msra.mxu0 %v6079
        %6103 = vmatmul.bf16.gmra.mxu0 %v6026
        %v6104 = vpop.f32.mrf.mxu0
        %v6105 = vadd.f32 0.0, %v6104
        %v6106 = vpop.f32.mrf.mxu0
        %v6107 = vadd.f32 0.0, %v6106
        %6108 = vmatmul.bf16.gmra.mxu0 %v6027
        %v6109 = vpop.f32.mrf.mxu0
        %v6110 = vadd.f32 0.0, %v6109
        %v6111 = vpop.f32.mrf.mxu0
        %v6112 = vadd.f32 0.0, %v6111
        %6113 = vmatmul.bf16.gmra.mxu0 %v6028
        %v6114 = vpop.f32.mrf.mxu0
        %v6115 = vadd.f32 0.0, %v6114
        %v6116 = vpop.f32.mrf.mxu0
        %v6117 = vadd.f32 0.0, %v6116
        %6118 = vmatmul.bf16.gmra.mxu0 %v6029
        %v6119 = vpop.f32.mrf.mxu0
        %v6120 = vadd.f32 0.0, %v6119
        %v6121 = vpop.f32.mrf.mxu0
        %v6122 = vadd.f32 0.0, %v6121
        %6123 = vdwg.mxu0
        %v6140 = vunpack.c.l.b16 %v5903
        %v6141 = vunpack.c.l.b16 %v5904
        %v6142 = vunpack.c.l.b16 %v5905
        %v6143 = vunpack.c.l.b16 %v5906
        %v6144 = vunpack.c.l.b16 %v5907
        %v6145 = vunpack.c.l.b16 %v5908
        %v6146 = vunpack.c.l.b16 %v5909
        %v6147 = vunpack.c.l.b16 %v5910
        %v6148 = vunpack.c.l.b16 %v5911
        %v6149 = vunpack.c.l.b16 %v5912
        %v6150 = vunpack.c.l.b16 %v5913
        %v6151 = vunpack.c.l.b16 %v5914
        %v6152 = vunpack.c.l.b16 %v5915
        %v6153 = vunpack.c.l.b16 %v5916
        %v6154 = vunpack.c.l.b16 %v5917
        %v6155 = vunpack.c.l.b16 %v5918
        %v6156 = vpack.c.b16 %v6141, %v6140
        %v6157 = vpack.c.b16 %v6143, %v6142
        %v6158 = vpack.c.b16 %v6145, %v6144
        %v6159 = vpack.c.b16 %v6147, %v6146
        %v6160 = vpack.c.b16 %v6149, %v6148
        %v6161 = vpack.c.b16 %v6151, %v6150
        %v6162 = vpack.c.b16 %v6153, %v6152
        %v6163 = vpack.c.b16 %v6155, %v6154
        %6172 = vmatpush.bf16.msra.mxu0 %v6163
        %6173 = vmatpush.bf16.msra.mxu0 %v6162
        %6174 = vmatpush.bf16.msra.mxu0 %v6161
        %6175 = vmatpush.bf16.msra.mxu0 %v6160
        %6176 = vmatpush.bf16.msra.mxu0 %v6159
        %6177 = vmatpush.bf16.msra.mxu0 %v6158
        %6178 = vmatpush.bf16.msra.mxu0 %v6157
        %6179 = vmatpush.bf16.msra.mxu0 %v6156
        %6180 = vmatmul.bf16.gmra.mxu0 %v5898
        %v6181 = vpop.f32.mrf.mxu0
        %v6182 = vadd.f32 %v6105, %v6181
        %v6183 = vpop.f32.mrf.mxu0
        %v6184 = vadd.f32 %v6107, %v6183
        %6185 = vmatmul.bf16.gmra.mxu0 %v5899
        %v6186 = vpop.f32.mrf.mxu0
        %v6187 = vadd.f32 %v6110, %v6186
        %v6188 = vpop.f32.mrf.mxu0
        %v6189 = vadd.f32 %v6112, %v6188
        %6190 = vmatmul.bf16.gmra.mxu0 %v5900
        %v6191 = vpop.f32.mrf.mxu0
        %v6192 = vadd.f32 %v6115, %v6191
        %v6193 = vpop.f32.mrf.mxu0
        %v6194 = vadd.f32 %v6117, %v6193
        %6195 = vmatmul.bf16.gmra.mxu0 %v5901
        %v6196 = vpop.f32.mrf.mxu0
        %v6197 = vadd.f32 %v6120, %v6196
        %v6198 = vpop.f32.mrf.mxu0
        %v6199 = vadd.f32 %v6122, %v6198
        %6200 = vdwg.mxu0
        %s6201 = scalar_lea.vmem [#allocation5], 128
        %v6202 = vld [vmem:[%s6201] sm:$0xff]
        %v6203 = vld [vmem:[%s6201 + $0x8] sm:$0xff]
        %v6204 = vld [vmem:[%s6201 + $0x10] sm:$0xff]
        %v6205 = vld [vmem:[%s6201 + $0x18] sm:$0xff]
        %v6206 = vld [vmem:[%s6201 + $0x20] sm:$0xff]
        %v6207 = vld [vmem:[%s6201 + $0x28] sm:$0xff]
        %v6208 = vld [vmem:[%s6201 + $0x30] sm:$0xff]
        %v6209 = vld [vmem:[%s6201 + $0x38] sm:$0xff]
        %v6218 = vunpack.c.l.b16 %v6202
        %v6219 = vunpack.c.h.b16 %v6202
        %v6220 = vunpack.c.l.b16 %v6203
        %v6221 = vunpack.c.h.b16 %v6203
        %v6222 = vunpack.c.l.b16 %v6204
        %v6223 = vunpack.c.h.b16 %v6204
        %v6224 = vunpack.c.l.b16 %v6205
        %v6225 = vunpack.c.h.b16 %v6205
        %v6226 = vunpack.c.l.b16 %v6206
        %v6227 = vunpack.c.h.b16 %v6206
        %v6228 = vunpack.c.l.b16 %v6207
        %v6229 = vunpack.c.h.b16 %v6207
        %v6230 = vunpack.c.l.b16 %v6208
        %v6231 = vunpack.c.h.b16 %v6208
        %v6232 = vunpack.c.l.b16 %v6209
        %v6233 = vunpack.c.h.b16 %v6209
        %v6234 = vpack.c.b16 %v6220, %v6218
        %v6235 = vpack.c.b16 %v6221, %v6219
        %v6236 = vpack.c.b16 %v6224, %v6222
        %v6237 = vpack.c.b16 %v6225, %v6223
        %v6238 = vpack.c.b16 %v6228, %v6226
        %v6239 = vpack.c.b16 %v6229, %v6227
        %v6240 = vpack.c.b16 %v6232, %v6230
        %v6241 = vpack.c.b16 %v6233, %v6231
        %6250 = vmatpush.bf16.msra.mxu0 %v5783
        %6251 = vmatpush.bf16.msra.mxu0 %v5782
        %6252 = vmatpush.bf16.msra.mxu0 %v5781
        %6253 = vmatpush.bf16.msra.mxu0 %v5780
        %6254 = vmatpush.bf16.msra.mxu0 %v5779
        %6255 = vmatpush.bf16.msra.mxu0 %v5778
        %6256 = vmatpush.bf16.msra.mxu0 %v5777
        %6257 = vmatpush.bf16.msra.mxu0 %v5776
        %6258 = vmatmul.bf16.gmra.mxu0 %v6234
        %v6259 = vpop.f32.mrf.mxu0
        %v6260 = vadd.f32 0.0, %v6259
        %v6261 = vpop.f32.mrf.mxu0
        %v6262 = vadd.f32 0.0, %v6261
        %6263 = vmatmul.bf16.gmra.mxu0 %v6236
        %v6264 = vpop.f32.mrf.mxu0
        %v6265 = vadd.f32 0.0, %v6264
        %v6266 = vpop.f32.mrf.mxu0
        %v6267 = vadd.f32 0.0, %v6266
        %6268 = vmatmul.bf16.gmra.mxu0 %v6238
        %v6269 = vpop.f32.mrf.mxu0
        %v6270 = vadd.f32 0.0, %v6269
        %v6271 = vpop.f32.mrf.mxu0
        %v6272 = vadd.f32 0.0, %v6271
        %6273 = vmatmul.bf16.gmra.mxu0 %v6240
        %v6274 = vpop.f32.mrf.mxu0
        %v6275 = vadd.f32 0.0, %v6274
        %v6276 = vpop.f32.mrf.mxu0
        %v6277 = vadd.f32 0.0, %v6276
        %6278 = vdwg.mxu0
        %6279 = vmatpush.bf16.msra.mxu0 %v5791
        %6280 = vmatpush.bf16.msra.mxu0 %v5790
        %6281 = vmatpush.bf16.msra.mxu0 %v5789
        %6282 = vmatpush.bf16.msra.mxu0 %v5788
        %6283 = vmatpush.bf16.msra.mxu0 %v5787
        %6284 = vmatpush.bf16.msra.mxu0 %v5786
        %6285 = vmatpush.bf16.msra.mxu0 %v5785
        %6286 = vmatpush.bf16.msra.mxu0 %v5784
        %6287 = vmatmul.bf16.gmra.mxu0 %v6235
        %v6288 = vpop.f32.mrf.mxu0
        %v6289 = vadd.f32 %v6260, %v6288
        %v6290 = vpop.f32.mrf.mxu0
        %v6291 = vadd.f32 %v6262, %v6290
        %6292 = vmatmul.bf16.gmra.mxu0 %v6237
        %v6293 = vpop.f32.mrf.mxu0
        %v6294 = vadd.f32 %v6265, %v6293
        %v6295 = vpop.f32.mrf.mxu0
        %v6296 = vadd.f32 %v6267, %v6295
        %6297 = vmatmul.bf16.gmra.mxu0 %v6239
        %v6298 = vpop.f32.mrf.mxu0
        %v6299 = vadd.f32 %v6270, %v6298
        %v6300 = vpop.f32.mrf.mxu0
        %v6301 = vadd.f32 %v6272, %v6300
        %6302 = vmatmul.bf16.gmra.mxu0 %v6241
        %v6303 = vpop.f32.mrf.mxu0
        %v6304 = vadd.f32 %v6275, %v6303
        %v6305 = vpop.f32.mrf.mxu0
        %v6306 = vadd.f32 %v6277, %v6305
        %6307 = vdwg.mxu0
        %v6308 = vpack.c.bf16 %v6291, %v6289
        %v6309 = vpack.c.bf16 %v6296, %v6294
        %v6310 = vpack.c.bf16 %v6301, %v6299
        %v6311 = vpack.c.bf16 %v6306, %v6304
        %s6312 = scalar_lea.vmem [#allocation10], 704
        %v6313 = vld [vmem:[%s6312] sm:$0xf]
        %v6314 = vld [vmem:[%s6312 + $0x4] sm:$0xf]
        %v6315 = vld [vmem:[%s6312 + $0x8] sm:$0xf]
        %v6316 = vld [vmem:[%s6312 + $0xc] sm:$0xf]
        %v6317 = vld [vmem:[%s6312 + $0x10] sm:$0xf]
        %v6318 = vld [vmem:[%s6312 + $0x14] sm:$0xf]
        %v6319 = vld [vmem:[%s6312 + $0x18] sm:$0xf]
        %v6320 = vld [vmem:[%s6312 + $0x1c] sm:$0xf]
        %v6321 = vld [vmem:[%s6312 + $0x20] sm:$0xf]
        %v6322 = vld [vmem:[%s6312 + $0x24] sm:$0xf]
        %v6323 = vld [vmem:[%s6312 + $0x28] sm:$0xf]
        %v6324 = vld [vmem:[%s6312 + $0x2c] sm:$0xf]
        %v6325 = vld [vmem:[%s6312 + $0x30] sm:$0xf]
        %v6326 = vld [vmem:[%s6312 + $0x34] sm:$0xf]
        %v6327 = vld [vmem:[%s6312 + $0x38] sm:$0xf]
        %v6328 = vld [vmem:[%s6312 + $0x3c] sm:$0xf]
        %v6345 = vunpack.c.l.b16 %v6313
        %v6346 = vunpack.c.l.b16 %v6314
        %v6347 = vunpack.c.l.b16 %v6315
        %v6348 = vunpack.c.l.b16 %v6316
        %v6349 = vunpack.c.l.b16 %v6317
        %v6350 = vunpack.c.l.b16 %v6318
        %v6351 = vunpack.c.l.b16 %v6319
        %v6352 = vunpack.c.l.b16 %v6320
        %v6353 = vunpack.c.l.b16 %v6321
        %v6354 = vunpack.c.l.b16 %v6322
        %v6355 = vunpack.c.l.b16 %v6323
        %v6356 = vunpack.c.l.b16 %v6324
        %v6357 = vunpack.c.l.b16 %v6325
        %v6358 = vunpack.c.l.b16 %v6326
        %v6359 = vunpack.c.l.b16 %v6327
        %v6360 = vunpack.c.l.b16 %v6328
        %v6361 = vpack.c.b16 %v6346, %v6345
        %v6362 = vpack.c.b16 %v6348, %v6347
        %v6363 = vpack.c.b16 %v6350, %v6349
        %v6364 = vpack.c.b16 %v6352, %v6351
        %v6365 = vpack.c.b16 %v6354, %v6353
        %v6366 = vpack.c.b16 %v6356, %v6355
        %v6367 = vpack.c.b16 %v6358, %v6357
        %v6368 = vpack.c.b16 %v6360, %v6359
        %6377 = vmatpush.bf16.msra.mxu0 %v6368
        %6378 = vmatpush.bf16.msra.mxu0 %v6367
        %6379 = vmatpush.bf16.msra.mxu0 %v6366
        %6380 = vmatpush.bf16.msra.mxu0 %v6365
        %6381 = vmatpush.bf16.msra.mxu0 %v6364
        %6382 = vmatpush.bf16.msra.mxu0 %v6363
        %6383 = vmatpush.bf16.msra.mxu0 %v6362
        %6384 = vmatpush.bf16.msra.mxu0 %v6361
        %6385 = vmatmul.bf16.gmra.mxu0 %v6308
        %v6386 = vpop.f32.mrf.mxu0
        %v6387 = vadd.f32 0.0, %v6386
        %v6388 = vpop.f32.mrf.mxu0
        %v6389 = vadd.f32 0.0, %v6388
        %6390 = vmatmul.bf16.gmra.mxu0 %v6309
        %v6391 = vpop.f32.mrf.mxu0
        %v6392 = vadd.f32 0.0, %v6391
        %v6393 = vpop.f32.mrf.mxu0
        %v6394 = vadd.f32 0.0, %v6393
        %6395 = vmatmul.bf16.gmra.mxu0 %v6310
        %v6396 = vpop.f32.mrf.mxu0
        %v6397 = vadd.f32 0.0, %v6396
        %v6398 = vpop.f32.mrf.mxu0
        %v6399 = vadd.f32 0.0, %v6398
        %6400 = vmatmul.bf16.gmra.mxu0 %v6311
        %v6401 = vpop.f32.mrf.mxu0
        %v6402 = vadd.f32 0.0, %v6401
        %v6403 = vpop.f32.mrf.mxu0
        %v6404 = vadd.f32 0.0, %v6403
        %6405 = vdwg.mxu0
        %v6406 = vadd.f32 %v6182, %v6387
        %v6407 = vadd.f32 %v6184, %v6389
        %v6408 = vadd.f32 %v6187, %v6392
        %v6409 = vadd.f32 %v6189, %v6394
        %v6410 = vadd.f32 %v6192, %v6397
        %v6411 = vadd.f32 %v6194, %v6399
        %v6412 = vadd.f32 %v6197, %v6402
        %v6413 = vadd.f32 %v6199, %v6404
        %s6414 = scalar_lea.vmem [#allocation5], 192
        %v6415 = vld [vmem:[%s6414] sm:$0xff]
        %v6416 = vld [vmem:[%s6414 + $0x8] sm:$0xff]
        %v6417 = vld [vmem:[%s6414 + $0x10] sm:$0xff]
        %v6418 = vld [vmem:[%s6414 + $0x18] sm:$0xff]
        %v6419 = vld [vmem:[%s6414 + $0x20] sm:$0xff]
        %v6420 = vld [vmem:[%s6414 + $0x28] sm:$0xff]
        %v6421 = vld [vmem:[%s6414 + $0x30] sm:$0xff]
        %v6422 = vld [vmem:[%s6414 + $0x38] sm:$0xff]
        %v6431 = vunpack.c.l.b16 %v6415
        %v6432 = vunpack.c.h.b16 %v6415
        %v6433 = vunpack.c.l.b16 %v6416
        %v6434 = vunpack.c.h.b16 %v6416
        %v6435 = vunpack.c.l.b16 %v6417
        %v6436 = vunpack.c.h.b16 %v6417
        %v6437 = vunpack.c.l.b16 %v6418
        %v6438 = vunpack.c.h.b16 %v6418
        %v6439 = vunpack.c.l.b16 %v6419
        %v6440 = vunpack.c.h.b16 %v6419
        %v6441 = vunpack.c.l.b16 %v6420
        %v6442 = vunpack.c.h.b16 %v6420
        %v6443 = vunpack.c.l.b16 %v6421
        %v6444 = vunpack.c.h.b16 %v6421
        %v6445 = vunpack.c.l.b16 %v6422
        %v6446 = vunpack.c.h.b16 %v6422
        %v6447 = vpack.c.b16 %v6433, %v6431
        %v6448 = vpack.c.b16 %v6434, %v6432
        %v6449 = vpack.c.b16 %v6437, %v6435
        %v6450 = vpack.c.b16 %v6438, %v6436
        %v6451 = vpack.c.b16 %v6441, %v6439
        %v6452 = vpack.c.b16 %v6442, %v6440
        %v6453 = vpack.c.b16 %v6445, %v6443
        %v6454 = vpack.c.b16 %v6446, %v6444
        %6463 = vmatpush.bf16.msra.mxu0 %v5783
        %6464 = vmatpush.bf16.msra.mxu0 %v5782
        %6465 = vmatpush.bf16.msra.mxu0 %v5781
        %6466 = vmatpush.bf16.msra.mxu0 %v5780
        %6467 = vmatpush.bf16.msra.mxu0 %v5779
        %6468 = vmatpush.bf16.msra.mxu0 %v5778
        %6469 = vmatpush.bf16.msra.mxu0 %v5777
        %6470 = vmatpush.bf16.msra.mxu0 %v5776
        %6471 = vmatmul.bf16.gmra.mxu0 %v6447
        %v6472 = vpop.f32.mrf.mxu0
        %v6473 = vadd.f32 0.0, %v6472
        %v6474 = vpop.f32.mrf.mxu0
        %v6475 = vadd.f32 0.0, %v6474
        %6476 = vmatmul.bf16.gmra.mxu0 %v6449
        %v6477 = vpop.f32.mrf.mxu0
        %v6478 = vadd.f32 0.0, %v6477
        %v6479 = vpop.f32.mrf.mxu0
        %v6480 = vadd.f32 0.0, %v6479
        %6481 = vmatmul.bf16.gmra.mxu0 %v6451
        %v6482 = vpop.f32.mrf.mxu0
        %v6483 = vadd.f32 0.0, %v6482
        %v6484 = vpop.f32.mrf.mxu0
        %v6485 = vadd.f32 0.0, %v6484
        %6486 = vmatmul.bf16.gmra.mxu0 %v6453
        %v6487 = vpop.f32.mrf.mxu0
        %v6488 = vadd.f32 0.0, %v6487
        %v6489 = vpop.f32.mrf.mxu0
        %v6490 = vadd.f32 0.0, %v6489
        %6491 = vdwg.mxu0
        %6492 = vmatpush.bf16.msra.mxu0 %v5791
        %6493 = vmatpush.bf16.msra.mxu0 %v5790
        %6494 = vmatpush.bf16.msra.mxu0 %v5789
        %6495 = vmatpush.bf16.msra.mxu0 %v5788
        %6496 = vmatpush.bf16.msra.mxu0 %v5787
        %6497 = vmatpush.bf16.msra.mxu0 %v5786
        %6498 = vmatpush.bf16.msra.mxu0 %v5785
        %6499 = vmatpush.bf16.msra.mxu0 %v5784
        %6500 = vmatmul.bf16.gmra.mxu0 %v6448
        %v6501 = vpop.f32.mrf.mxu0
        %v6502 = vadd.f32 %v6473, %v6501
        %v6503 = vpop.f32.mrf.mxu0
        %v6504 = vadd.f32 %v6475, %v6503
        %6505 = vmatmul.bf16.gmra.mxu0 %v6450
        %v6506 = vpop.f32.mrf.mxu0
        %v6507 = vadd.f32 %v6478, %v6506
        %v6508 = vpop.f32.mrf.mxu0
        %v6509 = vadd.f32 %v6480, %v6508
        %6510 = vmatmul.bf16.gmra.mxu0 %v6452
        %v6511 = vpop.f32.mrf.mxu0
        %v6512 = vadd.f32 %v6483, %v6511
        %v6513 = vpop.f32.mrf.mxu0
        %v6514 = vadd.f32 %v6485, %v6513
        %6515 = vmatmul.bf16.gmra.mxu0 %v6454
        %v6516 = vpop.f32.mrf.mxu0
        %v6517 = vadd.f32 %v6488, %v6516
        %v6518 = vpop.f32.mrf.mxu0
        %v6519 = vadd.f32 %v6490, %v6518
        %6520 = vdwg.mxu0
        %v6521 = vpack.c.bf16 %v6504, %v6502
        %v6522 = vpack.c.bf16 %v6509, %v6507
        %v6523 = vpack.c.bf16 %v6514, %v6512
        %v6524 = vpack.c.bf16 %v6519, %v6517
        %s6525 = scalar_lea.vmem [#allocation10], 768
        %v6526 = vld [vmem:[%s6525] sm:$0xf]
        %v6527 = vld [vmem:[%s6525 + $0x4] sm:$0xf]
        %v6528 = vld [vmem:[%s6525 + $0x8] sm:$0xf]
        %v6529 = vld [vmem:[%s6525 + $0xc] sm:$0xf]
        %v6530 = vld [vmem:[%s6525 + $0x10] sm:$0xf]
        %v6531 = vld [vmem:[%s6525 + $0x14] sm:$0xf]
        %v6532 = vld [vmem:[%s6525 + $0x18] sm:$0xf]
        %v6533 = vld [vmem:[%s6525 + $0x1c] sm:$0xf]
        %v6534 = vld [vmem:[%s6525 + $0x20] sm:$0xf]
        %v6535 = vld [vmem:[%s6525 + $0x24] sm:$0xf]
        %v6536 = vld [vmem:[%s6525 + $0x28] sm:$0xf]
        %v6537 = vld [vmem:[%s6525 + $0x2c] sm:$0xf]
        %v6538 = vld [vmem:[%s6525 + $0x30] sm:$0xf]
        %v6539 = vld [vmem:[%s6525 + $0x34] sm:$0xf]
        %v6540 = vld [vmem:[%s6525 + $0x38] sm:$0xf]
        %v6541 = vld [vmem:[%s6525 + $0x3c] sm:$0xf]
        %v6558 = vunpack.c.l.b16 %v6526
        %v6559 = vunpack.c.l.b16 %v6527
        %v6560 = vunpack.c.l.b16 %v6528
        %v6561 = vunpack.c.l.b16 %v6529
        %v6562 = vunpack.c.l.b16 %v6530
        %v6563 = vunpack.c.l.b16 %v6531
        %v6564 = vunpack.c.l.b16 %v6532
        %v6565 = vunpack.c.l.b16 %v6533
        %v6566 = vunpack.c.l.b16 %v6534
        %v6567 = vunpack.c.l.b16 %v6535
        %v6568 = vunpack.c.l.b16 %v6536
        %v6569 = vunpack.c.l.b16 %v6537
        %v6570 = vunpack.c.l.b16 %v6538
        %v6571 = vunpack.c.l.b16 %v6539
        %v6572 = vunpack.c.l.b16 %v6540
        %v6573 = vunpack.c.l.b16 %v6541
        %v6574 = vpack.c.b16 %v6559, %v6558
        %v6575 = vpack.c.b16 %v6561, %v6560
        %v6576 = vpack.c.b16 %v6563, %v6562
        %v6577 = vpack.c.b16 %v6565, %v6564
        %v6578 = vpack.c.b16 %v6567, %v6566
        %v6579 = vpack.c.b16 %v6569, %v6568
        %v6580 = vpack.c.b16 %v6571, %v6570
        %v6581 = vpack.c.b16 %v6573, %v6572
        %6590 = vmatpush.bf16.msra.mxu0 %v6581
        %6591 = vmatpush.bf16.msra.mxu0 %v6580
        %6592 = vmatpush.bf16.msra.mxu0 %v6579
        %6593 = vmatpush.bf16.msra.mxu0 %v6578
        %6594 = vmatpush.bf16.msra.mxu0 %v6577
        %6595 = vmatpush.bf16.msra.mxu0 %v6576
        %6596 = vmatpush.bf16.msra.mxu0 %v6575
        %6597 = vmatpush.bf16.msra.mxu0 %v6574
        %6598 = vmatmul.bf16.gmra.mxu0 %v6521
        %v6599 = vpop.f32.mrf.mxu0
        %v6600 = vadd.f32 0.0, %v6599
        %v6601 = vpop.f32.mrf.mxu0
        %v6602 = vadd.f32 0.0, %v6601
        %6603 = vmatmul.bf16.gmra.mxu0 %v6522
        %v6604 = vpop.f32.mrf.mxu0
        %v6605 = vadd.f32 0.0, %v6604
        %v6606 = vpop.f32.mrf.mxu0
        %v6607 = vadd.f32 0.0, %v6606
        %6608 = vmatmul.bf16.gmra.mxu0 %v6523
        %v6609 = vpop.f32.mrf.mxu0
        %v6610 = vadd.f32 0.0, %v6609
        %v6611 = vpop.f32.mrf.mxu0
        %v6612 = vadd.f32 0.0, %v6611
        %6613 = vmatmul.bf16.gmra.mxu0 %v6524
        %v6614 = vpop.f32.mrf.mxu0
        %v6615 = vadd.f32 0.0, %v6614
        %v6616 = vpop.f32.mrf.mxu0
        %v6617 = vadd.f32 0.0, %v6616
        %6618 = vdwg.mxu0
        %v6619 = vadd.f32 %v6406, %v6600
        %v6620 = vadd.f32 %v6407, %v6602
        %v6621 = vadd.f32 %v6408, %v6605
        %v6622 = vadd.f32 %v6409, %v6607
        %v6623 = vadd.f32 %v6410, %v6610
        %v6624 = vadd.f32 %v6411, %v6612
        %v6625 = vadd.f32 %v6412, %v6615
        %v6626 = vadd.f32 %v6413, %v6617
        %s6627 = scalar_lea.vmem [#allocation5], 256
        %v6628 = vld [vmem:[%s6627] sm:$0xff]
        %v6629 = vld [vmem:[%s6627 + $0x8] sm:$0xff]
        %v6630 = vld [vmem:[%s6627 + $0x10] sm:$0xff]
        %v6631 = vld [vmem:[%s6627 + $0x18] sm:$0xff]
        %v6632 = vld [vmem:[%s6627 + $0x20] sm:$0xff]
        %v6633 = vld [vmem:[%s6627 + $0x28] sm:$0xff]
        %v6634 = vld [vmem:[%s6627 + $0x30] sm:$0xff]
        %v6635 = vld [vmem:[%s6627 + $0x38] sm:$0xff]
        %v6644 = vunpack.c.l.b16 %v6628
        %v6645 = vunpack.c.h.b16 %v6628
        %v6646 = vunpack.c.l.b16 %v6629
        %v6647 = vunpack.c.h.b16 %v6629
        %v6648 = vunpack.c.l.b16 %v6630
        %v6649 = vunpack.c.h.b16 %v6630
        %v6650 = vunpack.c.l.b16 %v6631
        %v6651 = vunpack.c.h.b16 %v6631
        %v6652 = vunpack.c.l.b16 %v6632
        %v6653 = vunpack.c.h.b16 %v6632
        %v6654 = vunpack.c.l.b16 %v6633
        %v6655 = vunpack.c.h.b16 %v6633
        %v6656 = vunpack.c.l.b16 %v6634
        %v6657 = vunpack.c.h.b16 %v6634
        %v6658 = vunpack.c.l.b16 %v6635
        %v6659 = vunpack.c.h.b16 %v6635
        %v6660 = vpack.c.b16 %v6646, %v6644
        %v6661 = vpack.c.b16 %v6647, %v6645
        %v6662 = vpack.c.b16 %v6650, %v6648
        %v6663 = vpack.c.b16 %v6651, %v6649
        %v6664 = vpack.c.b16 %v6654, %v6652
        %v6665 = vpack.c.b16 %v6655, %v6653
        %v6666 = vpack.c.b16 %v6658, %v6656
        %v6667 = vpack.c.b16 %v6659, %v6657
        %6676 = vmatpush.bf16.msra.mxu0 %v5783
        %6677 = vmatpush.bf16.msra.mxu0 %v5782
        %6678 = vmatpush.bf16.msra.mxu0 %v5781
        %6679 = vmatpush.bf16.msra.mxu0 %v5780
        %6680 = vmatpush.bf16.msra.mxu0 %v5779
        %6681 = vmatpush.bf16.msra.mxu0 %v5778
        %6682 = vmatpush.bf16.msra.mxu0 %v5777
        %6683 = vmatpush.bf16.msra.mxu0 %v5776
        %6684 = vmatmul.bf16.gmra.mxu0 %v6660
        %v6685 = vpop.f32.mrf.mxu0
        %v6686 = vadd.f32 0.0, %v6685
        %v6687 = vpop.f32.mrf.mxu0
        %v6688 = vadd.f32 0.0, %v6687
        %6689 = vmatmul.bf16.gmra.mxu0 %v6662
        %v6690 = vpop.f32.mrf.mxu0
        %v6691 = vadd.f32 0.0, %v6690
        %v6692 = vpop.f32.mrf.mxu0
        %v6693 = vadd.f32 0.0, %v6692
        %6694 = vmatmul.bf16.gmra.mxu0 %v6664
        %v6695 = vpop.f32.mrf.mxu0
        %v6696 = vadd.f32 0.0, %v6695
        %v6697 = vpop.f32.mrf.mxu0
        %v6698 = vadd.f32 0.0, %v6697
        %6699 = vmatmul.bf16.gmra.mxu0 %v6666
        %v6700 = vpop.f32.mrf.mxu0
        %v6701 = vadd.f32 0.0, %v6700
        %v6702 = vpop.f32.mrf.mxu0
        %v6703 = vadd.f32 0.0, %v6702
        %6704 = vdwg.mxu0
        %6705 = vmatpush.bf16.msra.mxu0 %v5791
        %6706 = vmatpush.bf16.msra.mxu0 %v5790
        %6707 = vmatpush.bf16.msra.mxu0 %v5789
        %6708 = vmatpush.bf16.msra.mxu0 %v5788
        %6709 = vmatpush.bf16.msra.mxu0 %v5787
        %6710 = vmatpush.bf16.msra.mxu0 %v5786
        %6711 = vmatpush.bf16.msra.mxu0 %v5785
        %6712 = vmatpush.bf16.msra.mxu0 %v5784
        %6713 = vmatmul.bf16.gmra.mxu0 %v6661
        %v6714 = vpop.f32.mrf.mxu0
        %v6715 = vadd.f32 %v6686, %v6714
        %v6716 = vpop.f32.mrf.mxu0
        %v6717 = vadd.f32 %v6688, %v6716
        %6718 = vmatmul.bf16.gmra.mxu0 %v6663
        %v6719 = vpop.f32.mrf.mxu0
        %v6720 = vadd.f32 %v6691, %v6719
        %v6721 = vpop.f32.mrf.mxu0
        %v6722 = vadd.f32 %v6693, %v6721
        %6723 = vmatmul.bf16.gmra.mxu0 %v6665
        %v6724 = vpop.f32.mrf.mxu0
        %v6725 = vadd.f32 %v6696, %v6724
        %v6726 = vpop.f32.mrf.mxu0
        %v6727 = vadd.f32 %v6698, %v6726
        %6728 = vmatmul.bf16.gmra.mxu0 %v6667
        %v6729 = vpop.f32.mrf.mxu0
        %v6730 = vadd.f32 %v6701, %v6729
        %v6731 = vpop.f32.mrf.mxu0
        %v6732 = vadd.f32 %v6703, %v6731
        %6733 = vdwg.mxu0
        %v6734 = vpack.c.bf16 %v6717, %v6715
        %v6735 = vpack.c.bf16 %v6722, %v6720
        %v6736 = vpack.c.bf16 %v6727, %v6725
        %v6737 = vpack.c.bf16 %v6732, %v6730
        %s6738 = scalar_lea.vmem [#allocation10], 832
        %v6739 = vld [vmem:[%s6738] sm:$0xf]
        %v6740 = vld [vmem:[%s6738 + $0x4] sm:$0xf]
        %v6741 = vld [vmem:[%s6738 + $0x8] sm:$0xf]
        %v6742 = vld [vmem:[%s6738 + $0xc] sm:$0xf]
        %v6743 = vld [vmem:[%s6738 + $0x10] sm:$0xf]
        %v6744 = vld [vmem:[%s6738 + $0x14] sm:$0xf]
        %v6745 = vld [vmem:[%s6738 + $0x18] sm:$0xf]
        %v6746 = vld [vmem:[%s6738 + $0x1c] sm:$0xf]
        %v6747 = vld [vmem:[%s6738 + $0x20] sm:$0xf]
        %v6748 = vld [vmem:[%s6738 + $0x24] sm:$0xf]
        %v6749 = vld [vmem:[%s6738 + $0x28] sm:$0xf]
        %v6750 = vld [vmem:[%s6738 + $0x2c] sm:$0xf]
        %v6751 = vld [vmem:[%s6738 + $0x30] sm:$0xf]
        %v6752 = vld [vmem:[%s6738 + $0x34] sm:$0xf]
        %v6753 = vld [vmem:[%s6738 + $0x38] sm:$0xf]
        %v6754 = vld [vmem:[%s6738 + $0x3c] sm:$0xf]
        %v6771 = vunpack.c.l.b16 %v6739
        %v6772 = vunpack.c.l.b16 %v6740
        %v6773 = vunpack.c.l.b16 %v6741
        %v6774 = vunpack.c.l.b16 %v6742
        %v6775 = vunpack.c.l.b16 %v6743
        %v6776 = vunpack.c.l.b16 %v6744
        %v6777 = vunpack.c.l.b16 %v6745
        %v6778 = vunpack.c.l.b16 %v6746
        %v6779 = vunpack.c.l.b16 %v6747
        %v6780 = vunpack.c.l.b16 %v6748
        %v6781 = vunpack.c.l.b16 %v6749
        %v6782 = vunpack.c.l.b16 %v6750
        %v6783 = vunpack.c.l.b16 %v6751
        %v6784 = vunpack.c.l.b16 %v6752
        %v6785 = vunpack.c.l.b16 %v6753
        %v6786 = vunpack.c.l.b16 %v6754
        %v6787 = vpack.c.b16 %v6772, %v6771
        %v6788 = vpack.c.b16 %v6774, %v6773
        %v6789 = vpack.c.b16 %v6776, %v6775
        %v6790 = vpack.c.b16 %v6778, %v6777
        %v6791 = vpack.c.b16 %v6780, %v6779
        %v6792 = vpack.c.b16 %v6782, %v6781
        %v6793 = vpack.c.b16 %v6784, %v6783
        %v6794 = vpack.c.b16 %v6786, %v6785
        %6803 = vmatpush.bf16.msra.mxu0 %v6794
        %6804 = vmatpush.bf16.msra.mxu0 %v6793
        %6805 = vmatpush.bf16.msra.mxu0 %v6792
        %6806 = vmatpush.bf16.msra.mxu0 %v6791
        %6807 = vmatpush.bf16.msra.mxu0 %v6790
        %6808 = vmatpush.bf16.msra.mxu0 %v6789
        %6809 = vmatpush.bf16.msra.mxu0 %v6788
        %6810 = vmatpush.bf16.msra.mxu0 %v6787
        %6811 = vmatmul.bf16.gmra.mxu0 %v6734
        %v6812 = vpop.f32.mrf.mxu0
        %v6813 = vadd.f32 0.0, %v6812
        %v6814 = vpop.f32.mrf.mxu0
        %v6815 = vadd.f32 0.0, %v6814
        %6816 = vmatmul.bf16.gmra.mxu0 %v6735
        %v6817 = vpop.f32.mrf.mxu0
        %v6818 = vadd.f32 0.0, %v6817
        %v6819 = vpop.f32.mrf.mxu0
        %v6820 = vadd.f32 0.0, %v6819
        %6821 = vmatmul.bf16.gmra.mxu0 %v6736
        %v6822 = vpop.f32.mrf.mxu0
        %v6823 = vadd.f32 0.0, %v6822
        %v6824 = vpop.f32.mrf.mxu0
        %v6825 = vadd.f32 0.0, %v6824
        %6826 = vmatmul.bf16.gmra.mxu0 %v6737
        %v6827 = vpop.f32.mrf.mxu0
        %v6828 = vadd.f32 0.0, %v6827
        %v6829 = vpop.f32.mrf.mxu0
        %v6830 = vadd.f32 0.0, %v6829
        %6831 = vdwg.mxu0
        %v6832 = vadd.f32 %v6619, %v6813
        %v6833 = vadd.f32 %v6620, %v6815
        %v6834 = vadd.f32 %v6621, %v6818
        %v6835 = vadd.f32 %v6622, %v6820
        %v6836 = vadd.f32 %v6623, %v6823
        %v6837 = vadd.f32 %v6624, %v6825
        %v6838 = vadd.f32 %v6625, %v6828
        %v6839 = vadd.f32 %v6626, %v6830
        %s6840 = scalar_lea.vmem [#allocation5], 320
        %v6841 = vld [vmem:[%s6840] sm:$0xff]
        %v6842 = vld [vmem:[%s6840 + $0x8] sm:$0xff]
        %v6843 = vld [vmem:[%s6840 + $0x10] sm:$0xff]
        %v6844 = vld [vmem:[%s6840 + $0x18] sm:$0xff]
        %v6845 = vld [vmem:[%s6840 + $0x20] sm:$0xff]
        %v6846 = vld [vmem:[%s6840 + $0x28] sm:$0xff]
        %v6847 = vld [vmem:[%s6840 + $0x30] sm:$0xff]
        %v6848 = vld [vmem:[%s6840 + $0x38] sm:$0xff]
        %v6857 = vunpack.c.l.b16 %v6841
        %v6858 = vunpack.c.h.b16 %v6841
        %v6859 = vunpack.c.l.b16 %v6842
        %v6860 = vunpack.c.h.b16 %v6842
        %v6861 = vunpack.c.l.b16 %v6843
        %v6862 = vunpack.c.h.b16 %v6843
        %v6863 = vunpack.c.l.b16 %v6844
        %v6864 = vunpack.c.h.b16 %v6844
        %v6865 = vunpack.c.l.b16 %v6845
        %v6866 = vunpack.c.h.b16 %v6845
        %v6867 = vunpack.c.l.b16 %v6846
        %v6868 = vunpack.c.h.b16 %v6846
        %v6869 = vunpack.c.l.b16 %v6847
        %v6870 = vunpack.c.h.b16 %v6847
        %v6871 = vunpack.c.l.b16 %v6848
        %v6872 = vunpack.c.h.b16 %v6848
        %v6873 = vpack.c.b16 %v6859, %v6857
        %v6874 = vpack.c.b16 %v6860, %v6858
        %v6875 = vpack.c.b16 %v6863, %v6861
        %v6876 = vpack.c.b16 %v6864, %v6862
        %v6877 = vpack.c.b16 %v6867, %v6865
        %v6878 = vpack.c.b16 %v6868, %v6866
        %v6879 = vpack.c.b16 %v6871, %v6869
        %v6880 = vpack.c.b16 %v6872, %v6870
        %6889 = vmatpush.bf16.msra.mxu0 %v5783
        %6890 = vmatpush.bf16.msra.mxu0 %v5782
        %6891 = vmatpush.bf16.msra.mxu0 %v5781
        %6892 = vmatpush.bf16.msra.mxu0 %v5780
        %6893 = vmatpush.bf16.msra.mxu0 %v5779
        %6894 = vmatpush.bf16.msra.mxu0 %v5778
        %6895 = vmatpush.bf16.msra.mxu0 %v5777
        %6896 = vmatpush.bf16.msra.mxu0 %v5776
        %6897 = vmatmul.bf16.gmra.mxu0 %v6873
        %v6898 = vpop.f32.mrf.mxu0
        %v6899 = vadd.f32 0.0, %v6898
        %v6900 = vpop.f32.mrf.mxu0
        %v6901 = vadd.f32 0.0, %v6900
        %6902 = vmatmul.bf16.gmra.mxu0 %v6875
        %v6903 = vpop.f32.mrf.mxu0
        %v6904 = vadd.f32 0.0, %v6903
        %v6905 = vpop.f32.mrf.mxu0
        %v6906 = vadd.f32 0.0, %v6905
        %6907 = vmatmul.bf16.gmra.mxu0 %v6877
        %v6908 = vpop.f32.mrf.mxu0
        %v6909 = vadd.f32 0.0, %v6908
        %v6910 = vpop.f32.mrf.mxu0
        %v6911 = vadd.f32 0.0, %v6910
        %6912 = vmatmul.bf16.gmra.mxu0 %v6879
        %v6913 = vpop.f32.mrf.mxu0
        %v6914 = vadd.f32 0.0, %v6913
        %v6915 = vpop.f32.mrf.mxu0
        %v6916 = vadd.f32 0.0, %v6915
        %6917 = vdwg.mxu0
        %6918 = vmatpush.bf16.msra.mxu0 %v5791
        %6919 = vmatpush.bf16.msra.mxu0 %v5790
        %6920 = vmatpush.bf16.msra.mxu0 %v5789
        %6921 = vmatpush.bf16.msra.mxu0 %v5788
        %6922 = vmatpush.bf16.msra.mxu0 %v5787
        %6923 = vmatpush.bf16.msra.mxu0 %v5786
        %6924 = vmatpush.bf16.msra.mxu0 %v5785
        %6925 = vmatpush.bf16.msra.mxu0 %v5784
        %6926 = vmatmul.bf16.gmra.mxu0 %v6874
        %v6927 = vpop.f32.mrf.mxu0
        %v6928 = vadd.f32 %v6899, %v6927
        %v6929 = vpop.f32.mrf.mxu0
        %v6930 = vadd.f32 %v6901, %v6929
        %6931 = vmatmul.bf16.gmra.mxu0 %v6876
        %v6932 = vpop.f32.mrf.mxu0
        %v6933 = vadd.f32 %v6904, %v6932
        %v6934 = vpop.f32.mrf.mxu0
        %v6935 = vadd.f32 %v6906, %v6934
        %6936 = vmatmul.bf16.gmra.mxu0 %v6878
        %v6937 = vpop.f32.mrf.mxu0
        %v6938 = vadd.f32 %v6909, %v6937
        %v6939 = vpop.f32.mrf.mxu0
        %v6940 = vadd.f32 %v6911, %v6939
        %6941 = vmatmul.bf16.gmra.mxu0 %v6880
        %v6942 = vpop.f32.mrf.mxu0
        %v6943 = vadd.f32 %v6914, %v6942
        %v6944 = vpop.f32.mrf.mxu0
        %v6945 = vadd.f32 %v6916, %v6944
        %6946 = vdwg.mxu0
        %v6947 = vpack.c.bf16 %v6930, %v6928
        %v6948 = vpack.c.bf16 %v6935, %v6933
        %v6949 = vpack.c.bf16 %v6940, %v6938
        %v6950 = vpack.c.bf16 %v6945, %v6943
        %s6951 = scalar_lea.vmem [#allocation10], 896
        %v6952 = vld [vmem:[%s6951] sm:$0xf]
        %v6953 = vld [vmem:[%s6951 + $0x4] sm:$0xf]
        %v6954 = vld [vmem:[%s6951 + $0x8] sm:$0xf]
        %v6955 = vld [vmem:[%s6951 + $0xc] sm:$0xf]
        %v6956 = vld [vmem:[%s6951 + $0x10] sm:$0xf]
        %v6957 = vld [vmem:[%s6951 + $0x14] sm:$0xf]
        %v6958 = vld [vmem:[%s6951 + $0x18] sm:$0xf]
        %v6959 = vld [vmem:[%s6951 + $0x1c] sm:$0xf]
        %v6960 = vld [vmem:[%s6951 + $0x20] sm:$0xf]
        %v6961 = vld [vmem:[%s6951 + $0x24] sm:$0xf]
        %v6962 = vld [vmem:[%s6951 + $0x28] sm:$0xf]
        %v6963 = vld [vmem:[%s6951 + $0x2c] sm:$0xf]
        %v6964 = vld [vmem:[%s6951 + $0x30] sm:$0xf]
        %v6965 = vld [vmem:[%s6951 + $0x34] sm:$0xf]
        %v6966 = vld [vmem:[%s6951 + $0x38] sm:$0xf]
        %v6967 = vld [vmem:[%s6951 + $0x3c] sm:$0xf]
        %v6984 = vunpack.c.l.b16 %v6952
        %v6985 = vunpack.c.l.b16 %v6953
        %v6986 = vunpack.c.l.b16 %v6954
        %v6987 = vunpack.c.l.b16 %v6955
        %v6988 = vunpack.c.l.b16 %v6956
        %v6989 = vunpack.c.l.b16 %v6957
        %v6990 = vunpack.c.l.b16 %v6958
        %v6991 = vunpack.c.l.b16 %v6959
        %v6992 = vunpack.c.l.b16 %v6960
        %v6993 = vunpack.c.l.b16 %v6961
        %v6994 = vunpack.c.l.b16 %v6962
        %v6995 = vunpack.c.l.b16 %v6963
        %v6996 = vunpack.c.l.b16 %v6964
        %v6997 = vunpack.c.l.b16 %v6965
        %v6998 = vunpack.c.l.b16 %v6966
        %v6999 = vunpack.c.l.b16 %v6967
        %v7000 = vpack.c.b16 %v6985, %v6984
        %v7001 = vpack.c.b16 %v6987, %v6986
        %v7002 = vpack.c.b16 %v6989, %v6988
        %v7003 = vpack.c.b16 %v6991, %v6990
        %v7004 = vpack.c.b16 %v6993, %v6992
        %v7005 = vpack.c.b16 %v6995, %v6994
        %v7006 = vpack.c.b16 %v6997, %v6996
        %v7007 = vpack.c.b16 %v6999, %v6998
        %7016 = vmatpush.bf16.msra.mxu0 %v7007
        %7017 = vmatpush.bf16.msra.mxu0 %v7006
        %7018 = vmatpush.bf16.msra.mxu0 %v7005
        %7019 = vmatpush.bf16.msra.mxu0 %v7004
        %7020 = vmatpush.bf16.msra.mxu0 %v7003
        %7021 = vmatpush.bf16.msra.mxu0 %v7002
        %7022 = vmatpush.bf16.msra.mxu0 %v7001
        %7023 = vmatpush.bf16.msra.mxu0 %v7000
        %7024 = vmatmul.bf16.gmra.mxu0 %v6947
        %v7025 = vpop.f32.mrf.mxu0
        %v7026 = vadd.f32 0.0, %v7025
        %v7027 = vpop.f32.mrf.mxu0
        %v7028 = vadd.f32 0.0, %v7027
        %7029 = vmatmul.bf16.gmra.mxu0 %v6948
        %v7030 = vpop.f32.mrf.mxu0
        %v7031 = vadd.f32 0.0, %v7030
        %v7032 = vpop.f32.mrf.mxu0
        %v7033 = vadd.f32 0.0, %v7032
        %7034 = vmatmul.bf16.gmra.mxu0 %v6949
        %v7035 = vpop.f32.mrf.mxu0
        %v7036 = vadd.f32 0.0, %v7035
        %v7037 = vpop.f32.mrf.mxu0
        %v7038 = vadd.f32 0.0, %v7037
        %7039 = vmatmul.bf16.gmra.mxu0 %v6950
        %v7040 = vpop.f32.mrf.mxu0
        %v7041 = vadd.f32 0.0, %v7040
        %v7042 = vpop.f32.mrf.mxu0
        %v7043 = vadd.f32 0.0, %v7042
        %7044 = vdwg.mxu0
        %v7045 = vadd.f32 %v6832, %v7026
        %v7046 = vadd.f32 %v6833, %v7028
        %v7047 = vadd.f32 %v6834, %v7031
        %v7048 = vadd.f32 %v6835, %v7033
        %v7049 = vadd.f32 %v6836, %v7036
        %v7050 = vadd.f32 %v6837, %v7038
        %v7051 = vadd.f32 %v6838, %v7041
        %v7052 = vadd.f32 %v6839, %v7043
        %s7053 = scalar_lea.vmem [#allocation5], 384
        %v7054 = vld [vmem:[%s7053] sm:$0xff]
        %v7055 = vld [vmem:[%s7053 + $0x8] sm:$0xff]
        %v7056 = vld [vmem:[%s7053 + $0x10] sm:$0xff]
        %v7057 = vld [vmem:[%s7053 + $0x18] sm:$0xff]
        %v7058 = vld [vmem:[%s7053 + $0x20] sm:$0xff]
        %v7059 = vld [vmem:[%s7053 + $0x28] sm:$0xff]
        %v7060 = vld [vmem:[%s7053 + $0x30] sm:$0xff]
        %v7061 = vld [vmem:[%s7053 + $0x38] sm:$0xff]
        %v7070 = vunpack.c.l.b16 %v7054
        %v7071 = vunpack.c.h.b16 %v7054
        %v7072 = vunpack.c.l.b16 %v7055
        %v7073 = vunpack.c.h.b16 %v7055
        %v7074 = vunpack.c.l.b16 %v7056
        %v7075 = vunpack.c.h.b16 %v7056
        %v7076 = vunpack.c.l.b16 %v7057
        %v7077 = vunpack.c.h.b16 %v7057
        %v7078 = vunpack.c.l.b16 %v7058
        %v7079 = vunpack.c.h.b16 %v7058
        %v7080 = vunpack.c.l.b16 %v7059
        %v7081 = vunpack.c.h.b16 %v7059
        %v7082 = vunpack.c.l.b16 %v7060
        %v7083 = vunpack.c.h.b16 %v7060
        %v7084 = vunpack.c.l.b16 %v7061
        %v7085 = vunpack.c.h.b16 %v7061
        %v7086 = vpack.c.b16 %v7072, %v7070
        %v7087 = vpack.c.b16 %v7073, %v7071
        %v7088 = vpack.c.b16 %v7076, %v7074
        %v7089 = vpack.c.b16 %v7077, %v7075
        %v7090 = vpack.c.b16 %v7080, %v7078
        %v7091 = vpack.c.b16 %v7081, %v7079
        %v7092 = vpack.c.b16 %v7084, %v7082
        %v7093 = vpack.c.b16 %v7085, %v7083
        %7102 = vmatpush.bf16.msra.mxu0 %v5783
        %7103 = vmatpush.bf16.msra.mxu0 %v5782
        %7104 = vmatpush.bf16.msra.mxu0 %v5781
        %7105 = vmatpush.bf16.msra.mxu0 %v5780
        %7106 = vmatpush.bf16.msra.mxu0 %v5779
        %7107 = vmatpush.bf16.msra.mxu0 %v5778
        %7108 = vmatpush.bf16.msra.mxu0 %v5777
        %7109 = vmatpush.bf16.msra.mxu0 %v5776
        %7110 = vmatmul.bf16.gmra.mxu0 %v7086
        %v7111 = vpop.f32.mrf.mxu0
        %v7112 = vadd.f32 0.0, %v7111
        %v7113 = vpop.f32.mrf.mxu0
        %v7114 = vadd.f32 0.0, %v7113
        %7115 = vmatmul.bf16.gmra.mxu0 %v7088
        %v7116 = vpop.f32.mrf.mxu0
        %v7117 = vadd.f32 0.0, %v7116
        %v7118 = vpop.f32.mrf.mxu0
        %v7119 = vadd.f32 0.0, %v7118
        %7120 = vmatmul.bf16.gmra.mxu0 %v7090
        %v7121 = vpop.f32.mrf.mxu0
        %v7122 = vadd.f32 0.0, %v7121
        %v7123 = vpop.f32.mrf.mxu0
        %v7124 = vadd.f32 0.0, %v7123
        %7125 = vmatmul.bf16.gmra.mxu0 %v7092
        %v7126 = vpop.f32.mrf.mxu0
        %v7127 = vadd.f32 0.0, %v7126
        %v7128 = vpop.f32.mrf.mxu0
        %v7129 = vadd.f32 0.0, %v7128
        %7130 = vdwg.mxu0
        %7131 = vmatpush.bf16.msra.mxu0 %v5791
        %7132 = vmatpush.bf16.msra.mxu0 %v5790
        %7133 = vmatpush.bf16.msra.mxu0 %v5789
        %7134 = vmatpush.bf16.msra.mxu0 %v5788
        %7135 = vmatpush.bf16.msra.mxu0 %v5787
        %7136 = vmatpush.bf16.msra.mxu0 %v5786
        %7137 = vmatpush.bf16.msra.mxu0 %v5785
        %7138 = vmatpush.bf16.msra.mxu0 %v5784
        %7139 = vmatmul.bf16.gmra.mxu0 %v7087
        %v7140 = vpop.f32.mrf.mxu0
        %v7141 = vadd.f32 %v7112, %v7140
        %v7142 = vpop.f32.mrf.mxu0
        %v7143 = vadd.f32 %v7114, %v7142
        %7144 = vmatmul.bf16.gmra.mxu0 %v7089
        %v7145 = vpop.f32.mrf.mxu0
        %v7146 = vadd.f32 %v7117, %v7145
        %v7147 = vpop.f32.mrf.mxu0
        %v7148 = vadd.f32 %v7119, %v7147
        %7149 = vmatmul.bf16.gmra.mxu0 %v7091
        %v7150 = vpop.f32.mrf.mxu0
        %v7151 = vadd.f32 %v7122, %v7150
        %v7152 = vpop.f32.mrf.mxu0
        %v7153 = vadd.f32 %v7124, %v7152
        %7154 = vmatmul.bf16.gmra.mxu0 %v7093
        %v7155 = vpop.f32.mrf.mxu0
        %v7156 = vadd.f32 %v7127, %v7155
        %v7157 = vpop.f32.mrf.mxu0
        %v7158 = vadd.f32 %v7129, %v7157
        %7159 = vdwg.mxu0
        %v7160 = vpack.c.bf16 %v7143, %v7141
        %v7161 = vpack.c.bf16 %v7148, %v7146
        %v7162 = vpack.c.bf16 %v7153, %v7151
        %v7163 = vpack.c.bf16 %v7158, %v7156
        %s7164 = scalar_lea.vmem [#allocation10], 960
        %v7165 = vld [vmem:[%s7164] sm:$0xf]
        %v7166 = vld [vmem:[%s7164 + $0x4] sm:$0xf]
        %v7167 = vld [vmem:[%s7164 + $0x8] sm:$0xf]
        %v7168 = vld [vmem:[%s7164 + $0xc] sm:$0xf]
        %v7169 = vld [vmem:[%s7164 + $0x10] sm:$0xf]
        %v7170 = vld [vmem:[%s7164 + $0x14] sm:$0xf]
        %v7171 = vld [vmem:[%s7164 + $0x18] sm:$0xf]
        %v7172 = vld [vmem:[%s7164 + $0x1c] sm:$0xf]
        %v7173 = vld [vmem:[%s7164 + $0x20] sm:$0xf]
        %v7174 = vld [vmem:[%s7164 + $0x24] sm:$0xf]
        %v7175 = vld [vmem:[%s7164 + $0x28] sm:$0xf]
        %v7176 = vld [vmem:[%s7164 + $0x2c] sm:$0xf]
        %v7177 = vld [vmem:[%s7164 + $0x30] sm:$0xf]
        %v7178 = vld [vmem:[%s7164 + $0x34] sm:$0xf]
        %v7179 = vld [vmem:[%s7164 + $0x38] sm:$0xf]
        %v7180 = vld [vmem:[%s7164 + $0x3c] sm:$0xf]
        %v7197 = vunpack.c.l.b16 %v7165
        %v7198 = vunpack.c.l.b16 %v7166
        %v7199 = vunpack.c.l.b16 %v7167
        %v7200 = vunpack.c.l.b16 %v7168
        %v7201 = vunpack.c.l.b16 %v7169
        %v7202 = vunpack.c.l.b16 %v7170
        %v7203 = vunpack.c.l.b16 %v7171
        %v7204 = vunpack.c.l.b16 %v7172
        %v7205 = vunpack.c.l.b16 %v7173
        %v7206 = vunpack.c.l.b16 %v7174
        %v7207 = vunpack.c.l.b16 %v7175
        %v7208 = vunpack.c.l.b16 %v7176
        %v7209 = vunpack.c.l.b16 %v7177
        %v7210 = vunpack.c.l.b16 %v7178
        %v7211 = vunpack.c.l.b16 %v7179
        %v7212 = vunpack.c.l.b16 %v7180
        %v7213 = vpack.c.b16 %v7198, %v7197
        %v7214 = vpack.c.b16 %v7200, %v7199
        %v7215 = vpack.c.b16 %v7202, %v7201
        %v7216 = vpack.c.b16 %v7204, %v7203
        %v7217 = vpack.c.b16 %v7206, %v7205
        %v7218 = vpack.c.b16 %v7208, %v7207
        %v7219 = vpack.c.b16 %v7210, %v7209
        %v7220 = vpack.c.b16 %v7212, %v7211
        %7229 = vmatpush.bf16.msra.mxu0 %v7220
        %7230 = vmatpush.bf16.msra.mxu0 %v7219
        %7231 = vmatpush.bf16.msra.mxu0 %v7218
        %7232 = vmatpush.bf16.msra.mxu0 %v7217
        %7233 = vmatpush.bf16.msra.mxu0 %v7216
        %7234 = vmatpush.bf16.msra.mxu0 %v7215
        %7235 = vmatpush.bf16.msra.mxu0 %v7214
        %7236 = vmatpush.bf16.msra.mxu0 %v7213
        %7237 = vmatmul.bf16.gmra.mxu0 %v7160
        %v7238 = vpop.f32.mrf.mxu0
        %v7239 = vadd.f32 0.0, %v7238
        %v7240 = vpop.f32.mrf.mxu0
        %v7241 = vadd.f32 0.0, %v7240
        %7242 = vmatmul.bf16.gmra.mxu0 %v7161
        %v7243 = vpop.f32.mrf.mxu0
        %v7244 = vadd.f32 0.0, %v7243
        %v7245 = vpop.f32.mrf.mxu0
        %v7246 = vadd.f32 0.0, %v7245
        %7247 = vmatmul.bf16.gmra.mxu0 %v7162
        %v7248 = vpop.f32.mrf.mxu0
        %v7249 = vadd.f32 0.0, %v7248
        %v7250 = vpop.f32.mrf.mxu0
        %v7251 = vadd.f32 0.0, %v7250
        %7252 = vmatmul.bf16.gmra.mxu0 %v7163
        %v7253 = vpop.f32.mrf.mxu0
        %v7254 = vadd.f32 0.0, %v7253
        %v7255 = vpop.f32.mrf.mxu0
        %v7256 = vadd.f32 0.0, %v7255
        %7257 = vdwg.mxu0
        %v7258 = vadd.f32 %v7045, %v7239
        %v7259 = vadd.f32 %v7046, %v7241
        %v7260 = vadd.f32 %v7047, %v7244
        %v7261 = vadd.f32 %v7048, %v7246
        %v7262 = vadd.f32 %v7049, %v7249
        %v7263 = vadd.f32 %v7050, %v7251
        %v7264 = vadd.f32 %v7051, %v7254
        %v7265 = vadd.f32 %v7052, %v7256
        %s7266 = scalar_lea.vmem [#allocation5], 448
        %v7267 = vld [vmem:[%s7266] sm:$0xff]
        %v7268 = vld [vmem:[%s7266 + $0x8] sm:$0xff]
        %v7269 = vld [vmem:[%s7266 + $0x10] sm:$0xff]
        %v7270 = vld [vmem:[%s7266 + $0x18] sm:$0xff]
        %v7271 = vld [vmem:[%s7266 + $0x20] sm:$0xff]
        %v7272 = vld [vmem:[%s7266 + $0x28] sm:$0xff]
        %v7273 = vld [vmem:[%s7266 + $0x30] sm:$0xff]
        %v7274 = vld [vmem:[%s7266 + $0x38] sm:$0xff]
        %v7283 = vunpack.c.l.b16 %v7267
        %v7284 = vunpack.c.h.b16 %v7267
        %v7285 = vunpack.c.l.b16 %v7268
        %v7286 = vunpack.c.h.b16 %v7268
        %v7287 = vunpack.c.l.b16 %v7269
        %v7288 = vunpack.c.h.b16 %v7269
        %v7289 = vunpack.c.l.b16 %v7270
        %v7290 = vunpack.c.h.b16 %v7270
        %v7291 = vunpack.c.l.b16 %v7271
        %v7292 = vunpack.c.h.b16 %v7271
        %v7293 = vunpack.c.l.b16 %v7272
        %v7294 = vunpack.c.h.b16 %v7272
        %v7295 = vunpack.c.l.b16 %v7273
        %v7296 = vunpack.c.h.b16 %v7273
        %v7297 = vunpack.c.l.b16 %v7274
        %v7298 = vunpack.c.h.b16 %v7274
        %v7299 = vpack.c.b16 %v7285, %v7283
        %v7300 = vpack.c.b16 %v7286, %v7284
        %v7301 = vpack.c.b16 %v7289, %v7287
        %v7302 = vpack.c.b16 %v7290, %v7288
        %v7303 = vpack.c.b16 %v7293, %v7291
        %v7304 = vpack.c.b16 %v7294, %v7292
        %v7305 = vpack.c.b16 %v7297, %v7295
        %v7306 = vpack.c.b16 %v7298, %v7296
        %7315 = vmatpush.bf16.msra.mxu0 %v5783
        %7316 = vmatpush.bf16.msra.mxu0 %v5782
        %7317 = vmatpush.bf16.msra.mxu0 %v5781
        %7318 = vmatpush.bf16.msra.mxu0 %v5780
        %7319 = vmatpush.bf16.msra.mxu0 %v5779
        %7320 = vmatpush.bf16.msra.mxu0 %v5778
        %7321 = vmatpush.bf16.msra.mxu0 %v5777
        %7322 = vmatpush.bf16.msra.mxu0 %v5776
        %7323 = vmatmul.bf16.gmra.mxu0 %v7299
        %v7324 = vpop.f32.mrf.mxu0
        %v7325 = vadd.f32 0.0, %v7324
        %v7326 = vpop.f32.mrf.mxu0
        %v7327 = vadd.f32 0.0, %v7326
        %7328 = vmatmul.bf16.gmra.mxu0 %v7301
        %v7329 = vpop.f32.mrf.mxu0
        %v7330 = vadd.f32 0.0, %v7329
        %v7331 = vpop.f32.mrf.mxu0
        %v7332 = vadd.f32 0.0, %v7331
        %7333 = vmatmul.bf16.gmra.mxu0 %v7303
        %v7334 = vpop.f32.mrf.mxu0
        %v7335 = vadd.f32 0.0, %v7334
        %v7336 = vpop.f32.mrf.mxu0
        %v7337 = vadd.f32 0.0, %v7336
        %7338 = vmatmul.bf16.gmra.mxu0 %v7305
        %v7339 = vpop.f32.mrf.mxu0
        %v7340 = vadd.f32 0.0, %v7339
        %v7341 = vpop.f32.mrf.mxu0
        %v7342 = vadd.f32 0.0, %v7341
        %7343 = vdwg.mxu0
        %7344 = vmatpush.bf16.msra.mxu0 %v5791
        %7345 = vmatpush.bf16.msra.mxu0 %v5790
        %7346 = vmatpush.bf16.msra.mxu0 %v5789
        %7347 = vmatpush.bf16.msra.mxu0 %v5788
        %7348 = vmatpush.bf16.msra.mxu0 %v5787
        %7349 = vmatpush.bf16.msra.mxu0 %v5786
        %7350 = vmatpush.bf16.msra.mxu0 %v5785
        %7351 = vmatpush.bf16.msra.mxu0 %v5784
        %7352 = vmatmul.bf16.gmra.mxu0 %v7300
        %v7353 = vpop.f32.mrf.mxu0
        %v7354 = vadd.f32 %v7325, %v7353
        %v7355 = vpop.f32.mrf.mxu0
        %v7356 = vadd.f32 %v7327, %v7355
        %7357 = vmatmul.bf16.gmra.mxu0 %v7302
        %v7358 = vpop.f32.mrf.mxu0
        %v7359 = vadd.f32 %v7330, %v7358
        %v7360 = vpop.f32.mrf.mxu0
        %v7361 = vadd.f32 %v7332, %v7360
        %7362 = vmatmul.bf16.gmra.mxu0 %v7304
        %v7363 = vpop.f32.mrf.mxu0
        %v7364 = vadd.f32 %v7335, %v7363
        %v7365 = vpop.f32.mrf.mxu0
        %v7366 = vadd.f32 %v7337, %v7365
        %7367 = vmatmul.bf16.gmra.mxu0 %v7306
        %v7368 = vpop.f32.mrf.mxu0
        %v7369 = vadd.f32 %v7340, %v7368
        %v7370 = vpop.f32.mrf.mxu0
        %v7371 = vadd.f32 %v7342, %v7370
        %7372 = vdwg.mxu0
        %v7373 = vpack.c.bf16 %v7356, %v7354
        %v7374 = vpack.c.bf16 %v7361, %v7359
        %v7375 = vpack.c.bf16 %v7366, %v7364
        %v7376 = vpack.c.bf16 %v7371, %v7369
        %s7377 = scalar_lea.vmem [#allocation10], 1024
        %v7378 = vld [vmem:[%s7377] sm:$0xf]
        %v7379 = vld [vmem:[%s7377 + $0x4] sm:$0xf]
        %v7380 = vld [vmem:[%s7377 + $0x8] sm:$0xf]
        %v7381 = vld [vmem:[%s7377 + $0xc] sm:$0xf]
        %v7382 = vld [vmem:[%s7377 + $0x10] sm:$0xf]
        %v7383 = vld [vmem:[%s7377 + $0x14] sm:$0xf]
        %v7384 = vld [vmem:[%s7377 + $0x18] sm:$0xf]
        %v7385 = vld [vmem:[%s7377 + $0x1c] sm:$0xf]
        %v7386 = vld [vmem:[%s7377 + $0x20] sm:$0xf]
        %v7387 = vld [vmem:[%s7377 + $0x24] sm:$0xf]
        %v7388 = vld [vmem:[%s7377 + $0x28] sm:$0xf]
        %v7389 = vld [vmem:[%s7377 + $0x2c] sm:$0xf]
        %v7390 = vld [vmem:[%s7377 + $0x30] sm:$0xf]
        %v7391 = vld [vmem:[%s7377 + $0x34] sm:$0xf]
        %v7392 = vld [vmem:[%s7377 + $0x38] sm:$0xf]
        %v7393 = vld [vmem:[%s7377 + $0x3c] sm:$0xf]
        %v7410 = vunpack.c.l.b16 %v7378
        %v7411 = vunpack.c.l.b16 %v7379
        %v7412 = vunpack.c.l.b16 %v7380
        %v7413 = vunpack.c.l.b16 %v7381
        %v7414 = vunpack.c.l.b16 %v7382
        %v7415 = vunpack.c.l.b16 %v7383
        %v7416 = vunpack.c.l.b16 %v7384
        %v7417 = vunpack.c.l.b16 %v7385
        %v7418 = vunpack.c.l.b16 %v7386
        %v7419 = vunpack.c.l.b16 %v7387
        %v7420 = vunpack.c.l.b16 %v7388
        %v7421 = vunpack.c.l.b16 %v7389
        %v7422 = vunpack.c.l.b16 %v7390
        %v7423 = vunpack.c.l.b16 %v7391
        %v7424 = vunpack.c.l.b16 %v7392
        %v7425 = vunpack.c.l.b16 %v7393
        %v7426 = vpack.c.b16 %v7411, %v7410
        %v7427 = vpack.c.b16 %v7413, %v7412
        %v7428 = vpack.c.b16 %v7415, %v7414
        %v7429 = vpack.c.b16 %v7417, %v7416
        %v7430 = vpack.c.b16 %v7419, %v7418
        %v7431 = vpack.c.b16 %v7421, %v7420
        %v7432 = vpack.c.b16 %v7423, %v7422
        %v7433 = vpack.c.b16 %v7425, %v7424
        %7442 = vmatpush.bf16.msra.mxu0 %v7433
        %7443 = vmatpush.bf16.msra.mxu0 %v7432
        %7444 = vmatpush.bf16.msra.mxu0 %v7431
        %7445 = vmatpush.bf16.msra.mxu0 %v7430
        %7446 = vmatpush.bf16.msra.mxu0 %v7429
        %7447 = vmatpush.bf16.msra.mxu0 %v7428
        %7448 = vmatpush.bf16.msra.mxu0 %v7427
        %7449 = vmatpush.bf16.msra.mxu0 %v7426
        %7450 = vmatmul.bf16.gmra.mxu0 %v7373
        %v7451 = vpop.f32.mrf.mxu0
        %v7452 = vadd.f32 0.0, %v7451
        %v7453 = vpop.f32.mrf.mxu0
        %v7454 = vadd.f32 0.0, %v7453
        %7455 = vmatmul.bf16.gmra.mxu0 %v7374
        %v7456 = vpop.f32.mrf.mxu0
        %v7457 = vadd.f32 0.0, %v7456
        %v7458 = vpop.f32.mrf.mxu0
        %v7459 = vadd.f32 0.0, %v7458
        %7460 = vmatmul.bf16.gmra.mxu0 %v7375
        %v7461 = vpop.f32.mrf.mxu0
        %v7462 = vadd.f32 0.0, %v7461
        %v7463 = vpop.f32.mrf.mxu0
        %v7464 = vadd.f32 0.0, %v7463
        %7465 = vmatmul.bf16.gmra.mxu0 %v7376
        %v7466 = vpop.f32.mrf.mxu0
        %v7467 = vadd.f32 0.0, %v7466
        %v7468 = vpop.f32.mrf.mxu0
        %v7469 = vadd.f32 0.0, %v7468
        %7470 = vdwg.mxu0
        %v7471 = vadd.f32 %v7258, %v7452
        %v7472 = vadd.f32 %v7259, %v7454
        %v7473 = vadd.f32 %v7260, %v7457
        %v7474 = vadd.f32 %v7261, %v7459
        %v7475 = vadd.f32 %v7262, %v7462
        %v7476 = vadd.f32 %v7263, %v7464
        %v7477 = vadd.f32 %v7264, %v7467
        %v7478 = vadd.f32 %v7265, %v7469
        %s7479 = scalar_lea.vmem [#allocation5], 512
        %v7480 = vld [vmem:[%s7479] sm:$0xff]
        %v7481 = vld [vmem:[%s7479 + $0x8] sm:$0xff]
        %v7482 = vld [vmem:[%s7479 + $0x10] sm:$0xff]
        %v7483 = vld [vmem:[%s7479 + $0x18] sm:$0xff]
        %v7484 = vld [vmem:[%s7479 + $0x20] sm:$0xff]
        %v7485 = vld [vmem:[%s7479 + $0x28] sm:$0xff]
        %v7486 = vld [vmem:[%s7479 + $0x30] sm:$0xff]
        %v7487 = vld [vmem:[%s7479 + $0x38] sm:$0xff]
        %v7496 = vunpack.c.l.b16 %v7480
        %v7497 = vunpack.c.h.b16 %v7480
        %v7498 = vunpack.c.l.b16 %v7481
        %v7499 = vunpack.c.h.b16 %v7481
        %v7500 = vunpack.c.l.b16 %v7482
        %v7501 = vunpack.c.h.b16 %v7482
        %v7502 = vunpack.c.l.b16 %v7483
        %v7503 = vunpack.c.h.b16 %v7483
        %v7504 = vunpack.c.l.b16 %v7484
        %v7505 = vunpack.c.h.b16 %v7484
        %v7506 = vunpack.c.l.b16 %v7485
        %v7507 = vunpack.c.h.b16 %v7485
        %v7508 = vunpack.c.l.b16 %v7486
        %v7509 = vunpack.c.h.b16 %v7486
        %v7510 = vunpack.c.l.b16 %v7487
        %v7511 = vunpack.c.h.b16 %v7487
        %v7512 = vpack.c.b16 %v7498, %v7496
        %v7513 = vpack.c.b16 %v7499, %v7497
        %v7514 = vpack.c.b16 %v7502, %v7500
        %v7515 = vpack.c.b16 %v7503, %v7501
        %v7516 = vpack.c.b16 %v7506, %v7504
        %v7517 = vpack.c.b16 %v7507, %v7505
        %v7518 = vpack.c.b16 %v7510, %v7508
        %v7519 = vpack.c.b16 %v7511, %v7509
        %7528 = vmatpush.bf16.msra.mxu0 %v5783
        %7529 = vmatpush.bf16.msra.mxu0 %v5782
        %7530 = vmatpush.bf16.msra.mxu0 %v5781
        %7531 = vmatpush.bf16.msra.mxu0 %v5780
        %7532 = vmatpush.bf16.msra.mxu0 %v5779
        %7533 = vmatpush.bf16.msra.mxu0 %v5778
        %7534 = vmatpush.bf16.msra.mxu0 %v5777
        %7535 = vmatpush.bf16.msra.mxu0 %v5776
        %7536 = vmatmul.bf16.gmra.mxu0 %v7512
        %v7537 = vpop.f32.mrf.mxu0
        %v7538 = vadd.f32 0.0, %v7537
        %v7539 = vpop.f32.mrf.mxu0
        %v7540 = vadd.f32 0.0, %v7539
        %7541 = vmatmul.bf16.gmra.mxu0 %v7514
        %v7542 = vpop.f32.mrf.mxu0
        %v7543 = vadd.f32 0.0, %v7542
        %v7544 = vpop.f32.mrf.mxu0
        %v7545 = vadd.f32 0.0, %v7544
        %7546 = vmatmul.bf16.gmra.mxu0 %v7516
        %v7547 = vpop.f32.mrf.mxu0
        %v7548 = vadd.f32 0.0, %v7547
        %v7549 = vpop.f32.mrf.mxu0
        %v7550 = vadd.f32 0.0, %v7549
        %7551 = vmatmul.bf16.gmra.mxu0 %v7518
        %v7552 = vpop.f32.mrf.mxu0
        %v7553 = vadd.f32 0.0, %v7552
        %v7554 = vpop.f32.mrf.mxu0
        %v7555 = vadd.f32 0.0, %v7554
        %7556 = vdwg.mxu0
        %7557 = vmatpush.bf16.msra.mxu0 %v5791
        %7558 = vmatpush.bf16.msra.mxu0 %v5790
        %7559 = vmatpush.bf16.msra.mxu0 %v5789
        %7560 = vmatpush.bf16.msra.mxu0 %v5788
        %7561 = vmatpush.bf16.msra.mxu0 %v5787
        %7562 = vmatpush.bf16.msra.mxu0 %v5786
        %7563 = vmatpush.bf16.msra.mxu0 %v5785
        %7564 = vmatpush.bf16.msra.mxu0 %v5784
        %7565 = vmatmul.bf16.gmra.mxu0 %v7513
        %v7566 = vpop.f32.mrf.mxu0
        %v7567 = vadd.f32 %v7538, %v7566
        %v7568 = vpop.f32.mrf.mxu0
        %v7569 = vadd.f32 %v7540, %v7568
        %7570 = vmatmul.bf16.gmra.mxu0 %v7515
        %v7571 = vpop.f32.mrf.mxu0
        %v7572 = vadd.f32 %v7543, %v7571
        %v7573 = vpop.f32.mrf.mxu0
        %v7574 = vadd.f32 %v7545, %v7573
        %7575 = vmatmul.bf16.gmra.mxu0 %v7517
        %v7576 = vpop.f32.mrf.mxu0
        %v7577 = vadd.f32 %v7548, %v7576
        %v7578 = vpop.f32.mrf.mxu0
        %v7579 = vadd.f32 %v7550, %v7578
        %7580 = vmatmul.bf16.gmra.mxu0 %v7519
        %v7581 = vpop.f32.mrf.mxu0
        %v7582 = vadd.f32 %v7553, %v7581
        %v7583 = vpop.f32.mrf.mxu0
        %v7584 = vadd.f32 %v7555, %v7583
        %7585 = vdwg.mxu0
        %v7586 = vpack.c.bf16 %v7569, %v7567
        %v7587 = vpack.c.bf16 %v7574, %v7572
        %v7588 = vpack.c.bf16 %v7579, %v7577
        %v7589 = vpack.c.bf16 %v7584, %v7582
        %s7590 = scalar_lea.vmem [#allocation10], 1088
        %v7591 = vld [vmem:[%s7590] sm:$0xf]
        %v7592 = vld [vmem:[%s7590 + $0x4] sm:$0xf]
        %v7593 = vld [vmem:[%s7590 + $0x8] sm:$0xf]
        %v7594 = vld [vmem:[%s7590 + $0xc] sm:$0xf]
        %v7595 = vld [vmem:[%s7590 + $0x10] sm:$0xf]
        %v7596 = vld [vmem:[%s7590 + $0x14] sm:$0xf]
        %v7597 = vld [vmem:[%s7590 + $0x18] sm:$0xf]
        %v7598 = vld [vmem:[%s7590 + $0x1c] sm:$0xf]
        %v7599 = vld [vmem:[%s7590 + $0x20] sm:$0xf]
        %v7600 = vld [vmem:[%s7590 + $0x24] sm:$0xf]
        %v7601 = vld [vmem:[%s7590 + $0x28] sm:$0xf]
        %v7602 = vld [vmem:[%s7590 + $0x2c] sm:$0xf]
        %v7603 = vld [vmem:[%s7590 + $0x30] sm:$0xf]
        %v7604 = vld [vmem:[%s7590 + $0x34] sm:$0xf]
        %v7605 = vld [vmem:[%s7590 + $0x38] sm:$0xf]
        %v7606 = vld [vmem:[%s7590 + $0x3c] sm:$0xf]
        %v7623 = vunpack.c.l.b16 %v7591
        %v7624 = vunpack.c.l.b16 %v7592
        %v7625 = vunpack.c.l.b16 %v7593
        %v7626 = vunpack.c.l.b16 %v7594
        %v7627 = vunpack.c.l.b16 %v7595
        %v7628 = vunpack.c.l.b16 %v7596
        %v7629 = vunpack.c.l.b16 %v7597
        %v7630 = vunpack.c.l.b16 %v7598
        %v7631 = vunpack.c.l.b16 %v7599
        %v7632 = vunpack.c.l.b16 %v7600
        %v7633 = vunpack.c.l.b16 %v7601
        %v7634 = vunpack.c.l.b16 %v7602
        %v7635 = vunpack.c.l.b16 %v7603
        %v7636 = vunpack.c.l.b16 %v7604
        %v7637 = vunpack.c.l.b16 %v7605
        %v7638 = vunpack.c.l.b16 %v7606
        %v7639 = vpack.c.b16 %v7624, %v7623
        %v7640 = vpack.c.b16 %v7626, %v7625
        %v7641 = vpack.c.b16 %v7628, %v7627
        %v7642 = vpack.c.b16 %v7630, %v7629
        %v7643 = vpack.c.b16 %v7632, %v7631
        %v7644 = vpack.c.b16 %v7634, %v7633
        %v7645 = vpack.c.b16 %v7636, %v7635
        %v7646 = vpack.c.b16 %v7638, %v7637
        %7655 = vmatpush.bf16.msra.mxu0 %v7646
        %7656 = vmatpush.bf16.msra.mxu0 %v7645
        %7657 = vmatpush.bf16.msra.mxu0 %v7644
        %7658 = vmatpush.bf16.msra.mxu0 %v7643
        %7659 = vmatpush.bf16.msra.mxu0 %v7642
        %7660 = vmatpush.bf16.msra.mxu0 %v7641
        %7661 = vmatpush.bf16.msra.mxu0 %v7640
        %7662 = vmatpush.bf16.msra.mxu0 %v7639
        %7663 = vmatmul.bf16.gmra.mxu0 %v7586
        %v7664 = vpop.f32.mrf.mxu0
        %v7665 = vadd.f32 0.0, %v7664
        %v7666 = vpop.f32.mrf.mxu0
        %v7667 = vadd.f32 0.0, %v7666
        %7668 = vmatmul.bf16.gmra.mxu0 %v7587
        %v7669 = vpop.f32.mrf.mxu0
        %v7670 = vadd.f32 0.0, %v7669
        %v7671 = vpop.f32.mrf.mxu0
        %v7672 = vadd.f32 0.0, %v7671
        %7673 = vmatmul.bf16.gmra.mxu0 %v7588
        %v7674 = vpop.f32.mrf.mxu0
        %v7675 = vadd.f32 0.0, %v7674
        %v7676 = vpop.f32.mrf.mxu0
        %v7677 = vadd.f32 0.0, %v7676
        %7678 = vmatmul.bf16.gmra.mxu0 %v7589
        %v7679 = vpop.f32.mrf.mxu0
        %v7680 = vadd.f32 0.0, %v7679
        %v7681 = vpop.f32.mrf.mxu0
        %v7682 = vadd.f32 0.0, %v7681
        %7683 = vdwg.mxu0
        %v7684 = vadd.f32 %v7471, %v7665
        %v7685 = vadd.f32 %v7472, %v7667
        %v7686 = vadd.f32 %v7473, %v7670
        %v7687 = vadd.f32 %v7474, %v7672
        %v7688 = vadd.f32 %v7475, %v7675
        %v7689 = vadd.f32 %v7476, %v7677
        %v7690 = vadd.f32 %v7477, %v7680
        %v7691 = vadd.f32 %v7478, %v7682
        %s7692 = scalar_lea.vmem [#allocation11], 1
        %v7693 = vld [vmem:[%s7692] sm:$0x1]
        %v7695 = vperm.slane %v7693, 0
        %v7697 = vadd.f32 %v7684, %v7695
        %v7698 = vadd.f32 %v7685, %v7695
        %v7699 = vadd.f32 %v7686, %v7695
        %v7700 = vadd.f32 %v7687, %v7695
        %v7701 = vadd.f32 %v7688, %v7695
        %v7702 = vadd.f32 %v7689, %v7695
        %v7703 = vadd.f32 %v7690, %v7695
        %v7704 = vadd.f32 %v7691, %v7695
        %v7705 = vmax.f32 %v7697, 0.0
        %v7706 = vmax.f32 %v7698, 0.0
        %v7707 = vmax.f32 %v7699, 0.0
        %v7708 = vmax.f32 %v7700, 0.0
        %v7709 = vmax.f32 %v7701, 0.0
        %v7710 = vmax.f32 %v7702, 0.0
        %v7711 = vmax.f32 %v7703, 0.0
        %v7712 = vmax.f32 %v7704, 0.0
        %v7713 = vpack.c.bf16 %v7706, %v7705
        %v7714 = vpack.c.bf16 %v7708, %v7707
        %v7715 = vpack.c.bf16 %v7710, %v7709
        %v7716 = vpack.c.bf16 %v7712, %v7711
        %v7717 = vld [vmem:[#allocation7] sm:$0xf]
        %v7718 = vld [vmem:[#allocation7 + $0x4] sm:$0xf]
        %v7721 = vunpack.c.l.b16 %v7717
        %v7722 = vunpack.c.l.b16 %v7718
        %v7723 = vpack.c.b16 %v7722, %v7721
        %vm7724 = vcmask 523264
        %v7726 = vsel %vm7724, %v7723, 0
        %7728 = vmatpush.bf16.msra.mxu0 0
        %7729 = vmatpush.bf16.msra.mxu0 0
        %7730 = vmatpush.bf16.msra.mxu0 0
        %7731 = vmatpush.bf16.msra.mxu0 0
        %7732 = vmatpush.bf16.msra.mxu0 %v7716
        %7733 = vmatpush.bf16.msra.mxu0 %v7715
        %7734 = vmatpush.bf16.msra.mxu0 %v7714
        %7735 = vmatpush.bf16.msra.mxu0 %v7713
        %7736 = vmatmul.bf16.gmra.mxu0 %v7726
        %v7737 = vpop.f32.mrf.mxu0
        %v7738 = vadd.f32 0.0, %v7737
        %v7739 = vpop.f32.mrf.mxu0
        %v7740 = vadd.f32 0.0, %v7739
        %7741 = vdwg.mxu0
        %v7742 = vpack.c.bf16 %v7740, %v7738
        %s7743 = scalar_lea.vmem [#allocation10], 1152
        %v7744 = vld [vmem:[%s7743] sm:$0xf]
        %v7745 = vld [vmem:[%s7743 + $0x4] sm:$0xf]
        %v7746 = vld [vmem:[%s7743 + $0x8] sm:$0xf]
        %v7747 = vld [vmem:[%s7743 + $0xc] sm:$0xf]
        %v7748 = vld [vmem:[%s7743 + $0x10] sm:$0xf]
        %v7749 = vld [vmem:[%s7743 + $0x14] sm:$0xf]
        %v7750 = vld [vmem:[%s7743 + $0x18] sm:$0xf]
        %v7751 = vld [vmem:[%s7743 + $0x1c] sm:$0xf]
        %v7752 = vld [vmem:[%s7743 + $0x20] sm:$0xf]
        %v7753 = vld [vmem:[%s7743 + $0x24] sm:$0xf]
        %v7754 = vld [vmem:[%s7743 + $0x28] sm:$0xf]
        %v7755 = vld [vmem:[%s7743 + $0x2c] sm:$0xf]
        %v7756 = vld [vmem:[%s7743 + $0x30] sm:$0xf]
        %v7757 = vld [vmem:[%s7743 + $0x34] sm:$0xf]
        %v7758 = vld [vmem:[%s7743 + $0x38] sm:$0xf]
        %v7759 = vld [vmem:[%s7743 + $0x3c] sm:$0xf]
        %s7760 = scalar_lea.vmem [#allocation7], 8
        %v7761 = vld [vmem:[%s7760] sm:$0xf]
        %v7762 = vld [vmem:[%s7760 + $0x4] sm:$0xf]
        %v7765 = vunpack.c.l.b16 %v7761
        %v7766 = vunpack.c.l.b16 %v7762
        %v7767 = vpack.c.b16 %v7766, %v7765
        %v7769 = vsel %vm7724, %v7767, 0
        %7771 = vmatpush.bf16.msra.mxu0 0
        %7772 = vmatpush.bf16.msra.mxu0 0
        %7773 = vmatpush.bf16.msra.mxu0 0
        %7774 = vmatpush.bf16.msra.mxu0 0
        %7775 = vmatpush.bf16.msra.mxu0 %v7716
        %7776 = vmatpush.bf16.msra.mxu0 %v7715
        %7777 = vmatpush.bf16.msra.mxu0 %v7714
        %7778 = vmatpush.bf16.msra.mxu0 %v7713
        %7779 = vmatmul.bf16.gmra.mxu0 %v7769
        %v7780 = vpop.f32.mrf.mxu0
        %v7781 = vadd.f32 0.0, %v7780
        %v7782 = vpop.f32.mrf.mxu0
        %v7783 = vadd.f32 0.0, %v7782
        %7784 = vdwg.mxu0
        %v7785 = vpack.c.bf16 %v7783, %v7781
        %s7786 = scalar_lea.vmem [#allocation10], 1216
        %v7787 = vld [vmem:[%s7786] sm:$0xf]
        %v7788 = vld [vmem:[%s7786 + $0x4] sm:$0xf]
        %v7789 = vld [vmem:[%s7786 + $0x8] sm:$0xf]
        %v7790 = vld [vmem:[%s7786 + $0xc] sm:$0xf]
        %v7791 = vld [vmem:[%s7786 + $0x10] sm:$0xf]
        %v7792 = vld [vmem:[%s7786 + $0x14] sm:$0xf]
        %v7793 = vld [vmem:[%s7786 + $0x18] sm:$0xf]
        %v7794 = vld [vmem:[%s7786 + $0x1c] sm:$0xf]
        %v7795 = vld [vmem:[%s7786 + $0x20] sm:$0xf]
        %v7796 = vld [vmem:[%s7786 + $0x24] sm:$0xf]
        %v7797 = vld [vmem:[%s7786 + $0x28] sm:$0xf]
        %v7798 = vld [vmem:[%s7786 + $0x2c] sm:$0xf]
        %v7799 = vld [vmem:[%s7786 + $0x30] sm:$0xf]
        %v7800 = vld [vmem:[%s7786 + $0x34] sm:$0xf]
        %v7801 = vld [vmem:[%s7786 + $0x38] sm:$0xf]
        %v7802 = vld [vmem:[%s7786 + $0x3c] sm:$0xf]
        %v7819 = vunpack.c.l.b16 %v7787
        %v7820 = vunpack.c.l.b16 %v7788
        %v7821 = vunpack.c.l.b16 %v7789
        %v7822 = vunpack.c.l.b16 %v7790
        %v7823 = vunpack.c.l.b16 %v7791
        %v7824 = vunpack.c.l.b16 %v7792
        %v7825 = vunpack.c.l.b16 %v7793
        %v7826 = vunpack.c.l.b16 %v7794
        %v7827 = vunpack.c.l.b16 %v7795
        %v7828 = vunpack.c.l.b16 %v7796
        %v7829 = vunpack.c.l.b16 %v7797
        %v7830 = vunpack.c.l.b16 %v7798
        %v7831 = vunpack.c.l.b16 %v7799
        %v7832 = vunpack.c.l.b16 %v7800
        %v7833 = vunpack.c.l.b16 %v7801
        %v7834 = vunpack.c.l.b16 %v7802
        %v7835 = vpack.c.b16 %v7820, %v7819
        %v7836 = vpack.c.b16 %v7822, %v7821
        %v7837 = vpack.c.b16 %v7824, %v7823
        %v7838 = vpack.c.b16 %v7826, %v7825
        %v7839 = vpack.c.b16 %v7828, %v7827
        %v7840 = vpack.c.b16 %v7830, %v7829
        %v7841 = vpack.c.b16 %v7832, %v7831
        %v7842 = vpack.c.b16 %v7834, %v7833
        %7851 = vmatpush.bf16.msra.mxu0 %v7842
        %7852 = vmatpush.bf16.msra.mxu0 %v7841
        %7853 = vmatpush.bf16.msra.mxu0 %v7840
        %7854 = vmatpush.bf16.msra.mxu0 %v7839
        %7855 = vmatpush.bf16.msra.mxu0 %v7838
        %7856 = vmatpush.bf16.msra.mxu0 %v7837
        %7857 = vmatpush.bf16.msra.mxu0 %v7836
        %7858 = vmatpush.bf16.msra.mxu0 %v7835
        %7859 = vmatmul.bf16.gmra.mxu0 %v7785
        %v7860 = vpop.f32.mrf.mxu0
        %v7861 = vadd.f32 0.0, %v7860
        %v7862 = vpop.f32.mrf.mxu0
        %v7863 = vadd.f32 0.0, %v7862
        %7864 = vdwg.mxu0
        %v7881 = vunpack.c.l.b16 %v7744
        %v7882 = vunpack.c.l.b16 %v7745
        %v7883 = vunpack.c.l.b16 %v7746
        %v7884 = vunpack.c.l.b16 %v7747
        %v7885 = vunpack.c.l.b16 %v7748
        %v7886 = vunpack.c.l.b16 %v7749
        %v7887 = vunpack.c.l.b16 %v7750
        %v7888 = vunpack.c.l.b16 %v7751
        %v7889 = vunpack.c.l.b16 %v7752
        %v7890 = vunpack.c.l.b16 %v7753
        %v7891 = vunpack.c.l.b16 %v7754
        %v7892 = vunpack.c.l.b16 %v7755
        %v7893 = vunpack.c.l.b16 %v7756
        %v7894 = vunpack.c.l.b16 %v7757
        %v7895 = vunpack.c.l.b16 %v7758
        %v7896 = vunpack.c.l.b16 %v7759
        %v7897 = vpack.c.b16 %v7882, %v7881
        %v7898 = vpack.c.b16 %v7884, %v7883
        %v7899 = vpack.c.b16 %v7886, %v7885
        %v7900 = vpack.c.b16 %v7888, %v7887
        %v7901 = vpack.c.b16 %v7890, %v7889
        %v7902 = vpack.c.b16 %v7892, %v7891
        %v7903 = vpack.c.b16 %v7894, %v7893
        %v7904 = vpack.c.b16 %v7896, %v7895
        %7913 = vmatpush.bf16.msra.mxu0 %v7904
        %7914 = vmatpush.bf16.msra.mxu0 %v7903
        %7915 = vmatpush.bf16.msra.mxu0 %v7902
        %7916 = vmatpush.bf16.msra.mxu0 %v7901
        %7917 = vmatpush.bf16.msra.mxu0 %v7900
        %7918 = vmatpush.bf16.msra.mxu0 %v7899
        %7919 = vmatpush.bf16.msra.mxu0 %v7898
        %7920 = vmatpush.bf16.msra.mxu0 %v7897
        %7921 = vmatmul.bf16.gmra.mxu0 %v7742
        %v7922 = vpop.f32.mrf.mxu0
        %v7923 = vadd.f32 %v7861, %v7922
        %v7924 = vpop.f32.mrf.mxu0
        %v7925 = vadd.f32 %v7863, %v7924
        %7926 = vdwg.mxu0
        %s7927 = scalar_lea.vmem [#allocation7], 16
        %v7928 = vld [vmem:[%s7927] sm:$0xf]
        %v7929 = vld [vmem:[%s7927 + $0x4] sm:$0xf]
        %v7932 = vunpack.c.l.b16 %v7928
        %v7933 = vunpack.c.l.b16 %v7929
        %v7934 = vpack.c.b16 %v7933, %v7932
        %v7936 = vsel %vm7724, %v7934, 0
        %7938 = vmatpush.bf16.msra.mxu0 0
        %7939 = vmatpush.bf16.msra.mxu0 0
        %7940 = vmatpush.bf16.msra.mxu0 0
        %7941 = vmatpush.bf16.msra.mxu0 0
        %7942 = vmatpush.bf16.msra.mxu0 %v7716
        %7943 = vmatpush.bf16.msra.mxu0 %v7715
        %7944 = vmatpush.bf16.msra.mxu0 %v7714
        %7945 = vmatpush.bf16.msra.mxu0 %v7713
        %7946 = vmatmul.bf16.gmra.mxu0 %v7936
        %v7947 = vpop.f32.mrf.mxu0
        %v7948 = vadd.f32 0.0, %v7947
        %v7949 = vpop.f32.mrf.mxu0
        %v7950 = vadd.f32 0.0, %v7949
        %7951 = vdwg.mxu0
        %v7952 = vpack.c.bf16 %v7950, %v7948
        %s7953 = scalar_lea.vmem [#allocation10], 1280
        %v7954 = vld [vmem:[%s7953] sm:$0xf]
        %v7955 = vld [vmem:[%s7953 + $0x4] sm:$0xf]
        %v7956 = vld [vmem:[%s7953 + $0x8] sm:$0xf]
        %v7957 = vld [vmem:[%s7953 + $0xc] sm:$0xf]
        %v7958 = vld [vmem:[%s7953 + $0x10] sm:$0xf]
        %v7959 = vld [vmem:[%s7953 + $0x14] sm:$0xf]
        %v7960 = vld [vmem:[%s7953 + $0x18] sm:$0xf]
        %v7961 = vld [vmem:[%s7953 + $0x1c] sm:$0xf]
        %v7962 = vld [vmem:[%s7953 + $0x20] sm:$0xf]
        %v7963 = vld [vmem:[%s7953 + $0x24] sm:$0xf]
        %v7964 = vld [vmem:[%s7953 + $0x28] sm:$0xf]
        %v7965 = vld [vmem:[%s7953 + $0x2c] sm:$0xf]
        %v7966 = vld [vmem:[%s7953 + $0x30] sm:$0xf]
        %v7967 = vld [vmem:[%s7953 + $0x34] sm:$0xf]
        %v7968 = vld [vmem:[%s7953 + $0x38] sm:$0xf]
        %v7969 = vld [vmem:[%s7953 + $0x3c] sm:$0xf]
        %v7986 = vunpack.c.l.b16 %v7954
        %v7987 = vunpack.c.l.b16 %v7955
        %v7988 = vunpack.c.l.b16 %v7956
        %v7989 = vunpack.c.l.b16 %v7957
        %v7990 = vunpack.c.l.b16 %v7958
        %v7991 = vunpack.c.l.b16 %v7959
        %v7992 = vunpack.c.l.b16 %v7960
        %v7993 = vunpack.c.l.b16 %v7961
        %v7994 = vunpack.c.l.b16 %v7962
        %v7995 = vunpack.c.l.b16 %v7963
        %v7996 = vunpack.c.l.b16 %v7964
        %v7997 = vunpack.c.l.b16 %v7965
        %v7998 = vunpack.c.l.b16 %v7966
        %v7999 = vunpack.c.l.b16 %v7967
        %v8000 = vunpack.c.l.b16 %v7968
        %v8001 = vunpack.c.l.b16 %v7969
        %v8002 = vpack.c.b16 %v7987, %v7986
        %v8003 = vpack.c.b16 %v7989, %v7988
        %v8004 = vpack.c.b16 %v7991, %v7990
        %v8005 = vpack.c.b16 %v7993, %v7992
        %v8006 = vpack.c.b16 %v7995, %v7994
        %v8007 = vpack.c.b16 %v7997, %v7996
        %v8008 = vpack.c.b16 %v7999, %v7998
        %v8009 = vpack.c.b16 %v8001, %v8000
        %8018 = vmatpush.bf16.msra.mxu0 %v8009
        %8019 = vmatpush.bf16.msra.mxu0 %v8008
        %8020 = vmatpush.bf16.msra.mxu0 %v8007
        %8021 = vmatpush.bf16.msra.mxu0 %v8006
        %8022 = vmatpush.bf16.msra.mxu0 %v8005
        %8023 = vmatpush.bf16.msra.mxu0 %v8004
        %8024 = vmatpush.bf16.msra.mxu0 %v8003
        %8025 = vmatpush.bf16.msra.mxu0 %v8002
        %8026 = vmatmul.bf16.gmra.mxu0 %v7952
        %v8027 = vpop.f32.mrf.mxu0
        %v8028 = vadd.f32 0.0, %v8027
        %v8029 = vpop.f32.mrf.mxu0
        %v8030 = vadd.f32 0.0, %v8029
        %8031 = vdwg.mxu0
        %v8032 = vadd.f32 %v7923, %v8028
        %v8033 = vadd.f32 %v7925, %v8030
        %s8034 = scalar_lea.vmem [#allocation7], 24
        %v8035 = vld [vmem:[%s8034] sm:$0xf]
        %v8036 = vld [vmem:[%s8034 + $0x4] sm:$0xf]
        %v8039 = vunpack.c.l.b16 %v8035
        %v8040 = vunpack.c.l.b16 %v8036
        %v8041 = vpack.c.b16 %v8040, %v8039
        %v8043 = vsel %vm7724, %v8041, 0
        %8045 = vmatpush.bf16.msra.mxu0 0
        %8046 = vmatpush.bf16.msra.mxu0 0
        %8047 = vmatpush.bf16.msra.mxu0 0
        %8048 = vmatpush.bf16.msra.mxu0 0
        %8049 = vmatpush.bf16.msra.mxu0 %v7716
        %8050 = vmatpush.bf16.msra.mxu0 %v7715
        %8051 = vmatpush.bf16.msra.mxu0 %v7714
        %8052 = vmatpush.bf16.msra.mxu0 %v7713
        %8053 = vmatmul.bf16.gmra.mxu0 %v8043
        %v8054 = vpop.f32.mrf.mxu0
        %v8055 = vadd.f32 0.0, %v8054
        %v8056 = vpop.f32.mrf.mxu0
        %v8057 = vadd.f32 0.0, %v8056
        %8058 = vdwg.mxu0
        %v8059 = vpack.c.bf16 %v8057, %v8055
        %s8060 = scalar_lea.vmem [#allocation10], 1344
        %v8061 = vld [vmem:[%s8060] sm:$0xf]
        %v8062 = vld [vmem:[%s8060 + $0x4] sm:$0xf]
        %v8063 = vld [vmem:[%s8060 + $0x8] sm:$0xf]
        %v8064 = vld [vmem:[%s8060 + $0xc] sm:$0xf]
        %v8065 = vld [vmem:[%s8060 + $0x10] sm:$0xf]
        %v8066 = vld [vmem:[%s8060 + $0x14] sm:$0xf]
        %v8067 = vld [vmem:[%s8060 + $0x18] sm:$0xf]
        %v8068 = vld [vmem:[%s8060 + $0x1c] sm:$0xf]
        %v8069 = vld [vmem:[%s8060 + $0x20] sm:$0xf]
        %v8070 = vld [vmem:[%s8060 + $0x24] sm:$0xf]
        %v8071 = vld [vmem:[%s8060 + $0x28] sm:$0xf]
        %v8072 = vld [vmem:[%s8060 + $0x2c] sm:$0xf]
        %v8073 = vld [vmem:[%s8060 + $0x30] sm:$0xf]
        %v8074 = vld [vmem:[%s8060 + $0x34] sm:$0xf]
        %v8075 = vld [vmem:[%s8060 + $0x38] sm:$0xf]
        %v8076 = vld [vmem:[%s8060 + $0x3c] sm:$0xf]
        %v8093 = vunpack.c.l.b16 %v8061
        %v8094 = vunpack.c.l.b16 %v8062
        %v8095 = vunpack.c.l.b16 %v8063
        %v8096 = vunpack.c.l.b16 %v8064
        %v8097 = vunpack.c.l.b16 %v8065
        %v8098 = vunpack.c.l.b16 %v8066
        %v8099 = vunpack.c.l.b16 %v8067
        %v8100 = vunpack.c.l.b16 %v8068
        %v8101 = vunpack.c.l.b16 %v8069
        %v8102 = vunpack.c.l.b16 %v8070
        %v8103 = vunpack.c.l.b16 %v8071
        %v8104 = vunpack.c.l.b16 %v8072
        %v8105 = vunpack.c.l.b16 %v8073
        %v8106 = vunpack.c.l.b16 %v8074
        %v8107 = vunpack.c.l.b16 %v8075
        %v8108 = vunpack.c.l.b16 %v8076
        %v8109 = vpack.c.b16 %v8094, %v8093
        %v8110 = vpack.c.b16 %v8096, %v8095
        %v8111 = vpack.c.b16 %v8098, %v8097
        %v8112 = vpack.c.b16 %v8100, %v8099
        %v8113 = vpack.c.b16 %v8102, %v8101
        %v8114 = vpack.c.b16 %v8104, %v8103
        %v8115 = vpack.c.b16 %v8106, %v8105
        %v8116 = vpack.c.b16 %v8108, %v8107
        %8125 = vmatpush.bf16.msra.mxu0 %v8116
        %8126 = vmatpush.bf16.msra.mxu0 %v8115
        %8127 = vmatpush.bf16.msra.mxu0 %v8114
        %8128 = vmatpush.bf16.msra.mxu0 %v8113
        %8129 = vmatpush.bf16.msra.mxu0 %v8112
        %8130 = vmatpush.bf16.msra.mxu0 %v8111
        %8131 = vmatpush.bf16.msra.mxu0 %v8110
        %8132 = vmatpush.bf16.msra.mxu0 %v8109
        %8133 = vmatmul.bf16.gmra.mxu0 %v8059
        %v8134 = vpop.f32.mrf.mxu0
        %v8135 = vadd.f32 0.0, %v8134
        %v8136 = vpop.f32.mrf.mxu0
        %v8137 = vadd.f32 0.0, %v8136
        %8138 = vdwg.mxu0
        %v8139 = vadd.f32 %v8032, %v8135
        %v8140 = vadd.f32 %v8033, %v8137
        %s8141 = scalar_lea.vmem [#allocation7], 32
        %v8142 = vld [vmem:[%s8141] sm:$0xf]
        %v8143 = vld [vmem:[%s8141 + $0x4] sm:$0xf]
        %v8146 = vunpack.c.l.b16 %v8142
        %v8147 = vunpack.c.l.b16 %v8143
        %v8148 = vpack.c.b16 %v8147, %v8146
        %v8150 = vsel %vm7724, %v8148, 0
        %8152 = vmatpush.bf16.msra.mxu0 0
        %8153 = vmatpush.bf16.msra.mxu0 0
        %8154 = vmatpush.bf16.msra.mxu0 0
        %8155 = vmatpush.bf16.msra.mxu0 0
        %8156 = vmatpush.bf16.msra.mxu0 %v7716
        %8157 = vmatpush.bf16.msra.mxu0 %v7715
        %8158 = vmatpush.bf16.msra.mxu0 %v7714
        %8159 = vmatpush.bf16.msra.mxu0 %v7713
        %8160 = vmatmul.bf16.gmra.mxu0 %v8150
        %v8161 = vpop.f32.mrf.mxu0
        %v8162 = vadd.f32 0.0, %v8161
        %v8163 = vpop.f32.mrf.mxu0
        %v8164 = vadd.f32 0.0, %v8163
        %8165 = vdwg.mxu0
        %v8166 = vpack.c.bf16 %v8164, %v8162
        %s8167 = scalar_lea.vmem [#allocation10], 1408
        %v8168 = vld [vmem:[%s8167] sm:$0xf]
        %v8169 = vld [vmem:[%s8167 + $0x4] sm:$0xf]
        %v8170 = vld [vmem:[%s8167 + $0x8] sm:$0xf]
        %v8171 = vld [vmem:[%s8167 + $0xc] sm:$0xf]
        %v8172 = vld [vmem:[%s8167 + $0x10] sm:$0xf]
        %v8173 = vld [vmem:[%s8167 + $0x14] sm:$0xf]
        %v8174 = vld [vmem:[%s8167 + $0x18] sm:$0xf]
        %v8175 = vld [vmem:[%s8167 + $0x1c] sm:$0xf]
        %v8176 = vld [vmem:[%s8167 + $0x20] sm:$0xf]
        %v8177 = vld [vmem:[%s8167 + $0x24] sm:$0xf]
        %v8178 = vld [vmem:[%s8167 + $0x28] sm:$0xf]
        %v8179 = vld [vmem:[%s8167 + $0x2c] sm:$0xf]
        %v8180 = vld [vmem:[%s8167 + $0x30] sm:$0xf]
        %v8181 = vld [vmem:[%s8167 + $0x34] sm:$0xf]
        %v8182 = vld [vmem:[%s8167 + $0x38] sm:$0xf]
        %v8183 = vld [vmem:[%s8167 + $0x3c] sm:$0xf]
        %v8200 = vunpack.c.l.b16 %v8168
        %v8201 = vunpack.c.l.b16 %v8169
        %v8202 = vunpack.c.l.b16 %v8170
        %v8203 = vunpack.c.l.b16 %v8171
        %v8204 = vunpack.c.l.b16 %v8172
        %v8205 = vunpack.c.l.b16 %v8173
        %v8206 = vunpack.c.l.b16 %v8174
        %v8207 = vunpack.c.l.b16 %v8175
        %v8208 = vunpack.c.l.b16 %v8176
        %v8209 = vunpack.c.l.b16 %v8177
        %v8210 = vunpack.c.l.b16 %v8178
        %v8211 = vunpack.c.l.b16 %v8179
        %v8212 = vunpack.c.l.b16 %v8180
        %v8213 = vunpack.c.l.b16 %v8181
        %v8214 = vunpack.c.l.b16 %v8182
        %v8215 = vunpack.c.l.b16 %v8183
        %v8216 = vpack.c.b16 %v8201, %v8200
        %v8217 = vpack.c.b16 %v8203, %v8202
        %v8218 = vpack.c.b16 %v8205, %v8204
        %v8219 = vpack.c.b16 %v8207, %v8206
        %v8220 = vpack.c.b16 %v8209, %v8208
        %v8221 = vpack.c.b16 %v8211, %v8210
        %v8222 = vpack.c.b16 %v8213, %v8212
        %v8223 = vpack.c.b16 %v8215, %v8214
        %8232 = vmatpush.bf16.msra.mxu0 %v8223
        %8233 = vmatpush.bf16.msra.mxu0 %v8222
        %8234 = vmatpush.bf16.msra.mxu0 %v8221
        %8235 = vmatpush.bf16.msra.mxu0 %v8220
        %8236 = vmatpush.bf16.msra.mxu0 %v8219
        %8237 = vmatpush.bf16.msra.mxu0 %v8218
        %8238 = vmatpush.bf16.msra.mxu0 %v8217
        %8239 = vmatpush.bf16.msra.mxu0 %v8216
        %8240 = vmatmul.bf16.gmra.mxu0 %v8166
        %v8241 = vpop.f32.mrf.mxu0
        %v8242 = vadd.f32 0.0, %v8241
        %v8243 = vpop.f32.mrf.mxu0
        %v8244 = vadd.f32 0.0, %v8243
        %8245 = vdwg.mxu0
        %v8246 = vadd.f32 %v8139, %v8242
        %v8247 = vadd.f32 %v8140, %v8244
        %s8248 = scalar_lea.vmem [#allocation7], 40
        %v8249 = vld [vmem:[%s8248] sm:$0xf]
        %v8250 = vld [vmem:[%s8248 + $0x4] sm:$0xf]
        %v8253 = vunpack.c.l.b16 %v8249
        %v8254 = vunpack.c.l.b16 %v8250
        %v8255 = vpack.c.b16 %v8254, %v8253
        %v8257 = vsel %vm7724, %v8255, 0
        %8259 = vmatpush.bf16.msra.mxu0 0
        %8260 = vmatpush.bf16.msra.mxu0 0
        %8261 = vmatpush.bf16.msra.mxu0 0
        %8262 = vmatpush.bf16.msra.mxu0 0
        %8263 = vmatpush.bf16.msra.mxu0 %v7716
        %8264 = vmatpush.bf16.msra.mxu0 %v7715
        %8265 = vmatpush.bf16.msra.mxu0 %v7714
        %8266 = vmatpush.bf16.msra.mxu0 %v7713
        %8267 = vmatmul.bf16.gmra.mxu0 %v8257
        %v8268 = vpop.f32.mrf.mxu0
        %v8269 = vadd.f32 0.0, %v8268
        %v8270 = vpop.f32.mrf.mxu0
        %v8271 = vadd.f32 0.0, %v8270
        %8272 = vdwg.mxu0
        %v8273 = vpack.c.bf16 %v8271, %v8269
        %s8274 = scalar_lea.vmem [#allocation10], 1472
        %v8275 = vld [vmem:[%s8274] sm:$0xf]
        %v8276 = vld [vmem:[%s8274 + $0x4] sm:$0xf]
        %v8277 = vld [vmem:[%s8274 + $0x8] sm:$0xf]
        %v8278 = vld [vmem:[%s8274 + $0xc] sm:$0xf]
        %v8279 = vld [vmem:[%s8274 + $0x10] sm:$0xf]
        %v8280 = vld [vmem:[%s8274 + $0x14] sm:$0xf]
        %v8281 = vld [vmem:[%s8274 + $0x18] sm:$0xf]
        %v8282 = vld [vmem:[%s8274 + $0x1c] sm:$0xf]
        %v8283 = vld [vmem:[%s8274 + $0x20] sm:$0xf]
        %v8284 = vld [vmem:[%s8274 + $0x24] sm:$0xf]
        %v8285 = vld [vmem:[%s8274 + $0x28] sm:$0xf]
        %v8286 = vld [vmem:[%s8274 + $0x2c] sm:$0xf]
        %v8287 = vld [vmem:[%s8274 + $0x30] sm:$0xf]
        %v8288 = vld [vmem:[%s8274 + $0x34] sm:$0xf]
        %v8289 = vld [vmem:[%s8274 + $0x38] sm:$0xf]
        %v8290 = vld [vmem:[%s8274 + $0x3c] sm:$0xf]
        %v8307 = vunpack.c.l.b16 %v8275
        %v8308 = vunpack.c.l.b16 %v8276
        %v8309 = vunpack.c.l.b16 %v8277
        %v8310 = vunpack.c.l.b16 %v8278
        %v8311 = vunpack.c.l.b16 %v8279
        %v8312 = vunpack.c.l.b16 %v8280
        %v8313 = vunpack.c.l.b16 %v8281
        %v8314 = vunpack.c.l.b16 %v8282
        %v8315 = vunpack.c.l.b16 %v8283
        %v8316 = vunpack.c.l.b16 %v8284
        %v8317 = vunpack.c.l.b16 %v8285
        %v8318 = vunpack.c.l.b16 %v8286
        %v8319 = vunpack.c.l.b16 %v8287
        %v8320 = vunpack.c.l.b16 %v8288
        %v8321 = vunpack.c.l.b16 %v8289
        %v8322 = vunpack.c.l.b16 %v8290
        %v8323 = vpack.c.b16 %v8308, %v8307
        %v8324 = vpack.c.b16 %v8310, %v8309
        %v8325 = vpack.c.b16 %v8312, %v8311
        %v8326 = vpack.c.b16 %v8314, %v8313
        %v8327 = vpack.c.b16 %v8316, %v8315
        %v8328 = vpack.c.b16 %v8318, %v8317
        %v8329 = vpack.c.b16 %v8320, %v8319
        %v8330 = vpack.c.b16 %v8322, %v8321
        %8339 = vmatpush.bf16.msra.mxu0 %v8330
        %8340 = vmatpush.bf16.msra.mxu0 %v8329
        %8341 = vmatpush.bf16.msra.mxu0 %v8328
        %8342 = vmatpush.bf16.msra.mxu0 %v8327
        %8343 = vmatpush.bf16.msra.mxu0 %v8326
        %8344 = vmatpush.bf16.msra.mxu0 %v8325
        %8345 = vmatpush.bf16.msra.mxu0 %v8324
        %8346 = vmatpush.bf16.msra.mxu0 %v8323
        %8347 = vmatmul.bf16.gmra.mxu0 %v8273
        %v8348 = vpop.f32.mrf.mxu0
        %v8349 = vadd.f32 0.0, %v8348
        %v8350 = vpop.f32.mrf.mxu0
        %v8351 = vadd.f32 0.0, %v8350
        %8352 = vdwg.mxu0
        %v8353 = vadd.f32 %v8246, %v8349
        %v8354 = vadd.f32 %v8247, %v8351
        %s8355 = scalar_lea.vmem [#allocation7], 48
        %v8356 = vld [vmem:[%s8355] sm:$0xf]
        %v8357 = vld [vmem:[%s8355 + $0x4] sm:$0xf]
        %v8360 = vunpack.c.l.b16 %v8356
        %v8361 = vunpack.c.l.b16 %v8357
        %v8362 = vpack.c.b16 %v8361, %v8360
        %v8364 = vsel %vm7724, %v8362, 0
        %8366 = vmatpush.bf16.msra.mxu0 0
        %8367 = vmatpush.bf16.msra.mxu0 0
        %8368 = vmatpush.bf16.msra.mxu0 0
        %8369 = vmatpush.bf16.msra.mxu0 0
        %8370 = vmatpush.bf16.msra.mxu0 %v7716
        %8371 = vmatpush.bf16.msra.mxu0 %v7715
        %8372 = vmatpush.bf16.msra.mxu0 %v7714
        %8373 = vmatpush.bf16.msra.mxu0 %v7713
        %8374 = vmatmul.bf16.gmra.mxu0 %v8364
        %v8375 = vpop.f32.mrf.mxu0
        %v8376 = vadd.f32 0.0, %v8375
        %v8377 = vpop.f32.mrf.mxu0
        %v8378 = vadd.f32 0.0, %v8377
        %8379 = vdwg.mxu0
        %v8380 = vpack.c.bf16 %v8378, %v8376
        %s8381 = scalar_lea.vmem [#allocation10], 1536
        %v8382 = vld [vmem:[%s8381] sm:$0xf]
        %v8383 = vld [vmem:[%s8381 + $0x4] sm:$0xf]
        %v8384 = vld [vmem:[%s8381 + $0x8] sm:$0xf]
        %v8385 = vld [vmem:[%s8381 + $0xc] sm:$0xf]
        %v8386 = vld [vmem:[%s8381 + $0x10] sm:$0xf]
        %v8387 = vld [vmem:[%s8381 + $0x14] sm:$0xf]
        %v8388 = vld [vmem:[%s8381 + $0x18] sm:$0xf]
        %v8389 = vld [vmem:[%s8381 + $0x1c] sm:$0xf]
        %v8390 = vld [vmem:[%s8381 + $0x20] sm:$0xf]
        %v8391 = vld [vmem:[%s8381 + $0x24] sm:$0xf]
        %v8392 = vld [vmem:[%s8381 + $0x28] sm:$0xf]
        %v8393 = vld [vmem:[%s8381 + $0x2c] sm:$0xf]
        %v8394 = vld [vmem:[%s8381 + $0x30] sm:$0xf]
        %v8395 = vld [vmem:[%s8381 + $0x34] sm:$0xf]
        %v8396 = vld [vmem:[%s8381 + $0x38] sm:$0xf]
        %v8397 = vld [vmem:[%s8381 + $0x3c] sm:$0xf]
        %v8414 = vunpack.c.l.b16 %v8382
        %v8415 = vunpack.c.l.b16 %v8383
        %v8416 = vunpack.c.l.b16 %v8384
        %v8417 = vunpack.c.l.b16 %v8385
        %v8418 = vunpack.c.l.b16 %v8386
        %v8419 = vunpack.c.l.b16 %v8387
        %v8420 = vunpack.c.l.b16 %v8388
        %v8421 = vunpack.c.l.b16 %v8389
        %v8422 = vunpack.c.l.b16 %v8390
        %v8423 = vunpack.c.l.b16 %v8391
        %v8424 = vunpack.c.l.b16 %v8392
        %v8425 = vunpack.c.l.b16 %v8393
        %v8426 = vunpack.c.l.b16 %v8394
        %v8427 = vunpack.c.l.b16 %v8395
        %v8428 = vunpack.c.l.b16 %v8396
        %v8429 = vunpack.c.l.b16 %v8397
        %v8430 = vpack.c.b16 %v8415, %v8414
        %v8431 = vpack.c.b16 %v8417, %v8416
        %v8432 = vpack.c.b16 %v8419, %v8418
        %v8433 = vpack.c.b16 %v8421, %v8420
        %v8434 = vpack.c.b16 %v8423, %v8422
        %v8435 = vpack.c.b16 %v8425, %v8424
        %v8436 = vpack.c.b16 %v8427, %v8426
        %v8437 = vpack.c.b16 %v8429, %v8428
        %8446 = vmatpush.bf16.msra.mxu0 %v8437
        %8447 = vmatpush.bf16.msra.mxu0 %v8436
        %8448 = vmatpush.bf16.msra.mxu0 %v8435
        %8449 = vmatpush.bf16.msra.mxu0 %v8434
        %8450 = vmatpush.bf16.msra.mxu0 %v8433
        %8451 = vmatpush.bf16.msra.mxu0 %v8432
        %8452 = vmatpush.bf16.msra.mxu0 %v8431
        %8453 = vmatpush.bf16.msra.mxu0 %v8430
        %8454 = vmatmul.bf16.gmra.mxu0 %v8380
        %v8455 = vpop.f32.mrf.mxu0
        %v8456 = vadd.f32 0.0, %v8455
        %v8457 = vpop.f32.mrf.mxu0
        %v8458 = vadd.f32 0.0, %v8457
        %8459 = vdwg.mxu0
        %v8460 = vadd.f32 %v8353, %v8456
        %v8461 = vadd.f32 %v8354, %v8458
        %s8462 = scalar_lea.vmem [#allocation7], 56
        %v8463 = vld [vmem:[%s8462] sm:$0xf]
        %v8464 = vld [vmem:[%s8462 + $0x4] sm:$0xf]
        %v8467 = vunpack.c.l.b16 %v8463
        %v8468 = vunpack.c.l.b16 %v8464
        %v8469 = vpack.c.b16 %v8468, %v8467
        %v8471 = vsel %vm7724, %v8469, 0
        %8473 = vmatpush.bf16.msra.mxu0 0
        %8474 = vmatpush.bf16.msra.mxu0 0
        %8475 = vmatpush.bf16.msra.mxu0 0
        %8476 = vmatpush.bf16.msra.mxu0 0
        %8477 = vmatpush.bf16.msra.mxu0 %v7716
        %8478 = vmatpush.bf16.msra.mxu0 %v7715
        %8479 = vmatpush.bf16.msra.mxu0 %v7714
        %8480 = vmatpush.bf16.msra.mxu0 %v7713
        %8481 = vmatmul.bf16.gmra.mxu0 %v8471
        %v8482 = vpop.f32.mrf.mxu0
        %v8483 = vadd.f32 0.0, %v8482
        %v8484 = vpop.f32.mrf.mxu0
        %v8485 = vadd.f32 0.0, %v8484
        %8486 = vdwg.mxu0
        %v8487 = vpack.c.bf16 %v8485, %v8483
        %s8488 = scalar_lea.vmem [#allocation10], 1600
        %v8489 = vld [vmem:[%s8488] sm:$0xf]
        %v8490 = vld [vmem:[%s8488 + $0x4] sm:$0xf]
        %v8491 = vld [vmem:[%s8488 + $0x8] sm:$0xf]
        %v8492 = vld [vmem:[%s8488 + $0xc] sm:$0xf]
        %v8493 = vld [vmem:[%s8488 + $0x10] sm:$0xf]
        %v8494 = vld [vmem:[%s8488 + $0x14] sm:$0xf]
        %v8495 = vld [vmem:[%s8488 + $0x18] sm:$0xf]
        %v8496 = vld [vmem:[%s8488 + $0x1c] sm:$0xf]
        %v8497 = vld [vmem:[%s8488 + $0x20] sm:$0xf]
        %v8498 = vld [vmem:[%s8488 + $0x24] sm:$0xf]
        %v8499 = vld [vmem:[%s8488 + $0x28] sm:$0xf]
        %v8500 = vld [vmem:[%s8488 + $0x2c] sm:$0xf]
        %v8501 = vld [vmem:[%s8488 + $0x30] sm:$0xf]
        %v8502 = vld [vmem:[%s8488 + $0x34] sm:$0xf]
        %v8503 = vld [vmem:[%s8488 + $0x38] sm:$0xf]
        %v8504 = vld [vmem:[%s8488 + $0x3c] sm:$0xf]
        %v8521 = vunpack.c.l.b16 %v8489
        %v8522 = vunpack.c.l.b16 %v8490
        %v8523 = vunpack.c.l.b16 %v8491
        %v8524 = vunpack.c.l.b16 %v8492
        %v8525 = vunpack.c.l.b16 %v8493
        %v8526 = vunpack.c.l.b16 %v8494
        %v8527 = vunpack.c.l.b16 %v8495
        %v8528 = vunpack.c.l.b16 %v8496
        %v8529 = vunpack.c.l.b16 %v8497
        %v8530 = vunpack.c.l.b16 %v8498
        %v8531 = vunpack.c.l.b16 %v8499
        %v8532 = vunpack.c.l.b16 %v8500
        %v8533 = vunpack.c.l.b16 %v8501
        %v8534 = vunpack.c.l.b16 %v8502
        %v8535 = vunpack.c.l.b16 %v8503
        %v8536 = vunpack.c.l.b16 %v8504
        %v8537 = vpack.c.b16 %v8522, %v8521
        %v8538 = vpack.c.b16 %v8524, %v8523
        %v8539 = vpack.c.b16 %v8526, %v8525
        %v8540 = vpack.c.b16 %v8528, %v8527
        %v8541 = vpack.c.b16 %v8530, %v8529
        %v8542 = vpack.c.b16 %v8532, %v8531
        %v8543 = vpack.c.b16 %v8534, %v8533
        %v8544 = vpack.c.b16 %v8536, %v8535
        %8553 = vmatpush.bf16.msra.mxu0 %v8544
        %8554 = vmatpush.bf16.msra.mxu0 %v8543
        %8555 = vmatpush.bf16.msra.mxu0 %v8542
        %8556 = vmatpush.bf16.msra.mxu0 %v8541
        %8557 = vmatpush.bf16.msra.mxu0 %v8540
        %8558 = vmatpush.bf16.msra.mxu0 %v8539
        %8559 = vmatpush.bf16.msra.mxu0 %v8538
        %8560 = vmatpush.bf16.msra.mxu0 %v8537
        %8561 = vmatmul.bf16.gmra.mxu0 %v8487
        %v8562 = vpop.f32.mrf.mxu0
        %v8563 = vadd.f32 0.0, %v8562
        %v8564 = vpop.f32.mrf.mxu0
        %v8565 = vadd.f32 0.0, %v8564
        %8566 = vdwg.mxu0
        %v8567 = vadd.f32 %v8460, %v8563
        %v8568 = vadd.f32 %v8461, %v8565
        %s8569 = scalar_lea.vmem [#allocation7], 64
        %v8570 = vld [vmem:[%s8569] sm:$0xf]
        %v8571 = vld [vmem:[%s8569 + $0x4] sm:$0xf]
        %v8574 = vunpack.c.l.b16 %v8570
        %v8575 = vunpack.c.l.b16 %v8571
        %v8576 = vpack.c.b16 %v8575, %v8574
        %v8578 = vsel %vm7724, %v8576, 0
        %8580 = vmatpush.bf16.msra.mxu0 0
        %8581 = vmatpush.bf16.msra.mxu0 0
        %8582 = vmatpush.bf16.msra.mxu0 0
        %8583 = vmatpush.bf16.msra.mxu0 0
        %8584 = vmatpush.bf16.msra.mxu0 %v7716
        %8585 = vmatpush.bf16.msra.mxu0 %v7715
        %8586 = vmatpush.bf16.msra.mxu0 %v7714
        %8587 = vmatpush.bf16.msra.mxu0 %v7713
        %8588 = vmatmul.bf16.gmra.mxu0 %v8578
        %v8589 = vpop.f32.mrf.mxu0
        %v8590 = vadd.f32 0.0, %v8589
        %v8591 = vpop.f32.mrf.mxu0
        %v8592 = vadd.f32 0.0, %v8591
        %8593 = vdwg.mxu0
        %v8594 = vpack.c.bf16 %v8592, %v8590
        %s8595 = scalar_lea.vmem [#allocation10], 1664
        %v8596 = vld [vmem:[%s8595] sm:$0xf]
        %v8597 = vld [vmem:[%s8595 + $0x4] sm:$0xf]
        %v8598 = vld [vmem:[%s8595 + $0x8] sm:$0xf]
        %v8599 = vld [vmem:[%s8595 + $0xc] sm:$0xf]
        %v8600 = vld [vmem:[%s8595 + $0x10] sm:$0xf]
        %v8601 = vld [vmem:[%s8595 + $0x14] sm:$0xf]
        %v8602 = vld [vmem:[%s8595 + $0x18] sm:$0xf]
        %v8603 = vld [vmem:[%s8595 + $0x1c] sm:$0xf]
        %v8604 = vld [vmem:[%s8595 + $0x20] sm:$0xf]
        %v8605 = vld [vmem:[%s8595 + $0x24] sm:$0xf]
        %v8606 = vld [vmem:[%s8595 + $0x28] sm:$0xf]
        %v8607 = vld [vmem:[%s8595 + $0x2c] sm:$0xf]
        %v8608 = vld [vmem:[%s8595 + $0x30] sm:$0xf]
        %v8609 = vld [vmem:[%s8595 + $0x34] sm:$0xf]
        %v8610 = vld [vmem:[%s8595 + $0x38] sm:$0xf]
        %v8611 = vld [vmem:[%s8595 + $0x3c] sm:$0xf]
        %v8628 = vunpack.c.l.b16 %v8596
        %v8629 = vunpack.c.l.b16 %v8597
        %v8630 = vunpack.c.l.b16 %v8598
        %v8631 = vunpack.c.l.b16 %v8599
        %v8632 = vunpack.c.l.b16 %v8600
        %v8633 = vunpack.c.l.b16 %v8601
        %v8634 = vunpack.c.l.b16 %v8602
        %v8635 = vunpack.c.l.b16 %v8603
        %v8636 = vunpack.c.l.b16 %v8604
        %v8637 = vunpack.c.l.b16 %v8605
        %v8638 = vunpack.c.l.b16 %v8606
        %v8639 = vunpack.c.l.b16 %v8607
        %v8640 = vunpack.c.l.b16 %v8608
        %v8641 = vunpack.c.l.b16 %v8609
        %v8642 = vunpack.c.l.b16 %v8610
        %v8643 = vunpack.c.l.b16 %v8611
        %v8644 = vpack.c.b16 %v8629, %v8628
        %v8645 = vpack.c.b16 %v8631, %v8630
        %v8646 = vpack.c.b16 %v8633, %v8632
        %v8647 = vpack.c.b16 %v8635, %v8634
        %v8648 = vpack.c.b16 %v8637, %v8636
        %v8649 = vpack.c.b16 %v8639, %v8638
        %v8650 = vpack.c.b16 %v8641, %v8640
        %v8651 = vpack.c.b16 %v8643, %v8642
        %8660 = vmatpush.bf16.msra.mxu0 %v8651
        %8661 = vmatpush.bf16.msra.mxu0 %v8650
        %8662 = vmatpush.bf16.msra.mxu0 %v8649
        %8663 = vmatpush.bf16.msra.mxu0 %v8648
        %8664 = vmatpush.bf16.msra.mxu0 %v8647
        %8665 = vmatpush.bf16.msra.mxu0 %v8646
        %8666 = vmatpush.bf16.msra.mxu0 %v8645
        %8667 = vmatpush.bf16.msra.mxu0 %v8644
        %8668 = vmatmul.bf16.gmra.mxu0 %v8594
        %v8669 = vpop.f32.mrf.mxu0
        %v8670 = vadd.f32 0.0, %v8669
        %v8671 = vpop.f32.mrf.mxu0
        %v8672 = vadd.f32 0.0, %v8671
        %8673 = vdwg.mxu0
        %v8674 = vadd.f32 %v8567, %v8670
        %v8675 = vadd.f32 %v8568, %v8672
        %s8676 = scalar_lea.vmem [#allocation11], 2
        %v8677 = vld [vmem:[%s8676] sm:$0x1]
        %v8679 = vperm.slane %v8677, 0
        %v8681 = vadd.f32 %v8674, %v8679
        %v8682 = vadd.f32 %v8675, %v8679
        %v8683 = vmax.f32 %v8681, 0.0
        %v8684 = vmax.f32 %v8682, 0.0
        %v8685 = vpack.c.bf16 %v8684, %v8683
        %v8686 = vld [vmem:[#allocation8] sm:$0x3]
        %vm8687 = vcmask 130048
        %v8689 = vsel %vm8687, %v8686, 0
        %8691 = vmatpush.bf16.msra.mxu0 0
        %8692 = vmatpush.bf16.msra.mxu0 0
        %8693 = vmatpush.bf16.msra.mxu0 0
        %8694 = vmatpush.bf16.msra.mxu0 0
        %8695 = vmatpush.bf16.msra.mxu0 0
        %8696 = vmatpush.bf16.msra.mxu0 0
        %8697 = vmatpush.bf16.msra.mxu0 0
        %8698 = vmatpush.bf16.msra.mxu0 %v8685
        %8699 = vmatmul.bf16.gmra.mxu0 %v8689
        %v8700 = vpop.f32.mrf.mxu0
        %v8701 = vadd.f32 0.0, %v8700
        %v8702 = vpop.f32.mrf.mxu0
        %8703 = vdwg.mxu0
        %v8704 = vpack.c.bf16 %v8701, %v8701
        %s8705 = scalar_lea.vmem [#allocation10], 1728
        %v8706 = vld [vmem:[%s8705] sm:$0xf]
        %v8707 = vld [vmem:[%s8705 + $0x4] sm:$0xf]
        %v8708 = vld [vmem:[%s8705 + $0x8] sm:$0xf]
        %v8709 = vld [vmem:[%s8705 + $0xc] sm:$0xf]
        %v8710 = vld [vmem:[%s8705 + $0x10] sm:$0xf]
        %v8711 = vld [vmem:[%s8705 + $0x14] sm:$0xf]
        %v8712 = vld [vmem:[%s8705 + $0x18] sm:$0xf]
        %v8713 = vld [vmem:[%s8705 + $0x1c] sm:$0xf]
        %v8714 = vld [vmem:[%s8705 + $0x20] sm:$0xf]
        %v8715 = vld [vmem:[%s8705 + $0x24] sm:$0xf]
        %v8716 = vld [vmem:[%s8705 + $0x28] sm:$0xf]
        %v8717 = vld [vmem:[%s8705 + $0x2c] sm:$0xf]
        %v8718 = vld [vmem:[%s8705 + $0x30] sm:$0xf]
        %v8719 = vld [vmem:[%s8705 + $0x34] sm:$0xf]
        %v8720 = vld [vmem:[%s8705 + $0x38] sm:$0xf]
        %v8721 = vld [vmem:[%s8705 + $0x3c] sm:$0xf]
        %s8722 = scalar_lea.vmem [#allocation8], 2
        %v8723 = vld [vmem:[%s8722] sm:$0x3]
        %v8725 = vsel %vm8687, %v8723, 0
        %8727 = vmatpush.bf16.msra.mxu0 0
        %8728 = vmatpush.bf16.msra.mxu0 0
        %8729 = vmatpush.bf16.msra.mxu0 0
        %8730 = vmatpush.bf16.msra.mxu0 0
        %8731 = vmatpush.bf16.msra.mxu0 0
        %8732 = vmatpush.bf16.msra.mxu0 0
        %8733 = vmatpush.bf16.msra.mxu0 0
        %8734 = vmatpush.bf16.msra.mxu0 %v8685
        %8735 = vmatmul.bf16.gmra.mxu0 %v8725
        %v8736 = vpop.f32.mrf.mxu0
        %v8737 = vadd.f32 0.0, %v8736
        %v8738 = vpop.f32.mrf.mxu0
        %8739 = vdwg.mxu0
        %v8740 = vpack.c.bf16 %v8737, %v8737
        %s8741 = scalar_lea.vmem [#allocation10], 1792
        %v8742 = vld [vmem:[%s8741] sm:$0xf]
        %v8743 = vld [vmem:[%s8741 + $0x4] sm:$0xf]
        %v8744 = vld [vmem:[%s8741 + $0x8] sm:$0xf]
        %v8745 = vld [vmem:[%s8741 + $0xc] sm:$0xf]
        %v8746 = vld [vmem:[%s8741 + $0x10] sm:$0xf]
        %v8747 = vld [vmem:[%s8741 + $0x14] sm:$0xf]
        %v8748 = vld [vmem:[%s8741 + $0x18] sm:$0xf]
        %v8749 = vld [vmem:[%s8741 + $0x1c] sm:$0xf]
        %v8750 = vld [vmem:[%s8741 + $0x20] sm:$0xf]
        %v8751 = vld [vmem:[%s8741 + $0x24] sm:$0xf]
        %v8752 = vld [vmem:[%s8741 + $0x28] sm:$0xf]
        %v8753 = vld [vmem:[%s8741 + $0x2c] sm:$0xf]
        %v8754 = vld [vmem:[%s8741 + $0x30] sm:$0xf]
        %v8755 = vld [vmem:[%s8741 + $0x34] sm:$0xf]
        %v8756 = vld [vmem:[%s8741 + $0x38] sm:$0xf]
        %v8757 = vld [vmem:[%s8741 + $0x3c] sm:$0xf]
        %v8774 = vunpack.c.l.b16 %v8742
        %v8775 = vunpack.c.l.b16 %v8743
        %v8776 = vunpack.c.l.b16 %v8744
        %v8777 = vunpack.c.l.b16 %v8745
        %v8778 = vunpack.c.l.b16 %v8746
        %v8779 = vunpack.c.l.b16 %v8747
        %v8780 = vunpack.c.l.b16 %v8748
        %v8781 = vunpack.c.l.b16 %v8749
        %v8782 = vunpack.c.l.b16 %v8750
        %v8783 = vunpack.c.l.b16 %v8751
        %v8784 = vunpack.c.l.b16 %v8752
        %v8785 = vunpack.c.l.b16 %v8753
        %v8786 = vunpack.c.l.b16 %v8754
        %v8787 = vunpack.c.l.b16 %v8755
        %v8788 = vunpack.c.l.b16 %v8756
        %v8789 = vunpack.c.l.b16 %v8757
        %v8790 = vpack.c.b16 %v8775, %v8774
        %v8791 = vpack.c.b16 %v8777, %v8776
        %v8792 = vpack.c.b16 %v8779, %v8778
        %v8793 = vpack.c.b16 %v8781, %v8780
        %v8794 = vpack.c.b16 %v8783, %v8782
        %v8795 = vpack.c.b16 %v8785, %v8784
        %v8796 = vpack.c.b16 %v8787, %v8786
        %v8797 = vpack.c.b16 %v8789, %v8788
        %8806 = vmatpush.bf16.msra.mxu0 %v8797
        %8807 = vmatpush.bf16.msra.mxu0 %v8796
        %8808 = vmatpush.bf16.msra.mxu0 %v8795
        %8809 = vmatpush.bf16.msra.mxu0 %v8794
        %8810 = vmatpush.bf16.msra.mxu0 %v8793
        %8811 = vmatpush.bf16.msra.mxu0 %v8792
        %8812 = vmatpush.bf16.msra.mxu0 %v8791
        %8813 = vmatpush.bf16.msra.mxu0 %v8790
        %8814 = vmatmul.bf16.gmra.mxu0 %v8740
        %v8815 = vpop.f32.mrf.mxu0
        %v8816 = vadd.f32 0.0, %v8815
        %v8817 = vpop.f32.mrf.mxu0
        %8818 = vdwg.mxu0
        %v8835 = vunpack.c.l.b16 %v8706
        %v8836 = vunpack.c.l.b16 %v8707
        %v8837 = vunpack.c.l.b16 %v8708
        %v8838 = vunpack.c.l.b16 %v8709
        %v8839 = vunpack.c.l.b16 %v8710
        %v8840 = vunpack.c.l.b16 %v8711
        %v8841 = vunpack.c.l.b16 %v8712
        %v8842 = vunpack.c.l.b16 %v8713
        %v8843 = vunpack.c.l.b16 %v8714
        %v8844 = vunpack.c.l.b16 %v8715
        %v8845 = vunpack.c.l.b16 %v8716
        %v8846 = vunpack.c.l.b16 %v8717
        %v8847 = vunpack.c.l.b16 %v8718
        %v8848 = vunpack.c.l.b16 %v8719
        %v8849 = vunpack.c.l.b16 %v8720
        %v8850 = vunpack.c.l.b16 %v8721
        %v8851 = vpack.c.b16 %v8836, %v8835
        %v8852 = vpack.c.b16 %v8838, %v8837
        %v8853 = vpack.c.b16 %v8840, %v8839
        %v8854 = vpack.c.b16 %v8842, %v8841
        %v8855 = vpack.c.b16 %v8844, %v8843
        %v8856 = vpack.c.b16 %v8846, %v8845
        %v8857 = vpack.c.b16 %v8848, %v8847
        %v8858 = vpack.c.b16 %v8850, %v8849
        %8867 = vmatpush.bf16.msra.mxu0 %v8858
        %8868 = vmatpush.bf16.msra.mxu0 %v8857
        %8869 = vmatpush.bf16.msra.mxu0 %v8856
        %8870 = vmatpush.bf16.msra.mxu0 %v8855
        %8871 = vmatpush.bf16.msra.mxu0 %v8854
        %8872 = vmatpush.bf16.msra.mxu0 %v8853
        %8873 = vmatpush.bf16.msra.mxu0 %v8852
        %8874 = vmatpush.bf16.msra.mxu0 %v8851
        %8875 = vmatmul.bf16.gmra.mxu0 %v8704
        %v8876 = vpop.f32.mrf.mxu0
        %v8877 = vadd.f32 %v8816, %v8876
        %v8878 = vpop.f32.mrf.mxu0
        %8879 = vdwg.mxu0
        %s8880 = scalar_lea.vmem [#allocation8], 4
        %v8881 = vld [vmem:[%s8880] sm:$0x3]
        %v8883 = vsel %vm8687, %v8881, 0
        %8885 = vmatpush.bf16.msra.mxu0 0
        %8886 = vmatpush.bf16.msra.mxu0 0
        %8887 = vmatpush.bf16.msra.mxu0 0
        %8888 = vmatpush.bf16.msra.mxu0 0
        %8889 = vmatpush.bf16.msra.mxu0 0
        %8890 = vmatpush.bf16.msra.mxu0 0
        %8891 = vmatpush.bf16.msra.mxu0 0
        %8892 = vmatpush.bf16.msra.mxu0 %v8685
        %8893 = vmatmul.bf16.gmra.mxu0 %v8883
        %v8894 = vpop.f32.mrf.mxu0
        %v8895 = vadd.f32 0.0, %v8894
        %v8896 = vpop.f32.mrf.mxu0
        %8897 = vdwg.mxu0
        %v8898 = vpack.c.bf16 %v8895, %v8895
        %s8899 = scalar_lea.vmem [#allocation10], 1856
        %v8900 = vld [vmem:[%s8899] sm:$0xf]
        %v8901 = vld [vmem:[%s8899 + $0x4] sm:$0xf]
        %v8902 = vld [vmem:[%s8899 + $0x8] sm:$0xf]
        %v8903 = vld [vmem:[%s8899 + $0xc] sm:$0xf]
        %v8904 = vld [vmem:[%s8899 + $0x10] sm:$0xf]
        %v8905 = vld [vmem:[%s8899 + $0x14] sm:$0xf]
        %v8906 = vld [vmem:[%s8899 + $0x18] sm:$0xf]
        %v8907 = vld [vmem:[%s8899 + $0x1c] sm:$0xf]
        %v8908 = vld [vmem:[%s8899 + $0x20] sm:$0xf]
        %v8909 = vld [vmem:[%s8899 + $0x24] sm:$0xf]
        %v8910 = vld [vmem:[%s8899 + $0x28] sm:$0xf]
        %v8911 = vld [vmem:[%s8899 + $0x2c] sm:$0xf]
        %v8912 = vld [vmem:[%s8899 + $0x30] sm:$0xf]
        %v8913 = vld [vmem:[%s8899 + $0x34] sm:$0xf]
        %v8914 = vld [vmem:[%s8899 + $0x38] sm:$0xf]
        %v8915 = vld [vmem:[%s8899 + $0x3c] sm:$0xf]
        %v8932 = vunpack.c.l.b16 %v8900
        %v8933 = vunpack.c.l.b16 %v8901
        %v8934 = vunpack.c.l.b16 %v8902
        %v8935 = vunpack.c.l.b16 %v8903
        %v8936 = vunpack.c.l.b16 %v8904
        %v8937 = vunpack.c.l.b16 %v8905
        %v8938 = vunpack.c.l.b16 %v8906
        %v8939 = vunpack.c.l.b16 %v8907
        %v8940 = vunpack.c.l.b16 %v8908
        %v8941 = vunpack.c.l.b16 %v8909
        %v8942 = vunpack.c.l.b16 %v8910
        %v8943 = vunpack.c.l.b16 %v8911
        %v8944 = vunpack.c.l.b16 %v8912
        %v8945 = vunpack.c.l.b16 %v8913
        %v8946 = vunpack.c.l.b16 %v8914
        %v8947 = vunpack.c.l.b16 %v8915
        %v8948 = vpack.c.b16 %v8933, %v8932
        %v8949 = vpack.c.b16 %v8935, %v8934
        %v8950 = vpack.c.b16 %v8937, %v8936
        %v8951 = vpack.c.b16 %v8939, %v8938
        %v8952 = vpack.c.b16 %v8941, %v8940
        %v8953 = vpack.c.b16 %v8943, %v8942
        %v8954 = vpack.c.b16 %v8945, %v8944
        %v8955 = vpack.c.b16 %v8947, %v8946
        %8964 = vmatpush.bf16.msra.mxu0 %v8955
        %8965 = vmatpush.bf16.msra.mxu0 %v8954
        %8966 = vmatpush.bf16.msra.mxu0 %v8953
        %8967 = vmatpush.bf16.msra.mxu0 %v8952
        %8968 = vmatpush.bf16.msra.mxu0 %v8951
        %8969 = vmatpush.bf16.msra.mxu0 %v8950
        %8970 = vmatpush.bf16.msra.mxu0 %v8949
        %8971 = vmatpush.bf16.msra.mxu0 %v8948
        %8972 = vmatmul.bf16.gmra.mxu0 %v8898
        %v8973 = vpop.f32.mrf.mxu0
        %v8974 = vadd.f32 0.0, %v8973
        %v8975 = vpop.f32.mrf.mxu0
        %8976 = vdwg.mxu0
        %v8977 = vadd.f32 %v8877, %v8974
        %s8978 = scalar_lea.vmem [#allocation8], 6
        %v8979 = vld [vmem:[%s8978] sm:$0x3]
        %v8981 = vsel %vm8687, %v8979, 0
        %8983 = vmatpush.bf16.msra.mxu0 0
        %8984 = vmatpush.bf16.msra.mxu0 0
        %8985 = vmatpush.bf16.msra.mxu0 0
        %8986 = vmatpush.bf16.msra.mxu0 0
        %8987 = vmatpush.bf16.msra.mxu0 0
        %8988 = vmatpush.bf16.msra.mxu0 0
        %8989 = vmatpush.bf16.msra.mxu0 0
        %8990 = vmatpush.bf16.msra.mxu0 %v8685
        %8991 = vmatmul.bf16.gmra.mxu0 %v8981
        %v8992 = vpop.f32.mrf.mxu0
        %v8993 = vadd.f32 0.0, %v8992
        %v8994 = vpop.f32.mrf.mxu0
        %8995 = vdwg.mxu0
        %v8996 = vpack.c.bf16 %v8993, %v8993
        %s8997 = scalar_lea.vmem [#allocation10], 1920
        %v8998 = vld [vmem:[%s8997] sm:$0xf]
        %v8999 = vld [vmem:[%s8997 + $0x4] sm:$0xf]
        %v9000 = vld [vmem:[%s8997 + $0x8] sm:$0xf]
        %v9001 = vld [vmem:[%s8997 + $0xc] sm:$0xf]
        %v9002 = vld [vmem:[%s8997 + $0x10] sm:$0xf]
        %v9003 = vld [vmem:[%s8997 + $0x14] sm:$0xf]
        %v9004 = vld [vmem:[%s8997 + $0x18] sm:$0xf]
        %v9005 = vld [vmem:[%s8997 + $0x1c] sm:$0xf]
        %v9006 = vld [vmem:[%s8997 + $0x20] sm:$0xf]
        %v9007 = vld [vmem:[%s8997 + $0x24] sm:$0xf]
        %v9008 = vld [vmem:[%s8997 + $0x28] sm:$0xf]
        %v9009 = vld [vmem:[%s8997 + $0x2c] sm:$0xf]
        %v9010 = vld [vmem:[%s8997 + $0x30] sm:$0xf]
        %v9011 = vld [vmem:[%s8997 + $0x34] sm:$0xf]
        %v9012 = vld [vmem:[%s8997 + $0x38] sm:$0xf]
        %v9013 = vld [vmem:[%s8997 + $0x3c] sm:$0xf]
        %v9030 = vunpack.c.l.b16 %v8998
        %v9031 = vunpack.c.l.b16 %v8999
        %v9032 = vunpack.c.l.b16 %v9000
        %v9033 = vunpack.c.l.b16 %v9001
        %v9034 = vunpack.c.l.b16 %v9002
        %v9035 = vunpack.c.l.b16 %v9003
        %v9036 = vunpack.c.l.b16 %v9004
        %v9037 = vunpack.c.l.b16 %v9005
        %v9038 = vunpack.c.l.b16 %v9006
        %v9039 = vunpack.c.l.b16 %v9007
        %v9040 = vunpack.c.l.b16 %v9008
        %v9041 = vunpack.c.l.b16 %v9009
        %v9042 = vunpack.c.l.b16 %v9010
        %v9043 = vunpack.c.l.b16 %v9011
        %v9044 = vunpack.c.l.b16 %v9012
        %v9045 = vunpack.c.l.b16 %v9013
        %v9046 = vpack.c.b16 %v9031, %v9030
        %v9047 = vpack.c.b16 %v9033, %v9032
        %v9048 = vpack.c.b16 %v9035, %v9034
        %v9049 = vpack.c.b16 %v9037, %v9036
        %v9050 = vpack.c.b16 %v9039, %v9038
        %v9051 = vpack.c.b16 %v9041, %v9040
        %v9052 = vpack.c.b16 %v9043, %v9042
        %v9053 = vpack.c.b16 %v9045, %v9044
        %9062 = vmatpush.bf16.msra.mxu0 %v9053
        %9063 = vmatpush.bf16.msra.mxu0 %v9052
        %9064 = vmatpush.bf16.msra.mxu0 %v9051
        %9065 = vmatpush.bf16.msra.mxu0 %v9050
        %9066 = vmatpush.bf16.msra.mxu0 %v9049
        %9067 = vmatpush.bf16.msra.mxu0 %v9048
        %9068 = vmatpush.bf16.msra.mxu0 %v9047
        %9069 = vmatpush.bf16.msra.mxu0 %v9046
        %9070 = vmatmul.bf16.gmra.mxu0 %v8996
        %v9071 = vpop.f32.mrf.mxu0
        %v9072 = vadd.f32 0.0, %v9071
        %v9073 = vpop.f32.mrf.mxu0
        %9074 = vdwg.mxu0
        %v9075 = vadd.f32 %v8977, %v9072
        %s9076 = scalar_lea.vmem [#allocation8], 8
        %v9077 = vld [vmem:[%s9076] sm:$0x3]
        %v9079 = vsel %vm8687, %v9077, 0
        %9081 = vmatpush.bf16.msra.mxu0 0
        %9082 = vmatpush.bf16.msra.mxu0 0
        %9083 = vmatpush.bf16.msra.mxu0 0
        %9084 = vmatpush.bf16.msra.mxu0 0
        %9085 = vmatpush.bf16.msra.mxu0 0
        %9086 = vmatpush.bf16.msra.mxu0 0
        %9087 = vmatpush.bf16.msra.mxu0 0
        %9088 = vmatpush.bf16.msra.mxu0 %v8685
        %9089 = vmatmul.bf16.gmra.mxu0 %v9079
        %v9090 = vpop.f32.mrf.mxu0
        %v9091 = vadd.f32 0.0, %v9090
        %v9092 = vpop.f32.mrf.mxu0
        %9093 = vdwg.mxu0
        %v9094 = vpack.c.bf16 %v9091, %v9091
        %s9095 = scalar_lea.vmem [#allocation10], 1984
        %v9096 = vld [vmem:[%s9095] sm:$0xf]
        %v9097 = vld [vmem:[%s9095 + $0x4] sm:$0xf]
        %v9098 = vld [vmem:[%s9095 + $0x8] sm:$0xf]
        %v9099 = vld [vmem:[%s9095 + $0xc] sm:$0xf]
        %v9100 = vld [vmem:[%s9095 + $0x10] sm:$0xf]
        %v9101 = vld [vmem:[%s9095 + $0x14] sm:$0xf]
        %v9102 = vld [vmem:[%s9095 + $0x18] sm:$0xf]
        %v9103 = vld [vmem:[%s9095 + $0x1c] sm:$0xf]
        %v9104 = vld [vmem:[%s9095 + $0x20] sm:$0xf]
        %v9105 = vld [vmem:[%s9095 + $0x24] sm:$0xf]
        %v9106 = vld [vmem:[%s9095 + $0x28] sm:$0xf]
        %v9107 = vld [vmem:[%s9095 + $0x2c] sm:$0xf]
        %v9108 = vld [vmem:[%s9095 + $0x30] sm:$0xf]
        %v9109 = vld [vmem:[%s9095 + $0x34] sm:$0xf]
        %v9110 = vld [vmem:[%s9095 + $0x38] sm:$0xf]
        %v9111 = vld [vmem:[%s9095 + $0x3c] sm:$0xf]
        %v9128 = vunpack.c.l.b16 %v9096
        %v9129 = vunpack.c.l.b16 %v9097
        %v9130 = vunpack.c.l.b16 %v9098
        %v9131 = vunpack.c.l.b16 %v9099
        %v9132 = vunpack.c.l.b16 %v9100
        %v9133 = vunpack.c.l.b16 %v9101
        %v9134 = vunpack.c.l.b16 %v9102
        %v9135 = vunpack.c.l.b16 %v9103
        %v9136 = vunpack.c.l.b16 %v9104
        %v9137 = vunpack.c.l.b16 %v9105
        %v9138 = vunpack.c.l.b16 %v9106
        %v9139 = vunpack.c.l.b16 %v9107
        %v9140 = vunpack.c.l.b16 %v9108
        %v9141 = vunpack.c.l.b16 %v9109
        %v9142 = vunpack.c.l.b16 %v9110
        %v9143 = vunpack.c.l.b16 %v9111
        %v9144 = vpack.c.b16 %v9129, %v9128
        %v9145 = vpack.c.b16 %v9131, %v9130
        %v9146 = vpack.c.b16 %v9133, %v9132
        %v9147 = vpack.c.b16 %v9135, %v9134
        %v9148 = vpack.c.b16 %v9137, %v9136
        %v9149 = vpack.c.b16 %v9139, %v9138
        %v9150 = vpack.c.b16 %v9141, %v9140
        %v9151 = vpack.c.b16 %v9143, %v9142
        %9160 = vmatpush.bf16.msra.mxu0 %v9151
        %9161 = vmatpush.bf16.msra.mxu0 %v9150
        %9162 = vmatpush.bf16.msra.mxu0 %v9149
        %9163 = vmatpush.bf16.msra.mxu0 %v9148
        %9164 = vmatpush.bf16.msra.mxu0 %v9147
        %9165 = vmatpush.bf16.msra.mxu0 %v9146
        %9166 = vmatpush.bf16.msra.mxu0 %v9145
        %9167 = vmatpush.bf16.msra.mxu0 %v9144
        %9168 = vmatmul.bf16.gmra.mxu0 %v9094
        %v9169 = vpop.f32.mrf.mxu0
        %v9170 = vadd.f32 0.0, %v9169
        %v9171 = vpop.f32.mrf.mxu0
        %9172 = vdwg.mxu0
        %v9173 = vadd.f32 %v9075, %v9170
        %s9174 = scalar_lea.vmem [#allocation8], 10
        %v9175 = vld [vmem:[%s9174] sm:$0x3]
        %v9177 = vsel %vm8687, %v9175, 0
        %9179 = vmatpush.bf16.msra.mxu0 0
        %9180 = vmatpush.bf16.msra.mxu0 0
        %9181 = vmatpush.bf16.msra.mxu0 0
        %9182 = vmatpush.bf16.msra.mxu0 0
        %9183 = vmatpush.bf16.msra.mxu0 0
        %9184 = vmatpush.bf16.msra.mxu0 0
        %9185 = vmatpush.bf16.msra.mxu0 0
        %9186 = vmatpush.bf16.msra.mxu0 %v8685
        %9187 = vmatmul.bf16.gmra.mxu0 %v9177
        %v9188 = vpop.f32.mrf.mxu0
        %v9189 = vadd.f32 0.0, %v9188
        %v9190 = vpop.f32.mrf.mxu0
        %9191 = vdwg.mxu0
        %v9192 = vpack.c.bf16 %v9189, %v9189
        %s9193 = scalar_lea.vmem [#allocation10], 2048
        %v9194 = vld [vmem:[%s9193] sm:$0xf]
        %v9195 = vld [vmem:[%s9193 + $0x4] sm:$0xf]
        %v9196 = vld [vmem:[%s9193 + $0x8] sm:$0xf]
        %v9197 = vld [vmem:[%s9193 + $0xc] sm:$0xf]
        %v9198 = vld [vmem:[%s9193 + $0x10] sm:$0xf]
        %v9199 = vld [vmem:[%s9193 + $0x14] sm:$0xf]
        %v9200 = vld [vmem:[%s9193 + $0x18] sm:$0xf]
        %v9201 = vld [vmem:[%s9193 + $0x1c] sm:$0xf]
        %v9202 = vld [vmem:[%s9193 + $0x20] sm:$0xf]
        %v9203 = vld [vmem:[%s9193 + $0x24] sm:$0xf]
        %v9204 = vld [vmem:[%s9193 + $0x28] sm:$0xf]
        %v9205 = vld [vmem:[%s9193 + $0x2c] sm:$0xf]
        %v9206 = vld [vmem:[%s9193 + $0x30] sm:$0xf]
        %v9207 = vld [vmem:[%s9193 + $0x34] sm:$0xf]
        %v9208 = vld [vmem:[%s9193 + $0x38] sm:$0xf]
        %v9209 = vld [vmem:[%s9193 + $0x3c] sm:$0xf]
        %v9226 = vunpack.c.l.b16 %v9194
        %v9227 = vunpack.c.l.b16 %v9195
        %v9228 = vunpack.c.l.b16 %v9196
        %v9229 = vunpack.c.l.b16 %v9197
        %v9230 = vunpack.c.l.b16 %v9198
        %v9231 = vunpack.c.l.b16 %v9199
        %v9232 = vunpack.c.l.b16 %v9200
        %v9233 = vunpack.c.l.b16 %v9201
        %v9234 = vunpack.c.l.b16 %v9202
        %v9235 = vunpack.c.l.b16 %v9203
        %v9236 = vunpack.c.l.b16 %v9204
        %v9237 = vunpack.c.l.b16 %v9205
        %v9238 = vunpack.c.l.b16 %v9206
        %v9239 = vunpack.c.l.b16 %v9207
        %v9240 = vunpack.c.l.b16 %v9208
        %v9241 = vunpack.c.l.b16 %v9209
        %v9242 = vpack.c.b16 %v9227, %v9226
        %v9243 = vpack.c.b16 %v9229, %v9228
        %v9244 = vpack.c.b16 %v9231, %v9230
        %v9245 = vpack.c.b16 %v9233, %v9232
        %v9246 = vpack.c.b16 %v9235, %v9234
        %v9247 = vpack.c.b16 %v9237, %v9236
        %v9248 = vpack.c.b16 %v9239, %v9238
        %v9249 = vpack.c.b16 %v9241, %v9240
        %9258 = vmatpush.bf16.msra.mxu0 %v9249
        %9259 = vmatpush.bf16.msra.mxu0 %v9248
        %9260 = vmatpush.bf16.msra.mxu0 %v9247
        %9261 = vmatpush.bf16.msra.mxu0 %v9246
        %9262 = vmatpush.bf16.msra.mxu0 %v9245
        %9263 = vmatpush.bf16.msra.mxu0 %v9244
        %9264 = vmatpush.bf16.msra.mxu0 %v9243
        %9265 = vmatpush.bf16.msra.mxu0 %v9242
        %9266 = vmatmul.bf16.gmra.mxu0 %v9192
        %v9267 = vpop.f32.mrf.mxu0
        %v9268 = vadd.f32 0.0, %v9267
        %v9269 = vpop.f32.mrf.mxu0
        %9270 = vdwg.mxu0
        %v9271 = vadd.f32 %v9173, %v9268
        %s9272 = scalar_lea.vmem [#allocation8], 12
        %v9273 = vld [vmem:[%s9272] sm:$0x3]
        %v9275 = vsel %vm8687, %v9273, 0
        %9277 = vmatpush.bf16.msra.mxu0 0
        %9278 = vmatpush.bf16.msra.mxu0 0
        %9279 = vmatpush.bf16.msra.mxu0 0
        %9280 = vmatpush.bf16.msra.mxu0 0
        %9281 = vmatpush.bf16.msra.mxu0 0
        %9282 = vmatpush.bf16.msra.mxu0 0
        %9283 = vmatpush.bf16.msra.mxu0 0
        %9284 = vmatpush.bf16.msra.mxu0 %v8685
        %9285 = vmatmul.bf16.gmra.mxu0 %v9275
        %v9286 = vpop.f32.mrf.mxu0
        %v9287 = vadd.f32 0.0, %v9286
        %v9288 = vpop.f32.mrf.mxu0
        %9289 = vdwg.mxu0
        %v9290 = vpack.c.bf16 %v9287, %v9287
        %s9291 = scalar_lea.vmem [#allocation10], 2112
        %v9292 = vld [vmem:[%s9291] sm:$0xf]
        %v9293 = vld [vmem:[%s9291 + $0x4] sm:$0xf]
        %v9294 = vld [vmem:[%s9291 + $0x8] sm:$0xf]
        %v9295 = vld [vmem:[%s9291 + $0xc] sm:$0xf]
        %v9296 = vld [vmem:[%s9291 + $0x10] sm:$0xf]
        %v9297 = vld [vmem:[%s9291 + $0x14] sm:$0xf]
        %v9298 = vld [vmem:[%s9291 + $0x18] sm:$0xf]
        %v9299 = vld [vmem:[%s9291 + $0x1c] sm:$0xf]
        %v9300 = vld [vmem:[%s9291 + $0x20] sm:$0xf]
        %v9301 = vld [vmem:[%s9291 + $0x24] sm:$0xf]
        %v9302 = vld [vmem:[%s9291 + $0x28] sm:$0xf]
        %v9303 = vld [vmem:[%s9291 + $0x2c] sm:$0xf]
        %v9304 = vld [vmem:[%s9291 + $0x30] sm:$0xf]
        %v9305 = vld [vmem:[%s9291 + $0x34] sm:$0xf]
        %v9306 = vld [vmem:[%s9291 + $0x38] sm:$0xf]
        %v9307 = vld [vmem:[%s9291 + $0x3c] sm:$0xf]
        %v9324 = vunpack.c.l.b16 %v9292
        %v9325 = vunpack.c.l.b16 %v9293
        %v9326 = vunpack.c.l.b16 %v9294
        %v9327 = vunpack.c.l.b16 %v9295
        %v9328 = vunpack.c.l.b16 %v9296
        %v9329 = vunpack.c.l.b16 %v9297
        %v9330 = vunpack.c.l.b16 %v9298
        %v9331 = vunpack.c.l.b16 %v9299
        %v9332 = vunpack.c.l.b16 %v9300
        %v9333 = vunpack.c.l.b16 %v9301
        %v9334 = vunpack.c.l.b16 %v9302
        %v9335 = vunpack.c.l.b16 %v9303
        %v9336 = vunpack.c.l.b16 %v9304
        %v9337 = vunpack.c.l.b16 %v9305
        %v9338 = vunpack.c.l.b16 %v9306
        %v9339 = vunpack.c.l.b16 %v9307
        %v9340 = vpack.c.b16 %v9325, %v9324
        %v9341 = vpack.c.b16 %v9327, %v9326
        %v9342 = vpack.c.b16 %v9329, %v9328
        %v9343 = vpack.c.b16 %v9331, %v9330
        %v9344 = vpack.c.b16 %v9333, %v9332
        %v9345 = vpack.c.b16 %v9335, %v9334
        %v9346 = vpack.c.b16 %v9337, %v9336
        %v9347 = vpack.c.b16 %v9339, %v9338
        %9356 = vmatpush.bf16.msra.mxu0 %v9347
        %9357 = vmatpush.bf16.msra.mxu0 %v9346
        %9358 = vmatpush.bf16.msra.mxu0 %v9345
        %9359 = vmatpush.bf16.msra.mxu0 %v9344
        %9360 = vmatpush.bf16.msra.mxu0 %v9343
        %9361 = vmatpush.bf16.msra.mxu0 %v9342
        %9362 = vmatpush.bf16.msra.mxu0 %v9341
        %9363 = vmatpush.bf16.msra.mxu0 %v9340
        %9364 = vmatmul.bf16.gmra.mxu0 %v9290
        %v9365 = vpop.f32.mrf.mxu0
        %v9366 = vadd.f32 0.0, %v9365
        %v9367 = vpop.f32.mrf.mxu0
        %9368 = vdwg.mxu0
        %v9369 = vadd.f32 %v9271, %v9366
        %s9370 = scalar_lea.vmem [#allocation8], 14
        %v9371 = vld [vmem:[%s9370] sm:$0x3]
        %v9373 = vsel %vm8687, %v9371, 0
        %9375 = vmatpush.bf16.msra.mxu0 0
        %9376 = vmatpush.bf16.msra.mxu0 0
        %9377 = vmatpush.bf16.msra.mxu0 0
        %9378 = vmatpush.bf16.msra.mxu0 0
        %9379 = vmatpush.bf16.msra.mxu0 0
        %9380 = vmatpush.bf16.msra.mxu0 0
        %9381 = vmatpush.bf16.msra.mxu0 0
        %9382 = vmatpush.bf16.msra.mxu0 %v8685
        %9383 = vmatmul.bf16.gmra.mxu0 %v9373
        %v9384 = vpop.f32.mrf.mxu0
        %v9385 = vadd.f32 0.0, %v9384
        %v9386 = vpop.f32.mrf.mxu0
        %9387 = vdwg.mxu0
        %v9388 = vpack.c.bf16 %v9385, %v9385
        %s9389 = scalar_lea.vmem [#allocation10], 2176
        %v9390 = vld [vmem:[%s9389] sm:$0xf]
        %v9391 = vld [vmem:[%s9389 + $0x4] sm:$0xf]
        %v9392 = vld [vmem:[%s9389 + $0x8] sm:$0xf]
        %v9393 = vld [vmem:[%s9389 + $0xc] sm:$0xf]
        %v9394 = vld [vmem:[%s9389 + $0x10] sm:$0xf]
        %v9395 = vld [vmem:[%s9389 + $0x14] sm:$0xf]
        %v9396 = vld [vmem:[%s9389 + $0x18] sm:$0xf]
        %v9397 = vld [vmem:[%s9389 + $0x1c] sm:$0xf]
        %v9398 = vld [vmem:[%s9389 + $0x20] sm:$0xf]
        %v9399 = vld [vmem:[%s9389 + $0x24] sm:$0xf]
        %v9400 = vld [vmem:[%s9389 + $0x28] sm:$0xf]
        %v9401 = vld [vmem:[%s9389 + $0x2c] sm:$0xf]
        %v9402 = vld [vmem:[%s9389 + $0x30] sm:$0xf]
        %v9403 = vld [vmem:[%s9389 + $0x34] sm:$0xf]
        %v9404 = vld [vmem:[%s9389 + $0x38] sm:$0xf]
        %v9405 = vld [vmem:[%s9389 + $0x3c] sm:$0xf]
        %v9422 = vunpack.c.l.b16 %v9390
        %v9423 = vunpack.c.l.b16 %v9391
        %v9424 = vunpack.c.l.b16 %v9392
        %v9425 = vunpack.c.l.b16 %v9393
        %v9426 = vunpack.c.l.b16 %v9394
        %v9427 = vunpack.c.l.b16 %v9395
        %v9428 = vunpack.c.l.b16 %v9396
        %v9429 = vunpack.c.l.b16 %v9397
        %v9430 = vunpack.c.l.b16 %v9398
        %v9431 = vunpack.c.l.b16 %v9399
        %v9432 = vunpack.c.l.b16 %v9400
        %v9433 = vunpack.c.l.b16 %v9401
        %v9434 = vunpack.c.l.b16 %v9402
        %v9435 = vunpack.c.l.b16 %v9403
        %v9436 = vunpack.c.l.b16 %v9404
        %v9437 = vunpack.c.l.b16 %v9405
        %v9438 = vpack.c.b16 %v9423, %v9422
        %v9439 = vpack.c.b16 %v9425, %v9424
        %v9440 = vpack.c.b16 %v9427, %v9426
        %v9441 = vpack.c.b16 %v9429, %v9428
        %v9442 = vpack.c.b16 %v9431, %v9430
        %v9443 = vpack.c.b16 %v9433, %v9432
        %v9444 = vpack.c.b16 %v9435, %v9434
        %v9445 = vpack.c.b16 %v9437, %v9436
        %9454 = vmatpush.bf16.msra.mxu0 %v9445
        %9455 = vmatpush.bf16.msra.mxu0 %v9444
        %9456 = vmatpush.bf16.msra.mxu0 %v9443
        %9457 = vmatpush.bf16.msra.mxu0 %v9442
        %9458 = vmatpush.bf16.msra.mxu0 %v9441
        %9459 = vmatpush.bf16.msra.mxu0 %v9440
        %9460 = vmatpush.bf16.msra.mxu0 %v9439
        %9461 = vmatpush.bf16.msra.mxu0 %v9438
        %9462 = vmatmul.bf16.gmra.mxu0 %v9388
        %v9463 = vpop.f32.mrf.mxu0
        %v9464 = vadd.f32 0.0, %v9463
        %v9465 = vpop.f32.mrf.mxu0
        %9466 = vdwg.mxu0
        %v9467 = vadd.f32 %v9369, %v9464
        %s9468 = scalar_lea.vmem [#allocation8], 16
        %v9469 = vld [vmem:[%s9468] sm:$0x3]
        %v9471 = vsel %vm8687, %v9469, 0
        %9473 = vmatpush.bf16.msra.mxu0 0
        %9474 = vmatpush.bf16.msra.mxu0 0
        %9475 = vmatpush.bf16.msra.mxu0 0
        %9476 = vmatpush.bf16.msra.mxu0 0
        %9477 = vmatpush.bf16.msra.mxu0 0
        %9478 = vmatpush.bf16.msra.mxu0 0
        %9479 = vmatpush.bf16.msra.mxu0 0
        %9480 = vmatpush.bf16.msra.mxu0 %v8685
        %9481 = vmatmul.bf16.gmra.mxu0 %v9471
        %v9482 = vpop.f32.mrf.mxu0
        %v9483 = vadd.f32 0.0, %v9482
        %v9484 = vpop.f32.mrf.mxu0
        %9485 = vdwg.mxu0
        %v9486 = vpack.c.bf16 %v9483, %v9483
        %s9487 = scalar_lea.vmem [#allocation10], 2240
        %v9488 = vld [vmem:[%s9487] sm:$0xf]
        %v9489 = vld [vmem:[%s9487 + $0x4] sm:$0xf]
        %v9490 = vld [vmem:[%s9487 + $0x8] sm:$0xf]
        %v9491 = vld [vmem:[%s9487 + $0xc] sm:$0xf]
        %v9492 = vld [vmem:[%s9487 + $0x10] sm:$0xf]
        %v9493 = vld [vmem:[%s9487 + $0x14] sm:$0xf]
        %v9494 = vld [vmem:[%s9487 + $0x18] sm:$0xf]
        %v9495 = vld [vmem:[%s9487 + $0x1c] sm:$0xf]
        %v9496 = vld [vmem:[%s9487 + $0x20] sm:$0xf]
        %v9497 = vld [vmem:[%s9487 + $0x24] sm:$0xf]
        %v9498 = vld [vmem:[%s9487 + $0x28] sm:$0xf]
        %v9499 = vld [vmem:[%s9487 + $0x2c] sm:$0xf]
        %v9500 = vld [vmem:[%s9487 + $0x30] sm:$0xf]
        %v9501 = vld [vmem:[%s9487 + $0x34] sm:$0xf]
        %v9502 = vld [vmem:[%s9487 + $0x38] sm:$0xf]
        %v9503 = vld [vmem:[%s9487 + $0x3c] sm:$0xf]
        %v9520 = vunpack.c.l.b16 %v9488
        %v9521 = vunpack.c.l.b16 %v9489
        %v9522 = vunpack.c.l.b16 %v9490
        %v9523 = vunpack.c.l.b16 %v9491
        %v9524 = vunpack.c.l.b16 %v9492
        %v9525 = vunpack.c.l.b16 %v9493
        %v9526 = vunpack.c.l.b16 %v9494
        %v9527 = vunpack.c.l.b16 %v9495
        %v9528 = vunpack.c.l.b16 %v9496
        %v9529 = vunpack.c.l.b16 %v9497
        %v9530 = vunpack.c.l.b16 %v9498
        %v9531 = vunpack.c.l.b16 %v9499
        %v9532 = vunpack.c.l.b16 %v9500
        %v9533 = vunpack.c.l.b16 %v9501
        %v9534 = vunpack.c.l.b16 %v9502
        %v9535 = vunpack.c.l.b16 %v9503
        %v9536 = vpack.c.b16 %v9521, %v9520
        %v9537 = vpack.c.b16 %v9523, %v9522
        %v9538 = vpack.c.b16 %v9525, %v9524
        %v9539 = vpack.c.b16 %v9527, %v9526
        %v9540 = vpack.c.b16 %v9529, %v9528
        %v9541 = vpack.c.b16 %v9531, %v9530
        %v9542 = vpack.c.b16 %v9533, %v9532
        %v9543 = vpack.c.b16 %v9535, %v9534
        %9552 = vmatpush.bf16.msra.mxu0 %v9543
        %9553 = vmatpush.bf16.msra.mxu0 %v9542
        %9554 = vmatpush.bf16.msra.mxu0 %v9541
        %9555 = vmatpush.bf16.msra.mxu0 %v9540
        %9556 = vmatpush.bf16.msra.mxu0 %v9539
        %9557 = vmatpush.bf16.msra.mxu0 %v9538
        %9558 = vmatpush.bf16.msra.mxu0 %v9537
        %9559 = vmatpush.bf16.msra.mxu0 %v9536
        %9560 = vmatmul.bf16.gmra.mxu0 %v9486
        %v9561 = vpop.f32.mrf.mxu0
        %v9562 = vadd.f32 0.0, %v9561
        %v9563 = vpop.f32.mrf.mxu0
        %9564 = vdwg.mxu0
        %v9565 = vadd.f32 %v9467, %v9562
        %s9566 = scalar_lea.vmem [#allocation11], 3
        %v9567 = vld [vmem:[%s9566] sm:$0x1]
        %v9569 = vperm.slane %v9567, 0
        %v9571 = vadd.f32 %v9565, %v9569
        %v9572 = vmax.f32 %v9571, 0.0
        %v9573 = vpack.c.bf16 %v9572, %v9572
        %v9574 = vld [vmem:[%s5] sm:$0x1]
        %vm9575 = vcmask 31744
        %v9577 = vsel %vm9575, %v9574, 0
        %vm9579 = vcmask 1041408
        %v9581 = vsel %vm9579, %v9573, 0
        %9583 = vmatpush.bf16.msra.mxu0 0
        %9584 = vmatpush.bf16.msra.mxu0 0
        %9585 = vmatpush.bf16.msra.mxu0 0
        %9586 = vmatpush.bf16.msra.mxu0 0
        %9587 = vmatpush.bf16.msra.mxu0 0
        %9588 = vmatpush.bf16.msra.mxu0 0
        %9589 = vmatpush.bf16.msra.mxu0 0
        %9590 = vmatpush.bf16.msra.mxu0 %v9581
        %9591 = vmatmul.bf16.gmra.mxu0 %v9577
        %v9592 = vpop.f32.mrf.mxu0
        %v9593 = vadd.f32 0.0, %v9592
        %v9594 = vpop.f32.mrf.mxu0
        %9595 = vdwg.mxu0
        %v9596 = vpack.c.bf16 %v9593, %v9593
        %s9597 = scalar_lea.vmem [#allocation10], 2304
        %v9598 = vld [vmem:[%s9597] sm:$0xf]
        %v9599 = vld [vmem:[%s9597 + $0x4] sm:$0xf]
        %v9600 = vld [vmem:[%s9597 + $0x8] sm:$0xf]
        %v9601 = vld [vmem:[%s9597 + $0xc] sm:$0xf]
        %v9602 = vld [vmem:[%s9597 + $0x10] sm:$0xf]
        %v9603 = vld [vmem:[%s9597 + $0x14] sm:$0xf]
        %v9604 = vld [vmem:[%s9597 + $0x18] sm:$0xf]
        %v9605 = vld [vmem:[%s9597 + $0x1c] sm:$0xf]
        %v9606 = vld [vmem:[%s9597 + $0x20] sm:$0xf]
        %v9607 = vld [vmem:[%s9597 + $0x24] sm:$0xf]
        %v9608 = vld [vmem:[%s9597 + $0x28] sm:$0xf]
        %v9609 = vld [vmem:[%s9597 + $0x2c] sm:$0xf]
        %v9610 = vld [vmem:[%s9597 + $0x30] sm:$0xf]
        %v9611 = vld [vmem:[%s9597 + $0x34] sm:$0xf]
        %v9612 = vld [vmem:[%s9597 + $0x38] sm:$0xf]
        %v9613 = vld [vmem:[%s9597 + $0x3c] sm:$0xf]
        %s9614 = scalar_lea.vmem %s5, 1
        %v9615 = vld [vmem:[%s9614] sm:$0x1]
        %v9617 = vsel %vm9575, %v9615, 0
        %9619 = vmatpush.bf16.msra.mxu0 0
        %9620 = vmatpush.bf16.msra.mxu0 0
        %9621 = vmatpush.bf16.msra.mxu0 0
        %9622 = vmatpush.bf16.msra.mxu0 0
        %9623 = vmatpush.bf16.msra.mxu0 0
        %9624 = vmatpush.bf16.msra.mxu0 0
        %9625 = vmatpush.bf16.msra.mxu0 0
        %9626 = vmatpush.bf16.msra.mxu0 %v9581
        %9627 = vmatmul.bf16.gmra.mxu0 %v9617
        %v9628 = vpop.f32.mrf.mxu0
        %v9629 = vadd.f32 0.0, %v9628
        %v9630 = vpop.f32.mrf.mxu0
        %9631 = vdwg.mxu0
        %v9632 = vpack.c.bf16 %v9629, %v9629
        %s9633 = scalar_lea.vmem [#allocation10], 2368
        %v9634 = vld [vmem:[%s9633] sm:$0xf]
        %v9635 = vld [vmem:[%s9633 + $0x4] sm:$0xf]
        %v9636 = vld [vmem:[%s9633 + $0x8] sm:$0xf]
        %v9637 = vld [vmem:[%s9633 + $0xc] sm:$0xf]
        %v9638 = vld [vmem:[%s9633 + $0x10] sm:$0xf]
        %v9639 = vld [vmem:[%s9633 + $0x14] sm:$0xf]
        %v9640 = vld [vmem:[%s9633 + $0x18] sm:$0xf]
        %v9641 = vld [vmem:[%s9633 + $0x1c] sm:$0xf]
        %v9642 = vld [vmem:[%s9633 + $0x20] sm:$0xf]
        %v9643 = vld [vmem:[%s9633 + $0x24] sm:$0xf]
        %v9644 = vld [vmem:[%s9633 + $0x28] sm:$0xf]
        %v9645 = vld [vmem:[%s9633 + $0x2c] sm:$0xf]
        %v9646 = vld [vmem:[%s9633 + $0x30] sm:$0xf]
        %v9647 = vld [vmem:[%s9633 + $0x34] sm:$0xf]
        %v9648 = vld [vmem:[%s9633 + $0x38] sm:$0xf]
        %v9649 = vld [vmem:[%s9633 + $0x3c] sm:$0xf]
        %v9666 = vunpack.c.l.b16 %v9634
        %v9667 = vunpack.c.l.b16 %v9635
        %v9668 = vunpack.c.l.b16 %v9636
        %v9669 = vunpack.c.l.b16 %v9637
        %v9670 = vunpack.c.l.b16 %v9638
        %v9671 = vunpack.c.l.b16 %v9639
        %v9672 = vunpack.c.l.b16 %v9640
        %v9673 = vunpack.c.l.b16 %v9641
        %v9674 = vunpack.c.l.b16 %v9642
        %v9675 = vunpack.c.l.b16 %v9643
        %v9676 = vunpack.c.l.b16 %v9644
        %v9677 = vunpack.c.l.b16 %v9645
        %v9678 = vunpack.c.l.b16 %v9646
        %v9679 = vunpack.c.l.b16 %v9647
        %v9680 = vunpack.c.l.b16 %v9648
        %v9681 = vunpack.c.l.b16 %v9649
        %v9682 = vpack.c.b16 %v9667, %v9666
        %v9683 = vpack.c.b16 %v9669, %v9668
        %v9684 = vpack.c.b16 %v9671, %v9670
        %v9685 = vpack.c.b16 %v9673, %v9672
        %v9686 = vpack.c.b16 %v9675, %v9674
        %v9687 = vpack.c.b16 %v9677, %v9676
        %v9688 = vpack.c.b16 %v9679, %v9678
        %v9689 = vpack.c.b16 %v9681, %v9680
        %9698 = vmatpush.bf16.msra.mxu0 %v9689
        %9699 = vmatpush.bf16.msra.mxu0 %v9688
        %9700 = vmatpush.bf16.msra.mxu0 %v9687
        %9701 = vmatpush.bf16.msra.mxu0 %v9686
        %9702 = vmatpush.bf16.msra.mxu0 %v9685
        %9703 = vmatpush.bf16.msra.mxu0 %v9684
        %9704 = vmatpush.bf16.msra.mxu0 %v9683
        %9705 = vmatpush.bf16.msra.mxu0 %v9682
        %9706 = vmatmul.bf16.gmra.mxu0 %v9632
        %v9707 = vpop.f32.mrf.mxu0
        %v9708 = vadd.f32 0.0, %v9707
        %v9709 = vpop.f32.mrf.mxu0
        %9710 = vdwg.mxu0
        %v9727 = vunpack.c.l.b16 %v9598
        %v9728 = vunpack.c.l.b16 %v9599
        %v9729 = vunpack.c.l.b16 %v9600
        %v9730 = vunpack.c.l.b16 %v9601
        %v9731 = vunpack.c.l.b16 %v9602
        %v9732 = vunpack.c.l.b16 %v9603
        %v9733 = vunpack.c.l.b16 %v9604
        %v9734 = vunpack.c.l.b16 %v9605
        %v9735 = vunpack.c.l.b16 %v9606
        %v9736 = vunpack.c.l.b16 %v9607
        %v9737 = vunpack.c.l.b16 %v9608
        %v9738 = vunpack.c.l.b16 %v9609
        %v9739 = vunpack.c.l.b16 %v9610
        %v9740 = vunpack.c.l.b16 %v9611
        %v9741 = vunpack.c.l.b16 %v9612
        %v9742 = vunpack.c.l.b16 %v9613
        %v9743 = vpack.c.b16 %v9728, %v9727
        %v9744 = vpack.c.b16 %v9730, %v9729
        %v9745 = vpack.c.b16 %v9732, %v9731
        %v9746 = vpack.c.b16 %v9734, %v9733
        %v9747 = vpack.c.b16 %v9736, %v9735
        %v9748 = vpack.c.b16 %v9738, %v9737
        %v9749 = vpack.c.b16 %v9740, %v9739
        %v9750 = vpack.c.b16 %v9742, %v9741
        %9759 = vmatpush.bf16.msra.mxu0 %v9750
        %9760 = vmatpush.bf16.msra.mxu0 %v9749
        %9761 = vmatpush.bf16.msra.mxu0 %v9748
        %9762 = vmatpush.bf16.msra.mxu0 %v9747
        %9763 = vmatpush.bf16.msra.mxu0 %v9746
        %9764 = vmatpush.bf16.msra.mxu0 %v9745
        %9765 = vmatpush.bf16.msra.mxu0 %v9744
        %9766 = vmatpush.bf16.msra.mxu0 %v9743
        %9767 = vmatmul.bf16.gmra.mxu0 %v9596
        %v9768 = vpop.f32.mrf.mxu0
        %v9769 = vadd.f32 %v9708, %v9768
        %v9770 = vpop.f32.mrf.mxu0
        %9771 = vdwg.mxu0
        %s9772 = scalar_lea.vmem %s5, 2
        %v9773 = vld [vmem:[%s9772] sm:$0x1]
        %v9775 = vsel %vm9575, %v9773, 0
        %9777 = vmatpush.bf16.msra.mxu0 0
        %9778 = vmatpush.bf16.msra.mxu0 0
        %9779 = vmatpush.bf16.msra.mxu0 0
        %9780 = vmatpush.bf16.msra.mxu0 0
        %9781 = vmatpush.bf16.msra.mxu0 0
        %9782 = vmatpush.bf16.msra.mxu0 0
        %9783 = vmatpush.bf16.msra.mxu0 0
        %9784 = vmatpush.bf16.msra.mxu0 %v9581
        %9785 = vmatmul.bf16.gmra.mxu0 %v9775
        %v9786 = vpop.f32.mrf.mxu0
        %v9787 = vadd.f32 0.0, %v9786
        %v9788 = vpop.f32.mrf.mxu0
        %9789 = vdwg.mxu0
        %v9790 = vpack.c.bf16 %v9787, %v9787
        %s9791 = scalar_lea.vmem [#allocation10], 2432
        %v9792 = vld [vmem:[%s9791] sm:$0xf]
        %v9793 = vld [vmem:[%s9791 + $0x4] sm:$0xf]
        %v9794 = vld [vmem:[%s9791 + $0x8] sm:$0xf]
        %v9795 = vld [vmem:[%s9791 + $0xc] sm:$0xf]
        %v9796 = vld [vmem:[%s9791 + $0x10] sm:$0xf]
        %v9797 = vld [vmem:[%s9791 + $0x14] sm:$0xf]
        %v9798 = vld [vmem:[%s9791 + $0x18] sm:$0xf]
        %v9799 = vld [vmem:[%s9791 + $0x1c] sm:$0xf]
        %v9800 = vld [vmem:[%s9791 + $0x20] sm:$0xf]
        %v9801 = vld [vmem:[%s9791 + $0x24] sm:$0xf]
        %v9802 = vld [vmem:[%s9791 + $0x28] sm:$0xf]
        %v9803 = vld [vmem:[%s9791 + $0x2c] sm:$0xf]
        %v9804 = vld [vmem:[%s9791 + $0x30] sm:$0xf]
        %v9805 = vld [vmem:[%s9791 + $0x34] sm:$0xf]
        %v9806 = vld [vmem:[%s9791 + $0x38] sm:$0xf]
        %v9807 = vld [vmem:[%s9791 + $0x3c] sm:$0xf]
        %v9824 = vunpack.c.l.b16 %v9792
        %v9825 = vunpack.c.l.b16 %v9793
        %v9826 = vunpack.c.l.b16 %v9794
        %v9827 = vunpack.c.l.b16 %v9795
        %v9828 = vunpack.c.l.b16 %v9796
        %v9829 = vunpack.c.l.b16 %v9797
        %v9830 = vunpack.c.l.b16 %v9798
        %v9831 = vunpack.c.l.b16 %v9799
        %v9832 = vunpack.c.l.b16 %v9800
        %v9833 = vunpack.c.l.b16 %v9801
        %v9834 = vunpack.c.l.b16 %v9802
        %v9835 = vunpack.c.l.b16 %v9803
        %v9836 = vunpack.c.l.b16 %v9804
        %v9837 = vunpack.c.l.b16 %v9805
        %v9838 = vunpack.c.l.b16 %v9806
        %v9839 = vunpack.c.l.b16 %v9807
        %v9840 = vpack.c.b16 %v9825, %v9824
        %v9841 = vpack.c.b16 %v9827, %v9826
        %v9842 = vpack.c.b16 %v9829, %v9828
        %v9843 = vpack.c.b16 %v9831, %v9830
        %v9844 = vpack.c.b16 %v9833, %v9832
        %v9845 = vpack.c.b16 %v9835, %v9834
        %v9846 = vpack.c.b16 %v9837, %v9836
        %v9847 = vpack.c.b16 %v9839, %v9838
        %9856 = vmatpush.bf16.msra.mxu0 %v9847
        %9857 = vmatpush.bf16.msra.mxu0 %v9846
        %9858 = vmatpush.bf16.msra.mxu0 %v9845
        %9859 = vmatpush.bf16.msra.mxu0 %v9844
        %9860 = vmatpush.bf16.msra.mxu0 %v9843
        %9861 = vmatpush.bf16.msra.mxu0 %v9842
        %9862 = vmatpush.bf16.msra.mxu0 %v9841
        %9863 = vmatpush.bf16.msra.mxu0 %v9840
        %9864 = vmatmul.bf16.gmra.mxu0 %v9790
        %v9865 = vpop.f32.mrf.mxu0
        %v9866 = vadd.f32 0.0, %v9865
        %v9867 = vpop.f32.mrf.mxu0
        %9868 = vdwg.mxu0
        %v9869 = vadd.f32 %v9769, %v9866
        %s9870 = scalar_lea.vmem %s5, 3
        %v9871 = vld [vmem:[%s9870] sm:$0x1]
        %v9873 = vsel %vm9575, %v9871, 0
        %9875 = vmatpush.bf16.msra.mxu0 0
        %9876 = vmatpush.bf16.msra.mxu0 0
        %9877 = vmatpush.bf16.msra.mxu0 0
        %9878 = vmatpush.bf16.msra.mxu0 0
        %9879 = vmatpush.bf16.msra.mxu0 0
        %9880 = vmatpush.bf16.msra.mxu0 0
        %9881 = vmatpush.bf16.msra.mxu0 0
        %9882 = vmatpush.bf16.msra.mxu0 %v9581
        %9883 = vmatmul.bf16.gmra.mxu0 %v9873
        %v9884 = vpop.f32.mrf.mxu0
        %v9885 = vadd.f32 0.0, %v9884
        %v9886 = vpop.f32.mrf.mxu0
        %9887 = vdwg.mxu0
        %v9888 = vpack.c.bf16 %v9885, %v9885
        %s9889 = scalar_lea.vmem [#allocation10], 2496
        %v9890 = vld [vmem:[%s9889] sm:$0xf]
        %v9891 = vld [vmem:[%s9889 + $0x4] sm:$0xf]
        %v9892 = vld [vmem:[%s9889 + $0x8] sm:$0xf]
        %v9893 = vld [vmem:[%s9889 + $0xc] sm:$0xf]
        %v9894 = vld [vmem:[%s9889 + $0x10] sm:$0xf]
        %v9895 = vld [vmem:[%s9889 + $0x14] sm:$0xf]
        %v9896 = vld [vmem:[%s9889 + $0x18] sm:$0xf]
        %v9897 = vld [vmem:[%s9889 + $0x1c] sm:$0xf]
        %v9898 = vld [vmem:[%s9889 + $0x20] sm:$0xf]
        %v9899 = vld [vmem:[%s9889 + $0x24] sm:$0xf]
        %v9900 = vld [vmem:[%s9889 + $0x28] sm:$0xf]
        %v9901 = vld [vmem:[%s9889 + $0x2c] sm:$0xf]
        %v9902 = vld [vmem:[%s9889 + $0x30] sm:$0xf]
        %v9903 = vld [vmem:[%s9889 + $0x34] sm:$0xf]
        %v9904 = vld [vmem:[%s9889 + $0x38] sm:$0xf]
        %v9905 = vld [vmem:[%s9889 + $0x3c] sm:$0xf]
        %v9922 = vunpack.c.l.b16 %v9890
        %v9923 = vunpack.c.l.b16 %v9891
        %v9924 = vunpack.c.l.b16 %v9892
        %v9925 = vunpack.c.l.b16 %v9893
        %v9926 = vunpack.c.l.b16 %v9894
        %v9927 = vunpack.c.l.b16 %v9895
        %v9928 = vunpack.c.l.b16 %v9896
        %v9929 = vunpack.c.l.b16 %v9897
        %v9930 = vunpack.c.l.b16 %v9898
        %v9931 = vunpack.c.l.b16 %v9899
        %v9932 = vunpack.c.l.b16 %v9900
        %v9933 = vunpack.c.l.b16 %v9901
        %v9934 = vunpack.c.l.b16 %v9902
        %v9935 = vunpack.c.l.b16 %v9903
        %v9936 = vunpack.c.l.b16 %v9904
        %v9937 = vunpack.c.l.b16 %v9905
        %v9938 = vpack.c.b16 %v9923, %v9922
        %v9939 = vpack.c.b16 %v9925, %v9924
        %v9940 = vpack.c.b16 %v9927, %v9926
        %v9941 = vpack.c.b16 %v9929, %v9928
        %v9942 = vpack.c.b16 %v9931, %v9930
        %v9943 = vpack.c.b16 %v9933, %v9932
        %v9944 = vpack.c.b16 %v9935, %v9934
        %v9945 = vpack.c.b16 %v9937, %v9936
        %9954 = vmatpush.bf16.msra.mxu0 %v9945
        %9955 = vmatpush.bf16.msra.mxu0 %v9944
        %9956 = vmatpush.bf16.msra.mxu0 %v9943
        %9957 = vmatpush.bf16.msra.mxu0 %v9942
        %9958 = vmatpush.bf16.msra.mxu0 %v9941
        %9959 = vmatpush.bf16.msra.mxu0 %v9940
        %9960 = vmatpush.bf16.msra.mxu0 %v9939
        %9961 = vmatpush.bf16.msra.mxu0 %v9938
        %9962 = vmatmul.bf16.gmra.mxu0 %v9888
        %v9963 = vpop.f32.mrf.mxu0
        %v9964 = vadd.f32 0.0, %v9963
        %v9965 = vpop.f32.mrf.mxu0
        %9966 = vdwg.mxu0
        %v9967 = vadd.f32 %v9869, %v9964
        %s9968 = scalar_lea.vmem %s5, 4
        %v9969 = vld [vmem:[%s9968] sm:$0x1]
        %v9971 = vsel %vm9575, %v9969, 0
        %9973 = vmatpush.bf16.msra.mxu0 0
        %9974 = vmatpush.bf16.msra.mxu0 0
        %9975 = vmatpush.bf16.msra.mxu0 0
        %9976 = vmatpush.bf16.msra.mxu0 0
        %9977 = vmatpush.bf16.msra.mxu0 0
        %9978 = vmatpush.bf16.msra.mxu0 0
        %9979 = vmatpush.bf16.msra.mxu0 0
        %9980 = vmatpush.bf16.msra.mxu0 %v9581
        %9981 = vmatmul.bf16.gmra.mxu0 %v9971
        %v9982 = vpop.f32.mrf.mxu0
        %v9983 = vadd.f32 0.0, %v9982
        %v9984 = vpop.f32.mrf.mxu0
        %9985 = vdwg.mxu0
        %v9986 = vpack.c.bf16 %v9983, %v9983
        %s9987 = scalar_lea.vmem [#allocation10], 2560
        %v9988 = vld [vmem:[%s9987] sm:$0xf]
        %v9989 = vld [vmem:[%s9987 + $0x4] sm:$0xf]
        %v9990 = vld [vmem:[%s9987 + $0x8] sm:$0xf]
        %v9991 = vld [vmem:[%s9987 + $0xc] sm:$0xf]
        %v9992 = vld [vmem:[%s9987 + $0x10] sm:$0xf]
        %v9993 = vld [vmem:[%s9987 + $0x14] sm:$0xf]
        %v9994 = vld [vmem:[%s9987 + $0x18] sm:$0xf]
        %v9995 = vld [vmem:[%s9987 + $0x1c] sm:$0xf]
        %v9996 = vld [vmem:[%s9987 + $0x20] sm:$0xf]
        %v9997 = vld [vmem:[%s9987 + $0x24] sm:$0xf]
        %v9998 = vld [vmem:[%s9987 + $0x28] sm:$0xf]
        %v9999 = vld [vmem:[%s9987 + $0x2c] sm:$0xf]
        %v10000 = vld [vmem:[%s9987 + $0x30] sm:$0xf]
        %v10001 = vld [vmem:[%s9987 + $0x34] sm:$0xf]
        %v10002 = vld [vmem:[%s9987 + $0x38] sm:$0xf]
        %v10003 = vld [vmem:[%s9987 + $0x3c] sm:$0xf]
        %v10020 = vunpack.c.l.b16 %v9988
        %v10021 = vunpack.c.l.b16 %v9989
        %v10022 = vunpack.c.l.b16 %v9990
        %v10023 = vunpack.c.l.b16 %v9991
        %v10024 = vunpack.c.l.b16 %v9992
        %v10025 = vunpack.c.l.b16 %v9993
        %v10026 = vunpack.c.l.b16 %v9994
        %v10027 = vunpack.c.l.b16 %v9995
        %v10028 = vunpack.c.l.b16 %v9996
        %v10029 = vunpack.c.l.b16 %v9997
        %v10030 = vunpack.c.l.b16 %v9998
        %v10031 = vunpack.c.l.b16 %v9999
        %v10032 = vunpack.c.l.b16 %v10000
        %v10033 = vunpack.c.l.b16 %v10001
        %v10034 = vunpack.c.l.b16 %v10002
        %v10035 = vunpack.c.l.b16 %v10003
        %v10036 = vpack.c.b16 %v10021, %v10020
        %v10037 = vpack.c.b16 %v10023, %v10022
        %v10038 = vpack.c.b16 %v10025, %v10024
        %v10039 = vpack.c.b16 %v10027, %v10026
        %v10040 = vpack.c.b16 %v10029, %v10028
        %v10041 = vpack.c.b16 %v10031, %v10030
        %v10042 = vpack.c.b16 %v10033, %v10032
        %v10043 = vpack.c.b16 %v10035, %v10034
        %10052 = vmatpush.bf16.msra.mxu0 %v10043
        %10053 = vmatpush.bf16.msra.mxu0 %v10042
        %10054 = vmatpush.bf16.msra.mxu0 %v10041
        %10055 = vmatpush.bf16.msra.mxu0 %v10040
        %10056 = vmatpush.bf16.msra.mxu0 %v10039
        %10057 = vmatpush.bf16.msra.mxu0 %v10038
        %10058 = vmatpush.bf16.msra.mxu0 %v10037
        %10059 = vmatpush.bf16.msra.mxu0 %v10036
        %10060 = vmatmul.bf16.gmra.mxu0 %v9986
        %v10061 = vpop.f32.mrf.mxu0
        %v10062 = vadd.f32 0.0, %v10061
        %v10063 = vpop.f32.mrf.mxu0
        %10064 = vdwg.mxu0
        %v10065 = vadd.f32 %v9967, %v10062
        %s10066 = scalar_lea.vmem %s5, 5
        %v10067 = vld [vmem:[%s10066] sm:$0x1]
        %v10069 = vsel %vm9575, %v10067, 0
        %10071 = vmatpush.bf16.msra.mxu0 0
        %10072 = vmatpush.bf16.msra.mxu0 0
        %10073 = vmatpush.bf16.msra.mxu0 0
        %10074 = vmatpush.bf16.msra.mxu0 0
        %10075 = vmatpush.bf16.msra.mxu0 0
        %10076 = vmatpush.bf16.msra.mxu0 0
        %10077 = vmatpush.bf16.msra.mxu0 0
        %10078 = vmatpush.bf16.msra.mxu0 %v9581
        %10079 = vmatmul.bf16.gmra.mxu0 %v10069
        %v10080 = vpop.f32.mrf.mxu0
        %v10081 = vadd.f32 0.0, %v10080
        %v10082 = vpop.f32.mrf.mxu0
        %10083 = vdwg.mxu0
        %v10084 = vpack.c.bf16 %v10081, %v10081
        %s10085 = scalar_lea.vmem [#allocation10], 2624
        %v10086 = vld [vmem:[%s10085] sm:$0xf]
        %v10087 = vld [vmem:[%s10085 + $0x4] sm:$0xf]
        %v10088 = vld [vmem:[%s10085 + $0x8] sm:$0xf]
        %v10089 = vld [vmem:[%s10085 + $0xc] sm:$0xf]
        %v10090 = vld [vmem:[%s10085 + $0x10] sm:$0xf]
        %v10091 = vld [vmem:[%s10085 + $0x14] sm:$0xf]
        %v10092 = vld [vmem:[%s10085 + $0x18] sm:$0xf]
        %v10093 = vld [vmem:[%s10085 + $0x1c] sm:$0xf]
        %v10094 = vld [vmem:[%s10085 + $0x20] sm:$0xf]
        %v10095 = vld [vmem:[%s10085 + $0x24] sm:$0xf]
        %v10096 = vld [vmem:[%s10085 + $0x28] sm:$0xf]
        %v10097 = vld [vmem:[%s10085 + $0x2c] sm:$0xf]
        %v10098 = vld [vmem:[%s10085 + $0x30] sm:$0xf]
        %v10099 = vld [vmem:[%s10085 + $0x34] sm:$0xf]
        %v10100 = vld [vmem:[%s10085 + $0x38] sm:$0xf]
        %v10101 = vld [vmem:[%s10085 + $0x3c] sm:$0xf]
        %v10118 = vunpack.c.l.b16 %v10086
        %v10119 = vunpack.c.l.b16 %v10087
        %v10120 = vunpack.c.l.b16 %v10088
        %v10121 = vunpack.c.l.b16 %v10089
        %v10122 = vunpack.c.l.b16 %v10090
        %v10123 = vunpack.c.l.b16 %v10091
        %v10124 = vunpack.c.l.b16 %v10092
        %v10125 = vunpack.c.l.b16 %v10093
        %v10126 = vunpack.c.l.b16 %v10094
        %v10127 = vunpack.c.l.b16 %v10095
        %v10128 = vunpack.c.l.b16 %v10096
        %v10129 = vunpack.c.l.b16 %v10097
        %v10130 = vunpack.c.l.b16 %v10098
        %v10131 = vunpack.c.l.b16 %v10099
        %v10132 = vunpack.c.l.b16 %v10100
        %v10133 = vunpack.c.l.b16 %v10101
        %v10134 = vpack.c.b16 %v10119, %v10118
        %v10135 = vpack.c.b16 %v10121, %v10120
        %v10136 = vpack.c.b16 %v10123, %v10122
        %v10137 = vpack.c.b16 %v10125, %v10124
        %v10138 = vpack.c.b16 %v10127, %v10126
        %v10139 = vpack.c.b16 %v10129, %v10128
        %v10140 = vpack.c.b16 %v10131, %v10130
        %v10141 = vpack.c.b16 %v10133, %v10132
        %10150 = vmatpush.bf16.msra.mxu0 %v10141
        %10151 = vmatpush.bf16.msra.mxu0 %v10140
        %10152 = vmatpush.bf16.msra.mxu0 %v10139
        %10153 = vmatpush.bf16.msra.mxu0 %v10138
        %10154 = vmatpush.bf16.msra.mxu0 %v10137
        %10155 = vmatpush.bf16.msra.mxu0 %v10136
        %10156 = vmatpush.bf16.msra.mxu0 %v10135
        %10157 = vmatpush.bf16.msra.mxu0 %v10134
        %10158 = vmatmul.bf16.gmra.mxu0 %v10084
        %v10159 = vpop.f32.mrf.mxu0
        %v10160 = vadd.f32 0.0, %v10159
        %v10161 = vpop.f32.mrf.mxu0
        %10162 = vdwg.mxu0
        %v10163 = vadd.f32 %v10065, %v10160
        %s10164 = scalar_lea.vmem %s5, 6
        %v10165 = vld [vmem:[%s10164] sm:$0x1]
        %v10167 = vsel %vm9575, %v10165, 0
        %10169 = vmatpush.bf16.msra.mxu0 0
        %10170 = vmatpush.bf16.msra.mxu0 0
        %10171 = vmatpush.bf16.msra.mxu0 0
        %10172 = vmatpush.bf16.msra.mxu0 0
        %10173 = vmatpush.bf16.msra.mxu0 0
        %10174 = vmatpush.bf16.msra.mxu0 0
        %10175 = vmatpush.bf16.msra.mxu0 0
        %10176 = vmatpush.bf16.msra.mxu0 %v9581
        %10177 = vmatmul.bf16.gmra.mxu0 %v10167
        %v10178 = vpop.f32.mrf.mxu0
        %v10179 = vadd.f32 0.0, %v10178
        %v10180 = vpop.f32.mrf.mxu0
        %10181 = vdwg.mxu0
        %v10182 = vpack.c.bf16 %v10179, %v10179
        %s10183 = scalar_lea.vmem [#allocation10], 2688
        %v10184 = vld [vmem:[%s10183] sm:$0xf]
        %v10185 = vld [vmem:[%s10183 + $0x4] sm:$0xf]
        %v10186 = vld [vmem:[%s10183 + $0x8] sm:$0xf]
        %v10187 = vld [vmem:[%s10183 + $0xc] sm:$0xf]
        %v10188 = vld [vmem:[%s10183 + $0x10] sm:$0xf]
        %v10189 = vld [vmem:[%s10183 + $0x14] sm:$0xf]
        %v10190 = vld [vmem:[%s10183 + $0x18] sm:$0xf]
        %v10191 = vld [vmem:[%s10183 + $0x1c] sm:$0xf]
        %v10192 = vld [vmem:[%s10183 + $0x20] sm:$0xf]
        %v10193 = vld [vmem:[%s10183 + $0x24] sm:$0xf]
        %v10194 = vld [vmem:[%s10183 + $0x28] sm:$0xf]
        %v10195 = vld [vmem:[%s10183 + $0x2c] sm:$0xf]
        %v10196 = vld [vmem:[%s10183 + $0x30] sm:$0xf]
        %v10197 = vld [vmem:[%s10183 + $0x34] sm:$0xf]
        %v10198 = vld [vmem:[%s10183 + $0x38] sm:$0xf]
        %v10199 = vld [vmem:[%s10183 + $0x3c] sm:$0xf]
        %v10216 = vunpack.c.l.b16 %v10184
        %v10217 = vunpack.c.l.b16 %v10185
        %v10218 = vunpack.c.l.b16 %v10186
        %v10219 = vunpack.c.l.b16 %v10187
        %v10220 = vunpack.c.l.b16 %v10188
        %v10221 = vunpack.c.l.b16 %v10189
        %v10222 = vunpack.c.l.b16 %v10190
        %v10223 = vunpack.c.l.b16 %v10191
        %v10224 = vunpack.c.l.b16 %v10192
        %v10225 = vunpack.c.l.b16 %v10193
        %v10226 = vunpack.c.l.b16 %v10194
        %v10227 = vunpack.c.l.b16 %v10195
        %v10228 = vunpack.c.l.b16 %v10196
        %v10229 = vunpack.c.l.b16 %v10197
        %v10230 = vunpack.c.l.b16 %v10198
        %v10231 = vunpack.c.l.b16 %v10199
        %v10232 = vpack.c.b16 %v10217, %v10216
        %v10233 = vpack.c.b16 %v10219, %v10218
        %v10234 = vpack.c.b16 %v10221, %v10220
        %v10235 = vpack.c.b16 %v10223, %v10222
        %v10236 = vpack.c.b16 %v10225, %v10224
        %v10237 = vpack.c.b16 %v10227, %v10226
        %v10238 = vpack.c.b16 %v10229, %v10228
        %v10239 = vpack.c.b16 %v10231, %v10230
        %10248 = vmatpush.bf16.msra.mxu0 %v10239
        %10249 = vmatpush.bf16.msra.mxu0 %v10238
        %10250 = vmatpush.bf16.msra.mxu0 %v10237
        %10251 = vmatpush.bf16.msra.mxu0 %v10236
        %10252 = vmatpush.bf16.msra.mxu0 %v10235
        %10253 = vmatpush.bf16.msra.mxu0 %v10234
        %10254 = vmatpush.bf16.msra.mxu0 %v10233
        %10255 = vmatpush.bf16.msra.mxu0 %v10232
        %10256 = vmatmul.bf16.gmra.mxu0 %v10182
        %v10257 = vpop.f32.mrf.mxu0
        %v10258 = vadd.f32 0.0, %v10257
        %v10259 = vpop.f32.mrf.mxu0
        %10260 = vdwg.mxu0
        %v10261 = vadd.f32 %v10163, %v10258
        %s10262 = scalar_lea.vmem %s5, 7
        %v10263 = vld [vmem:[%s10262] sm:$0x1]
        %v10265 = vsel %vm9575, %v10263, 0
        %10267 = vmatpush.bf16.msra.mxu0 0
        %10268 = vmatpush.bf16.msra.mxu0 0
        %10269 = vmatpush.bf16.msra.mxu0 0
        %10270 = vmatpush.bf16.msra.mxu0 0
        %10271 = vmatpush.bf16.msra.mxu0 0
        %10272 = vmatpush.bf16.msra.mxu0 0
        %10273 = vmatpush.bf16.msra.mxu0 0
        %10274 = vmatpush.bf16.msra.mxu0 %v9581
        %10275 = vmatmul.bf16.gmra.mxu0 %v10265
        %v10276 = vpop.f32.mrf.mxu0
        %v10277 = vadd.f32 0.0, %v10276
        %v10278 = vpop.f32.mrf.mxu0
        %10279 = vdwg.mxu0
        %v10280 = vpack.c.bf16 %v10277, %v10277
        %s10281 = scalar_lea.vmem [#allocation10], 2752
        %v10282 = vld [vmem:[%s10281] sm:$0xf]
        %v10283 = vld [vmem:[%s10281 + $0x4] sm:$0xf]
        %v10284 = vld [vmem:[%s10281 + $0x8] sm:$0xf]
        %v10285 = vld [vmem:[%s10281 + $0xc] sm:$0xf]
        %v10286 = vld [vmem:[%s10281 + $0x10] sm:$0xf]
        %v10287 = vld [vmem:[%s10281 + $0x14] sm:$0xf]
        %v10288 = vld [vmem:[%s10281 + $0x18] sm:$0xf]
        %v10289 = vld [vmem:[%s10281 + $0x1c] sm:$0xf]
        %v10290 = vld [vmem:[%s10281 + $0x20] sm:$0xf]
        %v10291 = vld [vmem:[%s10281 + $0x24] sm:$0xf]
        %v10292 = vld [vmem:[%s10281 + $0x28] sm:$0xf]
        %v10293 = vld [vmem:[%s10281 + $0x2c] sm:$0xf]
        %v10294 = vld [vmem:[%s10281 + $0x30] sm:$0xf]
        %v10295 = vld [vmem:[%s10281 + $0x34] sm:$0xf]
        %v10296 = vld [vmem:[%s10281 + $0x38] sm:$0xf]
        %v10297 = vld [vmem:[%s10281 + $0x3c] sm:$0xf]
        %v10314 = vunpack.c.l.b16 %v10282
        %v10315 = vunpack.c.l.b16 %v10283
        %v10316 = vunpack.c.l.b16 %v10284
        %v10317 = vunpack.c.l.b16 %v10285
        %v10318 = vunpack.c.l.b16 %v10286
        %v10319 = vunpack.c.l.b16 %v10287
        %v10320 = vunpack.c.l.b16 %v10288
        %v10321 = vunpack.c.l.b16 %v10289
        %v10322 = vunpack.c.l.b16 %v10290
        %v10323 = vunpack.c.l.b16 %v10291
        %v10324 = vunpack.c.l.b16 %v10292
        %v10325 = vunpack.c.l.b16 %v10293
        %v10326 = vunpack.c.l.b16 %v10294
        %v10327 = vunpack.c.l.b16 %v10295
        %v10328 = vunpack.c.l.b16 %v10296
        %v10329 = vunpack.c.l.b16 %v10297
        %v10330 = vpack.c.b16 %v10315, %v10314
        %v10331 = vpack.c.b16 %v10317, %v10316
        %v10332 = vpack.c.b16 %v10319, %v10318
        %v10333 = vpack.c.b16 %v10321, %v10320
        %v10334 = vpack.c.b16 %v10323, %v10322
        %v10335 = vpack.c.b16 %v10325, %v10324
        %v10336 = vpack.c.b16 %v10327, %v10326
        %v10337 = vpack.c.b16 %v10329, %v10328
        %10346 = vmatpush.bf16.msra.mxu0 %v10337
        %10347 = vmatpush.bf16.msra.mxu0 %v10336
        %10348 = vmatpush.bf16.msra.mxu0 %v10335
        %10349 = vmatpush.bf16.msra.mxu0 %v10334
        %10350 = vmatpush.bf16.msra.mxu0 %v10333
        %10351 = vmatpush.bf16.msra.mxu0 %v10332
        %10352 = vmatpush.bf16.msra.mxu0 %v10331
        %10353 = vmatpush.bf16.msra.mxu0 %v10330
        %10354 = vmatmul.bf16.gmra.mxu0 %v10280
        %v10355 = vpop.f32.mrf.mxu0
        %v10356 = vadd.f32 0.0, %v10355
        %v10357 = vpop.f32.mrf.mxu0
        %10358 = vdwg.mxu0
        %v10359 = vadd.f32 %v10261, %v10356
        %s10360 = scalar_lea.vmem %s5, 8
        %v10361 = vld [vmem:[%s10360] sm:$0x1]
        %v10363 = vsel %vm9575, %v10361, 0
        %10365 = vmatpush.bf16.msra.mxu0 0
        %10366 = vmatpush.bf16.msra.mxu0 0
        %10367 = vmatpush.bf16.msra.mxu0 0
        %10368 = vmatpush.bf16.msra.mxu0 0
        %10369 = vmatpush.bf16.msra.mxu0 0
        %10370 = vmatpush.bf16.msra.mxu0 0
        %10371 = vmatpush.bf16.msra.mxu0 0
        %10372 = vmatpush.bf16.msra.mxu0 %v9581
        %10373 = vmatmul.bf16.gmra.mxu0 %v10363
        %v10374 = vpop.f32.mrf.mxu0
        %v10375 = vadd.f32 0.0, %v10374
        %v10376 = vpop.f32.mrf.mxu0
        %10377 = vdwg.mxu0
        %v10378 = vpack.c.bf16 %v10375, %v10375
        %s10379 = scalar_lea.vmem [#allocation10], 2816
        %v10380 = vld [vmem:[%s10379] sm:$0xf]
        %v10381 = vld [vmem:[%s10379 + $0x4] sm:$0xf]
        %v10382 = vld [vmem:[%s10379 + $0x8] sm:$0xf]
        %v10383 = vld [vmem:[%s10379 + $0xc] sm:$0xf]
        %v10384 = vld [vmem:[%s10379 + $0x10] sm:$0xf]
        %v10385 = vld [vmem:[%s10379 + $0x14] sm:$0xf]
        %v10386 = vld [vmem:[%s10379 + $0x18] sm:$0xf]
        %v10387 = vld [vmem:[%s10379 + $0x1c] sm:$0xf]
        %v10388 = vld [vmem:[%s10379 + $0x20] sm:$0xf]
        %v10389 = vld [vmem:[%s10379 + $0x24] sm:$0xf]
        %v10390 = vld [vmem:[%s10379 + $0x28] sm:$0xf]
        %v10391 = vld [vmem:[%s10379 + $0x2c] sm:$0xf]
        %v10392 = vld [vmem:[%s10379 + $0x30] sm:$0xf]
        %v10393 = vld [vmem:[%s10379 + $0x34] sm:$0xf]
        %v10394 = vld [vmem:[%s10379 + $0x38] sm:$0xf]
        %v10395 = vld [vmem:[%s10379 + $0x3c] sm:$0xf]
        %v10412 = vunpack.c.l.b16 %v10380
        %v10413 = vunpack.c.l.b16 %v10381
        %v10414 = vunpack.c.l.b16 %v10382
        %v10415 = vunpack.c.l.b16 %v10383
        %v10416 = vunpack.c.l.b16 %v10384
        %v10417 = vunpack.c.l.b16 %v10385
        %v10418 = vunpack.c.l.b16 %v10386
        %v10419 = vunpack.c.l.b16 %v10387
        %v10420 = vunpack.c.l.b16 %v10388
        %v10421 = vunpack.c.l.b16 %v10389
        %v10422 = vunpack.c.l.b16 %v10390
        %v10423 = vunpack.c.l.b16 %v10391
        %v10424 = vunpack.c.l.b16 %v10392
        %v10425 = vunpack.c.l.b16 %v10393
        %v10426 = vunpack.c.l.b16 %v10394
        %v10427 = vunpack.c.l.b16 %v10395
        %v10428 = vpack.c.b16 %v10413, %v10412
        %v10429 = vpack.c.b16 %v10415, %v10414
        %v10430 = vpack.c.b16 %v10417, %v10416
        %v10431 = vpack.c.b16 %v10419, %v10418
        %v10432 = vpack.c.b16 %v10421, %v10420
        %v10433 = vpack.c.b16 %v10423, %v10422
        %v10434 = vpack.c.b16 %v10425, %v10424
        %v10435 = vpack.c.b16 %v10427, %v10426
        %10444 = vmatpush.bf16.msra.mxu0 %v10435
        %10445 = vmatpush.bf16.msra.mxu0 %v10434
        %10446 = vmatpush.bf16.msra.mxu0 %v10433
        %10447 = vmatpush.bf16.msra.mxu0 %v10432
        %10448 = vmatpush.bf16.msra.mxu0 %v10431
        %10449 = vmatpush.bf16.msra.mxu0 %v10430
        %10450 = vmatpush.bf16.msra.mxu0 %v10429
        %10451 = vmatpush.bf16.msra.mxu0 %v10428
        %10452 = vmatmul.bf16.gmra.mxu0 %v10378
        %v10453 = vpop.f32.mrf.mxu0
        %v10454 = vadd.f32 0.0, %v10453
        %v10455 = vpop.f32.mrf.mxu0
        %10456 = vdwg.mxu0
        %v10457 = vadd.f32 %v10359, %v10454
        %s10458 = scalar_lea.vmem [#allocation11], 4
        %v10459 = vld [vmem:[%s10458] sm:$0x1]
        %v10460 = vadd.f32 %v10457, %v10459
        %v10461 = vmax.f32 %v10460, 0.0
        %v10462 = vpack.c.bf16 %v10461, %v10461
        %v10463 = vunpack.c.l.bf16 %v10462
        %v10464 = vadd.f32 %v10463, 0.0
        %v10465 = vpack.c.bf16 %v10464, %v10464
        %v10466 = vld [vmem:[#allocation13] sm:$0xf]
        %v10467 = vld [vmem:[#allocation13 + $0x4] sm:$0xf]
        %v10468 = vld [vmem:[#allocation13 + $0x8] sm:$0xf]
        %v10469 = vld [vmem:[#allocation13 + $0xc] sm:$0xf]
        %v10470 = vld [vmem:[#allocation13 + $0x10] sm:$0xf]
        %v10471 = vld [vmem:[#allocation13 + $0x14] sm:$0xf]
        %v10472 = vld [vmem:[#allocation13 + $0x18] sm:$0xf]
        %v10473 = vld [vmem:[#allocation13 + $0x1c] sm:$0xf]
        %v10474 = vld [vmem:[#allocation13 + $0x20] sm:$0xf]
        %v10475 = vld [vmem:[#allocation13 + $0x24] sm:$0xf]
        %v10476 = vld [vmem:[#allocation13 + $0x28] sm:$0xf]
        %v10477 = vld [vmem:[#allocation13 + $0x2c] sm:$0xf]
        %v10478 = vld [vmem:[#allocation13 + $0x30] sm:$0xf]
        %v10479 = vld [vmem:[#allocation13 + $0x34] sm:$0xf]
        %v10480 = vld [vmem:[#allocation13 + $0x38] sm:$0xf]
        %v10481 = vld [vmem:[#allocation13 + $0x3c] sm:$0xf]
        %v10482 = vld [vmem:[#allocation14] sm:$0x1]
        %v10499 = vunpack.c.l.b16 %v10466
        %v10500 = vunpack.c.l.b16 %v10467
        %v10501 = vunpack.c.l.b16 %v10468
        %v10502 = vunpack.c.l.b16 %v10469
        %v10503 = vunpack.c.l.b16 %v10470
        %v10504 = vunpack.c.l.b16 %v10471
        %v10505 = vunpack.c.l.b16 %v10472
        %v10506 = vunpack.c.l.b16 %v10473
        %v10507 = vunpack.c.l.b16 %v10474
        %v10508 = vunpack.c.l.b16 %v10475
        %v10509 = vunpack.c.l.b16 %v10476
        %v10510 = vunpack.c.l.b16 %v10477
        %v10511 = vunpack.c.l.b16 %v10478
        %v10512 = vunpack.c.l.b16 %v10479
        %v10513 = vunpack.c.l.b16 %v10480
        %v10514 = vunpack.c.l.b16 %v10481
        %v10515 = vpack.c.b16 %v10500, %v10499
        %v10516 = vpack.c.b16 %v10502, %v10501
        %v10517 = vpack.c.b16 %v10504, %v10503
        %v10518 = vpack.c.b16 %v10506, %v10505
        %v10519 = vpack.c.b16 %v10508, %v10507
        %v10520 = vpack.c.b16 %v10510, %v10509
        %v10521 = vpack.c.b16 %v10512, %v10511
        %v10522 = vpack.c.b16 %v10514, %v10513
        %10531 = vmatpush.bf16.msra.mxu0 %v10522
        %10532 = vmatpush.bf16.msra.mxu0 %v10521
        %10533 = vmatpush.bf16.msra.mxu0 %v10520
        %10534 = vmatpush.bf16.msra.mxu0 %v10519
        %10535 = vmatpush.bf16.msra.mxu0 %v10518
        %10536 = vmatpush.bf16.msra.mxu0 %v10517
        %10537 = vmatpush.bf16.msra.mxu0 %v10516
        %10538 = vmatpush.bf16.msra.mxu0 %v10515
        %10539 = vmatmul.bf16.gmra.mxu0 %v10465
        %v10540 = vpop.f32.mrf.mxu0
        %v10541 = vadd.f32 %v10482, %v10540
        %v10542 = vpop.f32.mrf.mxu0
        %10543 = vdwg.mxu0
        %10544 = vst [vmem:[%s482] sm:$0x1] %v10541
        %s10545 = sand.u32 %s252, 1
        %s10546 = scalar_lea.sflag [#allocation4], %s10545
        %s10547 = sand.u32 %s252, 1
        %s10548 = scalar_lea.vmem [#allocation16], %s10547
        // Predicated region
        $region93: #{encoder_decoder_forward.1} parent=59 // pred_check
          %p10549 = pneg %p262
        $region94: #{encoder_decoder_forward.1} parent=59 // pred_check_branch
          %10551 = sbr.rel (%p10549) target = $region96
        $region95: #{encoder_decoder_forward.1} parent=59 // pred_region
          %10553 = vsyncadd %s10546, 0
          %s10554 = scalar_lea.hbm %s10, %s29
          %s10556 = sshll.u32 %s10548, 4
          %s10557 = int_to_ptr.vmem [resolvable:$true] %s10556
          %s10558 = sshll.u32 %s10554, 4
          %s10559 = int_to_ptr.hbm [resolvable:$true] %s10558
          %10561 = dma.vmem_to_hbm [thread:$0]  %s10557, 16, %s10559, %s10546
        $region96: #{encoder_decoder_forward.1} parent=59 // pred_fallthru
          _
      $region60: #{encoder_decoder_forward.1} parent=5 // pred_fallthru
        _
      %p10562 = scmp.le.s32.totalorder 2, %s24
      // Predicated region
      $region97: #{encoder_decoder_forward.1} parent=5 // pred_check
        %p10563 = pneg %p10562
      $region98: #{encoder_decoder_forward.1} parent=5 // pred_check_branch
        %10565 = sbr.rel (%p10563) target = $region100
      $region99: #{encoder_decoder_forward.1} parent=5 // pred_region
        %s10566 = ssub.s32 %s24, 2
        // Predicated region
        $region101: #{encoder_decoder_forward.1} parent=99 // pred_check
          %p10567 = pneg %p268
        $region102: #{encoder_decoder_forward.1} parent=99 // pred_check_branch
          %10569 = sbr.rel (%p10567) target = $region104
        $region103: #{encoder_decoder_forward.1} parent=99 // pred_region
          %s10570 = sand.u32 %s253, 1
          %s10571 = scalar_lea.sflag [#allocation4], %s10570
          %s10572 = sand.u32 %s253, 1
          %s10573 = scalar_lea.vmem [#allocation16], %s10572
          %10575 = dma.done %s10571, 16
        $region104: #{encoder_decoder_forward.1} parent=99 // pred_fallthru
          _
      $region100: #{encoder_decoder_forward.1} parent=5 // pred_fallthru
        _
    $region6: #{encoder_decoder_forward.1} parent=1 // loop_footer
      %s28 = sadd.s32 1, %s24
    $region7: #{encoder_decoder_forward.1} parent=1 // loop_footer_branch
      %23 = sbr.rel target = $region3
    $region8: #{encoder_decoder_forward.1} parent=1 // loop_exit
      _
    %10576 = vsyncpa [#allocation3], 1
    %s10577 = scalar_lea.sflag [#allocation3], 1
    %10578 = vsyncpa %s10577, 1
    %10579 = vsyncpa [#allocation6], 1
    %10580 = vsyncpa [#allocation9], 1
    %10581 = vsyncpa [#allocation12], 1
    %10582 = vsyncpa [#allocation15], 1
    %10583 = vsyncpa [#allocation4], 1
    %s10584 = scalar_lea.sflag [#allocation4], 1
    %10585 = vsyncpa %s10584, 1

</llo_original>
